<compile_context>
chip_gen: v6e
topology: v6e:2x2x1
jax: 0.10.0
libtpu: 0.0.40
codegen_flags: <defaults>
</compile_context>

<pallas_src>
import math
import numpy as np

import jax
import jax.numpy as jnp
from jax import lax
from jax.experimental import pallas as pl
from jax.experimental.pallas import tpu as pltpu


# ----------------------------- Pallas kernel --------------------------------
def qnet_kernel(x_ref, w1_ref, b1_ref, w2_ref, b2_ref,
                w3_ref, b3_ref, w4_ref, b4_ref, out_ref):
    x = x_ref[...].astype(jnp.bfloat16)                       # (B, 64) lane-dense

    # conv1 as one dense structured matmul: (B,64)@(64,1152) -> (B, 36*32)
    h1 = jnp.dot(x, w1_ref[...], preferred_element_type=jnp.float32)
    h1 = jnp.maximum(h1 + b1_ref[...], 0.0)

    # conv2 as one dense structured matmul: (B,1152)@(1152,1600) -> (B, 25*64)
    h2 = jnp.dot(h1.astype(jnp.bfloat16), w2_ref[...],
                 preferred_element_type=jnp.float32)
    h2 = jnp.maximum(h2 + b2_ref[...], 0.0)

    # fc3 + relu: h2 is already in the (pos, chan) order w3 was permuted to,
    # so no flatten/relayout is needed.
    h3 = jnp.dot(h2.astype(jnp.bfloat16), w3_ref[...],
                 preferred_element_type=jnp.float32)
    h3 = jnp.maximum(h3 + b3_ref[...], 0.0)                   # (B, 512)

    # fc4 (output padded to 128 lanes -> lane-dense store)
    out = jnp.dot(h3.astype(jnp.bfloat16), w4_ref[...],
                  preferred_element_type=jnp.float32) + b4_ref[...]
    out_ref[...] = out.astype(out_ref.dtype)                  # (B, 128)


# ------------------------------- Wrapper -------------------------------------
def _conv_selector(in_hw, out_hw, k):
    """0/1 matrix (in_hw^2, out_hw^2, k^2): input pixel -> (output pos, tap)."""
    sel = np.zeros((in_hw * in_hw, out_hw * out_hw, k * k), np.float32)
    for oh in range(out_hw):
        for ow in range(out_hw):
            for kh in range(k):
                for kw in range(k):
                    sel[(oh + kh) * in_hw + (ow + kw),
                        oh * out_hw + ow, kh * k + kw] = 1.0
    return jnp.asarray(sel)


def _prep_weights(params, num_actions, n_out_pad):
    """PyTorch-shaped params -> dense structured kernel weights (bf16) + f32 biases."""
    # conv1 (O=32, I=1, 3, 3) -> dense (64, 36*32): pixel -> (out pos, channel).
    taps1 = jnp.transpose(params["conv1_w"], (2, 3, 1, 0)).reshape(9, 32)
    w1 = jnp.einsum("xpt,tc->xpc", _conv_selector(8, 6, 3), taps1).reshape(64, 36 * 32)
    b1 = jnp.tile(params["conv1_b"], 36).reshape(1, 36 * 32)

    # conv2 (O=64, I=32, 2, 2) -> dense (36*32, 25*64).
    taps2 = jnp.transpose(params["conv2_w"], (2, 3, 1, 0)).reshape(4, 32, 64)
    w2 = jnp.einsum("xpt,tio->xipo", _conv_selector(6, 5, 2),
                    taps2).reshape(36 * 32, 25 * 64)
    b2 = jnp.tile(params["conv2_b"], 25).reshape(1, 25 * 64)

    # fc3: torch flattens (C, H, W); the kernel's h2 layout is (pos=H*W, C).
    w3 = params["fc3_w"].reshape(512, 64, 25)
    w3 = jnp.transpose(w3, (2, 1, 0)).reshape(1600, 512)
    b3 = params["fc3_b"].reshape(1, 512)

    # fc4: pad N from num_actions up to a lane-dense multiple of 128.
    w4 = jnp.zeros((512, n_out_pad), jnp.float32).at[:, :num_actions].set(
        jnp.transpose(params["fc4_w"], (1, 0)))
    b4 = jnp.zeros((1, n_out_pad), jnp.float32).at[:, :num_actions].set(
        params["fc4_b"].reshape(1, num_actions))

    bf16 = lambda a: a.astype(jnp.bfloat16)
    return (bf16(w1), b1, bf16(w2), b2, bf16(w3), b3, bf16(w4), b4)


def _cost_estimate(batch, n_out_pad, weights):
    flops = 2 * batch * (64 * 1152 + 1152 * 1600 + 1600 * 512 + 512 * n_out_pad)
    w_bytes = sum(int(w.size) * w.dtype.itemsize for w in weights)
    io_bytes = batch * (64 * 4 + n_out_pad * 4)
    return pl.CostEstimate(flops=flops, transcendentals=0,
                           bytes_accessed=w_bytes + io_bytes)


def qnetwork_forward(x_nchw, params, *, batch_tile=256, grid_min_batch=64):
    """x_nchw: (B, 1, 8, 8) float32; params: dict of PyTorch-shaped tensors."""
    B = x_nchw.shape[0]
    num_actions = params["fc4_w"].shape[0]
    n_out_pad = 128 * pl.cdiv(num_actions, 128)          # lane-dense fc4 width

    x = x_nchw.reshape(B, 64)                            # (B,1,8,8) -> lane-dense (B,64)
    weights = _prep_weights(params, num_actions, n_out_pad)

    if B < grid_min_batch:
        # Small batch: single gridless invocation; everything VMEM-resident.
        vmem = pl.BlockSpec(memory_space=pltpu.MemorySpace.VMEM)
        out = pl.pallas_call(
            qnet_kernel,
            out_shape=jax.ShapeDtypeStruct((B, n_out_pad), jnp.float32),
            in_specs=[vmem] * 9,
            out_specs=vmem,
            cost_estimate=_cost_estimate(B, n_out_pad, weights),
        )(x, *weights)
        return out[:, :num_actions]

    # Large batch: batch-tiled grid; x/out tiles pipelined, weights resident.
    tb = min(batch_tile, B)
    if pl.cdiv(B, tb) < 2:
        tb = -(-B // 2)                                   # force >= 2 grid steps (v7x)
    tb = max(8, -(-tb // 8) * 8)                          # sublane multiple
    bp = pl.cdiv(B, tb) * tb
    if bp != B:                                           # pad final partial tile
        x = jnp.pad(x, ((0, bp - B), (0, 0)))

    def resident(a):                                      # same block every step
        zeros = (0,) * a.ndim
        return pl.BlockSpec(a.shape, lambda i: zeros)

    out = pl.pallas_call(
        qnet_kernel,
        out_shape=jax.ShapeDtypeStruct((bp, n_out_pad), jnp.float32),
        grid=(bp // tb,),
        in_specs=[pl.BlockSpec((tb, 64), lambda i: (i, 0))]
                + [resident(a) for a in weights],
        out_specs=pl.BlockSpec((tb, n_out_pad), lambda i: (i, 0)),
        compiler_params=pltpu.CompilerParams(
            dimension_semantics=("parallel",),
            vmem_limit_bytes=48 * 1024 * 1024),           # < v7x's 64 MiB physical
        cost_estimate=_cost_estimate(bp, n_out_pad, weights),
    )(x, *weights)
    return out[:B, :num_actions]


# ------------------------- Deterministic param init --------------------------
def init_params(num_actions, seed=0):
    """PyTorch-shaped parameters with PyTorch-style U(-1/sqrt(fan_in), ...) init."""
    key = jax.random.PRNGKey(seed)
    keys = jax.random.split(key, 8)

    def uinit(k, shape, fan_in):
        b = 1.0 / math.sqrt(fan_in)
        return jax.random.uniform(k, shape, jnp.float32, -b, b)

    return {
        "conv1_w": uinit(keys[0], (32, 1, 3, 3), 1 * 3 * 3),
        "conv1_b": uinit(keys[1], (32,), 1 * 3 * 3),
        "conv2_w": uinit(keys[2], (64, 32, 2, 2), 32 * 2 * 2),
        "conv2_b": uinit(keys[3], (64,), 32 * 2 * 2),
        "fc3_w":   uinit(keys[4], (512, 64 * 5 * 5), 64 * 5 * 5),
        "fc3_b":   uinit(keys[5], (512,), 64 * 5 * 5),
        "fc4_w":   uinit(keys[6], (num_actions, 512), 512),
        "fc4_b":   uinit(keys[7], (num_actions,), 512),
    }


# ---------------------- Pure-JAX reference (PyTorch semantics) ----------------
def qnetwork_reference(x_nchw, params):
    dn = ("NCHW", "OIHW", "NCHW")
    h = lax.conv_general_dilated(x_nchw, params["conv1_w"], (1, 1), "VALID",
                                 dimension_numbers=dn)
    h = jnp.maximum(h + params["conv1_b"].reshape(1, 32, 1, 1), 0.0)
    h = lax.conv_general_dilated(h, params["conv2_w"], (1, 1), "VALID",
                                 dimension_numbers=dn)
    h = jnp.maximum(h + params["conv2_b"].reshape(1, 64, 1, 1), 0.0)
    flat = h.reshape(h.shape[0], -1)                      # (C,H,W) flatten order
    h = jnp.maximum(flat @ params["fc3_w"].T + params["fc3_b"], 0.0)
    return h @ params["fc4_w"].T + params["fc4_b"]


if __name__ == "__main__":
    num_actions = 4
    params = init_params(num_actions, seed=0)

    key = jax.random.PRNGKey(0)
    k_small, k_big = jax.random.split(key)

    # Path 1: small batch -> single gridless invocation.
    x_small = jax.random.normal(k_small, (2, 1, 8, 8), jnp.float32)   # NCHW
    out_small = jax.block_until_ready(qnetwork_forward(x_small, params))
    ref_small = qnetwork_reference(x_small, params)
    assert out_small.shape == (2, num_actions)
    assert jnp.allclose(out_small, ref_small, atol=1e-2, rtol=2e-2), (
        float(jnp.max(jnp.abs(out_small - ref_small))))

    # Path 2: batch-tiled grid (>=2 "parallel" steps, here 2 x 32 samples).
    x_big = jax.random.normal(k_big, (64, 1, 8, 8), jnp.float32)
    out_big = jax.block_until_ready(qnetwork_forward(x_big, params))
    ref_big = qnetwork_reference(x_big, params)
    assert out_big.shape == (64, num_actions)
    assert jnp.allclose(out_big, ref_big, atol=1e-2, rtol=2e-2), (
        float(jnp.max(jnp.abs(out_big - ref_big))))

    print("KERNEL_OK")
</pallas_src>

<mosaic_0001>
module attributes {stable_mosaic.version = 11 : i64} {
  func.func @qnet_kernel(%arg0: memref<2x64xf32, #tpu.memory_space<vmem>>, %arg1: memref<64x1152xbf16, #tpu.memory_space<vmem>>, %arg2: memref<1x1152xf32, #tpu.memory_space<vmem>>, %arg3: memref<1152x1600xbf16, #tpu.memory_space<vmem>>, %arg4: memref<1x1600xf32, #tpu.memory_space<vmem>>, %arg5: memref<1600x512xbf16, #tpu.memory_space<vmem>>, %arg6: memref<1x512xf32, #tpu.memory_space<vmem>>, %arg7: memref<512x128xbf16, #tpu.memory_space<vmem>>, %arg8: memref<1x128xf32, #tpu.memory_space<vmem>>, %arg9: memref<2x128xf32, #tpu.memory_space<vmem>>) attributes {dimension_semantics = [], scalar_prefetch = 0 : i64, scratch_operands = 0 : i64, tpu.core_type = #tpu.core_type<tc>} {
    %c0 = arith.constant 0 : index
    %c0_0 = arith.constant 0 : index
    %0 = vector.load %arg0[%c0, %c0_0] : memref<2x64xf32, #tpu.memory_space<vmem>>, vector<2x64xf32>
    %1 = arith.truncf %0 : vector<2x64xf32> to vector<2x64xbf16>
    %c0_1 = arith.constant 0 : index
    %c0_2 = arith.constant 0 : index
    %2 = vector.load %arg1[%c0_1, %c0_2] : memref<64x1152xbf16, #tpu.memory_space<vmem>>, vector<64x1152xbf16>
    %cst = arith.constant dense<0.000000e+00> : vector<2x1152xf32>
    %3 = tpu.matmul %1, %2, %cst {dimension_numbers = #tpu.dot_dimension_numbers<[1], [0], [0], [1], [0, 0, 1, 1], [], []>} : vector<2x64xbf16>, vector<64x1152xbf16>, vector<2x1152xf32> -> vector<2x1152xf32>
    %c0_3 = arith.constant 0 : index
    %c0_4 = arith.constant 0 : index
    %4 = vector.load %arg2[%c0_3, %c0_4] : memref<1x1152xf32, #tpu.memory_space<vmem>>, vector<1x1152xf32>
    %5 = vector.broadcast %4 : vector<1x1152xf32> to vector<2x1152xf32>
    %6 = arith.addf %3, %5 : vector<2x1152xf32>
    %cst_5 = arith.constant 0.000000e+00 : f32
    %7 = vector.broadcast %cst_5 : f32 to vector<2x1152xf32>
    %8 = arith.maximumf %6, %7 : vector<2x1152xf32>
    %9 = arith.truncf %8 : vector<2x1152xf32> to vector<2x1152xbf16>
    %c0_6 = arith.constant 0 : index
    %c0_7 = arith.constant 0 : index
    %10 = vector.load %arg3[%c0_6, %c0_7] : memref<1152x1600xbf16, #tpu.memory_space<vmem>>, vector<1152x1600xbf16>
    %cst_8 = arith.constant dense<0.000000e+00> : vector<2x1600xf32>
    %11 = tpu.matmul %9, %10, %cst_8 {dimension_numbers = #tpu.dot_dimension_numbers<[1], [0], [0], [1], [0, 0, 1, 1], [], []>} : vector<2x1152xbf16>, vector<1152x1600xbf16>, vector<2x1600xf32> -> vector<2x1600xf32>
    %c0_9 = arith.constant 0 : index
    %c0_10 = arith.constant 0 : index
    %12 = vector.load %arg4[%c0_9, %c0_10] : memref<1x1600xf32, #tpu.memory_space<vmem>>, vector<1x1600xf32>
    %13 = vector.broadcast %12 : vector<1x1600xf32> to vector<2x1600xf32>
    %14 = arith.addf %11, %13 : vector<2x1600xf32>
    %cst_11 = arith.constant 0.000000e+00 : f32
    %15 = vector.broadcast %cst_11 : f32 to vector<2x1600xf32>
    %16 = arith.maximumf %14, %15 : vector<2x1600xf32>
    %17 = arith.truncf %16 : vector<2x1600xf32> to vector<2x1600xbf16>
    %c0_12 = arith.constant 0 : index
    %c0_13 = arith.constant 0 : index
    %18 = vector.load %arg5[%c0_12, %c0_13] : memref<1600x512xbf16, #tpu.memory_space<vmem>>, vector<1600x512xbf16>
    %cst_14 = arith.constant dense<0.000000e+00> : vector<2x512xf32>
    %19 = tpu.matmul %17, %18, %cst_14 {dimension_numbers = #tpu.dot_dimension_numbers<[1], [0], [0], [1], [0, 0, 1, 1], [], []>} : vector<2x1600xbf16>, vector<1600x512xbf16>, vector<2x512xf32> -> vector<2x512xf32>
    %c0_15 = arith.constant 0 : index
    %c0_16 = arith.constant 0 : index
    %20 = vector.load %arg6[%c0_15, %c0_16] : memref<1x512xf32, #tpu.memory_space<vmem>>, vector<1x512xf32>
    %21 = vector.broadcast %20 : vector<1x512xf32> to vector<2x512xf32>
    %22 = arith.addf %19, %21 : vector<2x512xf32>
    %cst_17 = arith.constant 0.000000e+00 : f32
    %23 = vector.broadcast %cst_17 : f32 to vector<2x512xf32>
    %24 = arith.maximumf %22, %23 : vector<2x512xf32>
    %25 = arith.truncf %24 : vector<2x512xf32> to vector<2x512xbf16>
    %c0_18 = arith.constant 0 : index
    %c0_19 = arith.constant 0 : index
    %26 = vector.load %arg7[%c0_18, %c0_19] : memref<512x128xbf16, #tpu.memory_space<vmem>>, vector<512x128xbf16>
    %cst_20 = arith.constant dense<0.000000e+00> : vector<2x128xf32>
    %27 = tpu.matmul %25, %26, %cst_20 {dimension_numbers = #tpu.dot_dimension_numbers<[1], [0], [0], [1], [0, 0, 1, 1], [], []>} : vector<2x512xbf16>, vector<512x128xbf16>, vector<2x128xf32> -> vector<2x128xf32>
    %c0_21 = arith.constant 0 : index
    %c0_22 = arith.constant 0 : index
    %28 = vector.load %arg8[%c0_21, %c0_22] : memref<1x128xf32, #tpu.memory_space<vmem>>, vector<1x128xf32>
    %29 = vector.broadcast %28 : vector<1x128xf32> to vector<2x128xf32>
    %30 = arith.addf %27, %29 : vector<2x128xf32>
    %c0_23 = arith.constant 0 : index
    %c0_24 = arith.constant 0 : index
    %31 = vector.load %arg9[%c0_23, %c0_24] : memref<2x128xf32, #tpu.memory_space<vmem>>, vector<2x128xf32>
    tpu.vector_store %arg9[%c0_23, %c0_24], %30 {strides = array<i32>} : memref<2x128xf32, #tpu.memory_space<vmem>>, vector<2x128xf32>,
    return
  }
}

</mosaic_0001>

<llo_original>
// kernel: tpu_custom_call.1
$region0: #{tpu_custom_call.1}
  #allocation0 [shape = 'u32[]', space=smem, size = 0x4, offset = 0x4, fixed_abs, tag = 'smem constant byte address 0x4 - core index']
  #allocation1 [shape = 'u32[144,128]{1,0:T(1,128)}', space=vmem, size = 0x12000, scoped, tag = 'internal scratch']
  %s0 = inlined_call_operand.vmem [shape: f32[2,64], index: 0, kind: input, shape index: {}]
  %s1 = inlined_call_operand.vmem [shape: bf16[64,1152], index: 1, kind: input, shape index: {}]
  %s2 = inlined_call_operand.vmem [shape: f32[1,1152], index: 2, kind: input, shape index: {}]
  %s3 = inlined_call_operand.vmem [shape: bf16[1152,1600], index: 3, kind: input, shape index: {}]
  %s4 = inlined_call_operand.vmem [shape: f32[1,1600], index: 4, kind: input, shape index: {}]
  %s5 = inlined_call_operand.vmem [shape: bf16[1600,512], index: 5, kind: input, shape index: {}]
  %s6 = inlined_call_operand.vmem [shape: f32[1,512], index: 6, kind: input, shape index: {}]
  %s7 = inlined_call_operand.vmem [shape: bf16[512,128], index: 7, kind: input, shape index: {}]
  %s8 = inlined_call_operand.vmem [shape: f32[1,128], index: 8, kind: input, shape index: {}]
  %s9 = inlined_call_operand.hbm [shape: f32[2,128], index: 9, kind: output, shape index: {}]
  %s10 = sld [smem:[#allocation0]]
  $region46: #{tpu_custom_call.1} parent=0
    _
  %s12 = ssub.s32 1, %s10
  %s13 = scalar_select 0, %s12, %s10
  $region1: #{tpu_custom_call.1} parent=0
    #allocation2 [shape = 'u8[1024]{0}', space=vmem, size = 0x400, scoped, tag = 'output window, operand 0, single buffered']
    #allocation3 [shape = 's32[1]{0}', space=sflag, size = 0x4, scoped, tag = 'scoped memory for tpu_custom_call.1']
    %14 = vsyncpa [#allocation3], 0
    // Predicated region
    $region2: #{tpu_custom_call.1} parent=1 // pred_check
      _
    $region3: #{tpu_custom_call.1} parent=1 // pred_check_branch
      %16 = sbr.rel (0) target = $region5
    $region4: #{tpu_custom_call.1} parent=1 // pred_region
      _
    $region5: #{tpu_custom_call.1} parent=1 // pred_fallthru
      _
    // Predicated region
    $region6: #{tpu_custom_call.1} parent=1 // pred_check
      _
    $region7: #{tpu_custom_call.1} parent=1 // pred_check_branch
      %18 = sbr.rel (0) target = $region9
    $region8: #{tpu_custom_call.1} parent=1 // pred_region
      _
    $region9: #{tpu_custom_call.1} parent=1 // pred_fallthru
      _
    // Predicated region
    $region10: #{tpu_custom_call.1} parent=1 // pred_check
      _
    $region11: #{tpu_custom_call.1} parent=1 // pred_check_branch
      %20 = sbr.rel (0) target = $region13
    $region12: #{tpu_custom_call.1} parent=1 // pred_region
      _
    $region13: #{tpu_custom_call.1} parent=1 // pred_fallthru
      _
    // Predicated region
    $region14: #{tpu_custom_call.1} parent=1 // pred_check
      _
    $region15: #{tpu_custom_call.1} parent=1 // pred_check_branch
      %22 = sbr.rel (0) target = $region17
    $region16: #{tpu_custom_call.1} parent=1 // pred_region
      _
    $region17: #{tpu_custom_call.1} parent=1 // pred_fallthru
      _
    // Predicated region
    $region18: #{tpu_custom_call.1} parent=1 // pred_check
      _
    $region19: #{tpu_custom_call.1} parent=1 // pred_check_branch
      %24 = sbr.rel (0) target = $region21
    $region20: #{tpu_custom_call.1} parent=1 // pred_region
      _
    $region21: #{tpu_custom_call.1} parent=1 // pred_fallthru
      _
    // Predicated region
    $region22: #{tpu_custom_call.1} parent=1 // pred_check
      _
    $region23: #{tpu_custom_call.1} parent=1 // pred_check_branch
      %26 = sbr.rel (0) target = $region25
    $region24: #{tpu_custom_call.1} parent=1 // pred_region
      _
    $region25: #{tpu_custom_call.1} parent=1 // pred_fallthru
      _
    // Predicated region
    $region26: #{tpu_custom_call.1} parent=1 // pred_check
      _
    $region27: #{tpu_custom_call.1} parent=1 // pred_check_branch
      %28 = sbr.rel (0) target = $region29
    $region28: #{tpu_custom_call.1} parent=1 // pred_region
      _
    $region29: #{tpu_custom_call.1} parent=1 // pred_fallthru
      _
    // Predicated region
    $region30: #{tpu_custom_call.1} parent=1 // pred_check
      _
    $region31: #{tpu_custom_call.1} parent=1 // pred_check_branch
      %30 = sbr.rel (0) target = $region33
    $region32: #{tpu_custom_call.1} parent=1 // pred_region
      _
    $region33: #{tpu_custom_call.1} parent=1 // pred_fallthru
      _
    // Predicated region
    $region34: #{tpu_custom_call.1} parent=1 // pred_check
      _
    $region35: #{tpu_custom_call.1} parent=1 // pred_check_branch
      %32 = sbr.rel (0) target = $region37
    $region36: #{tpu_custom_call.1} parent=1 // pred_region
      _
    $region37: #{tpu_custom_call.1} parent=1 // pred_fallthru
      _
    %v34 = vld [vmem:[%s0] sm:$0x3]
    %v35 = vpack.c.bf16 %v34, %v34
    %v36 = vld [vmem:[%s1] sm:$0xff]
    %v37 = vld [vmem:[%s1 + $0x8] sm:$0xff]
    %v38 = vld [vmem:[%s1 + $0x10] sm:$0xff]
    %v39 = vld [vmem:[%s1 + $0x18] sm:$0xff]
    %v40 = vld [vmem:[%s1 + $0x20] sm:$0xf]
    %v41 = vld [vmem:[%s1 + $0x24] sm:$0xff]
    %v42 = vld [vmem:[%s1 + $0x2c] sm:$0xff]
    %v43 = vld [vmem:[%s1 + $0x34] sm:$0xff]
    %v44 = vld [vmem:[%s1 + $0x3c] sm:$0xff]
    %v45 = vld [vmem:[%s1 + $0x44] sm:$0xf]
    %v46 = vld [vmem:[%s1 + $0x48] sm:$0xff]
    %v47 = vld [vmem:[%s1 + $0x50] sm:$0xff]
    %v48 = vld [vmem:[%s1 + $0x58] sm:$0xff]
    %v49 = vld [vmem:[%s1 + $0x60] sm:$0xff]
    %v50 = vld [vmem:[%s1 + $0x68] sm:$0xf]
    %v51 = vld [vmem:[%s1 + $0x6c] sm:$0xff]
    %v52 = vld [vmem:[%s1 + $0x74] sm:$0xff]
    %v53 = vld [vmem:[%s1 + $0x7c] sm:$0xff]
    %v54 = vld [vmem:[%s1 + $0x84] sm:$0xff]
    %v55 = vld [vmem:[%s1 + $0x8c] sm:$0xf]
    %v56 = vld [vmem:[%s1 + $0x90] sm:$0xff]
    %v57 = vld [vmem:[%s1 + $0x98] sm:$0xff]
    %v58 = vld [vmem:[%s1 + $0xa0] sm:$0xff]
    %v59 = vld [vmem:[%s1 + $0xa8] sm:$0xff]
    %v60 = vld [vmem:[%s1 + $0xb0] sm:$0xf]
    %v61 = vld [vmem:[%s1 + $0xb4] sm:$0xff]
    %v62 = vld [vmem:[%s1 + $0xbc] sm:$0xff]
    %v63 = vld [vmem:[%s1 + $0xc4] sm:$0xff]
    %v64 = vld [vmem:[%s1 + $0xcc] sm:$0xff]
    %v65 = vld [vmem:[%s1 + $0xd4] sm:$0xf]
    %v66 = vld [vmem:[%s1 + $0xd8] sm:$0xff]
    %v67 = vld [vmem:[%s1 + $0xe0] sm:$0xff]
    %v68 = vld [vmem:[%s1 + $0xe8] sm:$0xff]
    %v69 = vld [vmem:[%s1 + $0xf0] sm:$0xff]
    %v70 = vld [vmem:[%s1 + $0xf8] sm:$0xf]
    %v71 = vld [vmem:[%s1 + $0xfc] sm:$0xff]
    %v72 = vld [vmem:[%s1 + $0x104] sm:$0xff]
    %v73 = vld [vmem:[%s1 + $0x10c] sm:$0xff]
    %v74 = vld [vmem:[%s1 + $0x114] sm:$0xff]
    %v75 = vld [vmem:[%s1 + $0x11c] sm:$0xf]
    %v76 = vld [vmem:[%s2] sm:$0xff]
    %v77 = vld [vmem:[%s2 + $0x8] sm:$0x1]
    %v80 = vlaneseq
    %v81 = vshrl.u32 %v80, 7
    %v82 = vsub.s32 0, %v81
    %v83 = vrot.slane %v76, %v82
    %v84 = vlaneseq
    %v85 = vshrl.u32 %v84, 7
    %v86 = vsub.s32 1, %v85
    %v87 = vrot.slane %v76, %v86
    %v88 = vlaneseq
    %v89 = vshrl.u32 %v88, 7
    %v90 = vsub.s32 2, %v89
    %v91 = vrot.slane %v76, %v90
    %v92 = vlaneseq
    %v93 = vshrl.u32 %v92, 7
    %v94 = vsub.s32 3, %v93
    %v95 = vrot.slane %v76, %v94
    %v96 = vlaneseq
    %v97 = vshrl.u32 %v96, 7
    %v98 = vsub.s32 4, %v97
    %v99 = vrot.slane %v76, %v98
    %v100 = vlaneseq
    %v101 = vshrl.u32 %v100, 7
    %v102 = vsub.s32 5, %v101
    %v103 = vrot.slane %v76, %v102
    %v104 = vlaneseq
    %v105 = vshrl.u32 %v104, 7
    %v106 = vsub.s32 6, %v105
    %v107 = vrot.slane %v76, %v106
    %v108 = vlaneseq
    %v109 = vshrl.u32 %v108, 7
    %v110 = vsub.s32 7, %v109
    %v111 = vrot.slane %v76, %v110
    %v112 = vlaneseq
    %v113 = vshrl.u32 %v112, 7
    %v114 = vsub.s32 0, %v113
    %v115 = vrot.slane %v77, %v114
    %v165 = vunpack.c.l.b16 %v36
    %v166 = vunpack.c.h.b16 %v36
    %v167 = vunpack.c.l.b16 %v37
    %v168 = vunpack.c.h.b16 %v37
    %v169 = vunpack.c.l.b16 %v38
    %v170 = vunpack.c.h.b16 %v38
    %v171 = vunpack.c.l.b16 %v39
    %v172 = vunpack.c.h.b16 %v39
    %v173 = vunpack.c.l.b16 %v40
    %v174 = vunpack.c.l.b16 %v41
    %v175 = vunpack.c.h.b16 %v41
    %v176 = vunpack.c.l.b16 %v42
    %v177 = vunpack.c.h.b16 %v42
    %v178 = vunpack.c.l.b16 %v43
    %v179 = vunpack.c.h.b16 %v43
    %v180 = vunpack.c.l.b16 %v44
    %v181 = vunpack.c.h.b16 %v44
    %v182 = vunpack.c.l.b16 %v45
    %v183 = vunpack.c.l.b16 %v46
    %v184 = vunpack.c.h.b16 %v46
    %v185 = vunpack.c.l.b16 %v47
    %v186 = vunpack.c.h.b16 %v47
    %v187 = vunpack.c.l.b16 %v48
    %v188 = vunpack.c.h.b16 %v48
    %v189 = vunpack.c.l.b16 %v49
    %v190 = vunpack.c.h.b16 %v49
    %v191 = vunpack.c.l.b16 %v50
    %v192 = vunpack.c.l.b16 %v51
    %v193 = vunpack.c.h.b16 %v51
    %v194 = vunpack.c.l.b16 %v52
    %v195 = vunpack.c.h.b16 %v52
    %v196 = vunpack.c.l.b16 %v53
    %v197 = vunpack.c.h.b16 %v53
    %v198 = vunpack.c.l.b16 %v54
    %v199 = vunpack.c.h.b16 %v54
    %v200 = vunpack.c.l.b16 %v55
    %v201 = vunpack.c.l.b16 %v56
    %v202 = vunpack.c.h.b16 %v56
    %v203 = vunpack.c.l.b16 %v57
    %v204 = vunpack.c.h.b16 %v57
    %v205 = vunpack.c.l.b16 %v58
    %v206 = vunpack.c.h.b16 %v58
    %v207 = vunpack.c.l.b16 %v59
    %v208 = vunpack.c.h.b16 %v59
    %v209 = vunpack.c.l.b16 %v60
    %v210 = vunpack.c.l.b16 %v61
    %v211 = vunpack.c.h.b16 %v61
    %v212 = vunpack.c.l.b16 %v62
    %v213 = vunpack.c.h.b16 %v62
    %v214 = vunpack.c.l.b16 %v63
    %v215 = vunpack.c.h.b16 %v63
    %v216 = vunpack.c.l.b16 %v64
    %v217 = vunpack.c.h.b16 %v64
    %v218 = vunpack.c.l.b16 %v65
    %v219 = vunpack.c.l.b16 %v66
    %v220 = vunpack.c.h.b16 %v66
    %v221 = vunpack.c.l.b16 %v67
    %v222 = vunpack.c.h.b16 %v67
    %v223 = vunpack.c.l.b16 %v68
    %v224 = vunpack.c.h.b16 %v68
    %v225 = vunpack.c.l.b16 %v69
    %v226 = vunpack.c.h.b16 %v69
    %v227 = vunpack.c.l.b16 %v70
    %v228 = vunpack.c.l.b16 %v71
    %v229 = vunpack.c.h.b16 %v71
    %v230 = vunpack.c.l.b16 %v72
    %v231 = vunpack.c.h.b16 %v72
    %v232 = vunpack.c.l.b16 %v73
    %v233 = vunpack.c.h.b16 %v73
    %v234 = vunpack.c.l.b16 %v74
    %v235 = vunpack.c.h.b16 %v74
    %v236 = vunpack.c.l.b16 %v75
    %v237 = vpack.c.b16 %v174, %v165
    %v238 = vpack.c.b16 %v175, %v166
    %v239 = vpack.c.b16 %v176, %v167
    %v240 = vpack.c.b16 %v177, %v168
    %v241 = vpack.c.b16 %v178, %v169
    %v242 = vpack.c.b16 %v179, %v170
    %v243 = vpack.c.b16 %v180, %v171
    %v244 = vpack.c.b16 %v181, %v172
    %v245 = vpack.c.b16 %v182, %v173
    %v246 = vpack.c.b16 %v192, %v183
    %v247 = vpack.c.b16 %v193, %v184
    %v248 = vpack.c.b16 %v194, %v185
    %v249 = vpack.c.b16 %v195, %v186
    %v250 = vpack.c.b16 %v196, %v187
    %v251 = vpack.c.b16 %v197, %v188
    %v252 = vpack.c.b16 %v198, %v189
    %v253 = vpack.c.b16 %v199, %v190
    %v254 = vpack.c.b16 %v200, %v191
    %v255 = vpack.c.b16 %v210, %v201
    %v256 = vpack.c.b16 %v211, %v202
    %v257 = vpack.c.b16 %v212, %v203
    %v258 = vpack.c.b16 %v213, %v204
    %v259 = vpack.c.b16 %v214, %v205
    %v260 = vpack.c.b16 %v215, %v206
    %v261 = vpack.c.b16 %v216, %v207
    %v262 = vpack.c.b16 %v217, %v208
    %v263 = vpack.c.b16 %v218, %v209
    %v264 = vpack.c.b16 %v228, %v219
    %v265 = vpack.c.b16 %v229, %v220
    %v266 = vpack.c.b16 %v230, %v221
    %v267 = vpack.c.b16 %v231, %v222
    %v268 = vpack.c.b16 %v232, %v223
    %v269 = vpack.c.b16 %v233, %v224
    %v270 = vpack.c.b16 %v234, %v225
    %v271 = vpack.c.b16 %v235, %v226
    %v272 = vpack.c.b16 %v236, %v227
    %vm309 = vcmask 523264
    %v311 = vsel %vm309, %v35, 0
    %313 = vmatprep.subr.bf16.mxu0 0
    %314 = vmatpush1.bf16.msra.mxu0 0
    %315 = vmatprep.subr.bf16.mxu0 0
    %316 = vmatpush1.bf16.msra.mxu0 0
    %317 = vmatprep.subr.bf16.mxu0 0
    %318 = vmatpush1.bf16.msra.mxu0 0
    %319 = vmatprep.subr.bf16.mxu0 0
    %320 = vmatpush1.bf16.msra.mxu0 0
    %321 = vmatprep.subr.bf16.mxu0 %v265
    %322 = vmatpush1.bf16.msra.mxu0 %v264
    %323 = vmatprep.subr.bf16.mxu0 %v256
    %324 = vmatpush1.bf16.msra.mxu0 %v255
    %325 = vmatprep.subr.bf16.mxu0 %v247
    %326 = vmatpush1.bf16.msra.mxu0 %v246
    %327 = vmatprep.subr.bf16.mxu0 %v238
    %328 = vmatpush1.bf16.msra.mxu0 %v237
    %329 = vmatprep.subr.bf16.mxu0 0
    %330 = vmatpush2.bf16.msra.mxu0 0
    %331 = vmatprep.subr.bf16.mxu0 0
    %332 = vmatpush2.bf16.msra.mxu0 0
    %333 = vmatprep.subr.bf16.mxu0 0
    %334 = vmatpush2.bf16.msra.mxu0 0
    %335 = vmatprep.subr.bf16.mxu0 0
    %336 = vmatpush2.bf16.msra.mxu0 0
    %337 = vmatprep.subr.bf16.mxu0 0
    %338 = vmatpush2.bf16.msra.mxu0 0
    %339 = vmatprep.subr.bf16.mxu0 0
    %340 = vmatpush2.bf16.msra.mxu0 0
    %341 = vmatprep.subr.bf16.mxu0 0
    %342 = vmatpush2.bf16.msra.mxu0 0
    %343 = vmatprep.subr.bf16.mxu0 0
    %344 = vmatpush2.bf16.msra.mxu0 0
    %345 = vmatprep.mubr.bf16.mxu0 0
    %346 = vmatmul.mubr.bf16.gmra.mxu0 %v311
    %v347 = vpop.f32.mrf.mxu0
    %v348 = vadd.f32 %v83, %v347
    %v349 = vpop.f32.mrf.mxu0
    %v350 = vadd.f32 %v87, %v349
    %v351 = vpop.f32.mrf.mxu0
    %v352 = vpop.f32.mrf.mxu0
    %353 = vdwg.mxu0
    %354 = vmatprep.subr.bf16.mxu0 0
    %355 = vmatpush1.bf16.msra.mxu0 0
    %356 = vmatprep.subr.bf16.mxu0 0
    %357 = vmatpush1.bf16.msra.mxu0 0
    %358 = vmatprep.subr.bf16.mxu0 0
    %359 = vmatpush1.bf16.msra.mxu0 0
    %360 = vmatprep.subr.bf16.mxu0 0
    %361 = vmatpush1.bf16.msra.mxu0 0
    %362 = vmatprep.subr.bf16.mxu0 %v267
    %363 = vmatpush1.bf16.msra.mxu0 %v266
    %364 = vmatprep.subr.bf16.mxu0 %v258
    %365 = vmatpush1.bf16.msra.mxu0 %v257
    %366 = vmatprep.subr.bf16.mxu0 %v249
    %367 = vmatpush1.bf16.msra.mxu0 %v248
    %368 = vmatprep.subr.bf16.mxu0 %v240
    %369 = vmatpush1.bf16.msra.mxu0 %v239
    %370 = vmatprep.subr.bf16.mxu0 0
    %371 = vmatpush2.bf16.msra.mxu0 0
    %372 = vmatprep.subr.bf16.mxu0 0
    %373 = vmatpush2.bf16.msra.mxu0 0
    %374 = vmatprep.subr.bf16.mxu0 0
    %375 = vmatpush2.bf16.msra.mxu0 0
    %376 = vmatprep.subr.bf16.mxu0 0
    %377 = vmatpush2.bf16.msra.mxu0 0
    %378 = vmatprep.subr.bf16.mxu0 0
    %379 = vmatpush2.bf16.msra.mxu0 0
    %380 = vmatprep.subr.bf16.mxu0 0
    %381 = vmatpush2.bf16.msra.mxu0 0
    %382 = vmatprep.subr.bf16.mxu0 0
    %383 = vmatpush2.bf16.msra.mxu0 0
    %384 = vmatprep.subr.bf16.mxu0 0
    %385 = vmatpush2.bf16.msra.mxu0 0
    %386 = vmatprep.mubr.bf16.mxu0 0
    %387 = vmatmul.mubr.bf16.gmra.mxu0 %v311
    %v388 = vpop.f32.mrf.mxu0
    %v389 = vadd.f32 %v91, %v388
    %v390 = vpop.f32.mrf.mxu0
    %v391 = vadd.f32 %v95, %v390
    %v392 = vpop.f32.mrf.mxu0
    %v393 = vpop.f32.mrf.mxu0
    %394 = vdwg.mxu0
    %395 = vmatprep.subr.bf16.mxu0 0
    %396 = vmatpush1.bf16.msra.mxu0 0
    %397 = vmatprep.subr.bf16.mxu0 0
    %398 = vmatpush1.bf16.msra.mxu0 0
    %399 = vmatprep.subr.bf16.mxu0 0
    %400 = vmatpush1.bf16.msra.mxu0 0
    %401 = vmatprep.subr.bf16.mxu0 0
    %402 = vmatpush1.bf16.msra.mxu0 0
    %403 = vmatprep.subr.bf16.mxu0 %v269
    %404 = vmatpush1.bf16.msra.mxu0 %v268
    %405 = vmatprep.subr.bf16.mxu0 %v260
    %406 = vmatpush1.bf16.msra.mxu0 %v259
    %407 = vmatprep.subr.bf16.mxu0 %v251
    %408 = vmatpush1.bf16.msra.mxu0 %v250
    %409 = vmatprep.subr.bf16.mxu0 %v242
    %410 = vmatpush1.bf16.msra.mxu0 %v241
    %411 = vmatprep.subr.bf16.mxu0 0
    %412 = vmatpush2.bf16.msra.mxu0 0
    %413 = vmatprep.subr.bf16.mxu0 0
    %414 = vmatpush2.bf16.msra.mxu0 0
    %415 = vmatprep.subr.bf16.mxu0 0
    %416 = vmatpush2.bf16.msra.mxu0 0
    %417 = vmatprep.subr.bf16.mxu0 0
    %418 = vmatpush2.bf16.msra.mxu0 0
    %419 = vmatprep.subr.bf16.mxu0 0
    %420 = vmatpush2.bf16.msra.mxu0 0
    %421 = vmatprep.subr.bf16.mxu0 0
    %422 = vmatpush2.bf16.msra.mxu0 0
    %423 = vmatprep.subr.bf16.mxu0 0
    %424 = vmatpush2.bf16.msra.mxu0 0
    %425 = vmatprep.subr.bf16.mxu0 0
    %426 = vmatpush2.bf16.msra.mxu0 0
    %427 = vmatprep.mubr.bf16.mxu0 0
    %428 = vmatmul.mubr.bf16.gmra.mxu0 %v311
    %v429 = vpop.f32.mrf.mxu0
    %v430 = vadd.f32 %v99, %v429
    %v431 = vpop.f32.mrf.mxu0
    %v432 = vadd.f32 %v103, %v431
    %v433 = vpop.f32.mrf.mxu0
    %v434 = vpop.f32.mrf.mxu0
    %435 = vdwg.mxu0
    %436 = vmatprep.subr.bf16.mxu0 0
    %437 = vmatpush1.bf16.msra.mxu0 0
    %438 = vmatprep.subr.bf16.mxu0 0
    %439 = vmatpush1.bf16.msra.mxu0 0
    %440 = vmatprep.subr.bf16.mxu0 0
    %441 = vmatpush1.bf16.msra.mxu0 0
    %442 = vmatprep.subr.bf16.mxu0 0
    %443 = vmatpush1.bf16.msra.mxu0 0
    %444 = vmatprep.subr.bf16.mxu0 %v271
    %445 = vmatpush1.bf16.msra.mxu0 %v270
    %446 = vmatprep.subr.bf16.mxu0 %v262
    %447 = vmatpush1.bf16.msra.mxu0 %v261
    %448 = vmatprep.subr.bf16.mxu0 %v253
    %449 = vmatpush1.bf16.msra.mxu0 %v252
    %450 = vmatprep.subr.bf16.mxu0 %v244
    %451 = vmatpush1.bf16.msra.mxu0 %v243
    %452 = vmatprep.subr.bf16.mxu0 0
    %453 = vmatpush2.bf16.msra.mxu0 0
    %454 = vmatprep.subr.bf16.mxu0 0
    %455 = vmatpush2.bf16.msra.mxu0 0
    %456 = vmatprep.subr.bf16.mxu0 0
    %457 = vmatpush2.bf16.msra.mxu0 0
    %458 = vmatprep.subr.bf16.mxu0 0
    %459 = vmatpush2.bf16.msra.mxu0 0
    %460 = vmatprep.subr.bf16.mxu0 0
    %461 = vmatpush2.bf16.msra.mxu0 0
    %462 = vmatprep.subr.bf16.mxu0 0
    %463 = vmatpush2.bf16.msra.mxu0 0
    %464 = vmatprep.subr.bf16.mxu0 0
    %465 = vmatpush2.bf16.msra.mxu0 0
    %466 = vmatprep.subr.bf16.mxu0 0
    %467 = vmatpush2.bf16.msra.mxu0 0
    %468 = vmatprep.mubr.bf16.mxu0 0
    %469 = vmatmul.mubr.bf16.gmra.mxu0 %v311
    %v470 = vpop.f32.mrf.mxu0
    %v471 = vadd.f32 %v107, %v470
    %v472 = vpop.f32.mrf.mxu0
    %v473 = vadd.f32 %v111, %v472
    %v474 = vpop.f32.mrf.mxu0
    %v475 = vpop.f32.mrf.mxu0
    %476 = vdwg.mxu0
    %477 = vmatprep.subr.bf16.mxu0 0
    %478 = vmatpush1.bf16.msra.mxu0 0
    %479 = vmatprep.subr.bf16.mxu0 0
    %480 = vmatpush1.bf16.msra.mxu0 0
    %481 = vmatprep.subr.bf16.mxu0 0
    %482 = vmatpush1.bf16.msra.mxu0 0
    %483 = vmatprep.subr.bf16.mxu0 0
    %484 = vmatpush1.bf16.msra.mxu0 0
    %485 = vmatprep.subr.bf16.mxu0 0
    %486 = vmatpush1.bf16.msra.mxu0 %v272
    %487 = vmatprep.subr.bf16.mxu0 0
    %488 = vmatpush1.bf16.msra.mxu0 %v263
    %489 = vmatprep.subr.bf16.mxu0 0
    %490 = vmatpush1.bf16.msra.mxu0 %v254
    %491 = vmatprep.subr.bf16.mxu0 0
    %492 = vmatpush1.bf16.msra.mxu0 %v245
    %493 = vmatprep.subr.bf16.mxu0 0
    %494 = vmatpush2.bf16.msra.mxu0 0
    %495 = vmatprep.subr.bf16.mxu0 0
    %496 = vmatpush2.bf16.msra.mxu0 0
    %497 = vmatprep.subr.bf16.mxu0 0
    %498 = vmatpush2.bf16.msra.mxu0 0
    %499 = vmatprep.subr.bf16.mxu0 0
    %500 = vmatpush2.bf16.msra.mxu0 0
    %501 = vmatprep.subr.bf16.mxu0 0
    %502 = vmatpush2.bf16.msra.mxu0 0
    %503 = vmatprep.subr.bf16.mxu0 0
    %504 = vmatpush2.bf16.msra.mxu0 0
    %505 = vmatprep.subr.bf16.mxu0 0
    %506 = vmatpush2.bf16.msra.mxu0 0
    %507 = vmatprep.subr.bf16.mxu0 0
    %508 = vmatpush2.bf16.msra.mxu0 0
    %509 = vmatprep.mubr.bf16.mxu0 0
    %510 = vmatmul.mubr.bf16.gmra.mxu0 %v311
    %v511 = vpop.f32.mrf.mxu0
    %v512 = vadd.f32 %v115, %v511
    %v513 = vpop.f32.mrf.mxu0
    %v514 = vpop.f32.mrf.mxu0
    %v515 = vpop.f32.mrf.mxu0
    %516 = vdwg.mxu0
    %v517 = vmax.f32 %v348, 0.0
    %v518 = vmax.f32 %v350, 0.0
    %v519 = vmax.f32 %v389, 0.0
    %v520 = vmax.f32 %v391, 0.0
    %v521 = vmax.f32 %v430, 0.0
    %v522 = vmax.f32 %v432, 0.0
    %v523 = vmax.f32 %v471, 0.0
    %v524 = vmax.f32 %v473, 0.0
    %v525 = vmax.f32 %v512, 0.0
    %v526 = vpack.c.bf16 %v517, %v517
    %v527 = vpack.c.bf16 %v518, %v518
    %v528 = vpack.c.bf16 %v519, %v519
    %v529 = vpack.c.bf16 %v520, %v520
    %v530 = vpack.c.bf16 %v521, %v521
    %v531 = vpack.c.bf16 %v522, %v522
    %v532 = vpack.c.bf16 %v523, %v523
    %v533 = vpack.c.bf16 %v524, %v524
    %v534 = vpack.c.bf16 %v525, %v525
    %v535 = vld [vmem:[%s3] sm:$0xff]
    %v536 = vld [vmem:[%s3 + $0x8] sm:$0xff]
    %v537 = vld [vmem:[%s3 + $0x10] sm:$0xff]
    %v538 = vld [vmem:[%s3 + $0x18] sm:$0xff]
    %v539 = vld [vmem:[%s3 + $0x20] sm:$0xff]
    %v540 = vld [vmem:[%s3 + $0x28] sm:$0xff]
    %v541 = vld [vmem:[%s3 + $0x30] sm:$0xf]
    %v542 = vld [vmem:[%s3 + $0x34] sm:$0xff]
    %v543 = vld [vmem:[%s3 + $0x3c] sm:$0xff]
    %v544 = vld [vmem:[%s3 + $0x44] sm:$0xff]
    %v545 = vld [vmem:[%s3 + $0x4c] sm:$0xff]
    %v546 = vld [vmem:[%s3 + $0x54] sm:$0xff]
    %v547 = vld [vmem:[%s3 + $0x5c] sm:$0xff]
    %v548 = vld [vmem:[%s3 + $0x64] sm:$0xf]
    %v549 = vld [vmem:[%s3 + $0x68] sm:$0xff]
    %v550 = vld [vmem:[%s3 + $0x70] sm:$0xff]
    %v551 = vld [vmem:[%s3 + $0x78] sm:$0xff]
    %v552 = vld [vmem:[%s3 + $0x80] sm:$0xff]
    %v553 = vld [vmem:[%s3 + $0x88] sm:$0xff]
    %v554 = vld [vmem:[%s3 + $0x90] sm:$0xff]
    %v555 = vld [vmem:[%s3 + $0x98] sm:$0xf]
    %v556 = vld [vmem:[%s3 + $0x9c] sm:$0xff]
    %v557 = vld [vmem:[%s3 + $0xa4] sm:$0xff]
    %v558 = vld [vmem:[%s3 + $0xac] sm:$0xff]
    %v559 = vld [vmem:[%s3 + $0xb4] sm:$0xff]
    %v560 = vld [vmem:[%s3 + $0xbc] sm:$0xff]
    %v561 = vld [vmem:[%s3 + $0xc4] sm:$0xff]
    %v562 = vld [vmem:[%s3 + $0xcc] sm:$0xf]
    %v563 = vld [vmem:[%s3 + $0xd0] sm:$0xff]
    %v564 = vld [vmem:[%s3 + $0xd8] sm:$0xff]
    %v565 = vld [vmem:[%s3 + $0xe0] sm:$0xff]
    %v566 = vld [vmem:[%s3 + $0xe8] sm:$0xff]
    %v567 = vld [vmem:[%s3 + $0xf0] sm:$0xff]
    %v568 = vld [vmem:[%s3 + $0xf8] sm:$0xff]
    %v569 = vld [vmem:[%s3 + $0x100] sm:$0xf]
    %v570 = vld [vmem:[%s3 + $0x104] sm:$0xff]
    %v571 = vld [vmem:[%s3 + $0x10c] sm:$0xff]
    %v572 = vld [vmem:[%s3 + $0x114] sm:$0xff]
    %v573 = vld [vmem:[%s3 + $0x11c] sm:$0xff]
    %v574 = vld [vmem:[%s3 + $0x124] sm:$0xff]
    %v575 = vld [vmem:[%s3 + $0x12c] sm:$0xff]
    %v576 = vld [vmem:[%s3 + $0x134] sm:$0xf]
    %v577 = vld [vmem:[%s3 + $0x138] sm:$0xff]
    %v578 = vld [vmem:[%s3 + $0x140] sm:$0xff]
    %v579 = vld [vmem:[%s3 + $0x148] sm:$0xff]
    %v580 = vld [vmem:[%s3 + $0x150] sm:$0xff]
    %v581 = vld [vmem:[%s3 + $0x158] sm:$0xff]
    %v582 = vld [vmem:[%s3 + $0x160] sm:$0xff]
    %v583 = vld [vmem:[%s3 + $0x168] sm:$0xf]
    %v584 = vld [vmem:[%s3 + $0x16c] sm:$0xff]
    %v585 = vld [vmem:[%s3 + $0x174] sm:$0xff]
    %v586 = vld [vmem:[%s3 + $0x17c] sm:$0xff]
    %v587 = vld [vmem:[%s3 + $0x184] sm:$0xff]
    %v588 = vld [vmem:[%s3 + $0x18c] sm:$0xff]
    %v589 = vld [vmem:[%s3 + $0x194] sm:$0xff]
    %v590 = vld [vmem:[%s3 + $0x19c] sm:$0xf]
    %v591 = vld [vmem:[%s3 + $0x1a0] sm:$0xff]
    %v592 = vld [vmem:[%s3 + $0x1a8] sm:$0xff]
    %v593 = vld [vmem:[%s3 + $0x1b0] sm:$0xff]
    %v594 = vld [vmem:[%s3 + $0x1b8] sm:$0xff]
    %v595 = vld [vmem:[%s3 + $0x1c0] sm:$0xff]
    %v596 = vld [vmem:[%s3 + $0x1c8] sm:$0xff]
    %v597 = vld [vmem:[%s3 + $0x1d0] sm:$0xf]
    %v598 = vld [vmem:[%s3 + $0x1d4] sm:$0xff]
    %v599 = vld [vmem:[%s3 + $0x1dc] sm:$0xff]
    %v600 = vld [vmem:[%s3 + $0x1e4] sm:$0xff]
    %v601 = vld [vmem:[%s3 + $0x1ec] sm:$0xff]
    %v602 = vld [vmem:[%s3 + $0x1f4] sm:$0xff]
    %v603 = vld [vmem:[%s3 + $0x1fc] sm:$0xff]
    %v604 = vld [vmem:[%s3 + $0x204] sm:$0xf]
    %v605 = vld [vmem:[%s3 + $0x208] sm:$0xff]
    %v606 = vld [vmem:[%s3 + $0x210] sm:$0xff]
    %v607 = vld [vmem:[%s3 + $0x218] sm:$0xff]
    %v608 = vld [vmem:[%s3 + $0x220] sm:$0xff]
    %v609 = vld [vmem:[%s3 + $0x228] sm:$0xff]
    %v610 = vld [vmem:[%s3 + $0x230] sm:$0xff]
    %v611 = vld [vmem:[%s3 + $0x238] sm:$0xf]
    %v612 = vld [vmem:[%s3 + $0x23c] sm:$0xff]
    %v613 = vld [vmem:[%s3 + $0x244] sm:$0xff]
    %v614 = vld [vmem:[%s3 + $0x24c] sm:$0xff]
    %v615 = vld [vmem:[%s3 + $0x254] sm:$0xff]
    %v616 = vld [vmem:[%s3 + $0x25c] sm:$0xff]
    %v617 = vld [vmem:[%s3 + $0x264] sm:$0xff]
    %v618 = vld [vmem:[%s3 + $0x26c] sm:$0xf]
    %v619 = vld [vmem:[%s3 + $0x270] sm:$0xff]
    %v620 = vld [vmem:[%s3 + $0x278] sm:$0xff]
    %v621 = vld [vmem:[%s3 + $0x280] sm:$0xff]
    %v622 = vld [vmem:[%s3 + $0x288] sm:$0xff]
    %v623 = vld [vmem:[%s3 + $0x290] sm:$0xff]
    %v624 = vld [vmem:[%s3 + $0x298] sm:$0xff]
    %v625 = vld [vmem:[%s3 + $0x2a0] sm:$0xf]
    %v626 = vld [vmem:[%s3 + $0x2a4] sm:$0xff]
    %v627 = vld [vmem:[%s3 + $0x2ac] sm:$0xff]
    %v628 = vld [vmem:[%s3 + $0x2b4] sm:$0xff]
    %v629 = vld [vmem:[%s3 + $0x2bc] sm:$0xff]
    %v630 = vld [vmem:[%s3 + $0x2c4] sm:$0xff]
    %v631 = vld [vmem:[%s3 + $0x2cc] sm:$0xff]
    %v632 = vld [vmem:[%s3 + $0x2d4] sm:$0xf]
    %v633 = vld [vmem:[%s3 + $0x2d8] sm:$0xff]
    %v634 = vld [vmem:[%s3 + $0x2e0] sm:$0xff]
    %v635 = vld [vmem:[%s3 + $0x2e8] sm:$0xff]
    %v636 = vld [vmem:[%s3 + $0x2f0] sm:$0xff]
    %v637 = vld [vmem:[%s3 + $0x2f8] sm:$0xff]
    %v638 = vld [vmem:[%s3 + $0x300] sm:$0xff]
    %v639 = vld [vmem:[%s3 + $0x308] sm:$0xf]
    %v640 = vld [vmem:[%s3 + $0x30c] sm:$0xff]
    %v641 = vld [vmem:[%s3 + $0x314] sm:$0xff]
    %v642 = vld [vmem:[%s3 + $0x31c] sm:$0xff]
    %v643 = vld [vmem:[%s3 + $0x324] sm:$0xff]
    %v644 = vld [vmem:[%s3 + $0x32c] sm:$0xff]
    %v645 = vld [vmem:[%s3 + $0x334] sm:$0xff]
    %v646 = vld [vmem:[%s3 + $0x33c] sm:$0xf]
    %v647 = vld [vmem:[%s3 + $0x340] sm:$0xff]
    %v648 = vld [vmem:[%s3 + $0x348] sm:$0xff]
    %v649 = vld [vmem:[%s3 + $0x350] sm:$0xff]
    %v650 = vld [vmem:[%s3 + $0x358] sm:$0xff]
    %v651 = vld [vmem:[%s3 + $0x360] sm:$0xff]
    %v652 = vld [vmem:[%s3 + $0x368] sm:$0xff]
    %v653 = vld [vmem:[%s3 + $0x370] sm:$0xf]
    %v654 = vld [vmem:[%s3 + $0x374] sm:$0xff]
    %v655 = vld [vmem:[%s3 + $0x37c] sm:$0xff]
    %v656 = vld [vmem:[%s3 + $0x384] sm:$0xff]
    %v657 = vld [vmem:[%s3 + $0x38c] sm:$0xff]
    %v658 = vld [vmem:[%s3 + $0x394] sm:$0xff]
    %v659 = vld [vmem:[%s3 + $0x39c] sm:$0xff]
    %v660 = vld [vmem:[%s3 + $0x3a4] sm:$0xf]
    %v661 = vld [vmem:[%s3 + $0x3a8] sm:$0xff]
    %v662 = vld [vmem:[%s3 + $0x3b0] sm:$0xff]
    %v663 = vld [vmem:[%s3 + $0x3b8] sm:$0xff]
    %v664 = vld [vmem:[%s3 + $0x3c0] sm:$0xff]
    %v665 = vld [vmem:[%s3 + $0x3c8] sm:$0xff]
    %v666 = vld [vmem:[%s3 + $0x3d0] sm:$0xff]
    %v667 = vld [vmem:[%s3 + $0x3d8] sm:$0xf]
    %v668 = vld [vmem:[%s3 + $0x3dc] sm:$0xff]
    %v669 = vld [vmem:[%s3 + $0x3e4] sm:$0xff]
    %v670 = vld [vmem:[%s3 + $0x3ec] sm:$0xff]
    %v671 = vld [vmem:[%s3 + $0x3f4] sm:$0xff]
    %v672 = vld [vmem:[%s3 + $0x3fc] sm:$0xff]
    %v673 = vld [vmem:[%s3 + $0x404] sm:$0xff]
    %v674 = vld [vmem:[%s3 + $0x40c] sm:$0xf]
    %v675 = vld [vmem:[%s3 + $0x410] sm:$0xff]
    %v676 = vld [vmem:[%s3 + $0x418] sm:$0xff]
    %v677 = vld [vmem:[%s3 + $0x420] sm:$0xff]
    %v678 = vld [vmem:[%s3 + $0x428] sm:$0xff]
    %v679 = vld [vmem:[%s3 + $0x430] sm:$0xff]
    %v680 = vld [vmem:[%s3 + $0x438] sm:$0xff]
    %v681 = vld [vmem:[%s3 + $0x440] sm:$0xf]
    %v682 = vld [vmem:[%s3 + $0x444] sm:$0xff]
    %v683 = vld [vmem:[%s3 + $0x44c] sm:$0xff]
    %v684 = vld [vmem:[%s3 + $0x454] sm:$0xff]
    %v685 = vld [vmem:[%s3 + $0x45c] sm:$0xff]
    %v686 = vld [vmem:[%s3 + $0x464] sm:$0xff]
    %v687 = vld [vmem:[%s3 + $0x46c] sm:$0xff]
    %v688 = vld [vmem:[%s3 + $0x474] sm:$0xf]
    %v689 = vld [vmem:[%s3 + $0x478] sm:$0xff]
    %v690 = vld [vmem:[%s3 + $0x480] sm:$0xff]
    %v691 = vld [vmem:[%s3 + $0x488] sm:$0xff]
    %v692 = vld [vmem:[%s3 + $0x490] sm:$0xff]
    %v693 = vld [vmem:[%s3 + $0x498] sm:$0xff]
    %v694 = vld [vmem:[%s3 + $0x4a0] sm:$0xff]
    %v695 = vld [vmem:[%s3 + $0x4a8] sm:$0xf]
    %v696 = vld [vmem:[%s3 + $0x4ac] sm:$0xff]
    %v697 = vld [vmem:[%s3 + $0x4b4] sm:$0xff]
    %v698 = vld [vmem:[%s3 + $0x4bc] sm:$0xff]
    %v699 = vld [vmem:[%s3 + $0x4c4] sm:$0xff]
    %v700 = vld [vmem:[%s3 + $0x4cc] sm:$0xff]
    %v701 = vld [vmem:[%s3 + $0x4d4] sm:$0xff]
    %v702 = vld [vmem:[%s3 + $0x4dc] sm:$0xf]
    %v703 = vld [vmem:[%s3 + $0x4e0] sm:$0xff]
    %v704 = vld [vmem:[%s3 + $0x4e8] sm:$0xff]
    %v705 = vld [vmem:[%s3 + $0x4f0] sm:$0xff]
    %v706 = vld [vmem:[%s3 + $0x4f8] sm:$0xff]
    %v707 = vld [vmem:[%s3 + $0x500] sm:$0xff]
    %v708 = vld [vmem:[%s3 + $0x508] sm:$0xff]
    %v709 = vld [vmem:[%s3 + $0x510] sm:$0xf]
    %v710 = vld [vmem:[%s3 + $0x514] sm:$0xff]
    %v711 = vld [vmem:[%s3 + $0x51c] sm:$0xff]
    %v712 = vld [vmem:[%s3 + $0x524] sm:$0xff]
    %v713 = vld [vmem:[%s3 + $0x52c] sm:$0xff]
    %v714 = vld [vmem:[%s3 + $0x534] sm:$0xff]
    %v715 = vld [vmem:[%s3 + $0x53c] sm:$0xff]
    %v716 = vld [vmem:[%s3 + $0x544] sm:$0xf]
    %v717 = vld [vmem:[%s3 + $0x548] sm:$0xff]
    %v718 = vld [vmem:[%s3 + $0x550] sm:$0xff]
    %v719 = vld [vmem:[%s3 + $0x558] sm:$0xff]
    %v720 = vld [vmem:[%s3 + $0x560] sm:$0xff]
    %v721 = vld [vmem:[%s3 + $0x568] sm:$0xff]
    %v722 = vld [vmem:[%s3 + $0x570] sm:$0xff]
    %v723 = vld [vmem:[%s3 + $0x578] sm:$0xf]
    %v724 = vld [vmem:[%s3 + $0x57c] sm:$0xff]
    %v725 = vld [vmem:[%s3 + $0x584] sm:$0xff]
    %v726 = vld [vmem:[%s3 + $0x58c] sm:$0xff]
    %v727 = vld [vmem:[%s3 + $0x594] sm:$0xff]
    %v728 = vld [vmem:[%s3 + $0x59c] sm:$0xff]
    %v729 = vld [vmem:[%s3 + $0x5a4] sm:$0xff]
    %v730 = vld [vmem:[%s3 + $0x5ac] sm:$0xf]
    %v731 = vld [vmem:[%s3 + $0x5b0] sm:$0xff]
    %v732 = vld [vmem:[%s3 + $0x5b8] sm:$0xff]
    %v733 = vld [vmem:[%s3 + $0x5c0] sm:$0xff]
    %v734 = vld [vmem:[%s3 + $0x5c8] sm:$0xff]
    %v735 = vld [vmem:[%s3 + $0x5d0] sm:$0xff]
    %v736 = vld [vmem:[%s3 + $0x5d8] sm:$0xff]
    %v737 = vld [vmem:[%s3 + $0x5e0] sm:$0xf]
    %v738 = vld [vmem:[%s3 + $0x5e4] sm:$0xff]
    %v739 = vld [vmem:[%s3 + $0x5ec] sm:$0xff]
    %v740 = vld [vmem:[%s3 + $0x5f4] sm:$0xff]
    %v741 = vld [vmem:[%s3 + $0x5fc] sm:$0xff]
    %v742 = vld [vmem:[%s3 + $0x604] sm:$0xff]
    %v743 = vld [vmem:[%s3 + $0x60c] sm:$0xff]
    %v744 = vld [vmem:[%s3 + $0x614] sm:$0xf]
    %v745 = vld [vmem:[%s3 + $0x618] sm:$0xff]
    %v746 = vld [vmem:[%s3 + $0x620] sm:$0xff]
    %v747 = vld [vmem:[%s3 + $0x628] sm:$0xff]
    %v748 = vld [vmem:[%s3 + $0x630] sm:$0xff]
    %v749 = vld [vmem:[%s3 + $0x638] sm:$0xff]
    %v750 = vld [vmem:[%s3 + $0x640] sm:$0xff]
    %v751 = vld [vmem:[%s3 + $0x648] sm:$0xf]
    %v752 = vld [vmem:[%s3 + $0x64c] sm:$0xff]
    %v753 = vld [vmem:[%s3 + $0x654] sm:$0xff]
    %v754 = vld [vmem:[%s3 + $0x65c] sm:$0xff]
    %v755 = vld [vmem:[%s3 + $0x664] sm:$0xff]
    %v756 = vld [vmem:[%s3 + $0x66c] sm:$0xff]
    %v757 = vld [vmem:[%s3 + $0x674] sm:$0xff]
    %v758 = vld [vmem:[%s3 + $0x67c] sm:$0xf]
    %v759 = vld [vmem:[%s3 + $0x680] sm:$0xff]
    %v760 = vld [vmem:[%s3 + $0x688] sm:$0xff]
    %v761 = vld [vmem:[%s3 + $0x690] sm:$0xff]
    %v762 = vld [vmem:[%s3 + $0x698] sm:$0xff]
    %v763 = vld [vmem:[%s3 + $0x6a0] sm:$0xff]
    %v764 = vld [vmem:[%s3 + $0x6a8] sm:$0xff]
    %v765 = vld [vmem:[%s3 + $0x6b0] sm:$0xf]
    %v766 = vld [vmem:[%s3 + $0x6b4] sm:$0xff]
    %v767 = vld [vmem:[%s3 + $0x6bc] sm:$0xff]
    %v768 = vld [vmem:[%s3 + $0x6c4] sm:$0xff]
    %v769 = vld [vmem:[%s3 + $0x6cc] sm:$0xff]
    %v770 = vld [vmem:[%s3 + $0x6d4] sm:$0xff]
    %v771 = vld [vmem:[%s3 + $0x6dc] sm:$0xff]
    %v772 = vld [vmem:[%s3 + $0x6e4] sm:$0xf]
    %v773 = vld [vmem:[%s3 + $0x6e8] sm:$0xff]
    %v774 = vld [vmem:[%s3 + $0x6f0] sm:$0xff]
    %v775 = vld [vmem:[%s3 + $0x6f8] sm:$0xff]
    %v776 = vld [vmem:[%s3 + $0x700] sm:$0xff]
    %v777 = vld [vmem:[%s3 + $0x708] sm:$0xff]
    %v778 = vld [vmem:[%s3 + $0x710] sm:$0xff]
    %v779 = vld [vmem:[%s3 + $0x718] sm:$0xf]
    %v780 = vld [vmem:[%s3 + $0x71c] sm:$0xff]
    %v781 = vld [vmem:[%s3 + $0x724] sm:$0xff]
    %v782 = vld [vmem:[%s3 + $0x72c] sm:$0xff]
    %v783 = vld [vmem:[%s3 + $0x734] sm:$0xff]
    %v784 = vld [vmem:[%s3 + $0x73c] sm:$0xff]
    %v785 = vld [vmem:[%s3 + $0x744] sm:$0xff]
    %v786 = vld [vmem:[%s3 + $0x74c] sm:$0xf]
    %v787 = vld [vmem:[%s3 + $0x750] sm:$0xff]
    %v788 = vld [vmem:[%s3 + $0x758] sm:$0xff]
    %v789 = vld [vmem:[%s3 + $0x760] sm:$0xff]
    %v790 = vld [vmem:[%s3 + $0x768] sm:$0xff]
    %v791 = vld [vmem:[%s3 + $0x770] sm:$0xff]
    %v792 = vld [vmem:[%s3 + $0x778] sm:$0xff]
    %v793 = vld [vmem:[%s3 + $0x780] sm:$0xf]
    %v794 = vld [vmem:[%s3 + $0x784] sm:$0xff]
    %v795 = vld [vmem:[%s3 + $0x78c] sm:$0xff]
    %v796 = vld [vmem:[%s3 + $0x794] sm:$0xff]
    %v797 = vld [vmem:[%s3 + $0x79c] sm:$0xff]
    %v798 = vld [vmem:[%s3 + $0x7a4] sm:$0xff]
    %v799 = vld [vmem:[%s3 + $0x7ac] sm:$0xff]
    %v800 = vld [vmem:[%s3 + $0x7b4] sm:$0xf]
    %v801 = vld [vmem:[%s3 + $0x7b8] sm:$0xff]
    %v802 = vld [vmem:[%s3 + $0x7c0] sm:$0xff]
    %v803 = vld [vmem:[%s3 + $0x7c8] sm:$0xff]
    %v804 = vld [vmem:[%s3 + $0x7d0] sm:$0xff]
    %v805 = vld [vmem:[%s3 + $0x7d8] sm:$0xff]
    %v806 = vld [vmem:[%s3 + $0x7e0] sm:$0xff]
    %v807 = vld [vmem:[%s3 + $0x7e8] sm:$0xf]
    %v808 = vld [vmem:[%s3 + $0x7ec] sm:$0xff]
    %v809 = vld [vmem:[%s3 + $0x7f4] sm:$0xff]
    %v810 = vld [vmem:[%s3 + $0x7fc] sm:$0xff]
    %v811 = vld [vmem:[%s3 + $0x804] sm:$0xff]
    %v812 = vld [vmem:[%s3 + $0x80c] sm:$0xff]
    %v813 = vld [vmem:[%s3 + $0x814] sm:$0xff]
    %v814 = vld [vmem:[%s3 + $0x81c] sm:$0xf]
    %v815 = vld [vmem:[%s3 + $0x820] sm:$0xff]
    %v816 = vld [vmem:[%s3 + $0x828] sm:$0xff]
    %v817 = vld [vmem:[%s3 + $0x830] sm:$0xff]
    %v818 = vld [vmem:[%s3 + $0x838] sm:$0xff]
    %v819 = vld [vmem:[%s3 + $0x840] sm:$0xff]
    %v820 = vld [vmem:[%s3 + $0x848] sm:$0xff]
    %v821 = vld [vmem:[%s3 + $0x850] sm:$0xf]
    %v822 = vld [vmem:[%s3 + $0x854] sm:$0xff]
    %v823 = vld [vmem:[%s3 + $0x85c] sm:$0xff]
    %v824 = vld [vmem:[%s3 + $0x864] sm:$0xff]
    %v825 = vld [vmem:[%s3 + $0x86c] sm:$0xff]
    %v826 = vld [vmem:[%s3 + $0x874] sm:$0xff]
    %v827 = vld [vmem:[%s3 + $0x87c] sm:$0xff]
    %v828 = vld [vmem:[%s3 + $0x884] sm:$0xf]
    %v829 = vld [vmem:[%s3 + $0x888] sm:$0xff]
    %v830 = vld [vmem:[%s3 + $0x890] sm:$0xff]
    %v831 = vld [vmem:[%s3 + $0x898] sm:$0xff]
    %v832 = vld [vmem:[%s3 + $0x8a0] sm:$0xff]
    %v833 = vld [vmem:[%s3 + $0x8a8] sm:$0xff]
    %v834 = vld [vmem:[%s3 + $0x8b0] sm:$0xff]
    %v835 = vld [vmem:[%s3 + $0x8b8] sm:$0xf]
    %v836 = vld [vmem:[%s3 + $0x8bc] sm:$0xff]
    %v837 = vld [vmem:[%s3 + $0x8c4] sm:$0xff]
    %v838 = vld [vmem:[%s3 + $0x8cc] sm:$0xff]
    %v839 = vld [vmem:[%s3 + $0x8d4] sm:$0xff]
    %v840 = vld [vmem:[%s3 + $0x8dc] sm:$0xff]
    %v841 = vld [vmem:[%s3 + $0x8e4] sm:$0xff]
    %v842 = vld [vmem:[%s3 + $0x8ec] sm:$0xf]
    %v843 = vld [vmem:[%s3 + $0x8f0] sm:$0xff]
    %v844 = vld [vmem:[%s3 + $0x8f8] sm:$0xff]
    %v845 = vld [vmem:[%s3 + $0x900] sm:$0xff]
    %v846 = vld [vmem:[%s3 + $0x908] sm:$0xff]
    %v847 = vld [vmem:[%s3 + $0x910] sm:$0xff]
    %v848 = vld [vmem:[%s3 + $0x918] sm:$0xff]
    %v849 = vld [vmem:[%s3 + $0x920] sm:$0xf]
    %v850 = vld [vmem:[%s3 + $0x924] sm:$0xff]
    %v851 = vld [vmem:[%s3 + $0x92c] sm:$0xff]
    %v852 = vld [vmem:[%s3 + $0x934] sm:$0xff]
    %v853 = vld [vmem:[%s3 + $0x93c] sm:$0xff]
    %v854 = vld [vmem:[%s3 + $0x944] sm:$0xff]
    %v855 = vld [vmem:[%s3 + $0x94c] sm:$0xff]
    %v856 = vld [vmem:[%s3 + $0x954] sm:$0xf]
    %v857 = vld [vmem:[%s3 + $0x958] sm:$0xff]
    %v858 = vld [vmem:[%s3 + $0x960] sm:$0xff]
    %v859 = vld [vmem:[%s3 + $0x968] sm:$0xff]
    %v860 = vld [vmem:[%s3 + $0x970] sm:$0xff]
    %v861 = vld [vmem:[%s3 + $0x978] sm:$0xff]
    %v862 = vld [vmem:[%s3 + $0x980] sm:$0xff]
    %v863 = vld [vmem:[%s3 + $0x988] sm:$0xf]
    %v864 = vld [vmem:[%s3 + $0x98c] sm:$0xff]
    %v865 = vld [vmem:[%s3 + $0x994] sm:$0xff]
    %v866 = vld [vmem:[%s3 + $0x99c] sm:$0xff]
    %v867 = vld [vmem:[%s3 + $0x9a4] sm:$0xff]
    %v868 = vld [vmem:[%s3 + $0x9ac] sm:$0xff]
    %v869 = vld [vmem:[%s3 + $0x9b4] sm:$0xff]
    %v870 = vld [vmem:[%s3 + $0x9bc] sm:$0xf]
    %v871 = vld [vmem:[%s3 + $0x9c0] sm:$0xff]
    %v872 = vld [vmem:[%s3 + $0x9c8] sm:$0xff]
    %v873 = vld [vmem:[%s3 + $0x9d0] sm:$0xff]
    %v874 = vld [vmem:[%s3 + $0x9d8] sm:$0xff]
    %v875 = vld [vmem:[%s3 + $0x9e0] sm:$0xff]
    %v876 = vld [vmem:[%s3 + $0x9e8] sm:$0xff]
    %v877 = vld [vmem:[%s3 + $0x9f0] sm:$0xf]
    %v878 = vld [vmem:[%s3 + $0x9f4] sm:$0xff]
    %v879 = vld [vmem:[%s3 + $0x9fc] sm:$0xff]
    %v880 = vld [vmem:[%s3 + $0xa04] sm:$0xff]
    %v881 = vld [vmem:[%s3 + $0xa0c] sm:$0xff]
    %v882 = vld [vmem:[%s3 + $0xa14] sm:$0xff]
    %v883 = vld [vmem:[%s3 + $0xa1c] sm:$0xff]
    %v884 = vld [vmem:[%s3 + $0xa24] sm:$0xf]
    %v885 = vld [vmem:[%s3 + $0xa28] sm:$0xff]
    %v886 = vld [vmem:[%s3 + $0xa30] sm:$0xff]
    %v887 = vld [vmem:[%s3 + $0xa38] sm:$0xff]
    %v888 = vld [vmem:[%s3 + $0xa40] sm:$0xff]
    %v889 = vld [vmem:[%s3 + $0xa48] sm:$0xff]
    %v890 = vld [vmem:[%s3 + $0xa50] sm:$0xff]
    %v891 = vld [vmem:[%s3 + $0xa58] sm:$0xf]
    %v892 = vld [vmem:[%s3 + $0xa5c] sm:$0xff]
    %v893 = vld [vmem:[%s3 + $0xa64] sm:$0xff]
    %v894 = vld [vmem:[%s3 + $0xa6c] sm:$0xff]
    %v895 = vld [vmem:[%s3 + $0xa74] sm:$0xff]
    %v896 = vld [vmem:[%s3 + $0xa7c] sm:$0xff]
    %v897 = vld [vmem:[%s3 + $0xa84] sm:$0xff]
    %v898 = vld [vmem:[%s3 + $0xa8c] sm:$0xf]
    %v899 = vld [vmem:[%s3 + $0xa90] sm:$0xff]
    %v900 = vld [vmem:[%s3 + $0xa98] sm:$0xff]
    %v901 = vld [vmem:[%s3 + $0xaa0] sm:$0xff]
    %v902 = vld [vmem:[%s3 + $0xaa8] sm:$0xff]
    %v903 = vld [vmem:[%s3 + $0xab0] sm:$0xff]
    %v904 = vld [vmem:[%s3 + $0xab8] sm:$0xff]
    %v905 = vld [vmem:[%s3 + $0xac0] sm:$0xf]
    %v906 = vld [vmem:[%s3 + $0xac4] sm:$0xff]
    %v907 = vld [vmem:[%s3 + $0xacc] sm:$0xff]
    %v908 = vld [vmem:[%s3 + $0xad4] sm:$0xff]
    %v909 = vld [vmem:[%s3 + $0xadc] sm:$0xff]
    %v910 = vld [vmem:[%s3 + $0xae4] sm:$0xff]
    %v911 = vld [vmem:[%s3 + $0xaec] sm:$0xff]
    %v912 = vld [vmem:[%s3 + $0xaf4] sm:$0xf]
    %v913 = vld [vmem:[%s3 + $0xaf8] sm:$0xff]
    %v914 = vld [vmem:[%s3 + $0xb00] sm:$0xff]
    %v915 = vld [vmem:[%s3 + $0xb08] sm:$0xff]
    %v916 = vld [vmem:[%s3 + $0xb10] sm:$0xff]
    %v917 = vld [vmem:[%s3 + $0xb18] sm:$0xff]
    %v918 = vld [vmem:[%s3 + $0xb20] sm:$0xff]
    %v919 = vld [vmem:[%s3 + $0xb28] sm:$0xf]
    %v920 = vld [vmem:[%s3 + $0xb2c] sm:$0xff]
    %v921 = vld [vmem:[%s3 + $0xb34] sm:$0xff]
    %v922 = vld [vmem:[%s3 + $0xb3c] sm:$0xff]
    %v923 = vld [vmem:[%s3 + $0xb44] sm:$0xff]
    %v924 = vld [vmem:[%s3 + $0xb4c] sm:$0xff]
    %v925 = vld [vmem:[%s3 + $0xb54] sm:$0xff]
    %v926 = vld [vmem:[%s3 + $0xb5c] sm:$0xf]
    %v927 = vld [vmem:[%s3 + $0xb60] sm:$0xff]
    %v928 = vld [vmem:[%s3 + $0xb68] sm:$0xff]
    %v929 = vld [vmem:[%s3 + $0xb70] sm:$0xff]
    %v930 = vld [vmem:[%s3 + $0xb78] sm:$0xff]
    %v931 = vld [vmem:[%s3 + $0xb80] sm:$0xff]
    %v932 = vld [vmem:[%s3 + $0xb88] sm:$0xff]
    %v933 = vld [vmem:[%s3 + $0xb90] sm:$0xf]
    %v934 = vld [vmem:[%s3 + $0xb94] sm:$0xff]
    %v935 = vld [vmem:[%s3 + $0xb9c] sm:$0xff]
    %v936 = vld [vmem:[%s3 + $0xba4] sm:$0xff]
    %v937 = vld [vmem:[%s3 + $0xbac] sm:$0xff]
    %v938 = vld [vmem:[%s3 + $0xbb4] sm:$0xff]
    %v939 = vld [vmem:[%s3 + $0xbbc] sm:$0xff]
    %v940 = vld [vmem:[%s3 + $0xbc4] sm:$0xf]
    %v941 = vld [vmem:[%s3 + $0xbc8] sm:$0xff]
    %v942 = vld [vmem:[%s3 + $0xbd0] sm:$0xff]
    %v943 = vld [vmem:[%s3 + $0xbd8] sm:$0xff]
    %v944 = vld [vmem:[%s3 + $0xbe0] sm:$0xff]
    %v945 = vld [vmem:[%s3 + $0xbe8] sm:$0xff]
    %v946 = vld [vmem:[%s3 + $0xbf0] sm:$0xff]
    %v947 = vld [vmem:[%s3 + $0xbf8] sm:$0xf]
    %v948 = vld [vmem:[%s3 + $0xbfc] sm:$0xff]
    %v949 = vld [vmem:[%s3 + $0xc04] sm:$0xff]
    %v950 = vld [vmem:[%s3 + $0xc0c] sm:$0xff]
    %v951 = vld [vmem:[%s3 + $0xc14] sm:$0xff]
    %v952 = vld [vmem:[%s3 + $0xc1c] sm:$0xff]
    %v953 = vld [vmem:[%s3 + $0xc24] sm:$0xff]
    %v954 = vld [vmem:[%s3 + $0xc2c] sm:$0xf]
    %v955 = vld [vmem:[%s3 + $0xc30] sm:$0xff]
    %v956 = vld [vmem:[%s3 + $0xc38] sm:$0xff]
    %v957 = vld [vmem:[%s3 + $0xc40] sm:$0xff]
    %v958 = vld [vmem:[%s3 + $0xc48] sm:$0xff]
    %v959 = vld [vmem:[%s3 + $0xc50] sm:$0xff]
    %v960 = vld [vmem:[%s3 + $0xc58] sm:$0xff]
    %v961 = vld [vmem:[%s3 + $0xc60] sm:$0xf]
    %v962 = vld [vmem:[%s3 + $0xc64] sm:$0xff]
    %v963 = vld [vmem:[%s3 + $0xc6c] sm:$0xff]
    %v964 = vld [vmem:[%s3 + $0xc74] sm:$0xff]
    %v965 = vld [vmem:[%s3 + $0xc7c] sm:$0xff]
    %v966 = vld [vmem:[%s3 + $0xc84] sm:$0xff]
    %v967 = vld [vmem:[%s3 + $0xc8c] sm:$0xff]
    %v968 = vld [vmem:[%s3 + $0xc94] sm:$0xf]
    %v969 = vld [vmem:[%s3 + $0xc98] sm:$0xff]
    %v970 = vld [vmem:[%s3 + $0xca0] sm:$0xff]
    %v971 = vld [vmem:[%s3 + $0xca8] sm:$0xff]
    %v972 = vld [vmem:[%s3 + $0xcb0] sm:$0xff]
    %v973 = vld [vmem:[%s3 + $0xcb8] sm:$0xff]
    %v974 = vld [vmem:[%s3 + $0xcc0] sm:$0xff]
    %v975 = vld [vmem:[%s3 + $0xcc8] sm:$0xf]
    %v976 = vld [vmem:[%s3 + $0xccc] sm:$0xff]
    %v977 = vld [vmem:[%s3 + $0xcd4] sm:$0xff]
    %v978 = vld [vmem:[%s3 + $0xcdc] sm:$0xff]
    %v979 = vld [vmem:[%s3 + $0xce4] sm:$0xff]
    %v980 = vld [vmem:[%s3 + $0xcec] sm:$0xff]
    %v981 = vld [vmem:[%s3 + $0xcf4] sm:$0xff]
    %v982 = vld [vmem:[%s3 + $0xcfc] sm:$0xf]
    %v983 = vld [vmem:[%s3 + $0xd00] sm:$0xff]
    %v984 = vld [vmem:[%s3 + $0xd08] sm:$0xff]
    %v985 = vld [vmem:[%s3 + $0xd10] sm:$0xff]
    %v986 = vld [vmem:[%s3 + $0xd18] sm:$0xff]
    %v987 = vld [vmem:[%s3 + $0xd20] sm:$0xff]
    %v988 = vld [vmem:[%s3 + $0xd28] sm:$0xff]
    %v989 = vld [vmem:[%s3 + $0xd30] sm:$0xf]
    %v990 = vld [vmem:[%s3 + $0xd34] sm:$0xff]
    %v991 = vld [vmem:[%s3 + $0xd3c] sm:$0xff]
    %v992 = vld [vmem:[%s3 + $0xd44] sm:$0xff]
    %v993 = vld [vmem:[%s3 + $0xd4c] sm:$0xff]
    %v994 = vld [vmem:[%s3 + $0xd54] sm:$0xff]
    %v995 = vld [vmem:[%s3 + $0xd5c] sm:$0xff]
    %v996 = vld [vmem:[%s3 + $0xd64] sm:$0xf]
    %v997 = vld [vmem:[%s3 + $0xd68] sm:$0xff]
    %v998 = vld [vmem:[%s3 + $0xd70] sm:$0xff]
    %v999 = vld [vmem:[%s3 + $0xd78] sm:$0xff]
    %v1000 = vld [vmem:[%s3 + $0xd80] sm:$0xff]
    %v1001 = vld [vmem:[%s3 + $0xd88] sm:$0xff]
    %v1002 = vld [vmem:[%s3 + $0xd90] sm:$0xff]
    %v1003 = vld [vmem:[%s3 + $0xd98] sm:$0xf]
    %v1004 = vld [vmem:[%s3 + $0xd9c] sm:$0xff]
    %v1005 = vld [vmem:[%s3 + $0xda4] sm:$0xff]
    %v1006 = vld [vmem:[%s3 + $0xdac] sm:$0xff]
    %v1007 = vld [vmem:[%s3 + $0xdb4] sm:$0xff]
    %v1008 = vld [vmem:[%s3 + $0xdbc] sm:$0xff]
    %v1009 = vld [vmem:[%s3 + $0xdc4] sm:$0xff]
    %v1010 = vld [vmem:[%s3 + $0xdcc] sm:$0xf]
    %v1011 = vld [vmem:[%s3 + $0xdd0] sm:$0xff]
    %v1012 = vld [vmem:[%s3 + $0xdd8] sm:$0xff]
    %v1013 = vld [vmem:[%s3 + $0xde0] sm:$0xff]
    %v1014 = vld [vmem:[%s3 + $0xde8] sm:$0xff]
    %v1015 = vld [vmem:[%s3 + $0xdf0] sm:$0xff]
    %v1016 = vld [vmem:[%s3 + $0xdf8] sm:$0xff]
    %v1017 = vld [vmem:[%s3 + $0xe00] sm:$0xf]
    %v1018 = vld [vmem:[%s3 + $0xe04] sm:$0xff]
    %v1019 = vld [vmem:[%s3 + $0xe0c] sm:$0xff]
    %v1020 = vld [vmem:[%s3 + $0xe14] sm:$0xff]
    %v1021 = vld [vmem:[%s3 + $0xe1c] sm:$0xff]
    %v1022 = vld [vmem:[%s3 + $0xe24] sm:$0xff]
    %v1023 = vld [vmem:[%s3 + $0xe2c] sm:$0xff]
    %v1024 = vld [vmem:[%s3 + $0xe34] sm:$0xf]
    %v1025 = vld [vmem:[%s3 + $0xe38] sm:$0xff]
    %v1026 = vld [vmem:[%s3 + $0xe40] sm:$0xff]
    %v1027 = vld [vmem:[%s3 + $0xe48] sm:$0xff]
    %v1028 = vld [vmem:[%s3 + $0xe50] sm:$0xff]
    %v1029 = vld [vmem:[%s3 + $0xe58] sm:$0xff]
    %v1030 = vld [vmem:[%s3 + $0xe60] sm:$0xff]
    %v1031 = vld [vmem:[%s3 + $0xe68] sm:$0xf]
    %v1032 = vld [vmem:[%s3 + $0xe6c] sm:$0xff]
    %v1033 = vld [vmem:[%s3 + $0xe74] sm:$0xff]
    %v1034 = vld [vmem:[%s3 + $0xe7c] sm:$0xff]
    %v1035 = vld [vmem:[%s3 + $0xe84] sm:$0xff]
    %v1036 = vld [vmem:[%s3 + $0xe8c] sm:$0xff]
    %v1037 = vld [vmem:[%s3 + $0xe94] sm:$0xff]
    %v1038 = vld [vmem:[%s3 + $0xe9c] sm:$0xf]
    %v1039 = vld [vmem:[%s3 + $0xea0] sm:$0xff]
    %v1040 = vld [vmem:[%s3 + $0xea8] sm:$0xff]
    %v1041 = vld [vmem:[%s3 + $0xeb0] sm:$0xff]
    %v1042 = vld [vmem:[%s3 + $0xeb8] sm:$0xff]
    %v1043 = vld [vmem:[%s3 + $0xec0] sm:$0xff]
    %v1044 = vld [vmem:[%s3 + $0xec8] sm:$0xff]
    %v1045 = vld [vmem:[%s3 + $0xed0] sm:$0xf]
    %v1046 = vld [vmem:[%s3 + $0xed4] sm:$0xff]
    %v1047 = vld [vmem:[%s3 + $0xedc] sm:$0xff]
    %v1048 = vld [vmem:[%s3 + $0xee4] sm:$0xff]
    %v1049 = vld [vmem:[%s3 + $0xeec] sm:$0xff]
    %v1050 = vld [vmem:[%s3 + $0xef4] sm:$0xff]
    %v1051 = vld [vmem:[%s3 + $0xefc] sm:$0xff]
    %v1052 = vld [vmem:[%s3 + $0xf04] sm:$0xf]
    %v1053 = vld [vmem:[%s3 + $0xf08] sm:$0xff]
    %v1054 = vld [vmem:[%s3 + $0xf10] sm:$0xff]
    %v1055 = vld [vmem:[%s3 + $0xf18] sm:$0xff]
    %v1056 = vld [vmem:[%s3 + $0xf20] sm:$0xff]
    %v1057 = vld [vmem:[%s3 + $0xf28] sm:$0xff]
    %v1058 = vld [vmem:[%s3 + $0xf30] sm:$0xff]
    %v1059 = vld [vmem:[%s3 + $0xf38] sm:$0xf]
    %v1060 = vld [vmem:[%s3 + $0xf3c] sm:$0xff]
    %v1061 = vld [vmem:[%s3 + $0xf44] sm:$0xff]
    %v1062 = vld [vmem:[%s3 + $0xf4c] sm:$0xff]
    %v1063 = vld [vmem:[%s3 + $0xf54] sm:$0xff]
    %v1064 = vld [vmem:[%s3 + $0xf5c] sm:$0xff]
    %v1065 = vld [vmem:[%s3 + $0xf64] sm:$0xff]
    %v1066 = vld [vmem:[%s3 + $0xf6c] sm:$0xf]
    %v1067 = vld [vmem:[%s3 + $0xf70] sm:$0xff]
    %v1068 = vld [vmem:[%s3 + $0xf78] sm:$0xff]
    %v1069 = vld [vmem:[%s3 + $0xf80] sm:$0xff]
    %v1070 = vld [vmem:[%s3 + $0xf88] sm:$0xff]
    %v1071 = vld [vmem:[%s3 + $0xf90] sm:$0xff]
    %v1072 = vld [vmem:[%s3 + $0xf98] sm:$0xff]
    %v1073 = vld [vmem:[%s3 + $0xfa0] sm:$0xf]
    %v1074 = vld [vmem:[%s3 + $0xfa4] sm:$0xff]
    %v1075 = vld [vmem:[%s3 + $0xfac] sm:$0xff]
    %v1076 = vld [vmem:[%s3 + $0xfb4] sm:$0xff]
    %v1077 = vld [vmem:[%s3 + $0xfbc] sm:$0xff]
    %v1078 = vld [vmem:[%s3 + $0xfc4] sm:$0xff]
    %v1079 = vld [vmem:[%s3 + $0xfcc] sm:$0xff]
    %v1080 = vld [vmem:[%s3 + $0xfd4] sm:$0xf]
    %v1081 = vld [vmem:[%s3 + $0xfd8] sm:$0xff]
    %v1082 = vld [vmem:[%s3 + $0xfe0] sm:$0xff]
    %v1083 = vld [vmem:[%s3 + $0xfe8] sm:$0xff]
    %v1084 = vld [vmem:[%s3 + $0xff0] sm:$0xff]
    %v1085 = vld [vmem:[%s3 + $0xff8] sm:$0xff]
    %v1086 = vld [vmem:[%s3 + $0x1000] sm:$0xff]
    %v1087 = vld [vmem:[%s3 + $0x1008] sm:$0xf]
    %v1088 = vld [vmem:[%s3 + $0x100c] sm:$0xff]
    %v1089 = vld [vmem:[%s3 + $0x1014] sm:$0xff]
    %v1090 = vld [vmem:[%s3 + $0x101c] sm:$0xff]
    %v1091 = vld [vmem:[%s3 + $0x1024] sm:$0xff]
    %v1092 = vld [vmem:[%s3 + $0x102c] sm:$0xff]
    %v1093 = vld [vmem:[%s3 + $0x1034] sm:$0xff]
    %v1094 = vld [vmem:[%s3 + $0x103c] sm:$0xf]
    %v1095 = vld [vmem:[%s3 + $0x1040] sm:$0xff]
    %v1096 = vld [vmem:[%s3 + $0x1048] sm:$0xff]
    %v1097 = vld [vmem:[%s3 + $0x1050] sm:$0xff]
    %v1098 = vld [vmem:[%s3 + $0x1058] sm:$0xff]
    %v1099 = vld [vmem:[%s3 + $0x1060] sm:$0xff]
    %v1100 = vld [vmem:[%s3 + $0x1068] sm:$0xff]
    %v1101 = vld [vmem:[%s3 + $0x1070] sm:$0xf]
    %v1102 = vld [vmem:[%s3 + $0x1074] sm:$0xff]
    %v1103 = vld [vmem:[%s3 + $0x107c] sm:$0xff]
    %v1104 = vld [vmem:[%s3 + $0x1084] sm:$0xff]
    %v1105 = vld [vmem:[%s3 + $0x108c] sm:$0xff]
    %v1106 = vld [vmem:[%s3 + $0x1094] sm:$0xff]
    %v1107 = vld [vmem:[%s3 + $0x109c] sm:$0xff]
    %v1108 = vld [vmem:[%s3 + $0x10a4] sm:$0xf]
    %v1109 = vld [vmem:[%s3 + $0x10a8] sm:$0xff]
    %v1110 = vld [vmem:[%s3 + $0x10b0] sm:$0xff]
    %v1111 = vld [vmem:[%s3 + $0x10b8] sm:$0xff]
    %v1112 = vld [vmem:[%s3 + $0x10c0] sm:$0xff]
    %v1113 = vld [vmem:[%s3 + $0x10c8] sm:$0xff]
    %v1114 = vld [vmem:[%s3 + $0x10d0] sm:$0xff]
    %v1115 = vld [vmem:[%s3 + $0x10d8] sm:$0xf]
    %v1116 = vld [vmem:[%s3 + $0x10dc] sm:$0xff]
    %v1117 = vld [vmem:[%s3 + $0x10e4] sm:$0xff]
    %v1118 = vld [vmem:[%s3 + $0x10ec] sm:$0xff]
    %v1119 = vld [vmem:[%s3 + $0x10f4] sm:$0xff]
    %v1120 = vld [vmem:[%s3 + $0x10fc] sm:$0xff]
    %v1121 = vld [vmem:[%s3 + $0x1104] sm:$0xff]
    %v1122 = vld [vmem:[%s3 + $0x110c] sm:$0xf]
    %v1123 = vld [vmem:[%s3 + $0x1110] sm:$0xff]
    %v1124 = vld [vmem:[%s3 + $0x1118] sm:$0xff]
    %v1125 = vld [vmem:[%s3 + $0x1120] sm:$0xff]
    %v1126 = vld [vmem:[%s3 + $0x1128] sm:$0xff]
    %v1127 = vld [vmem:[%s3 + $0x1130] sm:$0xff]
    %v1128 = vld [vmem:[%s3 + $0x1138] sm:$0xff]
    %v1129 = vld [vmem:[%s3 + $0x1140] sm:$0xf]
    %v1130 = vld [vmem:[%s3 + $0x1144] sm:$0xff]
    %v1131 = vld [vmem:[%s3 + $0x114c] sm:$0xff]
    %v1132 = vld [vmem:[%s3 + $0x1154] sm:$0xff]
    %v1133 = vld [vmem:[%s3 + $0x115c] sm:$0xff]
    %v1134 = vld [vmem:[%s3 + $0x1164] sm:$0xff]
    %v1135 = vld [vmem:[%s3 + $0x116c] sm:$0xff]
    %v1136 = vld [vmem:[%s3 + $0x1174] sm:$0xf]
    %v1137 = vld [vmem:[%s3 + $0x1178] sm:$0xff]
    %v1138 = vld [vmem:[%s3 + $0x1180] sm:$0xff]
    %v1139 = vld [vmem:[%s3 + $0x1188] sm:$0xff]
    %v1140 = vld [vmem:[%s3 + $0x1190] sm:$0xff]
    %v1141 = vld [vmem:[%s3 + $0x1198] sm:$0xff]
    %v1142 = vld [vmem:[%s3 + $0x11a0] sm:$0xff]
    %v1143 = vld [vmem:[%s3 + $0x11a8] sm:$0xf]
    %v1144 = vld [vmem:[%s3 + $0x11ac] sm:$0xff]
    %v1145 = vld [vmem:[%s3 + $0x11b4] sm:$0xff]
    %v1146 = vld [vmem:[%s3 + $0x11bc] sm:$0xff]
    %v1147 = vld [vmem:[%s3 + $0x11c4] sm:$0xff]
    %v1148 = vld [vmem:[%s3 + $0x11cc] sm:$0xff]
    %v1149 = vld [vmem:[%s3 + $0x11d4] sm:$0xff]
    %v1150 = vld [vmem:[%s3 + $0x11dc] sm:$0xf]
    %v1151 = vld [vmem:[%s3 + $0x11e0] sm:$0xff]
    %v1152 = vld [vmem:[%s3 + $0x11e8] sm:$0xff]
    %v1153 = vld [vmem:[%s3 + $0x11f0] sm:$0xff]
    %v1154 = vld [vmem:[%s3 + $0x11f8] sm:$0xff]
    %v1155 = vld [vmem:[%s3 + $0x1200] sm:$0xff]
    %v1156 = vld [vmem:[%s3 + $0x1208] sm:$0xff]
    %v1157 = vld [vmem:[%s3 + $0x1210] sm:$0xf]
    %v1158 = vld [vmem:[%s3 + $0x1214] sm:$0xff]
    %v1159 = vld [vmem:[%s3 + $0x121c] sm:$0xff]
    %v1160 = vld [vmem:[%s3 + $0x1224] sm:$0xff]
    %v1161 = vld [vmem:[%s3 + $0x122c] sm:$0xff]
    %v1162 = vld [vmem:[%s3 + $0x1234] sm:$0xff]
    %v1163 = vld [vmem:[%s3 + $0x123c] sm:$0xff]
    %v1164 = vld [vmem:[%s3 + $0x1244] sm:$0xf]
    %v1165 = vld [vmem:[%s3 + $0x1248] sm:$0xff]
    %v1166 = vld [vmem:[%s3 + $0x1250] sm:$0xff]
    %v1167 = vld [vmem:[%s3 + $0x1258] sm:$0xff]
    %v1168 = vld [vmem:[%s3 + $0x1260] sm:$0xff]
    %v1169 = vld [vmem:[%s3 + $0x1268] sm:$0xff]
    %v1170 = vld [vmem:[%s3 + $0x1270] sm:$0xff]
    %v1171 = vld [vmem:[%s3 + $0x1278] sm:$0xf]
    %v1172 = vld [vmem:[%s3 + $0x127c] sm:$0xff]
    %v1173 = vld [vmem:[%s3 + $0x1284] sm:$0xff]
    %v1174 = vld [vmem:[%s3 + $0x128c] sm:$0xff]
    %v1175 = vld [vmem:[%s3 + $0x1294] sm:$0xff]
    %v1176 = vld [vmem:[%s3 + $0x129c] sm:$0xff]
    %v1177 = vld [vmem:[%s3 + $0x12a4] sm:$0xff]
    %v1178 = vld [vmem:[%s3 + $0x12ac] sm:$0xf]
    %v1179 = vld [vmem:[%s3 + $0x12b0] sm:$0xff]
    %v1180 = vld [vmem:[%s3 + $0x12b8] sm:$0xff]
    %v1181 = vld [vmem:[%s3 + $0x12c0] sm:$0xff]
    %v1182 = vld [vmem:[%s3 + $0x12c8] sm:$0xff]
    %v1183 = vld [vmem:[%s3 + $0x12d0] sm:$0xff]
    %v1184 = vld [vmem:[%s3 + $0x12d8] sm:$0xff]
    %v1185 = vld [vmem:[%s3 + $0x12e0] sm:$0xf]
    %v1186 = vld [vmem:[%s3 + $0x12e4] sm:$0xff]
    %v1187 = vld [vmem:[%s3 + $0x12ec] sm:$0xff]
    %v1188 = vld [vmem:[%s3 + $0x12f4] sm:$0xff]
    %v1189 = vld [vmem:[%s3 + $0x12fc] sm:$0xff]
    %v1190 = vld [vmem:[%s3 + $0x1304] sm:$0xff]
    %v1191 = vld [vmem:[%s3 + $0x130c] sm:$0xff]
    %v1192 = vld [vmem:[%s3 + $0x1314] sm:$0xf]
    %v1193 = vld [vmem:[%s3 + $0x1318] sm:$0xff]
    %v1194 = vld [vmem:[%s3 + $0x1320] sm:$0xff]
    %v1195 = vld [vmem:[%s3 + $0x1328] sm:$0xff]
    %v1196 = vld [vmem:[%s3 + $0x1330] sm:$0xff]
    %v1197 = vld [vmem:[%s3 + $0x1338] sm:$0xff]
    %v1198 = vld [vmem:[%s3 + $0x1340] sm:$0xff]
    %v1199 = vld [vmem:[%s3 + $0x1348] sm:$0xf]
    %v1200 = vld [vmem:[%s3 + $0x134c] sm:$0xff]
    %v1201 = vld [vmem:[%s3 + $0x1354] sm:$0xff]
    %v1202 = vld [vmem:[%s3 + $0x135c] sm:$0xff]
    %v1203 = vld [vmem:[%s3 + $0x1364] sm:$0xff]
    %v1204 = vld [vmem:[%s3 + $0x136c] sm:$0xff]
    %v1205 = vld [vmem:[%s3 + $0x1374] sm:$0xff]
    %v1206 = vld [vmem:[%s3 + $0x137c] sm:$0xf]
    %v1207 = vld [vmem:[%s3 + $0x1380] sm:$0xff]
    %v1208 = vld [vmem:[%s3 + $0x1388] sm:$0xff]
    %v1209 = vld [vmem:[%s3 + $0x1390] sm:$0xff]
    %v1210 = vld [vmem:[%s3 + $0x1398] sm:$0xff]
    %v1211 = vld [vmem:[%s3 + $0x13a0] sm:$0xff]
    %v1212 = vld [vmem:[%s3 + $0x13a8] sm:$0xff]
    %v1213 = vld [vmem:[%s3 + $0x13b0] sm:$0xf]
    %v1214 = vld [vmem:[%s3 + $0x13b4] sm:$0xff]
    %v1215 = vld [vmem:[%s3 + $0x13bc] sm:$0xff]
    %v1216 = vld [vmem:[%s3 + $0x13c4] sm:$0xff]
    %v1217 = vld [vmem:[%s3 + $0x13cc] sm:$0xff]
    %v1218 = vld [vmem:[%s3 + $0x13d4] sm:$0xff]
    %v1219 = vld [vmem:[%s3 + $0x13dc] sm:$0xff]
    %v1220 = vld [vmem:[%s3 + $0x13e4] sm:$0xf]
    %v1221 = vld [vmem:[%s3 + $0x13e8] sm:$0xff]
    %v1222 = vld [vmem:[%s3 + $0x13f0] sm:$0xff]
    %v1223 = vld [vmem:[%s3 + $0x13f8] sm:$0xff]
    %v1224 = vld [vmem:[%s3 + $0x1400] sm:$0xff]
    %v1225 = vld [vmem:[%s3 + $0x1408] sm:$0xff]
    %v1226 = vld [vmem:[%s3 + $0x1410] sm:$0xff]
    %v1227 = vld [vmem:[%s3 + $0x1418] sm:$0xf]
    %v1228 = vld [vmem:[%s3 + $0x141c] sm:$0xff]
    %v1229 = vld [vmem:[%s3 + $0x1424] sm:$0xff]
    %v1230 = vld [vmem:[%s3 + $0x142c] sm:$0xff]
    %v1231 = vld [vmem:[%s3 + $0x1434] sm:$0xff]
    %v1232 = vld [vmem:[%s3 + $0x143c] sm:$0xff]
    %v1233 = vld [vmem:[%s3 + $0x1444] sm:$0xff]
    %v1234 = vld [vmem:[%s3 + $0x144c] sm:$0xf]
    %v1235 = vld [vmem:[%s3 + $0x1450] sm:$0xff]
    %v1236 = vld [vmem:[%s3 + $0x1458] sm:$0xff]
    %v1237 = vld [vmem:[%s3 + $0x1460] sm:$0xff]
    %v1238 = vld [vmem:[%s3 + $0x1468] sm:$0xff]
    %v1239 = vld [vmem:[%s3 + $0x1470] sm:$0xff]
    %v1240 = vld [vmem:[%s3 + $0x1478] sm:$0xff]
    %v1241 = vld [vmem:[%s3 + $0x1480] sm:$0xf]
    %v1242 = vld [vmem:[%s3 + $0x1484] sm:$0xff]
    %v1243 = vld [vmem:[%s3 + $0x148c] sm:$0xff]
    %v1244 = vld [vmem:[%s3 + $0x1494] sm:$0xff]
    %v1245 = vld [vmem:[%s3 + $0x149c] sm:$0xff]
    %v1246 = vld [vmem:[%s3 + $0x14a4] sm:$0xff]
    %v1247 = vld [vmem:[%s3 + $0x14ac] sm:$0xff]
    %v1248 = vld [vmem:[%s3 + $0x14b4] sm:$0xf]
    %v1249 = vld [vmem:[%s3 + $0x14b8] sm:$0xff]
    %v1250 = vld [vmem:[%s3 + $0x14c0] sm:$0xff]
    %v1251 = vld [vmem:[%s3 + $0x14c8] sm:$0xff]
    %v1252 = vld [vmem:[%s3 + $0x14d0] sm:$0xff]
    %v1253 = vld [vmem:[%s3 + $0x14d8] sm:$0xff]
    %v1254 = vld [vmem:[%s3 + $0x14e0] sm:$0xff]
    %v1255 = vld [vmem:[%s3 + $0x14e8] sm:$0xf]
    %v1256 = vld [vmem:[%s3 + $0x14ec] sm:$0xff]
    %v1257 = vld [vmem:[%s3 + $0x14f4] sm:$0xff]
    %v1258 = vld [vmem:[%s3 + $0x14fc] sm:$0xff]
    %v1259 = vld [vmem:[%s3 + $0x1504] sm:$0xff]
    %v1260 = vld [vmem:[%s3 + $0x150c] sm:$0xff]
    %v1261 = vld [vmem:[%s3 + $0x1514] sm:$0xff]
    %v1262 = vld [vmem:[%s3 + $0x151c] sm:$0xf]
    %v1263 = vld [vmem:[%s3 + $0x1520] sm:$0xff]
    %v1264 = vld [vmem:[%s3 + $0x1528] sm:$0xff]
    %v1265 = vld [vmem:[%s3 + $0x1530] sm:$0xff]
    %v1266 = vld [vmem:[%s3 + $0x1538] sm:$0xff]
    %v1267 = vld [vmem:[%s3 + $0x1540] sm:$0xff]
    %v1268 = vld [vmem:[%s3 + $0x1548] sm:$0xff]
    %v1269 = vld [vmem:[%s3 + $0x1550] sm:$0xf]
    %v1270 = vld [vmem:[%s3 + $0x1554] sm:$0xff]
    %v1271 = vld [vmem:[%s3 + $0x155c] sm:$0xff]
    %v1272 = vld [vmem:[%s3 + $0x1564] sm:$0xff]
    %v1273 = vld [vmem:[%s3 + $0x156c] sm:$0xff]
    %v1274 = vld [vmem:[%s3 + $0x1574] sm:$0xff]
    %v1275 = vld [vmem:[%s3 + $0x157c] sm:$0xff]
    %v1276 = vld [vmem:[%s3 + $0x1584] sm:$0xf]
    %v1277 = vld [vmem:[%s3 + $0x1588] sm:$0xff]
    %v1278 = vld [vmem:[%s3 + $0x1590] sm:$0xff]
    %v1279 = vld [vmem:[%s3 + $0x1598] sm:$0xff]
    %v1280 = vld [vmem:[%s3 + $0x15a0] sm:$0xff]
    %v1281 = vld [vmem:[%s3 + $0x15a8] sm:$0xff]
    %v1282 = vld [vmem:[%s3 + $0x15b0] sm:$0xff]
    %v1283 = vld [vmem:[%s3 + $0x15b8] sm:$0xf]
    %v1284 = vld [vmem:[%s3 + $0x15bc] sm:$0xff]
    %v1285 = vld [vmem:[%s3 + $0x15c4] sm:$0xff]
    %v1286 = vld [vmem:[%s3 + $0x15cc] sm:$0xff]
    %v1287 = vld [vmem:[%s3 + $0x15d4] sm:$0xff]
    %v1288 = vld [vmem:[%s3 + $0x15dc] sm:$0xff]
    %v1289 = vld [vmem:[%s3 + $0x15e4] sm:$0xff]
    %v1290 = vld [vmem:[%s3 + $0x15ec] sm:$0xf]
    %v1291 = vld [vmem:[%s3 + $0x15f0] sm:$0xff]
    %v1292 = vld [vmem:[%s3 + $0x15f8] sm:$0xff]
    %v1293 = vld [vmem:[%s3 + $0x1600] sm:$0xff]
    %v1294 = vld [vmem:[%s3 + $0x1608] sm:$0xff]
    %v1295 = vld [vmem:[%s3 + $0x1610] sm:$0xff]
    %v1296 = vld [vmem:[%s3 + $0x1618] sm:$0xff]
    %v1297 = vld [vmem:[%s3 + $0x1620] sm:$0xf]
    %v1298 = vld [vmem:[%s3 + $0x1624] sm:$0xff]
    %v1299 = vld [vmem:[%s3 + $0x162c] sm:$0xff]
    %v1300 = vld [vmem:[%s3 + $0x1634] sm:$0xff]
    %v1301 = vld [vmem:[%s3 + $0x163c] sm:$0xff]
    %v1302 = vld [vmem:[%s3 + $0x1644] sm:$0xff]
    %v1303 = vld [vmem:[%s3 + $0x164c] sm:$0xff]
    %v1304 = vld [vmem:[%s3 + $0x1654] sm:$0xf]
    %v1305 = vld [vmem:[%s3 + $0x1658] sm:$0xff]
    %v1306 = vld [vmem:[%s3 + $0x1660] sm:$0xff]
    %v1307 = vld [vmem:[%s3 + $0x1668] sm:$0xff]
    %v1308 = vld [vmem:[%s3 + $0x1670] sm:$0xff]
    %v1309 = vld [vmem:[%s3 + $0x1678] sm:$0xff]
    %v1310 = vld [vmem:[%s3 + $0x1680] sm:$0xff]
    %v1311 = vld [vmem:[%s3 + $0x1688] sm:$0xf]
    %v1312 = vld [vmem:[%s3 + $0x168c] sm:$0xff]
    %v1313 = vld [vmem:[%s3 + $0x1694] sm:$0xff]
    %v1314 = vld [vmem:[%s3 + $0x169c] sm:$0xff]
    %v1315 = vld [vmem:[%s3 + $0x16a4] sm:$0xff]
    %v1316 = vld [vmem:[%s3 + $0x16ac] sm:$0xff]
    %v1317 = vld [vmem:[%s3 + $0x16b4] sm:$0xff]
    %v1318 = vld [vmem:[%s3 + $0x16bc] sm:$0xf]
    %v1319 = vld [vmem:[%s3 + $0x16c0] sm:$0xff]
    %v1320 = vld [vmem:[%s3 + $0x16c8] sm:$0xff]
    %v1321 = vld [vmem:[%s3 + $0x16d0] sm:$0xff]
    %v1322 = vld [vmem:[%s3 + $0x16d8] sm:$0xff]
    %v1323 = vld [vmem:[%s3 + $0x16e0] sm:$0xff]
    %v1324 = vld [vmem:[%s3 + $0x16e8] sm:$0xff]
    %v1325 = vld [vmem:[%s3 + $0x16f0] sm:$0xf]
    %v1326 = vld [vmem:[%s3 + $0x16f4] sm:$0xff]
    %v1327 = vld [vmem:[%s3 + $0x16fc] sm:$0xff]
    %v1328 = vld [vmem:[%s3 + $0x1704] sm:$0xff]
    %v1329 = vld [vmem:[%s3 + $0x170c] sm:$0xff]
    %v1330 = vld [vmem:[%s3 + $0x1714] sm:$0xff]
    %v1331 = vld [vmem:[%s3 + $0x171c] sm:$0xff]
    %v1332 = vld [vmem:[%s3 + $0x1724] sm:$0xf]
    %v1333 = vld [vmem:[%s3 + $0x1728] sm:$0xff]
    %v1334 = vld [vmem:[%s3 + $0x1730] sm:$0xff]
    %v1335 = vld [vmem:[%s3 + $0x1738] sm:$0xff]
    %v1336 = vld [vmem:[%s3 + $0x1740] sm:$0xff]
    %v1337 = vld [vmem:[%s3 + $0x1748] sm:$0xff]
    %v1338 = vld [vmem:[%s3 + $0x1750] sm:$0xff]
    %v1339 = vld [vmem:[%s3 + $0x1758] sm:$0xf]
    %v1340 = vld [vmem:[%s3 + $0x175c] sm:$0xff]
    %v1341 = vld [vmem:[%s3 + $0x1764] sm:$0xff]
    %v1342 = vld [vmem:[%s3 + $0x176c] sm:$0xff]
    %v1343 = vld [vmem:[%s3 + $0x1774] sm:$0xff]
    %v1344 = vld [vmem:[%s3 + $0x177c] sm:$0xff]
    %v1345 = vld [vmem:[%s3 + $0x1784] sm:$0xff]
    %v1346 = vld [vmem:[%s3 + $0x178c] sm:$0xf]
    %v1347 = vld [vmem:[%s3 + $0x1790] sm:$0xff]
    %v1348 = vld [vmem:[%s3 + $0x1798] sm:$0xff]
    %v1349 = vld [vmem:[%s3 + $0x17a0] sm:$0xff]
    %v1350 = vld [vmem:[%s3 + $0x17a8] sm:$0xff]
    %v1351 = vld [vmem:[%s3 + $0x17b0] sm:$0xff]
    %v1352 = vld [vmem:[%s3 + $0x17b8] sm:$0xff]
    %v1353 = vld [vmem:[%s3 + $0x17c0] sm:$0xf]
    %v1354 = vld [vmem:[%s3 + $0x17c4] sm:$0xff]
    %v1355 = vld [vmem:[%s3 + $0x17cc] sm:$0xff]
    %v1356 = vld [vmem:[%s3 + $0x17d4] sm:$0xff]
    %v1357 = vld [vmem:[%s3 + $0x17dc] sm:$0xff]
    %v1358 = vld [vmem:[%s3 + $0x17e4] sm:$0xff]
    %v1359 = vld [vmem:[%s3 + $0x17ec] sm:$0xff]
    %v1360 = vld [vmem:[%s3 + $0x17f4] sm:$0xf]
    %v1361 = vld [vmem:[%s3 + $0x17f8] sm:$0xff]
    %v1362 = vld [vmem:[%s3 + $0x1800] sm:$0xff]
    %v1363 = vld [vmem:[%s3 + $0x1808] sm:$0xff]
    %v1364 = vld [vmem:[%s3 + $0x1810] sm:$0xff]
    %v1365 = vld [vmem:[%s3 + $0x1818] sm:$0xff]
    %v1366 = vld [vmem:[%s3 + $0x1820] sm:$0xff]
    %v1367 = vld [vmem:[%s3 + $0x1828] sm:$0xf]
    %v1368 = vld [vmem:[%s3 + $0x182c] sm:$0xff]
    %v1369 = vld [vmem:[%s3 + $0x1834] sm:$0xff]
    %v1370 = vld [vmem:[%s3 + $0x183c] sm:$0xff]
    %v1371 = vld [vmem:[%s3 + $0x1844] sm:$0xff]
    %v1372 = vld [vmem:[%s3 + $0x184c] sm:$0xff]
    %v1373 = vld [vmem:[%s3 + $0x1854] sm:$0xff]
    %v1374 = vld [vmem:[%s3 + $0x185c] sm:$0xf]
    %v1375 = vld [vmem:[%s3 + $0x1860] sm:$0xff]
    %v1376 = vld [vmem:[%s3 + $0x1868] sm:$0xff]
    %v1377 = vld [vmem:[%s3 + $0x1870] sm:$0xff]
    %v1378 = vld [vmem:[%s3 + $0x1878] sm:$0xff]
    %v1379 = vld [vmem:[%s3 + $0x1880] sm:$0xff]
    %v1380 = vld [vmem:[%s3 + $0x1888] sm:$0xff]
    %v1381 = vld [vmem:[%s3 + $0x1890] sm:$0xf]
    %v1382 = vld [vmem:[%s3 + $0x1894] sm:$0xff]
    %v1383 = vld [vmem:[%s3 + $0x189c] sm:$0xff]
    %v1384 = vld [vmem:[%s3 + $0x18a4] sm:$0xff]
    %v1385 = vld [vmem:[%s3 + $0x18ac] sm:$0xff]
    %v1386 = vld [vmem:[%s3 + $0x18b4] sm:$0xff]
    %v1387 = vld [vmem:[%s3 + $0x18bc] sm:$0xff]
    %v1388 = vld [vmem:[%s3 + $0x18c4] sm:$0xf]
    %v1389 = vld [vmem:[%s3 + $0x18c8] sm:$0xff]
    %v1390 = vld [vmem:[%s3 + $0x18d0] sm:$0xff]
    %v1391 = vld [vmem:[%s3 + $0x18d8] sm:$0xff]
    %v1392 = vld [vmem:[%s3 + $0x18e0] sm:$0xff]
    %v1393 = vld [vmem:[%s3 + $0x18e8] sm:$0xff]
    %v1394 = vld [vmem:[%s3 + $0x18f0] sm:$0xff]
    %v1395 = vld [vmem:[%s3 + $0x18f8] sm:$0xf]
    %v1396 = vld [vmem:[%s3 + $0x18fc] sm:$0xff]
    %v1397 = vld [vmem:[%s3 + $0x1904] sm:$0xff]
    %v1398 = vld [vmem:[%s3 + $0x190c] sm:$0xff]
    %v1399 = vld [vmem:[%s3 + $0x1914] sm:$0xff]
    %v1400 = vld [vmem:[%s3 + $0x191c] sm:$0xff]
    %v1401 = vld [vmem:[%s3 + $0x1924] sm:$0xff]
    %v1402 = vld [vmem:[%s3 + $0x192c] sm:$0xf]
    %v1403 = vld [vmem:[%s3 + $0x1930] sm:$0xff]
    %v1404 = vld [vmem:[%s3 + $0x1938] sm:$0xff]
    %v1405 = vld [vmem:[%s3 + $0x1940] sm:$0xff]
    %v1406 = vld [vmem:[%s3 + $0x1948] sm:$0xff]
    %v1407 = vld [vmem:[%s3 + $0x1950] sm:$0xff]
    %v1408 = vld [vmem:[%s3 + $0x1958] sm:$0xff]
    %v1409 = vld [vmem:[%s3 + $0x1960] sm:$0xf]
    %v1410 = vld [vmem:[%s3 + $0x1964] sm:$0xff]
    %v1411 = vld [vmem:[%s3 + $0x196c] sm:$0xff]
    %v1412 = vld [vmem:[%s3 + $0x1974] sm:$0xff]
    %v1413 = vld [vmem:[%s3 + $0x197c] sm:$0xff]
    %v1414 = vld [vmem:[%s3 + $0x1984] sm:$0xff]
    %v1415 = vld [vmem:[%s3 + $0x198c] sm:$0xff]
    %v1416 = vld [vmem:[%s3 + $0x1994] sm:$0xf]
    %v1417 = vld [vmem:[%s3 + $0x1998] sm:$0xff]
    %v1418 = vld [vmem:[%s3 + $0x19a0] sm:$0xff]
    %v1419 = vld [vmem:[%s3 + $0x19a8] sm:$0xff]
    %v1420 = vld [vmem:[%s3 + $0x19b0] sm:$0xff]
    %v1421 = vld [vmem:[%s3 + $0x19b8] sm:$0xff]
    %v1422 = vld [vmem:[%s3 + $0x19c0] sm:$0xff]
    %v1423 = vld [vmem:[%s3 + $0x19c8] sm:$0xf]
    %v1424 = vld [vmem:[%s3 + $0x19cc] sm:$0xff]
    %v1425 = vld [vmem:[%s3 + $0x19d4] sm:$0xff]
    %v1426 = vld [vmem:[%s3 + $0x19dc] sm:$0xff]
    %v1427 = vld [vmem:[%s3 + $0x19e4] sm:$0xff]
    %v1428 = vld [vmem:[%s3 + $0x19ec] sm:$0xff]
    %v1429 = vld [vmem:[%s3 + $0x19f4] sm:$0xff]
    %v1430 = vld [vmem:[%s3 + $0x19fc] sm:$0xf]
    %v1431 = vld [vmem:[%s3 + $0x1a00] sm:$0xff]
    %v1432 = vld [vmem:[%s3 + $0x1a08] sm:$0xff]
    %v1433 = vld [vmem:[%s3 + $0x1a10] sm:$0xff]
    %v1434 = vld [vmem:[%s3 + $0x1a18] sm:$0xff]
    %v1435 = vld [vmem:[%s3 + $0x1a20] sm:$0xff]
    %v1436 = vld [vmem:[%s3 + $0x1a28] sm:$0xff]
    %v1437 = vld [vmem:[%s3 + $0x1a30] sm:$0xf]
    %v1438 = vld [vmem:[%s3 + $0x1a34] sm:$0xff]
    %v1439 = vld [vmem:[%s3 + $0x1a3c] sm:$0xff]
    %v1440 = vld [vmem:[%s3 + $0x1a44] sm:$0xff]
    %v1441 = vld [vmem:[%s3 + $0x1a4c] sm:$0xff]
    %v1442 = vld [vmem:[%s3 + $0x1a54] sm:$0xff]
    %v1443 = vld [vmem:[%s3 + $0x1a5c] sm:$0xff]
    %v1444 = vld [vmem:[%s3 + $0x1a64] sm:$0xf]
    %v1445 = vld [vmem:[%s3 + $0x1a68] sm:$0xff]
    %v1446 = vld [vmem:[%s3 + $0x1a70] sm:$0xff]
    %v1447 = vld [vmem:[%s3 + $0x1a78] sm:$0xff]
    %v1448 = vld [vmem:[%s3 + $0x1a80] sm:$0xff]
    %v1449 = vld [vmem:[%s3 + $0x1a88] sm:$0xff]
    %v1450 = vld [vmem:[%s3 + $0x1a90] sm:$0xff]
    %v1451 = vld [vmem:[%s3 + $0x1a98] sm:$0xf]
    %v1452 = vld [vmem:[%s3 + $0x1a9c] sm:$0xff]
    %v1453 = vld [vmem:[%s3 + $0x1aa4] sm:$0xff]
    %v1454 = vld [vmem:[%s3 + $0x1aac] sm:$0xff]
    %v1455 = vld [vmem:[%s3 + $0x1ab4] sm:$0xff]
    %v1456 = vld [vmem:[%s3 + $0x1abc] sm:$0xff]
    %v1457 = vld [vmem:[%s3 + $0x1ac4] sm:$0xff]
    %v1458 = vld [vmem:[%s3 + $0x1acc] sm:$0xf]
    %v1459 = vld [vmem:[%s3 + $0x1ad0] sm:$0xff]
    %v1460 = vld [vmem:[%s3 + $0x1ad8] sm:$0xff]
    %v1461 = vld [vmem:[%s3 + $0x1ae0] sm:$0xff]
    %v1462 = vld [vmem:[%s3 + $0x1ae8] sm:$0xff]
    %v1463 = vld [vmem:[%s3 + $0x1af0] sm:$0xff]
    %v1464 = vld [vmem:[%s3 + $0x1af8] sm:$0xff]
    %v1465 = vld [vmem:[%s3 + $0x1b00] sm:$0xf]
    %v1466 = vld [vmem:[%s3 + $0x1b04] sm:$0xff]
    %v1467 = vld [vmem:[%s3 + $0x1b0c] sm:$0xff]
    %v1468 = vld [vmem:[%s3 + $0x1b14] sm:$0xff]
    %v1469 = vld [vmem:[%s3 + $0x1b1c] sm:$0xff]
    %v1470 = vld [vmem:[%s3 + $0x1b24] sm:$0xff]
    %v1471 = vld [vmem:[%s3 + $0x1b2c] sm:$0xff]
    %v1472 = vld [vmem:[%s3 + $0x1b34] sm:$0xf]
    %v1473 = vld [vmem:[%s3 + $0x1b38] sm:$0xff]
    %v1474 = vld [vmem:[%s3 + $0x1b40] sm:$0xff]
    %v1475 = vld [vmem:[%s3 + $0x1b48] sm:$0xff]
    %v1476 = vld [vmem:[%s3 + $0x1b50] sm:$0xff]
    %v1477 = vld [vmem:[%s3 + $0x1b58] sm:$0xff]
    %v1478 = vld [vmem:[%s3 + $0x1b60] sm:$0xff]
    %v1479 = vld [vmem:[%s3 + $0x1b68] sm:$0xf]
    %v1480 = vld [vmem:[%s3 + $0x1b6c] sm:$0xff]
    %v1481 = vld [vmem:[%s3 + $0x1b74] sm:$0xff]
    %v1482 = vld [vmem:[%s3 + $0x1b7c] sm:$0xff]
    %v1483 = vld [vmem:[%s3 + $0x1b84] sm:$0xff]
    %v1484 = vld [vmem:[%s3 + $0x1b8c] sm:$0xff]
    %v1485 = vld [vmem:[%s3 + $0x1b94] sm:$0xff]
    %v1486 = vld [vmem:[%s3 + $0x1b9c] sm:$0xf]
    %v1487 = vld [vmem:[%s3 + $0x1ba0] sm:$0xff]
    %v1488 = vld [vmem:[%s3 + $0x1ba8] sm:$0xff]
    %v1489 = vld [vmem:[%s3 + $0x1bb0] sm:$0xff]
    %v1490 = vld [vmem:[%s3 + $0x1bb8] sm:$0xff]
    %v1491 = vld [vmem:[%s3 + $0x1bc0] sm:$0xff]
    %v1492 = vld [vmem:[%s3 + $0x1bc8] sm:$0xff]
    %v1493 = vld [vmem:[%s3 + $0x1bd0] sm:$0xf]
    %v1494 = vld [vmem:[%s3 + $0x1bd4] sm:$0xff]
    %v1495 = vld [vmem:[%s3 + $0x1bdc] sm:$0xff]
    %v1496 = vld [vmem:[%s3 + $0x1be4] sm:$0xff]
    %v1497 = vld [vmem:[%s3 + $0x1bec] sm:$0xff]
    %v1498 = vld [vmem:[%s3 + $0x1bf4] sm:$0xff]
    %v1499 = vld [vmem:[%s3 + $0x1bfc] sm:$0xff]
    %v1500 = vld [vmem:[%s3 + $0x1c04] sm:$0xf]
    %v1501 = vld [vmem:[%s3 + $0x1c08] sm:$0xff]
    %v1502 = vld [vmem:[%s3 + $0x1c10] sm:$0xff]
    %v1503 = vld [vmem:[%s3 + $0x1c18] sm:$0xff]
    %v1504 = vld [vmem:[%s3 + $0x1c20] sm:$0xff]
    %v1505 = vld [vmem:[%s3 + $0x1c28] sm:$0xff]
    %v1506 = vld [vmem:[%s3 + $0x1c30] sm:$0xff]
    %v1507 = vld [vmem:[%s3 + $0x1c38] sm:$0xf]
    %v1508 = vld [vmem:[%s3 + $0x1c3c] sm:$0xff]
    %v1509 = vld [vmem:[%s3 + $0x1c44] sm:$0xff]
    %v1510 = vld [vmem:[%s3 + $0x1c4c] sm:$0xff]
    %v1511 = vld [vmem:[%s3 + $0x1c54] sm:$0xff]
    %v1512 = vld [vmem:[%s3 + $0x1c5c] sm:$0xff]
    %v1513 = vld [vmem:[%s3 + $0x1c64] sm:$0xff]
    %v1514 = vld [vmem:[%s3 + $0x1c6c] sm:$0xf]
    %v1515 = vld [vmem:[%s3 + $0x1c70] sm:$0xff]
    %v1516 = vld [vmem:[%s3 + $0x1c78] sm:$0xff]
    %v1517 = vld [vmem:[%s3 + $0x1c80] sm:$0xff]
    %v1518 = vld [vmem:[%s3 + $0x1c88] sm:$0xff]
    %v1519 = vld [vmem:[%s3 + $0x1c90] sm:$0xff]
    %v1520 = vld [vmem:[%s3 + $0x1c98] sm:$0xff]
    %v1521 = vld [vmem:[%s3 + $0x1ca0] sm:$0xf]
    %v1522 = vld [vmem:[%s3 + $0x1ca4] sm:$0xff]
    %v1523 = vld [vmem:[%s3 + $0x1cac] sm:$0xff]
    %v1524 = vld [vmem:[%s3 + $0x1cb4] sm:$0xff]
    %v1525 = vld [vmem:[%s3 + $0x1cbc] sm:$0xff]
    %v1526 = vld [vmem:[%s3 + $0x1cc4] sm:$0xff]
    %v1527 = vld [vmem:[%s3 + $0x1ccc] sm:$0xff]
    %v1528 = vld [vmem:[%s3 + $0x1cd4] sm:$0xf]
    %v1529 = vld [vmem:[%s3 + $0x1cd8] sm:$0xff]
    %v1530 = vld [vmem:[%s3 + $0x1ce0] sm:$0xff]
    %v1531 = vld [vmem:[%s3 + $0x1ce8] sm:$0xff]
    %v1532 = vld [vmem:[%s3 + $0x1cf0] sm:$0xff]
    %v1533 = vld [vmem:[%s3 + $0x1cf8] sm:$0xff]
    %v1534 = vld [vmem:[%s3 + $0x1d00] sm:$0xff]
    %v1535 = vld [vmem:[%s3 + $0x1d08] sm:$0xf]
    %v1536 = vld [vmem:[%s3 + $0x1d0c] sm:$0xff]
    %v1537 = vld [vmem:[%s3 + $0x1d14] sm:$0xff]
    %v1538 = vld [vmem:[%s3 + $0x1d1c] sm:$0xff]
    %v1539 = vld [vmem:[%s3 + $0x1d24] sm:$0xff]
    %v1540 = vld [vmem:[%s3 + $0x1d2c] sm:$0xff]
    %v1541 = vld [vmem:[%s3 + $0x1d34] sm:$0xff]
    %v1542 = vld [vmem:[%s3 + $0x1d3c] sm:$0xf]
    %v1543 = vld [vmem:[%s4] sm:$0xff]
    %v1544 = vld [vmem:[%s4 + $0x8] sm:$0x1f]
    %v1547 = vlaneseq
    %v1548 = vshrl.u32 %v1547, 7
    %v1549 = vsub.s32 0, %v1548
    %v1550 = vrot.slane %v1543, %v1549
    %v1551 = vlaneseq
    %v1552 = vshrl.u32 %v1551, 7
    %v1553 = vsub.s32 1, %v1552
    %v1554 = vrot.slane %v1543, %v1553
    %v1555 = vlaneseq
    %v1556 = vshrl.u32 %v1555, 7
    %v1557 = vsub.s32 2, %v1556
    %v1558 = vrot.slane %v1543, %v1557
    %v1559 = vlaneseq
    %v1560 = vshrl.u32 %v1559, 7
    %v1561 = vsub.s32 3, %v1560
    %v1562 = vrot.slane %v1543, %v1561
    %v1563 = vlaneseq
    %v1564 = vshrl.u32 %v1563, 7
    %v1565 = vsub.s32 4, %v1564
    %v1566 = vrot.slane %v1543, %v1565
    %v1567 = vlaneseq
    %v1568 = vshrl.u32 %v1567, 7
    %v1569 = vsub.s32 5, %v1568
    %v1570 = vrot.slane %v1543, %v1569
    %v1571 = vlaneseq
    %v1572 = vshrl.u32 %v1571, 7
    %v1573 = vsub.s32 6, %v1572
    %v1574 = vrot.slane %v1543, %v1573
    %v1575 = vlaneseq
    %v1576 = vshrl.u32 %v1575, 7
    %v1577 = vsub.s32 7, %v1576
    %v1578 = vrot.slane %v1543, %v1577
    %v1579 = vlaneseq
    %v1580 = vshrl.u32 %v1579, 7
    %v1581 = vsub.s32 0, %v1580
    %v1582 = vrot.slane %v1544, %v1581
    %v1583 = vlaneseq
    %v1584 = vshrl.u32 %v1583, 7
    %v1585 = vsub.s32 1, %v1584
    %v1586 = vrot.slane %v1544, %v1585
    %v1587 = vlaneseq
    %v1588 = vshrl.u32 %v1587, 7
    %v1589 = vsub.s32 2, %v1588
    %v1590 = vrot.slane %v1544, %v1589
    %v1591 = vlaneseq
    %v1592 = vshrl.u32 %v1591, 7
    %v1593 = vsub.s32 3, %v1592
    %v1594 = vrot.slane %v1544, %v1593
    %v1595 = vlaneseq
    %v1596 = vshrl.u32 %v1595, 7
    %v1597 = vsub.s32 4, %v1596
    %v1598 = vrot.slane %v1544, %v1597
    %v2620 = vunpack.c.l.b16 %v535
    %v2621 = vunpack.c.h.b16 %v535
    %v2622 = vunpack.c.l.b16 %v536
    %v2623 = vunpack.c.h.b16 %v536
    %v2624 = vunpack.c.l.b16 %v537
    %v2625 = vunpack.c.h.b16 %v537
    %v2626 = vunpack.c.l.b16 %v538
    %v2627 = vunpack.c.h.b16 %v538
    %v2628 = vunpack.c.l.b16 %v539
    %v2629 = vunpack.c.h.b16 %v539
    %v2630 = vunpack.c.l.b16 %v540
    %v2631 = vunpack.c.h.b16 %v540
    %v2632 = vunpack.c.l.b16 %v541
    %v2633 = vunpack.c.l.b16 %v542
    %v2634 = vunpack.c.h.b16 %v542
    %v2635 = vunpack.c.l.b16 %v543
    %v2636 = vunpack.c.h.b16 %v543
    %v2637 = vunpack.c.l.b16 %v544
    %v2638 = vunpack.c.h.b16 %v544
    %v2639 = vunpack.c.l.b16 %v545
    %v2640 = vunpack.c.h.b16 %v545
    %v2641 = vunpack.c.l.b16 %v546
    %v2642 = vunpack.c.h.b16 %v546
    %v2643 = vunpack.c.l.b16 %v547
    %v2644 = vunpack.c.h.b16 %v547
    %v2645 = vunpack.c.l.b16 %v548
    %v2646 = vunpack.c.l.b16 %v549
    %v2647 = vunpack.c.h.b16 %v549
    %v2648 = vunpack.c.l.b16 %v550
    %v2649 = vunpack.c.h.b16 %v550
    %v2650 = vunpack.c.l.b16 %v551
    %v2651 = vunpack.c.h.b16 %v551
    %v2652 = vunpack.c.l.b16 %v552
    %v2653 = vunpack.c.h.b16 %v552
    %v2654 = vunpack.c.l.b16 %v553
    %v2655 = vunpack.c.h.b16 %v553
    %v2656 = vunpack.c.l.b16 %v554
    %v2657 = vunpack.c.h.b16 %v554
    %v2658 = vunpack.c.l.b16 %v555
    %v2659 = vunpack.c.l.b16 %v556
    %v2660 = vunpack.c.h.b16 %v556
    %v2661 = vunpack.c.l.b16 %v557
    %v2662 = vunpack.c.h.b16 %v557
    %v2663 = vunpack.c.l.b16 %v558
    %v2664 = vunpack.c.h.b16 %v558
    %v2665 = vunpack.c.l.b16 %v559
    %v2666 = vunpack.c.h.b16 %v559
    %v2667 = vunpack.c.l.b16 %v560
    %v2668 = vunpack.c.h.b16 %v560
    %v2669 = vunpack.c.l.b16 %v561
    %v2670 = vunpack.c.h.b16 %v561
    %v2671 = vunpack.c.l.b16 %v562
    %v2672 = vunpack.c.l.b16 %v563
    %v2673 = vunpack.c.h.b16 %v563
    %v2674 = vunpack.c.l.b16 %v564
    %v2675 = vunpack.c.h.b16 %v564
    %v2676 = vunpack.c.l.b16 %v565
    %v2677 = vunpack.c.h.b16 %v565
    %v2678 = vunpack.c.l.b16 %v566
    %v2679 = vunpack.c.h.b16 %v566
    %v2680 = vunpack.c.l.b16 %v567
    %v2681 = vunpack.c.h.b16 %v567
    %v2682 = vunpack.c.l.b16 %v568
    %v2683 = vunpack.c.h.b16 %v568
    %v2684 = vunpack.c.l.b16 %v569
    %v2685 = vunpack.c.l.b16 %v570
    %v2686 = vunpack.c.h.b16 %v570
    %v2687 = vunpack.c.l.b16 %v571
    %v2688 = vunpack.c.h.b16 %v571
    %v2689 = vunpack.c.l.b16 %v572
    %v2690 = vunpack.c.h.b16 %v572
    %v2691 = vunpack.c.l.b16 %v573
    %v2692 = vunpack.c.h.b16 %v573
    %v2693 = vunpack.c.l.b16 %v574
    %v2694 = vunpack.c.h.b16 %v574
    %v2695 = vunpack.c.l.b16 %v575
    %v2696 = vunpack.c.h.b16 %v575
    %v2697 = vunpack.c.l.b16 %v576
    %v2698 = vunpack.c.l.b16 %v577
    %v2699 = vunpack.c.h.b16 %v577
    %v2700 = vunpack.c.l.b16 %v578
    %v2701 = vunpack.c.h.b16 %v578
    %v2702 = vunpack.c.l.b16 %v579
    %v2703 = vunpack.c.h.b16 %v579
    %v2704 = vunpack.c.l.b16 %v580
    %v2705 = vunpack.c.h.b16 %v580
    %v2706 = vunpack.c.l.b16 %v581
    %v2707 = vunpack.c.h.b16 %v581
    %v2708 = vunpack.c.l.b16 %v582
    %v2709 = vunpack.c.h.b16 %v582
    %v2710 = vunpack.c.l.b16 %v583
    %v2711 = vunpack.c.l.b16 %v584
    %v2712 = vunpack.c.h.b16 %v584
    %v2713 = vunpack.c.l.b16 %v585
    %v2714 = vunpack.c.h.b16 %v585
    %v2715 = vunpack.c.l.b16 %v586
    %v2716 = vunpack.c.h.b16 %v586
    %v2717 = vunpack.c.l.b16 %v587
    %v2718 = vunpack.c.h.b16 %v587
    %v2719 = vunpack.c.l.b16 %v588
    %v2720 = vunpack.c.h.b16 %v588
    %v2721 = vunpack.c.l.b16 %v589
    %v2722 = vunpack.c.h.b16 %v589
    %v2723 = vunpack.c.l.b16 %v590
    %v2724 = vunpack.c.l.b16 %v591
    %v2725 = vunpack.c.h.b16 %v591
    %v2726 = vunpack.c.l.b16 %v592
    %v2727 = vunpack.c.h.b16 %v592
    %v2728 = vunpack.c.l.b16 %v593
    %v2729 = vunpack.c.h.b16 %v593
    %v2730 = vunpack.c.l.b16 %v594
    %v2731 = vunpack.c.h.b16 %v594
    %v2732 = vunpack.c.l.b16 %v595
    %v2733 = vunpack.c.h.b16 %v595
    %v2734 = vunpack.c.l.b16 %v596
    %v2735 = vunpack.c.h.b16 %v596
    %v2736 = vunpack.c.l.b16 %v597
    %v2737 = vunpack.c.l.b16 %v598
    %v2738 = vunpack.c.h.b16 %v598
    %v2739 = vunpack.c.l.b16 %v599
    %v2740 = vunpack.c.h.b16 %v599
    %v2741 = vunpack.c.l.b16 %v600
    %v2742 = vunpack.c.h.b16 %v600
    %v2743 = vunpack.c.l.b16 %v601
    %v2744 = vunpack.c.h.b16 %v601
    %v2745 = vunpack.c.l.b16 %v602
    %v2746 = vunpack.c.h.b16 %v602
    %v2747 = vunpack.c.l.b16 %v603
    %v2748 = vunpack.c.h.b16 %v603
    %v2749 = vunpack.c.l.b16 %v604
    %v2750 = vunpack.c.l.b16 %v605
    %v2751 = vunpack.c.h.b16 %v605
    %v2752 = vunpack.c.l.b16 %v606
    %v2753 = vunpack.c.h.b16 %v606
    %v2754 = vunpack.c.l.b16 %v607
    %v2755 = vunpack.c.h.b16 %v607
    %v2756 = vunpack.c.l.b16 %v608
    %v2757 = vunpack.c.h.b16 %v608
    %v2758 = vunpack.c.l.b16 %v609
    %v2759 = vunpack.c.h.b16 %v609
    %v2760 = vunpack.c.l.b16 %v610
    %v2761 = vunpack.c.h.b16 %v610
    %v2762 = vunpack.c.l.b16 %v611
    %v2763 = vunpack.c.l.b16 %v612
    %v2764 = vunpack.c.h.b16 %v612
    %v2765 = vunpack.c.l.b16 %v613
    %v2766 = vunpack.c.h.b16 %v613
    %v2767 = vunpack.c.l.b16 %v614
    %v2768 = vunpack.c.h.b16 %v614
    %v2769 = vunpack.c.l.b16 %v615
    %v2770 = vunpack.c.h.b16 %v615
    %v2771 = vunpack.c.l.b16 %v616
    %v2772 = vunpack.c.h.b16 %v616
    %v2773 = vunpack.c.l.b16 %v617
    %v2774 = vunpack.c.h.b16 %v617
    %v2775 = vunpack.c.l.b16 %v618
    %v2776 = vunpack.c.l.b16 %v619
    %v2777 = vunpack.c.h.b16 %v619
    %v2778 = vunpack.c.l.b16 %v620
    %v2779 = vunpack.c.h.b16 %v620
    %v2780 = vunpack.c.l.b16 %v621
    %v2781 = vunpack.c.h.b16 %v621
    %v2782 = vunpack.c.l.b16 %v622
    %v2783 = vunpack.c.h.b16 %v622
    %v2784 = vunpack.c.l.b16 %v623
    %v2785 = vunpack.c.h.b16 %v623
    %v2786 = vunpack.c.l.b16 %v624
    %v2787 = vunpack.c.h.b16 %v624
    %v2788 = vunpack.c.l.b16 %v625
    %v2789 = vunpack.c.l.b16 %v626
    %v2790 = vunpack.c.h.b16 %v626
    %v2791 = vunpack.c.l.b16 %v627
    %v2792 = vunpack.c.h.b16 %v627
    %v2793 = vunpack.c.l.b16 %v628
    %v2794 = vunpack.c.h.b16 %v628
    %v2795 = vunpack.c.l.b16 %v629
    %v2796 = vunpack.c.h.b16 %v629
    %v2797 = vunpack.c.l.b16 %v630
    %v2798 = vunpack.c.h.b16 %v630
    %v2799 = vunpack.c.l.b16 %v631
    %v2800 = vunpack.c.h.b16 %v631
    %v2801 = vunpack.c.l.b16 %v632
    %v2802 = vunpack.c.l.b16 %v633
    %v2803 = vunpack.c.h.b16 %v633
    %v2804 = vunpack.c.l.b16 %v634
    %v2805 = vunpack.c.h.b16 %v634
    %v2806 = vunpack.c.l.b16 %v635
    %v2807 = vunpack.c.h.b16 %v635
    %v2808 = vunpack.c.l.b16 %v636
    %v2809 = vunpack.c.h.b16 %v636
    %v2810 = vunpack.c.l.b16 %v637
    %v2811 = vunpack.c.h.b16 %v637
    %v2812 = vunpack.c.l.b16 %v638
    %v2813 = vunpack.c.h.b16 %v638
    %v2814 = vunpack.c.l.b16 %v639
    %v2815 = vunpack.c.l.b16 %v640
    %v2816 = vunpack.c.h.b16 %v640
    %v2817 = vunpack.c.l.b16 %v641
    %v2818 = vunpack.c.h.b16 %v641
    %v2819 = vunpack.c.l.b16 %v642
    %v2820 = vunpack.c.h.b16 %v642
    %v2821 = vunpack.c.l.b16 %v643
    %v2822 = vunpack.c.h.b16 %v643
    %v2823 = vunpack.c.l.b16 %v644
    %v2824 = vunpack.c.h.b16 %v644
    %v2825 = vunpack.c.l.b16 %v645
    %v2826 = vunpack.c.h.b16 %v645
    %v2827 = vunpack.c.l.b16 %v646
    %v2828 = vunpack.c.l.b16 %v647
    %v2829 = vunpack.c.h.b16 %v647
    %v2830 = vunpack.c.l.b16 %v648
    %v2831 = vunpack.c.h.b16 %v648
    %v2832 = vunpack.c.l.b16 %v649
    %v2833 = vunpack.c.h.b16 %v649
    %v2834 = vunpack.c.l.b16 %v650
    %v2835 = vunpack.c.h.b16 %v650
    %v2836 = vunpack.c.l.b16 %v651
    %v2837 = vunpack.c.h.b16 %v651
    %v2838 = vunpack.c.l.b16 %v652
    %v2839 = vunpack.c.h.b16 %v652
    %v2840 = vunpack.c.l.b16 %v653
    %v2841 = vunpack.c.l.b16 %v654
    %v2842 = vunpack.c.h.b16 %v654
    %v2843 = vunpack.c.l.b16 %v655
    %v2844 = vunpack.c.h.b16 %v655
    %v2845 = vunpack.c.l.b16 %v656
    %v2846 = vunpack.c.h.b16 %v656
    %v2847 = vunpack.c.l.b16 %v657
    %v2848 = vunpack.c.h.b16 %v657
    %v2849 = vunpack.c.l.b16 %v658
    %v2850 = vunpack.c.h.b16 %v658
    %v2851 = vunpack.c.l.b16 %v659
    %v2852 = vunpack.c.h.b16 %v659
    %v2853 = vunpack.c.l.b16 %v660
    %v2854 = vunpack.c.l.b16 %v661
    %v2855 = vunpack.c.h.b16 %v661
    %v2856 = vunpack.c.l.b16 %v662
    %v2857 = vunpack.c.h.b16 %v662
    %v2858 = vunpack.c.l.b16 %v663
    %v2859 = vunpack.c.h.b16 %v663
    %v2860 = vunpack.c.l.b16 %v664
    %v2861 = vunpack.c.h.b16 %v664
    %v2862 = vunpack.c.l.b16 %v665
    %v2863 = vunpack.c.h.b16 %v665
    %v2864 = vunpack.c.l.b16 %v666
    %v2865 = vunpack.c.h.b16 %v666
    %v2866 = vunpack.c.l.b16 %v667
    %v2867 = vunpack.c.l.b16 %v668
    %v2868 = vunpack.c.h.b16 %v668
    %v2869 = vunpack.c.l.b16 %v669
    %v2870 = vunpack.c.h.b16 %v669
    %v2871 = vunpack.c.l.b16 %v670
    %v2872 = vunpack.c.h.b16 %v670
    %v2873 = vunpack.c.l.b16 %v671
    %v2874 = vunpack.c.h.b16 %v671
    %v2875 = vunpack.c.l.b16 %v672
    %v2876 = vunpack.c.h.b16 %v672
    %v2877 = vunpack.c.l.b16 %v673
    %v2878 = vunpack.c.h.b16 %v673
    %v2879 = vunpack.c.l.b16 %v674
    %v2880 = vunpack.c.l.b16 %v675
    %v2881 = vunpack.c.h.b16 %v675
    %v2882 = vunpack.c.l.b16 %v676
    %v2883 = vunpack.c.h.b16 %v676
    %v2884 = vunpack.c.l.b16 %v677
    %v2885 = vunpack.c.h.b16 %v677
    %v2886 = vunpack.c.l.b16 %v678
    %v2887 = vunpack.c.h.b16 %v678
    %v2888 = vunpack.c.l.b16 %v679
    %v2889 = vunpack.c.h.b16 %v679
    %v2890 = vunpack.c.l.b16 %v680
    %v2891 = vunpack.c.h.b16 %v680
    %v2892 = vunpack.c.l.b16 %v681
    %v2893 = vunpack.c.l.b16 %v682
    %v2894 = vunpack.c.h.b16 %v682
    %v2895 = vunpack.c.l.b16 %v683
    %v2896 = vunpack.c.h.b16 %v683
    %v2897 = vunpack.c.l.b16 %v684
    %v2898 = vunpack.c.h.b16 %v684
    %v2899 = vunpack.c.l.b16 %v685
    %v2900 = vunpack.c.h.b16 %v685
    %v2901 = vunpack.c.l.b16 %v686
    %v2902 = vunpack.c.h.b16 %v686
    %v2903 = vunpack.c.l.b16 %v687
    %v2904 = vunpack.c.h.b16 %v687
    %v2905 = vunpack.c.l.b16 %v688
    %v2906 = vunpack.c.l.b16 %v689
    %v2907 = vunpack.c.h.b16 %v689
    %v2908 = vunpack.c.l.b16 %v690
    %v2909 = vunpack.c.h.b16 %v690
    %v2910 = vunpack.c.l.b16 %v691
    %v2911 = vunpack.c.h.b16 %v691
    %v2912 = vunpack.c.l.b16 %v692
    %v2913 = vunpack.c.h.b16 %v692
    %v2914 = vunpack.c.l.b16 %v693
    %v2915 = vunpack.c.h.b16 %v693
    %v2916 = vunpack.c.l.b16 %v694
    %v2917 = vunpack.c.h.b16 %v694
    %v2918 = vunpack.c.l.b16 %v695
    %v2919 = vunpack.c.l.b16 %v696
    %v2920 = vunpack.c.h.b16 %v696
    %v2921 = vunpack.c.l.b16 %v697
    %v2922 = vunpack.c.h.b16 %v697
    %v2923 = vunpack.c.l.b16 %v698
    %v2924 = vunpack.c.h.b16 %v698
    %v2925 = vunpack.c.l.b16 %v699
    %v2926 = vunpack.c.h.b16 %v699
    %v2927 = vunpack.c.l.b16 %v700
    %v2928 = vunpack.c.h.b16 %v700
    %v2929 = vunpack.c.l.b16 %v701
    %v2930 = vunpack.c.h.b16 %v701
    %v2931 = vunpack.c.l.b16 %v702
    %v2932 = vunpack.c.l.b16 %v703
    %v2933 = vunpack.c.h.b16 %v703
    %v2934 = vunpack.c.l.b16 %v704
    %v2935 = vunpack.c.h.b16 %v704
    %v2936 = vunpack.c.l.b16 %v705
    %v2937 = vunpack.c.h.b16 %v705
    %v2938 = vunpack.c.l.b16 %v706
    %v2939 = vunpack.c.h.b16 %v706
    %v2940 = vunpack.c.l.b16 %v707
    %v2941 = vunpack.c.h.b16 %v707
    %v2942 = vunpack.c.l.b16 %v708
    %v2943 = vunpack.c.h.b16 %v708
    %v2944 = vunpack.c.l.b16 %v709
    %v2945 = vunpack.c.l.b16 %v710
    %v2946 = vunpack.c.h.b16 %v710
    %v2947 = vunpack.c.l.b16 %v711
    %v2948 = vunpack.c.h.b16 %v711
    %v2949 = vunpack.c.l.b16 %v712
    %v2950 = vunpack.c.h.b16 %v712
    %v2951 = vunpack.c.l.b16 %v713
    %v2952 = vunpack.c.h.b16 %v713
    %v2953 = vunpack.c.l.b16 %v714
    %v2954 = vunpack.c.h.b16 %v714
    %v2955 = vunpack.c.l.b16 %v715
    %v2956 = vunpack.c.h.b16 %v715
    %v2957 = vunpack.c.l.b16 %v716
    %v2958 = vunpack.c.l.b16 %v717
    %v2959 = vunpack.c.h.b16 %v717
    %v2960 = vunpack.c.l.b16 %v718
    %v2961 = vunpack.c.h.b16 %v718
    %v2962 = vunpack.c.l.b16 %v719
    %v2963 = vunpack.c.h.b16 %v719
    %v2964 = vunpack.c.l.b16 %v720
    %v2965 = vunpack.c.h.b16 %v720
    %v2966 = vunpack.c.l.b16 %v721
    %v2967 = vunpack.c.h.b16 %v721
    %v2968 = vunpack.c.l.b16 %v722
    %v2969 = vunpack.c.h.b16 %v722
    %v2970 = vunpack.c.l.b16 %v723
    %v2971 = vunpack.c.l.b16 %v724
    %v2972 = vunpack.c.h.b16 %v724
    %v2973 = vunpack.c.l.b16 %v725
    %v2974 = vunpack.c.h.b16 %v725
    %v2975 = vunpack.c.l.b16 %v726
    %v2976 = vunpack.c.h.b16 %v726
    %v2977 = vunpack.c.l.b16 %v727
    %v2978 = vunpack.c.h.b16 %v727
    %v2979 = vunpack.c.l.b16 %v728
    %v2980 = vunpack.c.h.b16 %v728
    %v2981 = vunpack.c.l.b16 %v729
    %v2982 = vunpack.c.h.b16 %v729
    %v2983 = vunpack.c.l.b16 %v730
    %v2984 = vunpack.c.l.b16 %v731
    %v2985 = vunpack.c.h.b16 %v731
    %v2986 = vunpack.c.l.b16 %v732
    %v2987 = vunpack.c.h.b16 %v732
    %v2988 = vunpack.c.l.b16 %v733
    %v2989 = vunpack.c.h.b16 %v733
    %v2990 = vunpack.c.l.b16 %v734
    %v2991 = vunpack.c.h.b16 %v734
    %v2992 = vunpack.c.l.b16 %v735
    %v2993 = vunpack.c.h.b16 %v735
    %v2994 = vunpack.c.l.b16 %v736
    %v2995 = vunpack.c.h.b16 %v736
    %v2996 = vunpack.c.l.b16 %v737
    %v2997 = vunpack.c.l.b16 %v738
    %v2998 = vunpack.c.h.b16 %v738
    %v2999 = vunpack.c.l.b16 %v739
    %v3000 = vunpack.c.h.b16 %v739
    %v3001 = vunpack.c.l.b16 %v740
    %v3002 = vunpack.c.h.b16 %v740
    %v3003 = vunpack.c.l.b16 %v741
    %v3004 = vunpack.c.h.b16 %v741
    %v3005 = vunpack.c.l.b16 %v742
    %v3006 = vunpack.c.h.b16 %v742
    %v3007 = vunpack.c.l.b16 %v743
    %v3008 = vunpack.c.h.b16 %v743
    %v3009 = vunpack.c.l.b16 %v744
    %v3010 = vunpack.c.l.b16 %v745
    %v3011 = vunpack.c.h.b16 %v745
    %v3012 = vunpack.c.l.b16 %v746
    %v3013 = vunpack.c.h.b16 %v746
    %v3014 = vunpack.c.l.b16 %v747
    %v3015 = vunpack.c.h.b16 %v747
    %v3016 = vunpack.c.l.b16 %v748
    %v3017 = vunpack.c.h.b16 %v748
    %v3018 = vunpack.c.l.b16 %v749
    %v3019 = vunpack.c.h.b16 %v749
    %v3020 = vunpack.c.l.b16 %v750
    %v3021 = vunpack.c.h.b16 %v750
    %v3022 = vunpack.c.l.b16 %v751
    %v3023 = vunpack.c.l.b16 %v752
    %v3024 = vunpack.c.h.b16 %v752
    %v3025 = vunpack.c.l.b16 %v753
    %v3026 = vunpack.c.h.b16 %v753
    %v3027 = vunpack.c.l.b16 %v754
    %v3028 = vunpack.c.h.b16 %v754
    %v3029 = vunpack.c.l.b16 %v755
    %v3030 = vunpack.c.h.b16 %v755
    %v3031 = vunpack.c.l.b16 %v756
    %v3032 = vunpack.c.h.b16 %v756
    %v3033 = vunpack.c.l.b16 %v757
    %v3034 = vunpack.c.h.b16 %v757
    %v3035 = vunpack.c.l.b16 %v758
    %v3036 = vunpack.c.l.b16 %v759
    %v3037 = vunpack.c.h.b16 %v759
    %v3038 = vunpack.c.l.b16 %v760
    %v3039 = vunpack.c.h.b16 %v760
    %v3040 = vunpack.c.l.b16 %v761
    %v3041 = vunpack.c.h.b16 %v761
    %v3042 = vunpack.c.l.b16 %v762
    %v3043 = vunpack.c.h.b16 %v762
    %v3044 = vunpack.c.l.b16 %v763
    %v3045 = vunpack.c.h.b16 %v763
    %v3046 = vunpack.c.l.b16 %v764
    %v3047 = vunpack.c.h.b16 %v764
    %v3048 = vunpack.c.l.b16 %v765
    %v3049 = vunpack.c.l.b16 %v766
    %v3050 = vunpack.c.h.b16 %v766
    %v3051 = vunpack.c.l.b16 %v767
    %v3052 = vunpack.c.h.b16 %v767
    %v3053 = vunpack.c.l.b16 %v768
    %v3054 = vunpack.c.h.b16 %v768
    %v3055 = vunpack.c.l.b16 %v769
    %v3056 = vunpack.c.h.b16 %v769
    %v3057 = vunpack.c.l.b16 %v770
    %v3058 = vunpack.c.h.b16 %v770
    %v3059 = vunpack.c.l.b16 %v771
    %v3060 = vunpack.c.h.b16 %v771
    %v3061 = vunpack.c.l.b16 %v772
    %v3062 = vunpack.c.l.b16 %v773
    %v3063 = vunpack.c.h.b16 %v773
    %v3064 = vunpack.c.l.b16 %v774
    %v3065 = vunpack.c.h.b16 %v774
    %v3066 = vunpack.c.l.b16 %v775
    %v3067 = vunpack.c.h.b16 %v775
    %v3068 = vunpack.c.l.b16 %v776
    %v3069 = vunpack.c.h.b16 %v776
    %v3070 = vunpack.c.l.b16 %v777
    %v3071 = vunpack.c.h.b16 %v777
    %v3072 = vunpack.c.l.b16 %v778
    %v3073 = vunpack.c.h.b16 %v778
    %v3074 = vunpack.c.l.b16 %v779
    %v3075 = vunpack.c.l.b16 %v780
    %v3076 = vunpack.c.h.b16 %v780
    %v3077 = vunpack.c.l.b16 %v781
    %v3078 = vunpack.c.h.b16 %v781
    %v3079 = vunpack.c.l.b16 %v782
    %v3080 = vunpack.c.h.b16 %v782
    %v3081 = vunpack.c.l.b16 %v783
    %v3082 = vunpack.c.h.b16 %v783
    %v3083 = vunpack.c.l.b16 %v784
    %v3084 = vunpack.c.h.b16 %v784
    %v3085 = vunpack.c.l.b16 %v785
    %v3086 = vunpack.c.h.b16 %v785
    %v3087 = vunpack.c.l.b16 %v786
    %v3088 = vunpack.c.l.b16 %v787
    %v3089 = vunpack.c.h.b16 %v787
    %v3090 = vunpack.c.l.b16 %v788
    %v3091 = vunpack.c.h.b16 %v788
    %v3092 = vunpack.c.l.b16 %v789
    %v3093 = vunpack.c.h.b16 %v789
    %v3094 = vunpack.c.l.b16 %v790
    %v3095 = vunpack.c.h.b16 %v790
    %v3096 = vunpack.c.l.b16 %v791
    %v3097 = vunpack.c.h.b16 %v791
    %v3098 = vunpack.c.l.b16 %v792
    %v3099 = vunpack.c.h.b16 %v792
    %v3100 = vunpack.c.l.b16 %v793
    %v3101 = vunpack.c.l.b16 %v794
    %v3102 = vunpack.c.h.b16 %v794
    %v3103 = vunpack.c.l.b16 %v795
    %v3104 = vunpack.c.h.b16 %v795
    %v3105 = vunpack.c.l.b16 %v796
    %v3106 = vunpack.c.h.b16 %v796
    %v3107 = vunpack.c.l.b16 %v797
    %v3108 = vunpack.c.h.b16 %v797
    %v3109 = vunpack.c.l.b16 %v798
    %v3110 = vunpack.c.h.b16 %v798
    %v3111 = vunpack.c.l.b16 %v799
    %v3112 = vunpack.c.h.b16 %v799
    %v3113 = vunpack.c.l.b16 %v800
    %v3114 = vunpack.c.l.b16 %v801
    %v3115 = vunpack.c.h.b16 %v801
    %v3116 = vunpack.c.l.b16 %v802
    %v3117 = vunpack.c.h.b16 %v802
    %v3118 = vunpack.c.l.b16 %v803
    %v3119 = vunpack.c.h.b16 %v803
    %v3120 = vunpack.c.l.b16 %v804
    %v3121 = vunpack.c.h.b16 %v804
    %v3122 = vunpack.c.l.b16 %v805
    %v3123 = vunpack.c.h.b16 %v805
    %v3124 = vunpack.c.l.b16 %v806
    %v3125 = vunpack.c.h.b16 %v806
    %v3126 = vunpack.c.l.b16 %v807
    %v3127 = vunpack.c.l.b16 %v808
    %v3128 = vunpack.c.h.b16 %v808
    %v3129 = vunpack.c.l.b16 %v809
    %v3130 = vunpack.c.h.b16 %v809
    %v3131 = vunpack.c.l.b16 %v810
    %v3132 = vunpack.c.h.b16 %v810
    %v3133 = vunpack.c.l.b16 %v811
    %v3134 = vunpack.c.h.b16 %v811
    %v3135 = vunpack.c.l.b16 %v812
    %v3136 = vunpack.c.h.b16 %v812
    %v3137 = vunpack.c.l.b16 %v813
    %v3138 = vunpack.c.h.b16 %v813
    %v3139 = vunpack.c.l.b16 %v814
    %v3140 = vunpack.c.l.b16 %v815
    %v3141 = vunpack.c.h.b16 %v815
    %v3142 = vunpack.c.l.b16 %v816
    %v3143 = vunpack.c.h.b16 %v816
    %v3144 = vunpack.c.l.b16 %v817
    %v3145 = vunpack.c.h.b16 %v817
    %v3146 = vunpack.c.l.b16 %v818
    %v3147 = vunpack.c.h.b16 %v818
    %v3148 = vunpack.c.l.b16 %v819
    %v3149 = vunpack.c.h.b16 %v819
    %v3150 = vunpack.c.l.b16 %v820
    %v3151 = vunpack.c.h.b16 %v820
    %v3152 = vunpack.c.l.b16 %v821
    %v3153 = vunpack.c.l.b16 %v822
    %v3154 = vunpack.c.h.b16 %v822
    %v3155 = vunpack.c.l.b16 %v823
    %v3156 = vunpack.c.h.b16 %v823
    %v3157 = vunpack.c.l.b16 %v824
    %v3158 = vunpack.c.h.b16 %v824
    %v3159 = vunpack.c.l.b16 %v825
    %v3160 = vunpack.c.h.b16 %v825
    %v3161 = vunpack.c.l.b16 %v826
    %v3162 = vunpack.c.h.b16 %v826
    %v3163 = vunpack.c.l.b16 %v827
    %v3164 = vunpack.c.h.b16 %v827
    %v3165 = vunpack.c.l.b16 %v828
    %v3166 = vunpack.c.l.b16 %v829
    %v3167 = vunpack.c.h.b16 %v829
    %v3168 = vunpack.c.l.b16 %v830
    %v3169 = vunpack.c.h.b16 %v830
    %v3170 = vunpack.c.l.b16 %v831
    %v3171 = vunpack.c.h.b16 %v831
    %v3172 = vunpack.c.l.b16 %v832
    %v3173 = vunpack.c.h.b16 %v832
    %v3174 = vunpack.c.l.b16 %v833
    %v3175 = vunpack.c.h.b16 %v833
    %v3176 = vunpack.c.l.b16 %v834
    %v3177 = vunpack.c.h.b16 %v834
    %v3178 = vunpack.c.l.b16 %v835
    %v3179 = vunpack.c.l.b16 %v836
    %v3180 = vunpack.c.h.b16 %v836
    %v3181 = vunpack.c.l.b16 %v837
    %v3182 = vunpack.c.h.b16 %v837
    %v3183 = vunpack.c.l.b16 %v838
    %v3184 = vunpack.c.h.b16 %v838
    %v3185 = vunpack.c.l.b16 %v839
    %v3186 = vunpack.c.h.b16 %v839
    %v3187 = vunpack.c.l.b16 %v840
    %v3188 = vunpack.c.h.b16 %v840
    %v3189 = vunpack.c.l.b16 %v841
    %v3190 = vunpack.c.h.b16 %v841
    %v3191 = vunpack.c.l.b16 %v842
    %v3192 = vunpack.c.l.b16 %v843
    %v3193 = vunpack.c.h.b16 %v843
    %v3194 = vunpack.c.l.b16 %v844
    %v3195 = vunpack.c.h.b16 %v844
    %v3196 = vunpack.c.l.b16 %v845
    %v3197 = vunpack.c.h.b16 %v845
    %v3198 = vunpack.c.l.b16 %v846
    %v3199 = vunpack.c.h.b16 %v846
    %v3200 = vunpack.c.l.b16 %v847
    %v3201 = vunpack.c.h.b16 %v847
    %v3202 = vunpack.c.l.b16 %v848
    %v3203 = vunpack.c.h.b16 %v848
    %v3204 = vunpack.c.l.b16 %v849
    %v3205 = vunpack.c.l.b16 %v850
    %v3206 = vunpack.c.h.b16 %v850
    %v3207 = vunpack.c.l.b16 %v851
    %v3208 = vunpack.c.h.b16 %v851
    %v3209 = vunpack.c.l.b16 %v852
    %v3210 = vunpack.c.h.b16 %v852
    %v3211 = vunpack.c.l.b16 %v853
    %v3212 = vunpack.c.h.b16 %v853
    %v3213 = vunpack.c.l.b16 %v854
    %v3214 = vunpack.c.h.b16 %v854
    %v3215 = vunpack.c.l.b16 %v855
    %v3216 = vunpack.c.h.b16 %v855
    %v3217 = vunpack.c.l.b16 %v856
    %v3218 = vunpack.c.l.b16 %v857
    %v3219 = vunpack.c.h.b16 %v857
    %v3220 = vunpack.c.l.b16 %v858
    %v3221 = vunpack.c.h.b16 %v858
    %v3222 = vunpack.c.l.b16 %v859
    %v3223 = vunpack.c.h.b16 %v859
    %v3224 = vunpack.c.l.b16 %v860
    %v3225 = vunpack.c.h.b16 %v860
    %v3226 = vunpack.c.l.b16 %v861
    %v3227 = vunpack.c.h.b16 %v861
    %v3228 = vunpack.c.l.b16 %v862
    %v3229 = vunpack.c.h.b16 %v862
    %v3230 = vunpack.c.l.b16 %v863
    %v3231 = vunpack.c.l.b16 %v864
    %v3232 = vunpack.c.h.b16 %v864
    %v3233 = vunpack.c.l.b16 %v865
    %v3234 = vunpack.c.h.b16 %v865
    %v3235 = vunpack.c.l.b16 %v866
    %v3236 = vunpack.c.h.b16 %v866
    %v3237 = vunpack.c.l.b16 %v867
    %v3238 = vunpack.c.h.b16 %v867
    %v3239 = vunpack.c.l.b16 %v868
    %v3240 = vunpack.c.h.b16 %v868
    %v3241 = vunpack.c.l.b16 %v869
    %v3242 = vunpack.c.h.b16 %v869
    %v3243 = vunpack.c.l.b16 %v870
    %v3244 = vunpack.c.l.b16 %v871
    %v3245 = vunpack.c.h.b16 %v871
    %v3246 = vunpack.c.l.b16 %v872
    %v3247 = vunpack.c.h.b16 %v872
    %v3248 = vunpack.c.l.b16 %v873
    %v3249 = vunpack.c.h.b16 %v873
    %v3250 = vunpack.c.l.b16 %v874
    %v3251 = vunpack.c.h.b16 %v874
    %v3252 = vunpack.c.l.b16 %v875
    %v3253 = vunpack.c.h.b16 %v875
    %v3254 = vunpack.c.l.b16 %v876
    %v3255 = vunpack.c.h.b16 %v876
    %v3256 = vunpack.c.l.b16 %v877
    %v3257 = vunpack.c.l.b16 %v878
    %v3258 = vunpack.c.h.b16 %v878
    %v3259 = vunpack.c.l.b16 %v879
    %v3260 = vunpack.c.h.b16 %v879
    %v3261 = vunpack.c.l.b16 %v880
    %v3262 = vunpack.c.h.b16 %v880
    %v3263 = vunpack.c.l.b16 %v881
    %v3264 = vunpack.c.h.b16 %v881
    %v3265 = vunpack.c.l.b16 %v882
    %v3266 = vunpack.c.h.b16 %v882
    %v3267 = vunpack.c.l.b16 %v883
    %v3268 = vunpack.c.h.b16 %v883
    %v3269 = vunpack.c.l.b16 %v884
    %v3270 = vunpack.c.l.b16 %v885
    %v3271 = vunpack.c.h.b16 %v885
    %v3272 = vunpack.c.l.b16 %v886
    %v3273 = vunpack.c.h.b16 %v886
    %v3274 = vunpack.c.l.b16 %v887
    %v3275 = vunpack.c.h.b16 %v887
    %v3276 = vunpack.c.l.b16 %v888
    %v3277 = vunpack.c.h.b16 %v888
    %v3278 = vunpack.c.l.b16 %v889
    %v3279 = vunpack.c.h.b16 %v889
    %v3280 = vunpack.c.l.b16 %v890
    %v3281 = vunpack.c.h.b16 %v890
    %v3282 = vunpack.c.l.b16 %v891
    %v3283 = vunpack.c.l.b16 %v892
    %v3284 = vunpack.c.h.b16 %v892
    %v3285 = vunpack.c.l.b16 %v893
    %v3286 = vunpack.c.h.b16 %v893
    %v3287 = vunpack.c.l.b16 %v894
    %v3288 = vunpack.c.h.b16 %v894
    %v3289 = vunpack.c.l.b16 %v895
    %v3290 = vunpack.c.h.b16 %v895
    %v3291 = vunpack.c.l.b16 %v896
    %v3292 = vunpack.c.h.b16 %v896
    %v3293 = vunpack.c.l.b16 %v897
    %v3294 = vunpack.c.h.b16 %v897
    %v3295 = vunpack.c.l.b16 %v898
    %v3296 = vunpack.c.l.b16 %v899
    %v3297 = vunpack.c.h.b16 %v899
    %v3298 = vunpack.c.l.b16 %v900
    %v3299 = vunpack.c.h.b16 %v900
    %v3300 = vunpack.c.l.b16 %v901
    %v3301 = vunpack.c.h.b16 %v901
    %v3302 = vunpack.c.l.b16 %v902
    %v3303 = vunpack.c.h.b16 %v902
    %v3304 = vunpack.c.l.b16 %v903
    %v3305 = vunpack.c.h.b16 %v903
    %v3306 = vunpack.c.l.b16 %v904
    %v3307 = vunpack.c.h.b16 %v904
    %v3308 = vunpack.c.l.b16 %v905
    %v3309 = vunpack.c.l.b16 %v906
    %v3310 = vunpack.c.h.b16 %v906
    %v3311 = vunpack.c.l.b16 %v907
    %v3312 = vunpack.c.h.b16 %v907
    %v3313 = vunpack.c.l.b16 %v908
    %v3314 = vunpack.c.h.b16 %v908
    %v3315 = vunpack.c.l.b16 %v909
    %v3316 = vunpack.c.h.b16 %v909
    %v3317 = vunpack.c.l.b16 %v910
    %v3318 = vunpack.c.h.b16 %v910
    %v3319 = vunpack.c.l.b16 %v911
    %v3320 = vunpack.c.h.b16 %v911
    %v3321 = vunpack.c.l.b16 %v912
    %v3322 = vunpack.c.l.b16 %v913
    %v3323 = vunpack.c.h.b16 %v913
    %v3324 = vunpack.c.l.b16 %v914
    %v3325 = vunpack.c.h.b16 %v914
    %v3326 = vunpack.c.l.b16 %v915
    %v3327 = vunpack.c.h.b16 %v915
    %v3328 = vunpack.c.l.b16 %v916
    %v3329 = vunpack.c.h.b16 %v916
    %v3330 = vunpack.c.l.b16 %v917
    %v3331 = vunpack.c.h.b16 %v917
    %v3332 = vunpack.c.l.b16 %v918
    %v3333 = vunpack.c.h.b16 %v918
    %v3334 = vunpack.c.l.b16 %v919
    %v3335 = vunpack.c.l.b16 %v920
    %v3336 = vunpack.c.h.b16 %v920
    %v3337 = vunpack.c.l.b16 %v921
    %v3338 = vunpack.c.h.b16 %v921
    %v3339 = vunpack.c.l.b16 %v922
    %v3340 = vunpack.c.h.b16 %v922
    %v3341 = vunpack.c.l.b16 %v923
    %v3342 = vunpack.c.h.b16 %v923
    %v3343 = vunpack.c.l.b16 %v924
    %v3344 = vunpack.c.h.b16 %v924
    %v3345 = vunpack.c.l.b16 %v925
    %v3346 = vunpack.c.h.b16 %v925
    %v3347 = vunpack.c.l.b16 %v926
    %v3348 = vunpack.c.l.b16 %v927
    %v3349 = vunpack.c.h.b16 %v927
    %v3350 = vunpack.c.l.b16 %v928
    %v3351 = vunpack.c.h.b16 %v928
    %v3352 = vunpack.c.l.b16 %v929
    %v3353 = vunpack.c.h.b16 %v929
    %v3354 = vunpack.c.l.b16 %v930
    %v3355 = vunpack.c.h.b16 %v930
    %v3356 = vunpack.c.l.b16 %v931
    %v3357 = vunpack.c.h.b16 %v931
    %v3358 = vunpack.c.l.b16 %v932
    %v3359 = vunpack.c.h.b16 %v932
    %v3360 = vunpack.c.l.b16 %v933
    %v3361 = vunpack.c.l.b16 %v934
    %v3362 = vunpack.c.h.b16 %v934
    %v3363 = vunpack.c.l.b16 %v935
    %v3364 = vunpack.c.h.b16 %v935
    %v3365 = vunpack.c.l.b16 %v936
    %v3366 = vunpack.c.h.b16 %v936
    %v3367 = vunpack.c.l.b16 %v937
    %v3368 = vunpack.c.h.b16 %v937
    %v3369 = vunpack.c.l.b16 %v938
    %v3370 = vunpack.c.h.b16 %v938
    %v3371 = vunpack.c.l.b16 %v939
    %v3372 = vunpack.c.h.b16 %v939
    %v3373 = vunpack.c.l.b16 %v940
    %v3374 = vunpack.c.l.b16 %v941
    %v3375 = vunpack.c.h.b16 %v941
    %v3376 = vunpack.c.l.b16 %v942
    %v3377 = vunpack.c.h.b16 %v942
    %v3378 = vunpack.c.l.b16 %v943
    %v3379 = vunpack.c.h.b16 %v943
    %v3380 = vunpack.c.l.b16 %v944
    %v3381 = vunpack.c.h.b16 %v944
    %v3382 = vunpack.c.l.b16 %v945
    %v3383 = vunpack.c.h.b16 %v945
    %v3384 = vunpack.c.l.b16 %v946
    %v3385 = vunpack.c.h.b16 %v946
    %v3386 = vunpack.c.l.b16 %v947
    %v3387 = vunpack.c.l.b16 %v948
    %v3388 = vunpack.c.h.b16 %v948
    %v3389 = vunpack.c.l.b16 %v949
    %v3390 = vunpack.c.h.b16 %v949
    %v3391 = vunpack.c.l.b16 %v950
    %v3392 = vunpack.c.h.b16 %v950
    %v3393 = vunpack.c.l.b16 %v951
    %v3394 = vunpack.c.h.b16 %v951
    %v3395 = vunpack.c.l.b16 %v952
    %v3396 = vunpack.c.h.b16 %v952
    %v3397 = vunpack.c.l.b16 %v953
    %v3398 = vunpack.c.h.b16 %v953
    %v3399 = vunpack.c.l.b16 %v954
    %v3400 = vunpack.c.l.b16 %v955
    %v3401 = vunpack.c.h.b16 %v955
    %v3402 = vunpack.c.l.b16 %v956
    %v3403 = vunpack.c.h.b16 %v956
    %v3404 = vunpack.c.l.b16 %v957
    %v3405 = vunpack.c.h.b16 %v957
    %v3406 = vunpack.c.l.b16 %v958
    %v3407 = vunpack.c.h.b16 %v958
    %v3408 = vunpack.c.l.b16 %v959
    %v3409 = vunpack.c.h.b16 %v959
    %v3410 = vunpack.c.l.b16 %v960
    %v3411 = vunpack.c.h.b16 %v960
    %v3412 = vunpack.c.l.b16 %v961
    %v3413 = vunpack.c.l.b16 %v962
    %v3414 = vunpack.c.h.b16 %v962
    %v3415 = vunpack.c.l.b16 %v963
    %v3416 = vunpack.c.h.b16 %v963
    %v3417 = vunpack.c.l.b16 %v964
    %v3418 = vunpack.c.h.b16 %v964
    %v3419 = vunpack.c.l.b16 %v965
    %v3420 = vunpack.c.h.b16 %v965
    %v3421 = vunpack.c.l.b16 %v966
    %v3422 = vunpack.c.h.b16 %v966
    %v3423 = vunpack.c.l.b16 %v967
    %v3424 = vunpack.c.h.b16 %v967
    %v3425 = vunpack.c.l.b16 %v968
    %v3426 = vunpack.c.l.b16 %v969
    %v3427 = vunpack.c.h.b16 %v969
    %v3428 = vunpack.c.l.b16 %v970
    %v3429 = vunpack.c.h.b16 %v970
    %v3430 = vunpack.c.l.b16 %v971
    %v3431 = vunpack.c.h.b16 %v971
    %v3432 = vunpack.c.l.b16 %v972
    %v3433 = vunpack.c.h.b16 %v972
    %v3434 = vunpack.c.l.b16 %v973
    %v3435 = vunpack.c.h.b16 %v973
    %v3436 = vunpack.c.l.b16 %v974
    %v3437 = vunpack.c.h.b16 %v974
    %v3438 = vunpack.c.l.b16 %v975
    %v3439 = vunpack.c.l.b16 %v976
    %v3440 = vunpack.c.h.b16 %v976
    %v3441 = vunpack.c.l.b16 %v977
    %v3442 = vunpack.c.h.b16 %v977
    %v3443 = vunpack.c.l.b16 %v978
    %v3444 = vunpack.c.h.b16 %v978
    %v3445 = vunpack.c.l.b16 %v979
    %v3446 = vunpack.c.h.b16 %v979
    %v3447 = vunpack.c.l.b16 %v980
    %v3448 = vunpack.c.h.b16 %v980
    %v3449 = vunpack.c.l.b16 %v981
    %v3450 = vunpack.c.h.b16 %v981
    %v3451 = vunpack.c.l.b16 %v982
    %v3452 = vunpack.c.l.b16 %v983
    %v3453 = vunpack.c.h.b16 %v983
    %v3454 = vunpack.c.l.b16 %v984
    %v3455 = vunpack.c.h.b16 %v984
    %v3456 = vunpack.c.l.b16 %v985
    %v3457 = vunpack.c.h.b16 %v985
    %v3458 = vunpack.c.l.b16 %v986
    %v3459 = vunpack.c.h.b16 %v986
    %v3460 = vunpack.c.l.b16 %v987
    %v3461 = vunpack.c.h.b16 %v987
    %v3462 = vunpack.c.l.b16 %v988
    %v3463 = vunpack.c.h.b16 %v988
    %v3464 = vunpack.c.l.b16 %v989
    %v3465 = vunpack.c.l.b16 %v990
    %v3466 = vunpack.c.h.b16 %v990
    %v3467 = vunpack.c.l.b16 %v991
    %v3468 = vunpack.c.h.b16 %v991
    %v3469 = vunpack.c.l.b16 %v992
    %v3470 = vunpack.c.h.b16 %v992
    %v3471 = vunpack.c.l.b16 %v993
    %v3472 = vunpack.c.h.b16 %v993
    %v3473 = vunpack.c.l.b16 %v994
    %v3474 = vunpack.c.h.b16 %v994
    %v3475 = vunpack.c.l.b16 %v995
    %v3476 = vunpack.c.h.b16 %v995
    %v3477 = vunpack.c.l.b16 %v996
    %v3478 = vunpack.c.l.b16 %v997
    %v3479 = vunpack.c.h.b16 %v997
    %v3480 = vunpack.c.l.b16 %v998
    %v3481 = vunpack.c.h.b16 %v998
    %v3482 = vunpack.c.l.b16 %v999
    %v3483 = vunpack.c.h.b16 %v999
    %v3484 = vunpack.c.l.b16 %v1000
    %v3485 = vunpack.c.h.b16 %v1000
    %v3486 = vunpack.c.l.b16 %v1001
    %v3487 = vunpack.c.h.b16 %v1001
    %v3488 = vunpack.c.l.b16 %v1002
    %v3489 = vunpack.c.h.b16 %v1002
    %v3490 = vunpack.c.l.b16 %v1003
    %v3491 = vunpack.c.l.b16 %v1004
    %v3492 = vunpack.c.h.b16 %v1004
    %v3493 = vunpack.c.l.b16 %v1005
    %v3494 = vunpack.c.h.b16 %v1005
    %v3495 = vunpack.c.l.b16 %v1006
    %v3496 = vunpack.c.h.b16 %v1006
    %v3497 = vunpack.c.l.b16 %v1007
    %v3498 = vunpack.c.h.b16 %v1007
    %v3499 = vunpack.c.l.b16 %v1008
    %v3500 = vunpack.c.h.b16 %v1008
    %v3501 = vunpack.c.l.b16 %v1009
    %v3502 = vunpack.c.h.b16 %v1009
    %v3503 = vunpack.c.l.b16 %v1010
    %v3504 = vunpack.c.l.b16 %v1011
    %v3505 = vunpack.c.h.b16 %v1011
    %v3506 = vunpack.c.l.b16 %v1012
    %v3507 = vunpack.c.h.b16 %v1012
    %v3508 = vunpack.c.l.b16 %v1013
    %v3509 = vunpack.c.h.b16 %v1013
    %v3510 = vunpack.c.l.b16 %v1014
    %v3511 = vunpack.c.h.b16 %v1014
    %v3512 = vunpack.c.l.b16 %v1015
    %v3513 = vunpack.c.h.b16 %v1015
    %v3514 = vunpack.c.l.b16 %v1016
    %v3515 = vunpack.c.h.b16 %v1016
    %v3516 = vunpack.c.l.b16 %v1017
    %v3517 = vunpack.c.l.b16 %v1018
    %v3518 = vunpack.c.h.b16 %v1018
    %v3519 = vunpack.c.l.b16 %v1019
    %v3520 = vunpack.c.h.b16 %v1019
    %v3521 = vunpack.c.l.b16 %v1020
    %v3522 = vunpack.c.h.b16 %v1020
    %v3523 = vunpack.c.l.b16 %v1021
    %v3524 = vunpack.c.h.b16 %v1021
    %v3525 = vunpack.c.l.b16 %v1022
    %v3526 = vunpack.c.h.b16 %v1022
    %v3527 = vunpack.c.l.b16 %v1023
    %v3528 = vunpack.c.h.b16 %v1023
    %v3529 = vunpack.c.l.b16 %v1024
    %v3530 = vunpack.c.l.b16 %v1025
    %v3531 = vunpack.c.h.b16 %v1025
    %v3532 = vunpack.c.l.b16 %v1026
    %v3533 = vunpack.c.h.b16 %v1026
    %v3534 = vunpack.c.l.b16 %v1027
    %v3535 = vunpack.c.h.b16 %v1027
    %v3536 = vunpack.c.l.b16 %v1028
    %v3537 = vunpack.c.h.b16 %v1028
    %v3538 = vunpack.c.l.b16 %v1029
    %v3539 = vunpack.c.h.b16 %v1029
    %v3540 = vunpack.c.l.b16 %v1030
    %v3541 = vunpack.c.h.b16 %v1030
    %v3542 = vunpack.c.l.b16 %v1031
    %v3543 = vunpack.c.l.b16 %v1032
    %v3544 = vunpack.c.h.b16 %v1032
    %v3545 = vunpack.c.l.b16 %v1033
    %v3546 = vunpack.c.h.b16 %v1033
    %v3547 = vunpack.c.l.b16 %v1034
    %v3548 = vunpack.c.h.b16 %v1034
    %v3549 = vunpack.c.l.b16 %v1035
    %v3550 = vunpack.c.h.b16 %v1035
    %v3551 = vunpack.c.l.b16 %v1036
    %v3552 = vunpack.c.h.b16 %v1036
    %v3553 = vunpack.c.l.b16 %v1037
    %v3554 = vunpack.c.h.b16 %v1037
    %v3555 = vunpack.c.l.b16 %v1038
    %v3556 = vunpack.c.l.b16 %v1039
    %v3557 = vunpack.c.h.b16 %v1039
    %v3558 = vunpack.c.l.b16 %v1040
    %v3559 = vunpack.c.h.b16 %v1040
    %v3560 = vunpack.c.l.b16 %v1041
    %v3561 = vunpack.c.h.b16 %v1041
    %v3562 = vunpack.c.l.b16 %v1042
    %v3563 = vunpack.c.h.b16 %v1042
    %v3564 = vunpack.c.l.b16 %v1043
    %v3565 = vunpack.c.h.b16 %v1043
    %v3566 = vunpack.c.l.b16 %v1044
    %v3567 = vunpack.c.h.b16 %v1044
    %v3568 = vunpack.c.l.b16 %v1045
    %v3569 = vunpack.c.l.b16 %v1046
    %v3570 = vunpack.c.h.b16 %v1046
    %v3571 = vunpack.c.l.b16 %v1047
    %v3572 = vunpack.c.h.b16 %v1047
    %v3573 = vunpack.c.l.b16 %v1048
    %v3574 = vunpack.c.h.b16 %v1048
    %v3575 = vunpack.c.l.b16 %v1049
    %v3576 = vunpack.c.h.b16 %v1049
    %v3577 = vunpack.c.l.b16 %v1050
    %v3578 = vunpack.c.h.b16 %v1050
    %v3579 = vunpack.c.l.b16 %v1051
    %v3580 = vunpack.c.h.b16 %v1051
    %v3581 = vunpack.c.l.b16 %v1052
    %v3582 = vunpack.c.l.b16 %v1053
    %v3583 = vunpack.c.h.b16 %v1053
    %v3584 = vunpack.c.l.b16 %v1054
    %v3585 = vunpack.c.h.b16 %v1054
    %v3586 = vunpack.c.l.b16 %v1055
    %v3587 = vunpack.c.h.b16 %v1055
    %v3588 = vunpack.c.l.b16 %v1056
    %v3589 = vunpack.c.h.b16 %v1056
    %v3590 = vunpack.c.l.b16 %v1057
    %v3591 = vunpack.c.h.b16 %v1057
    %v3592 = vunpack.c.l.b16 %v1058
    %v3593 = vunpack.c.h.b16 %v1058
    %v3594 = vunpack.c.l.b16 %v1059
    %v3595 = vunpack.c.l.b16 %v1060
    %v3596 = vunpack.c.h.b16 %v1060
    %v3597 = vunpack.c.l.b16 %v1061
    %v3598 = vunpack.c.h.b16 %v1061
    %v3599 = vunpack.c.l.b16 %v1062
    %v3600 = vunpack.c.h.b16 %v1062
    %v3601 = vunpack.c.l.b16 %v1063
    %v3602 = vunpack.c.h.b16 %v1063
    %v3603 = vunpack.c.l.b16 %v1064
    %v3604 = vunpack.c.h.b16 %v1064
    %v3605 = vunpack.c.l.b16 %v1065
    %v3606 = vunpack.c.h.b16 %v1065
    %v3607 = vunpack.c.l.b16 %v1066
    %v3608 = vunpack.c.l.b16 %v1067
    %v3609 = vunpack.c.h.b16 %v1067
    %v3610 = vunpack.c.l.b16 %v1068
    %v3611 = vunpack.c.h.b16 %v1068
    %v3612 = vunpack.c.l.b16 %v1069
    %v3613 = vunpack.c.h.b16 %v1069
    %v3614 = vunpack.c.l.b16 %v1070
    %v3615 = vunpack.c.h.b16 %v1070
    %v3616 = vunpack.c.l.b16 %v1071
    %v3617 = vunpack.c.h.b16 %v1071
    %v3618 = vunpack.c.l.b16 %v1072
    %v3619 = vunpack.c.h.b16 %v1072
    %v3620 = vunpack.c.l.b16 %v1073
    %v3621 = vunpack.c.l.b16 %v1074
    %v3622 = vunpack.c.h.b16 %v1074
    %v3623 = vunpack.c.l.b16 %v1075
    %v3624 = vunpack.c.h.b16 %v1075
    %v3625 = vunpack.c.l.b16 %v1076
    %v3626 = vunpack.c.h.b16 %v1076
    %v3627 = vunpack.c.l.b16 %v1077
    %v3628 = vunpack.c.h.b16 %v1077
    %v3629 = vunpack.c.l.b16 %v1078
    %v3630 = vunpack.c.h.b16 %v1078
    %v3631 = vunpack.c.l.b16 %v1079
    %v3632 = vunpack.c.h.b16 %v1079
    %v3633 = vunpack.c.l.b16 %v1080
    %v3634 = vunpack.c.l.b16 %v1081
    %v3635 = vunpack.c.h.b16 %v1081
    %v3636 = vunpack.c.l.b16 %v1082
    %v3637 = vunpack.c.h.b16 %v1082
    %v3638 = vunpack.c.l.b16 %v1083
    %v3639 = vunpack.c.h.b16 %v1083
    %v3640 = vunpack.c.l.b16 %v1084
    %v3641 = vunpack.c.h.b16 %v1084
    %v3642 = vunpack.c.l.b16 %v1085
    %v3643 = vunpack.c.h.b16 %v1085
    %v3644 = vunpack.c.l.b16 %v1086
    %v3645 = vunpack.c.h.b16 %v1086
    %v3646 = vunpack.c.l.b16 %v1087
    %v3647 = vunpack.c.l.b16 %v1088
    %v3648 = vunpack.c.h.b16 %v1088
    %v3649 = vunpack.c.l.b16 %v1089
    %v3650 = vunpack.c.h.b16 %v1089
    %v3651 = vunpack.c.l.b16 %v1090
    %v3652 = vunpack.c.h.b16 %v1090
    %v3653 = vunpack.c.l.b16 %v1091
    %v3654 = vunpack.c.h.b16 %v1091
    %v3655 = vunpack.c.l.b16 %v1092
    %v3656 = vunpack.c.h.b16 %v1092
    %v3657 = vunpack.c.l.b16 %v1093
    %v3658 = vunpack.c.h.b16 %v1093
    %v3659 = vunpack.c.l.b16 %v1094
    %v3660 = vunpack.c.l.b16 %v1095
    %v3661 = vunpack.c.h.b16 %v1095
    %v3662 = vunpack.c.l.b16 %v1096
    %v3663 = vunpack.c.h.b16 %v1096
    %v3664 = vunpack.c.l.b16 %v1097
    %v3665 = vunpack.c.h.b16 %v1097
    %v3666 = vunpack.c.l.b16 %v1098
    %v3667 = vunpack.c.h.b16 %v1098
    %v3668 = vunpack.c.l.b16 %v1099
    %v3669 = vunpack.c.h.b16 %v1099
    %v3670 = vunpack.c.l.b16 %v1100
    %v3671 = vunpack.c.h.b16 %v1100
    %v3672 = vunpack.c.l.b16 %v1101
    %v3673 = vunpack.c.l.b16 %v1102
    %v3674 = vunpack.c.h.b16 %v1102
    %v3675 = vunpack.c.l.b16 %v1103
    %v3676 = vunpack.c.h.b16 %v1103
    %v3677 = vunpack.c.l.b16 %v1104
    %v3678 = vunpack.c.h.b16 %v1104
    %v3679 = vunpack.c.l.b16 %v1105
    %v3680 = vunpack.c.h.b16 %v1105
    %v3681 = vunpack.c.l.b16 %v1106
    %v3682 = vunpack.c.h.b16 %v1106
    %v3683 = vunpack.c.l.b16 %v1107
    %v3684 = vunpack.c.h.b16 %v1107
    %v3685 = vunpack.c.l.b16 %v1108
    %v3686 = vunpack.c.l.b16 %v1109
    %v3687 = vunpack.c.h.b16 %v1109
    %v3688 = vunpack.c.l.b16 %v1110
    %v3689 = vunpack.c.h.b16 %v1110
    %v3690 = vunpack.c.l.b16 %v1111
    %v3691 = vunpack.c.h.b16 %v1111
    %v3692 = vunpack.c.l.b16 %v1112
    %v3693 = vunpack.c.h.b16 %v1112
    %v3694 = vunpack.c.l.b16 %v1113
    %v3695 = vunpack.c.h.b16 %v1113
    %v3696 = vunpack.c.l.b16 %v1114
    %v3697 = vunpack.c.h.b16 %v1114
    %v3698 = vunpack.c.l.b16 %v1115
    %v3699 = vunpack.c.l.b16 %v1116
    %v3700 = vunpack.c.h.b16 %v1116
    %v3701 = vunpack.c.l.b16 %v1117
    %v3702 = vunpack.c.h.b16 %v1117
    %v3703 = vunpack.c.l.b16 %v1118
    %v3704 = vunpack.c.h.b16 %v1118
    %v3705 = vunpack.c.l.b16 %v1119
    %v3706 = vunpack.c.h.b16 %v1119
    %v3707 = vunpack.c.l.b16 %v1120
    %v3708 = vunpack.c.h.b16 %v1120
    %v3709 = vunpack.c.l.b16 %v1121
    %v3710 = vunpack.c.h.b16 %v1121
    %v3711 = vunpack.c.l.b16 %v1122
    %v3712 = vunpack.c.l.b16 %v1123
    %v3713 = vunpack.c.h.b16 %v1123
    %v3714 = vunpack.c.l.b16 %v1124
    %v3715 = vunpack.c.h.b16 %v1124
    %v3716 = vunpack.c.l.b16 %v1125
    %v3717 = vunpack.c.h.b16 %v1125
    %v3718 = vunpack.c.l.b16 %v1126
    %v3719 = vunpack.c.h.b16 %v1126
    %v3720 = vunpack.c.l.b16 %v1127
    %v3721 = vunpack.c.h.b16 %v1127
    %v3722 = vunpack.c.l.b16 %v1128
    %v3723 = vunpack.c.h.b16 %v1128
    %v3724 = vunpack.c.l.b16 %v1129
    %v3725 = vunpack.c.l.b16 %v1130
    %v3726 = vunpack.c.h.b16 %v1130
    %v3727 = vunpack.c.l.b16 %v1131
    %v3728 = vunpack.c.h.b16 %v1131
    %v3729 = vunpack.c.l.b16 %v1132
    %v3730 = vunpack.c.h.b16 %v1132
    %v3731 = vunpack.c.l.b16 %v1133
    %v3732 = vunpack.c.h.b16 %v1133
    %v3733 = vunpack.c.l.b16 %v1134
    %v3734 = vunpack.c.h.b16 %v1134
    %v3735 = vunpack.c.l.b16 %v1135
    %v3736 = vunpack.c.h.b16 %v1135
    %v3737 = vunpack.c.l.b16 %v1136
    %v3738 = vunpack.c.l.b16 %v1137
    %v3739 = vunpack.c.h.b16 %v1137
    %v3740 = vunpack.c.l.b16 %v1138
    %v3741 = vunpack.c.h.b16 %v1138
    %v3742 = vunpack.c.l.b16 %v1139
    %v3743 = vunpack.c.h.b16 %v1139
    %v3744 = vunpack.c.l.b16 %v1140
    %v3745 = vunpack.c.h.b16 %v1140
    %v3746 = vunpack.c.l.b16 %v1141
    %v3747 = vunpack.c.h.b16 %v1141
    %v3748 = vunpack.c.l.b16 %v1142
    %v3749 = vunpack.c.h.b16 %v1142
    %v3750 = vunpack.c.l.b16 %v1143
    %v3751 = vunpack.c.l.b16 %v1144
    %v3752 = vunpack.c.h.b16 %v1144
    %v3753 = vunpack.c.l.b16 %v1145
    %v3754 = vunpack.c.h.b16 %v1145
    %v3755 = vunpack.c.l.b16 %v1146
    %v3756 = vunpack.c.h.b16 %v1146
    %v3757 = vunpack.c.l.b16 %v1147
    %v3758 = vunpack.c.h.b16 %v1147
    %v3759 = vunpack.c.l.b16 %v1148
    %v3760 = vunpack.c.h.b16 %v1148
    %v3761 = vunpack.c.l.b16 %v1149
    %v3762 = vunpack.c.h.b16 %v1149
    %v3763 = vunpack.c.l.b16 %v1150
    %v3764 = vunpack.c.l.b16 %v1151
    %v3765 = vunpack.c.h.b16 %v1151
    %v3766 = vunpack.c.l.b16 %v1152
    %v3767 = vunpack.c.h.b16 %v1152
    %v3768 = vunpack.c.l.b16 %v1153
    %v3769 = vunpack.c.h.b16 %v1153
    %v3770 = vunpack.c.l.b16 %v1154
    %v3771 = vunpack.c.h.b16 %v1154
    %v3772 = vunpack.c.l.b16 %v1155
    %v3773 = vunpack.c.h.b16 %v1155
    %v3774 = vunpack.c.l.b16 %v1156
    %v3775 = vunpack.c.h.b16 %v1156
    %v3776 = vunpack.c.l.b16 %v1157
    %v3777 = vunpack.c.l.b16 %v1158
    %v3778 = vunpack.c.h.b16 %v1158
    %v3779 = vunpack.c.l.b16 %v1159
    %v3780 = vunpack.c.h.b16 %v1159
    %v3781 = vunpack.c.l.b16 %v1160
    %v3782 = vunpack.c.h.b16 %v1160
    %v3783 = vunpack.c.l.b16 %v1161
    %v3784 = vunpack.c.h.b16 %v1161
    %v3785 = vunpack.c.l.b16 %v1162
    %v3786 = vunpack.c.h.b16 %v1162
    %v3787 = vunpack.c.l.b16 %v1163
    %v3788 = vunpack.c.h.b16 %v1163
    %v3789 = vunpack.c.l.b16 %v1164
    %v3790 = vunpack.c.l.b16 %v1165
    %v3791 = vunpack.c.h.b16 %v1165
    %v3792 = vunpack.c.l.b16 %v1166
    %v3793 = vunpack.c.h.b16 %v1166
    %v3794 = vunpack.c.l.b16 %v1167
    %v3795 = vunpack.c.h.b16 %v1167
    %v3796 = vunpack.c.l.b16 %v1168
    %v3797 = vunpack.c.h.b16 %v1168
    %v3798 = vunpack.c.l.b16 %v1169
    %v3799 = vunpack.c.h.b16 %v1169
    %v3800 = vunpack.c.l.b16 %v1170
    %v3801 = vunpack.c.h.b16 %v1170
    %v3802 = vunpack.c.l.b16 %v1171
    %v3803 = vunpack.c.l.b16 %v1172
    %v3804 = vunpack.c.h.b16 %v1172
    %v3805 = vunpack.c.l.b16 %v1173
    %v3806 = vunpack.c.h.b16 %v1173
    %v3807 = vunpack.c.l.b16 %v1174
    %v3808 = vunpack.c.h.b16 %v1174
    %v3809 = vunpack.c.l.b16 %v1175
    %v3810 = vunpack.c.h.b16 %v1175
    %v3811 = vunpack.c.l.b16 %v1176
    %v3812 = vunpack.c.h.b16 %v1176
    %v3813 = vunpack.c.l.b16 %v1177
    %v3814 = vunpack.c.h.b16 %v1177
    %v3815 = vunpack.c.l.b16 %v1178
    %v3816 = vunpack.c.l.b16 %v1179
    %v3817 = vunpack.c.h.b16 %v1179
    %v3818 = vunpack.c.l.b16 %v1180
    %v3819 = vunpack.c.h.b16 %v1180
    %v3820 = vunpack.c.l.b16 %v1181
    %v3821 = vunpack.c.h.b16 %v1181
    %v3822 = vunpack.c.l.b16 %v1182
    %v3823 = vunpack.c.h.b16 %v1182
    %v3824 = vunpack.c.l.b16 %v1183
    %v3825 = vunpack.c.h.b16 %v1183
    %v3826 = vunpack.c.l.b16 %v1184
    %v3827 = vunpack.c.h.b16 %v1184
    %v3828 = vunpack.c.l.b16 %v1185
    %v3829 = vunpack.c.l.b16 %v1186
    %v3830 = vunpack.c.h.b16 %v1186
    %v3831 = vunpack.c.l.b16 %v1187
    %v3832 = vunpack.c.h.b16 %v1187
    %v3833 = vunpack.c.l.b16 %v1188
    %v3834 = vunpack.c.h.b16 %v1188
    %v3835 = vunpack.c.l.b16 %v1189
    %v3836 = vunpack.c.h.b16 %v1189
    %v3837 = vunpack.c.l.b16 %v1190
    %v3838 = vunpack.c.h.b16 %v1190
    %v3839 = vunpack.c.l.b16 %v1191
    %v3840 = vunpack.c.h.b16 %v1191
    %v3841 = vunpack.c.l.b16 %v1192
    %v3842 = vunpack.c.l.b16 %v1193
    %v3843 = vunpack.c.h.b16 %v1193
    %v3844 = vunpack.c.l.b16 %v1194
    %v3845 = vunpack.c.h.b16 %v1194
    %v3846 = vunpack.c.l.b16 %v1195
    %v3847 = vunpack.c.h.b16 %v1195
    %v3848 = vunpack.c.l.b16 %v1196
    %v3849 = vunpack.c.h.b16 %v1196
    %v3850 = vunpack.c.l.b16 %v1197
    %v3851 = vunpack.c.h.b16 %v1197
    %v3852 = vunpack.c.l.b16 %v1198
    %v3853 = vunpack.c.h.b16 %v1198
    %v3854 = vunpack.c.l.b16 %v1199
    %v3855 = vunpack.c.l.b16 %v1200
    %v3856 = vunpack.c.h.b16 %v1200
    %v3857 = vunpack.c.l.b16 %v1201
    %v3858 = vunpack.c.h.b16 %v1201
    %v3859 = vunpack.c.l.b16 %v1202
    %v3860 = vunpack.c.h.b16 %v1202
    %v3861 = vunpack.c.l.b16 %v1203
    %v3862 = vunpack.c.h.b16 %v1203
    %v3863 = vunpack.c.l.b16 %v1204
    %v3864 = vunpack.c.h.b16 %v1204
    %v3865 = vunpack.c.l.b16 %v1205
    %v3866 = vunpack.c.h.b16 %v1205
    %v3867 = vunpack.c.l.b16 %v1206
    %v3868 = vunpack.c.l.b16 %v1207
    %v3869 = vunpack.c.h.b16 %v1207
    %v3870 = vunpack.c.l.b16 %v1208
    %v3871 = vunpack.c.h.b16 %v1208
    %v3872 = vunpack.c.l.b16 %v1209
    %v3873 = vunpack.c.h.b16 %v1209
    %v3874 = vunpack.c.l.b16 %v1210
    %v3875 = vunpack.c.h.b16 %v1210
    %v3876 = vunpack.c.l.b16 %v1211
    %v3877 = vunpack.c.h.b16 %v1211
    %v3878 = vunpack.c.l.b16 %v1212
    %v3879 = vunpack.c.h.b16 %v1212
    %v3880 = vunpack.c.l.b16 %v1213
    %v3881 = vunpack.c.l.b16 %v1214
    %v3882 = vunpack.c.h.b16 %v1214
    %v3883 = vunpack.c.l.b16 %v1215
    %v3884 = vunpack.c.h.b16 %v1215
    %v3885 = vunpack.c.l.b16 %v1216
    %v3886 = vunpack.c.h.b16 %v1216
    %v3887 = vunpack.c.l.b16 %v1217
    %v3888 = vunpack.c.h.b16 %v1217
    %v3889 = vunpack.c.l.b16 %v1218
    %v3890 = vunpack.c.h.b16 %v1218
    %v3891 = vunpack.c.l.b16 %v1219
    %v3892 = vunpack.c.h.b16 %v1219
    %v3893 = vunpack.c.l.b16 %v1220
    %v3894 = vunpack.c.l.b16 %v1221
    %v3895 = vunpack.c.h.b16 %v1221
    %v3896 = vunpack.c.l.b16 %v1222
    %v3897 = vunpack.c.h.b16 %v1222
    %v3898 = vunpack.c.l.b16 %v1223
    %v3899 = vunpack.c.h.b16 %v1223
    %v3900 = vunpack.c.l.b16 %v1224
    %v3901 = vunpack.c.h.b16 %v1224
    %v3902 = vunpack.c.l.b16 %v1225
    %v3903 = vunpack.c.h.b16 %v1225
    %v3904 = vunpack.c.l.b16 %v1226
    %v3905 = vunpack.c.h.b16 %v1226
    %v3906 = vunpack.c.l.b16 %v1227
    %v3907 = vunpack.c.l.b16 %v1228
    %v3908 = vunpack.c.h.b16 %v1228
    %v3909 = vunpack.c.l.b16 %v1229
    %v3910 = vunpack.c.h.b16 %v1229
    %v3911 = vunpack.c.l.b16 %v1230
    %v3912 = vunpack.c.h.b16 %v1230
    %v3913 = vunpack.c.l.b16 %v1231
    %v3914 = vunpack.c.h.b16 %v1231
    %v3915 = vunpack.c.l.b16 %v1232
    %v3916 = vunpack.c.h.b16 %v1232
    %v3917 = vunpack.c.l.b16 %v1233
    %v3918 = vunpack.c.h.b16 %v1233
    %v3919 = vunpack.c.l.b16 %v1234
    %v3920 = vunpack.c.l.b16 %v1235
    %v3921 = vunpack.c.h.b16 %v1235
    %v3922 = vunpack.c.l.b16 %v1236
    %v3923 = vunpack.c.h.b16 %v1236
    %v3924 = vunpack.c.l.b16 %v1237
    %v3925 = vunpack.c.h.b16 %v1237
    %v3926 = vunpack.c.l.b16 %v1238
    %v3927 = vunpack.c.h.b16 %v1238
    %v3928 = vunpack.c.l.b16 %v1239
    %v3929 = vunpack.c.h.b16 %v1239
    %v3930 = vunpack.c.l.b16 %v1240
    %v3931 = vunpack.c.h.b16 %v1240
    %v3932 = vunpack.c.l.b16 %v1241
    %v3933 = vunpack.c.l.b16 %v1242
    %v3934 = vunpack.c.h.b16 %v1242
    %v3935 = vunpack.c.l.b16 %v1243
    %v3936 = vunpack.c.h.b16 %v1243
    %v3937 = vunpack.c.l.b16 %v1244
    %v3938 = vunpack.c.h.b16 %v1244
    %v3939 = vunpack.c.l.b16 %v1245
    %v3940 = vunpack.c.h.b16 %v1245
    %v3941 = vunpack.c.l.b16 %v1246
    %v3942 = vunpack.c.h.b16 %v1246
    %v3943 = vunpack.c.l.b16 %v1247
    %v3944 = vunpack.c.h.b16 %v1247
    %v3945 = vunpack.c.l.b16 %v1248
    %v3946 = vunpack.c.l.b16 %v1249
    %v3947 = vunpack.c.h.b16 %v1249
    %v3948 = vunpack.c.l.b16 %v1250
    %v3949 = vunpack.c.h.b16 %v1250
    %v3950 = vunpack.c.l.b16 %v1251
    %v3951 = vunpack.c.h.b16 %v1251
    %v3952 = vunpack.c.l.b16 %v1252
    %v3953 = vunpack.c.h.b16 %v1252
    %v3954 = vunpack.c.l.b16 %v1253
    %v3955 = vunpack.c.h.b16 %v1253
    %v3956 = vunpack.c.l.b16 %v1254
    %v3957 = vunpack.c.h.b16 %v1254
    %v3958 = vunpack.c.l.b16 %v1255
    %v3959 = vunpack.c.l.b16 %v1256
    %v3960 = vunpack.c.h.b16 %v1256
    %v3961 = vunpack.c.l.b16 %v1257
    %v3962 = vunpack.c.h.b16 %v1257
    %v3963 = vunpack.c.l.b16 %v1258
    %v3964 = vunpack.c.h.b16 %v1258
    %v3965 = vunpack.c.l.b16 %v1259
    %v3966 = vunpack.c.h.b16 %v1259
    %v3967 = vunpack.c.l.b16 %v1260
    %v3968 = vunpack.c.h.b16 %v1260
    %v3969 = vunpack.c.l.b16 %v1261
    %v3970 = vunpack.c.h.b16 %v1261
    %v3971 = vunpack.c.l.b16 %v1262
    %v3972 = vunpack.c.l.b16 %v1263
    %v3973 = vunpack.c.h.b16 %v1263
    %v3974 = vunpack.c.l.b16 %v1264
    %v3975 = vunpack.c.h.b16 %v1264
    %v3976 = vunpack.c.l.b16 %v1265
    %v3977 = vunpack.c.h.b16 %v1265
    %v3978 = vunpack.c.l.b16 %v1266
    %v3979 = vunpack.c.h.b16 %v1266
    %v3980 = vunpack.c.l.b16 %v1267
    %v3981 = vunpack.c.h.b16 %v1267
    %v3982 = vunpack.c.l.b16 %v1268
    %v3983 = vunpack.c.h.b16 %v1268
    %v3984 = vunpack.c.l.b16 %v1269
    %v3985 = vunpack.c.l.b16 %v1270
    %v3986 = vunpack.c.h.b16 %v1270
    %v3987 = vunpack.c.l.b16 %v1271
    %v3988 = vunpack.c.h.b16 %v1271
    %v3989 = vunpack.c.l.b16 %v1272
    %v3990 = vunpack.c.h.b16 %v1272
    %v3991 = vunpack.c.l.b16 %v1273
    %v3992 = vunpack.c.h.b16 %v1273
    %v3993 = vunpack.c.l.b16 %v1274
    %v3994 = vunpack.c.h.b16 %v1274
    %v3995 = vunpack.c.l.b16 %v1275
    %v3996 = vunpack.c.h.b16 %v1275
    %v3997 = vunpack.c.l.b16 %v1276
    %v3998 = vunpack.c.l.b16 %v1277
    %v3999 = vunpack.c.h.b16 %v1277
    %v4000 = vunpack.c.l.b16 %v1278
    %v4001 = vunpack.c.h.b16 %v1278
    %v4002 = vunpack.c.l.b16 %v1279
    %v4003 = vunpack.c.h.b16 %v1279
    %v4004 = vunpack.c.l.b16 %v1280
    %v4005 = vunpack.c.h.b16 %v1280
    %v4006 = vunpack.c.l.b16 %v1281
    %v4007 = vunpack.c.h.b16 %v1281
    %v4008 = vunpack.c.l.b16 %v1282
    %v4009 = vunpack.c.h.b16 %v1282
    %v4010 = vunpack.c.l.b16 %v1283
    %v4011 = vunpack.c.l.b16 %v1284
    %v4012 = vunpack.c.h.b16 %v1284
    %v4013 = vunpack.c.l.b16 %v1285
    %v4014 = vunpack.c.h.b16 %v1285
    %v4015 = vunpack.c.l.b16 %v1286
    %v4016 = vunpack.c.h.b16 %v1286
    %v4017 = vunpack.c.l.b16 %v1287
    %v4018 = vunpack.c.h.b16 %v1287
    %v4019 = vunpack.c.l.b16 %v1288
    %v4020 = vunpack.c.h.b16 %v1288
    %v4021 = vunpack.c.l.b16 %v1289
    %v4022 = vunpack.c.h.b16 %v1289
    %v4023 = vunpack.c.l.b16 %v1290
    %v4024 = vunpack.c.l.b16 %v1291
    %v4025 = vunpack.c.h.b16 %v1291
    %v4026 = vunpack.c.l.b16 %v1292
    %v4027 = vunpack.c.h.b16 %v1292
    %v4028 = vunpack.c.l.b16 %v1293
    %v4029 = vunpack.c.h.b16 %v1293
    %v4030 = vunpack.c.l.b16 %v1294
    %v4031 = vunpack.c.h.b16 %v1294
    %v4032 = vunpack.c.l.b16 %v1295
    %v4033 = vunpack.c.h.b16 %v1295
    %v4034 = vunpack.c.l.b16 %v1296
    %v4035 = vunpack.c.h.b16 %v1296
    %v4036 = vunpack.c.l.b16 %v1297
    %v4037 = vunpack.c.l.b16 %v1298
    %v4038 = vunpack.c.h.b16 %v1298
    %v4039 = vunpack.c.l.b16 %v1299
    %v4040 = vunpack.c.h.b16 %v1299
    %v4041 = vunpack.c.l.b16 %v1300
    %v4042 = vunpack.c.h.b16 %v1300
    %v4043 = vunpack.c.l.b16 %v1301
    %v4044 = vunpack.c.h.b16 %v1301
    %v4045 = vunpack.c.l.b16 %v1302
    %v4046 = vunpack.c.h.b16 %v1302
    %v4047 = vunpack.c.l.b16 %v1303
    %v4048 = vunpack.c.h.b16 %v1303
    %v4049 = vunpack.c.l.b16 %v1304
    %v4050 = vunpack.c.l.b16 %v1305
    %v4051 = vunpack.c.h.b16 %v1305
    %v4052 = vunpack.c.l.b16 %v1306
    %v4053 = vunpack.c.h.b16 %v1306
    %v4054 = vunpack.c.l.b16 %v1307
    %v4055 = vunpack.c.h.b16 %v1307
    %v4056 = vunpack.c.l.b16 %v1308
    %v4057 = vunpack.c.h.b16 %v1308
    %v4058 = vunpack.c.l.b16 %v1309
    %v4059 = vunpack.c.h.b16 %v1309
    %v4060 = vunpack.c.l.b16 %v1310
    %v4061 = vunpack.c.h.b16 %v1310
    %v4062 = vunpack.c.l.b16 %v1311
    %v4063 = vunpack.c.l.b16 %v1312
    %v4064 = vunpack.c.h.b16 %v1312
    %v4065 = vunpack.c.l.b16 %v1313
    %v4066 = vunpack.c.h.b16 %v1313
    %v4067 = vunpack.c.l.b16 %v1314
    %v4068 = vunpack.c.h.b16 %v1314
    %v4069 = vunpack.c.l.b16 %v1315
    %v4070 = vunpack.c.h.b16 %v1315
    %v4071 = vunpack.c.l.b16 %v1316
    %v4072 = vunpack.c.h.b16 %v1316
    %v4073 = vunpack.c.l.b16 %v1317
    %v4074 = vunpack.c.h.b16 %v1317
    %v4075 = vunpack.c.l.b16 %v1318
    %v4076 = vunpack.c.l.b16 %v1319
    %v4077 = vunpack.c.h.b16 %v1319
    %v4078 = vunpack.c.l.b16 %v1320
    %v4079 = vunpack.c.h.b16 %v1320
    %v4080 = vunpack.c.l.b16 %v1321
    %v4081 = vunpack.c.h.b16 %v1321
    %v4082 = vunpack.c.l.b16 %v1322
    %v4083 = vunpack.c.h.b16 %v1322
    %v4084 = vunpack.c.l.b16 %v1323
    %v4085 = vunpack.c.h.b16 %v1323
    %v4086 = vunpack.c.l.b16 %v1324
    %v4087 = vunpack.c.h.b16 %v1324
    %v4088 = vunpack.c.l.b16 %v1325
    %v4089 = vunpack.c.l.b16 %v1326
    %v4090 = vunpack.c.h.b16 %v1326
    %v4091 = vunpack.c.l.b16 %v1327
    %v4092 = vunpack.c.h.b16 %v1327
    %v4093 = vunpack.c.l.b16 %v1328
    %v4094 = vunpack.c.h.b16 %v1328
    %v4095 = vunpack.c.l.b16 %v1329
    %v4096 = vunpack.c.h.b16 %v1329
    %v4097 = vunpack.c.l.b16 %v1330
    %v4098 = vunpack.c.h.b16 %v1330
    %v4099 = vunpack.c.l.b16 %v1331
    %v4100 = vunpack.c.h.b16 %v1331
    %v4101 = vunpack.c.l.b16 %v1332
    %v4102 = vunpack.c.l.b16 %v1333
    %v4103 = vunpack.c.h.b16 %v1333
    %v4104 = vunpack.c.l.b16 %v1334
    %v4105 = vunpack.c.h.b16 %v1334
    %v4106 = vunpack.c.l.b16 %v1335
    %v4107 = vunpack.c.h.b16 %v1335
    %v4108 = vunpack.c.l.b16 %v1336
    %v4109 = vunpack.c.h.b16 %v1336
    %v4110 = vunpack.c.l.b16 %v1337
    %v4111 = vunpack.c.h.b16 %v1337
    %v4112 = vunpack.c.l.b16 %v1338
    %v4113 = vunpack.c.h.b16 %v1338
    %v4114 = vunpack.c.l.b16 %v1339
    %v4115 = vunpack.c.l.b16 %v1340
    %v4116 = vunpack.c.h.b16 %v1340
    %v4117 = vunpack.c.l.b16 %v1341
    %v4118 = vunpack.c.h.b16 %v1341
    %v4119 = vunpack.c.l.b16 %v1342
    %v4120 = vunpack.c.h.b16 %v1342
    %v4121 = vunpack.c.l.b16 %v1343
    %v4122 = vunpack.c.h.b16 %v1343
    %v4123 = vunpack.c.l.b16 %v1344
    %v4124 = vunpack.c.h.b16 %v1344
    %v4125 = vunpack.c.l.b16 %v1345
    %v4126 = vunpack.c.h.b16 %v1345
    %v4127 = vunpack.c.l.b16 %v1346
    %v4128 = vunpack.c.l.b16 %v1347
    %v4129 = vunpack.c.h.b16 %v1347
    %v4130 = vunpack.c.l.b16 %v1348
    %v4131 = vunpack.c.h.b16 %v1348
    %v4132 = vunpack.c.l.b16 %v1349
    %v4133 = vunpack.c.h.b16 %v1349
    %v4134 = vunpack.c.l.b16 %v1350
    %v4135 = vunpack.c.h.b16 %v1350
    %v4136 = vunpack.c.l.b16 %v1351
    %v4137 = vunpack.c.h.b16 %v1351
    %v4138 = vunpack.c.l.b16 %v1352
    %v4139 = vunpack.c.h.b16 %v1352
    %v4140 = vunpack.c.l.b16 %v1353
    %v4141 = vunpack.c.l.b16 %v1354
    %v4142 = vunpack.c.h.b16 %v1354
    %v4143 = vunpack.c.l.b16 %v1355
    %v4144 = vunpack.c.h.b16 %v1355
    %v4145 = vunpack.c.l.b16 %v1356
    %v4146 = vunpack.c.h.b16 %v1356
    %v4147 = vunpack.c.l.b16 %v1357
    %v4148 = vunpack.c.h.b16 %v1357
    %v4149 = vunpack.c.l.b16 %v1358
    %v4150 = vunpack.c.h.b16 %v1358
    %v4151 = vunpack.c.l.b16 %v1359
    %v4152 = vunpack.c.h.b16 %v1359
    %v4153 = vunpack.c.l.b16 %v1360
    %v4154 = vunpack.c.l.b16 %v1361
    %v4155 = vunpack.c.h.b16 %v1361
    %v4156 = vunpack.c.l.b16 %v1362
    %v4157 = vunpack.c.h.b16 %v1362
    %v4158 = vunpack.c.l.b16 %v1363
    %v4159 = vunpack.c.h.b16 %v1363
    %v4160 = vunpack.c.l.b16 %v1364
    %v4161 = vunpack.c.h.b16 %v1364
    %v4162 = vunpack.c.l.b16 %v1365
    %v4163 = vunpack.c.h.b16 %v1365
    %v4164 = vunpack.c.l.b16 %v1366
    %v4165 = vunpack.c.h.b16 %v1366
    %v4166 = vunpack.c.l.b16 %v1367
    %v4167 = vunpack.c.l.b16 %v1368
    %v4168 = vunpack.c.h.b16 %v1368
    %v4169 = vunpack.c.l.b16 %v1369
    %v4170 = vunpack.c.h.b16 %v1369
    %v4171 = vunpack.c.l.b16 %v1370
    %v4172 = vunpack.c.h.b16 %v1370
    %v4173 = vunpack.c.l.b16 %v1371
    %v4174 = vunpack.c.h.b16 %v1371
    %v4175 = vunpack.c.l.b16 %v1372
    %v4176 = vunpack.c.h.b16 %v1372
    %v4177 = vunpack.c.l.b16 %v1373
    %v4178 = vunpack.c.h.b16 %v1373
    %v4179 = vunpack.c.l.b16 %v1374
    %v4180 = vunpack.c.l.b16 %v1375
    %v4181 = vunpack.c.h.b16 %v1375
    %v4182 = vunpack.c.l.b16 %v1376
    %v4183 = vunpack.c.h.b16 %v1376
    %v4184 = vunpack.c.l.b16 %v1377
    %v4185 = vunpack.c.h.b16 %v1377
    %v4186 = vunpack.c.l.b16 %v1378
    %v4187 = vunpack.c.h.b16 %v1378
    %v4188 = vunpack.c.l.b16 %v1379
    %v4189 = vunpack.c.h.b16 %v1379
    %v4190 = vunpack.c.l.b16 %v1380
    %v4191 = vunpack.c.h.b16 %v1380
    %v4192 = vunpack.c.l.b16 %v1381
    %v4193 = vunpack.c.l.b16 %v1382
    %v4194 = vunpack.c.h.b16 %v1382
    %v4195 = vunpack.c.l.b16 %v1383
    %v4196 = vunpack.c.h.b16 %v1383
    %v4197 = vunpack.c.l.b16 %v1384
    %v4198 = vunpack.c.h.b16 %v1384
    %v4199 = vunpack.c.l.b16 %v1385
    %v4200 = vunpack.c.h.b16 %v1385
    %v4201 = vunpack.c.l.b16 %v1386
    %v4202 = vunpack.c.h.b16 %v1386
    %v4203 = vunpack.c.l.b16 %v1387
    %v4204 = vunpack.c.h.b16 %v1387
    %v4205 = vunpack.c.l.b16 %v1388
    %v4206 = vunpack.c.l.b16 %v1389
    %v4207 = vunpack.c.h.b16 %v1389
    %v4208 = vunpack.c.l.b16 %v1390
    %v4209 = vunpack.c.h.b16 %v1390
    %v4210 = vunpack.c.l.b16 %v1391
    %v4211 = vunpack.c.h.b16 %v1391
    %v4212 = vunpack.c.l.b16 %v1392
    %v4213 = vunpack.c.h.b16 %v1392
    %v4214 = vunpack.c.l.b16 %v1393
    %v4215 = vunpack.c.h.b16 %v1393
    %v4216 = vunpack.c.l.b16 %v1394
    %v4217 = vunpack.c.h.b16 %v1394
    %v4218 = vunpack.c.l.b16 %v1395
    %v4219 = vunpack.c.l.b16 %v1396
    %v4220 = vunpack.c.h.b16 %v1396
    %v4221 = vunpack.c.l.b16 %v1397
    %v4222 = vunpack.c.h.b16 %v1397
    %v4223 = vunpack.c.l.b16 %v1398
    %v4224 = vunpack.c.h.b16 %v1398
    %v4225 = vunpack.c.l.b16 %v1399
    %v4226 = vunpack.c.h.b16 %v1399
    %v4227 = vunpack.c.l.b16 %v1400
    %v4228 = vunpack.c.h.b16 %v1400
    %v4229 = vunpack.c.l.b16 %v1401
    %v4230 = vunpack.c.h.b16 %v1401
    %v4231 = vunpack.c.l.b16 %v1402
    %v4232 = vunpack.c.l.b16 %v1403
    %v4233 = vunpack.c.h.b16 %v1403
    %v4234 = vunpack.c.l.b16 %v1404
    %v4235 = vunpack.c.h.b16 %v1404
    %v4236 = vunpack.c.l.b16 %v1405
    %v4237 = vunpack.c.h.b16 %v1405
    %v4238 = vunpack.c.l.b16 %v1406
    %v4239 = vunpack.c.h.b16 %v1406
    %v4240 = vunpack.c.l.b16 %v1407
    %v4241 = vunpack.c.h.b16 %v1407
    %v4242 = vunpack.c.l.b16 %v1408
    %v4243 = vunpack.c.h.b16 %v1408
    %v4244 = vunpack.c.l.b16 %v1409
    %v4245 = vunpack.c.l.b16 %v1410
    %v4246 = vunpack.c.h.b16 %v1410
    %v4247 = vunpack.c.l.b16 %v1411
    %v4248 = vunpack.c.h.b16 %v1411
    %v4249 = vunpack.c.l.b16 %v1412
    %v4250 = vunpack.c.h.b16 %v1412
    %v4251 = vunpack.c.l.b16 %v1413
    %v4252 = vunpack.c.h.b16 %v1413
    %v4253 = vunpack.c.l.b16 %v1414
    %v4254 = vunpack.c.h.b16 %v1414
    %v4255 = vunpack.c.l.b16 %v1415
    %v4256 = vunpack.c.h.b16 %v1415
    %v4257 = vunpack.c.l.b16 %v1416
    %v4258 = vunpack.c.l.b16 %v1417
    %v4259 = vunpack.c.h.b16 %v1417
    %v4260 = vunpack.c.l.b16 %v1418
    %v4261 = vunpack.c.h.b16 %v1418
    %v4262 = vunpack.c.l.b16 %v1419
    %v4263 = vunpack.c.h.b16 %v1419
    %v4264 = vunpack.c.l.b16 %v1420
    %v4265 = vunpack.c.h.b16 %v1420
    %v4266 = vunpack.c.l.b16 %v1421
    %v4267 = vunpack.c.h.b16 %v1421
    %v4268 = vunpack.c.l.b16 %v1422
    %v4269 = vunpack.c.h.b16 %v1422
    %v4270 = vunpack.c.l.b16 %v1423
    %v4271 = vunpack.c.l.b16 %v1424
    %v4272 = vunpack.c.h.b16 %v1424
    %v4273 = vunpack.c.l.b16 %v1425
    %v4274 = vunpack.c.h.b16 %v1425
    %v4275 = vunpack.c.l.b16 %v1426
    %v4276 = vunpack.c.h.b16 %v1426
    %v4277 = vunpack.c.l.b16 %v1427
    %v4278 = vunpack.c.h.b16 %v1427
    %v4279 = vunpack.c.l.b16 %v1428
    %v4280 = vunpack.c.h.b16 %v1428
    %v4281 = vunpack.c.l.b16 %v1429
    %v4282 = vunpack.c.h.b16 %v1429
    %v4283 = vunpack.c.l.b16 %v1430
    %v4284 = vunpack.c.l.b16 %v1431
    %v4285 = vunpack.c.h.b16 %v1431
    %v4286 = vunpack.c.l.b16 %v1432
    %v4287 = vunpack.c.h.b16 %v1432
    %v4288 = vunpack.c.l.b16 %v1433
    %v4289 = vunpack.c.h.b16 %v1433
    %v4290 = vunpack.c.l.b16 %v1434
    %v4291 = vunpack.c.h.b16 %v1434
    %v4292 = vunpack.c.l.b16 %v1435
    %v4293 = vunpack.c.h.b16 %v1435
    %v4294 = vunpack.c.l.b16 %v1436
    %v4295 = vunpack.c.h.b16 %v1436
    %v4296 = vunpack.c.l.b16 %v1437
    %v4297 = vunpack.c.l.b16 %v1438
    %v4298 = vunpack.c.h.b16 %v1438
    %v4299 = vunpack.c.l.b16 %v1439
    %v4300 = vunpack.c.h.b16 %v1439
    %v4301 = vunpack.c.l.b16 %v1440
    %v4302 = vunpack.c.h.b16 %v1440
    %v4303 = vunpack.c.l.b16 %v1441
    %v4304 = vunpack.c.h.b16 %v1441
    %v4305 = vunpack.c.l.b16 %v1442
    %v4306 = vunpack.c.h.b16 %v1442
    %v4307 = vunpack.c.l.b16 %v1443
    %v4308 = vunpack.c.h.b16 %v1443
    %v4309 = vunpack.c.l.b16 %v1444
    %v4310 = vunpack.c.l.b16 %v1445
    %v4311 = vunpack.c.h.b16 %v1445
    %v4312 = vunpack.c.l.b16 %v1446
    %v4313 = vunpack.c.h.b16 %v1446
    %v4314 = vunpack.c.l.b16 %v1447
    %v4315 = vunpack.c.h.b16 %v1447
    %v4316 = vunpack.c.l.b16 %v1448
    %v4317 = vunpack.c.h.b16 %v1448
    %v4318 = vunpack.c.l.b16 %v1449
    %v4319 = vunpack.c.h.b16 %v1449
    %v4320 = vunpack.c.l.b16 %v1450
    %v4321 = vunpack.c.h.b16 %v1450
    %v4322 = vunpack.c.l.b16 %v1451
    %v4323 = vunpack.c.l.b16 %v1452
    %v4324 = vunpack.c.h.b16 %v1452
    %v4325 = vunpack.c.l.b16 %v1453
    %v4326 = vunpack.c.h.b16 %v1453
    %v4327 = vunpack.c.l.b16 %v1454
    %v4328 = vunpack.c.h.b16 %v1454
    %v4329 = vunpack.c.l.b16 %v1455
    %v4330 = vunpack.c.h.b16 %v1455
    %v4331 = vunpack.c.l.b16 %v1456
    %v4332 = vunpack.c.h.b16 %v1456
    %v4333 = vunpack.c.l.b16 %v1457
    %v4334 = vunpack.c.h.b16 %v1457
    %v4335 = vunpack.c.l.b16 %v1458
    %v4336 = vunpack.c.l.b16 %v1459
    %v4337 = vunpack.c.h.b16 %v1459
    %v4338 = vunpack.c.l.b16 %v1460
    %v4339 = vunpack.c.h.b16 %v1460
    %v4340 = vunpack.c.l.b16 %v1461
    %v4341 = vunpack.c.h.b16 %v1461
    %v4342 = vunpack.c.l.b16 %v1462
    %v4343 = vunpack.c.h.b16 %v1462
    %v4344 = vunpack.c.l.b16 %v1463
    %v4345 = vunpack.c.h.b16 %v1463
    %v4346 = vunpack.c.l.b16 %v1464
    %v4347 = vunpack.c.h.b16 %v1464
    %v4348 = vunpack.c.l.b16 %v1465
    %v4349 = vunpack.c.l.b16 %v1466
    %v4350 = vunpack.c.h.b16 %v1466
    %v4351 = vunpack.c.l.b16 %v1467
    %v4352 = vunpack.c.h.b16 %v1467
    %v4353 = vunpack.c.l.b16 %v1468
    %v4354 = vunpack.c.h.b16 %v1468
    %v4355 = vunpack.c.l.b16 %v1469
    %v4356 = vunpack.c.h.b16 %v1469
    %v4357 = vunpack.c.l.b16 %v1470
    %v4358 = vunpack.c.h.b16 %v1470
    %v4359 = vunpack.c.l.b16 %v1471
    %v4360 = vunpack.c.h.b16 %v1471
    %v4361 = vunpack.c.l.b16 %v1472
    %v4362 = vunpack.c.l.b16 %v1473
    %v4363 = vunpack.c.h.b16 %v1473
    %v4364 = vunpack.c.l.b16 %v1474
    %v4365 = vunpack.c.h.b16 %v1474
    %v4366 = vunpack.c.l.b16 %v1475
    %v4367 = vunpack.c.h.b16 %v1475
    %v4368 = vunpack.c.l.b16 %v1476
    %v4369 = vunpack.c.h.b16 %v1476
    %v4370 = vunpack.c.l.b16 %v1477
    %v4371 = vunpack.c.h.b16 %v1477
    %v4372 = vunpack.c.l.b16 %v1478
    %v4373 = vunpack.c.h.b16 %v1478
    %v4374 = vunpack.c.l.b16 %v1479
    %v4375 = vunpack.c.l.b16 %v1480
    %v4376 = vunpack.c.h.b16 %v1480
    %v4377 = vunpack.c.l.b16 %v1481
    %v4378 = vunpack.c.h.b16 %v1481
    %v4379 = vunpack.c.l.b16 %v1482
    %v4380 = vunpack.c.h.b16 %v1482
    %v4381 = vunpack.c.l.b16 %v1483
    %v4382 = vunpack.c.h.b16 %v1483
    %v4383 = vunpack.c.l.b16 %v1484
    %v4384 = vunpack.c.h.b16 %v1484
    %v4385 = vunpack.c.l.b16 %v1485
    %v4386 = vunpack.c.h.b16 %v1485
    %v4387 = vunpack.c.l.b16 %v1486
    %v4388 = vunpack.c.l.b16 %v1487
    %v4389 = vunpack.c.h.b16 %v1487
    %v4390 = vunpack.c.l.b16 %v1488
    %v4391 = vunpack.c.h.b16 %v1488
    %v4392 = vunpack.c.l.b16 %v1489
    %v4393 = vunpack.c.h.b16 %v1489
    %v4394 = vunpack.c.l.b16 %v1490
    %v4395 = vunpack.c.h.b16 %v1490
    %v4396 = vunpack.c.l.b16 %v1491
    %v4397 = vunpack.c.h.b16 %v1491
    %v4398 = vunpack.c.l.b16 %v1492
    %v4399 = vunpack.c.h.b16 %v1492
    %v4400 = vunpack.c.l.b16 %v1493
    %v4401 = vunpack.c.l.b16 %v1494
    %v4402 = vunpack.c.h.b16 %v1494
    %v4403 = vunpack.c.l.b16 %v1495
    %v4404 = vunpack.c.h.b16 %v1495
    %v4405 = vunpack.c.l.b16 %v1496
    %v4406 = vunpack.c.h.b16 %v1496
    %v4407 = vunpack.c.l.b16 %v1497
    %v4408 = vunpack.c.h.b16 %v1497
    %v4409 = vunpack.c.l.b16 %v1498
    %v4410 = vunpack.c.h.b16 %v1498
    %v4411 = vunpack.c.l.b16 %v1499
    %v4412 = vunpack.c.h.b16 %v1499
    %v4413 = vunpack.c.l.b16 %v1500
    %v4414 = vunpack.c.l.b16 %v1501
    %v4415 = vunpack.c.h.b16 %v1501
    %v4416 = vunpack.c.l.b16 %v1502
    %v4417 = vunpack.c.h.b16 %v1502
    %v4418 = vunpack.c.l.b16 %v1503
    %v4419 = vunpack.c.h.b16 %v1503
    %v4420 = vunpack.c.l.b16 %v1504
    %v4421 = vunpack.c.h.b16 %v1504
    %v4422 = vunpack.c.l.b16 %v1505
    %v4423 = vunpack.c.h.b16 %v1505
    %v4424 = vunpack.c.l.b16 %v1506
    %v4425 = vunpack.c.h.b16 %v1506
    %v4426 = vunpack.c.l.b16 %v1507
    %v4427 = vunpack.c.l.b16 %v1508
    %v4428 = vunpack.c.h.b16 %v1508
    %v4429 = vunpack.c.l.b16 %v1509
    %v4430 = vunpack.c.h.b16 %v1509
    %v4431 = vunpack.c.l.b16 %v1510
    %v4432 = vunpack.c.h.b16 %v1510
    %v4433 = vunpack.c.l.b16 %v1511
    %v4434 = vunpack.c.h.b16 %v1511
    %v4435 = vunpack.c.l.b16 %v1512
    %v4436 = vunpack.c.h.b16 %v1512
    %v4437 = vunpack.c.l.b16 %v1513
    %v4438 = vunpack.c.h.b16 %v1513
    %v4439 = vunpack.c.l.b16 %v1514
    %v4440 = vunpack.c.l.b16 %v1515
    %v4441 = vunpack.c.h.b16 %v1515
    %v4442 = vunpack.c.l.b16 %v1516
    %v4443 = vunpack.c.h.b16 %v1516
    %v4444 = vunpack.c.l.b16 %v1517
    %v4445 = vunpack.c.h.b16 %v1517
    %v4446 = vunpack.c.l.b16 %v1518
    %v4447 = vunpack.c.h.b16 %v1518
    %v4448 = vunpack.c.l.b16 %v1519
    %v4449 = vunpack.c.h.b16 %v1519
    %v4450 = vunpack.c.l.b16 %v1520
    %v4451 = vunpack.c.h.b16 %v1520
    %v4452 = vunpack.c.l.b16 %v1521
    %v4453 = vunpack.c.l.b16 %v1522
    %v4454 = vunpack.c.h.b16 %v1522
    %v4455 = vunpack.c.l.b16 %v1523
    %v4456 = vunpack.c.h.b16 %v1523
    %v4457 = vunpack.c.l.b16 %v1524
    %v4458 = vunpack.c.h.b16 %v1524
    %v4459 = vunpack.c.l.b16 %v1525
    %v4460 = vunpack.c.h.b16 %v1525
    %v4461 = vunpack.c.l.b16 %v1526
    %v4462 = vunpack.c.h.b16 %v1526
    %v4463 = vunpack.c.l.b16 %v1527
    %v4464 = vunpack.c.h.b16 %v1527
    %v4465 = vunpack.c.l.b16 %v1528
    %v4466 = vunpack.c.l.b16 %v1529
    %v4467 = vunpack.c.h.b16 %v1529
    %v4468 = vunpack.c.l.b16 %v1530
    %v4469 = vunpack.c.h.b16 %v1530
    %v4470 = vunpack.c.l.b16 %v1531
    %v4471 = vunpack.c.h.b16 %v1531
    %v4472 = vunpack.c.l.b16 %v1532
    %v4473 = vunpack.c.h.b16 %v1532
    %v4474 = vunpack.c.l.b16 %v1533
    %v4475 = vunpack.c.h.b16 %v1533
    %v4476 = vunpack.c.l.b16 %v1534
    %v4477 = vunpack.c.h.b16 %v1534
    %v4478 = vunpack.c.l.b16 %v1535
    %v4479 = vunpack.c.l.b16 %v1536
    %v4480 = vunpack.c.h.b16 %v1536
    %v4481 = vunpack.c.l.b16 %v1537
    %v4482 = vunpack.c.h.b16 %v1537
    %v4483 = vunpack.c.l.b16 %v1538
    %v4484 = vunpack.c.h.b16 %v1538
    %v4485 = vunpack.c.l.b16 %v1539
    %v4486 = vunpack.c.h.b16 %v1539
    %v4487 = vunpack.c.l.b16 %v1540
    %v4488 = vunpack.c.h.b16 %v1540
    %v4489 = vunpack.c.l.b16 %v1541
    %v4490 = vunpack.c.h.b16 %v1541
    %v4491 = vunpack.c.l.b16 %v1542
    %v4492 = vpack.c.b16 %v2633, %v2620
    %v4493 = vpack.c.b16 %v2634, %v2621
    %v4494 = vpack.c.b16 %v2635, %v2622
    %v4495 = vpack.c.b16 %v2636, %v2623
    %v4496 = vpack.c.b16 %v2637, %v2624
    %v4497 = vpack.c.b16 %v2638, %v2625
    %v4498 = vpack.c.b16 %v2639, %v2626
    %v4499 = vpack.c.b16 %v2640, %v2627
    %v4500 = vpack.c.b16 %v2641, %v2628
    %v4501 = vpack.c.b16 %v2642, %v2629
    %v4502 = vpack.c.b16 %v2643, %v2630
    %v4503 = vpack.c.b16 %v2644, %v2631
    %v4504 = vpack.c.b16 %v2645, %v2632
    %v4505 = vpack.c.b16 %v2659, %v2646
    %v4506 = vpack.c.b16 %v2660, %v2647
    %v4507 = vpack.c.b16 %v2661, %v2648
    %v4508 = vpack.c.b16 %v2662, %v2649
    %v4509 = vpack.c.b16 %v2663, %v2650
    %v4510 = vpack.c.b16 %v2664, %v2651
    %v4511 = vpack.c.b16 %v2665, %v2652
    %v4512 = vpack.c.b16 %v2666, %v2653
    %v4513 = vpack.c.b16 %v2667, %v2654
    %v4514 = vpack.c.b16 %v2668, %v2655
    %v4515 = vpack.c.b16 %v2669, %v2656
    %v4516 = vpack.c.b16 %v2670, %v2657
    %v4517 = vpack.c.b16 %v2671, %v2658
    %v4518 = vpack.c.b16 %v2685, %v2672
    %v4519 = vpack.c.b16 %v2686, %v2673
    %v4520 = vpack.c.b16 %v2687, %v2674
    %v4521 = vpack.c.b16 %v2688, %v2675
    %v4522 = vpack.c.b16 %v2689, %v2676
    %v4523 = vpack.c.b16 %v2690, %v2677
    %v4524 = vpack.c.b16 %v2691, %v2678
    %v4525 = vpack.c.b16 %v2692, %v2679
    %v4526 = vpack.c.b16 %v2693, %v2680
    %v4527 = vpack.c.b16 %v2694, %v2681
    %v4528 = vpack.c.b16 %v2695, %v2682
    %v4529 = vpack.c.b16 %v2696, %v2683
    %v4530 = vpack.c.b16 %v2697, %v2684
    %v4531 = vpack.c.b16 %v2711, %v2698
    %v4532 = vpack.c.b16 %v2712, %v2699
    %v4533 = vpack.c.b16 %v2713, %v2700
    %v4534 = vpack.c.b16 %v2714, %v2701
    %v4535 = vpack.c.b16 %v2715, %v2702
    %v4536 = vpack.c.b16 %v2716, %v2703
    %v4537 = vpack.c.b16 %v2717, %v2704
    %v4538 = vpack.c.b16 %v2718, %v2705
    %v4539 = vpack.c.b16 %v2719, %v2706
    %v4540 = vpack.c.b16 %v2720, %v2707
    %v4541 = vpack.c.b16 %v2721, %v2708
    %v4542 = vpack.c.b16 %v2722, %v2709
    %v4543 = vpack.c.b16 %v2723, %v2710
    %v4544 = vpack.c.b16 %v2737, %v2724
    %v4545 = vpack.c.b16 %v2738, %v2725
    %v4546 = vpack.c.b16 %v2739, %v2726
    %v4547 = vpack.c.b16 %v2740, %v2727
    %v4548 = vpack.c.b16 %v2741, %v2728
    %v4549 = vpack.c.b16 %v2742, %v2729
    %v4550 = vpack.c.b16 %v2743, %v2730
    %v4551 = vpack.c.b16 %v2744, %v2731
    %v4552 = vpack.c.b16 %v2745, %v2732
    %v4553 = vpack.c.b16 %v2746, %v2733
    %v4554 = vpack.c.b16 %v2747, %v2734
    %v4555 = vpack.c.b16 %v2748, %v2735
    %v4556 = vpack.c.b16 %v2749, %v2736
    %v4557 = vpack.c.b16 %v2763, %v2750
    %v4558 = vpack.c.b16 %v2764, %v2751
    %v4559 = vpack.c.b16 %v2765, %v2752
    %v4560 = vpack.c.b16 %v2766, %v2753
    %v4561 = vpack.c.b16 %v2767, %v2754
    %v4562 = vpack.c.b16 %v2768, %v2755
    %v4563 = vpack.c.b16 %v2769, %v2756
    %v4564 = vpack.c.b16 %v2770, %v2757
    %v4565 = vpack.c.b16 %v2771, %v2758
    %v4566 = vpack.c.b16 %v2772, %v2759
    %v4567 = vpack.c.b16 %v2773, %v2760
    %v4568 = vpack.c.b16 %v2774, %v2761
    %v4569 = vpack.c.b16 %v2775, %v2762
    %v4570 = vpack.c.b16 %v2789, %v2776
    %v4571 = vpack.c.b16 %v2790, %v2777
    %v4572 = vpack.c.b16 %v2791, %v2778
    %v4573 = vpack.c.b16 %v2792, %v2779
    %v4574 = vpack.c.b16 %v2793, %v2780
    %v4575 = vpack.c.b16 %v2794, %v2781
    %v4576 = vpack.c.b16 %v2795, %v2782
    %v4577 = vpack.c.b16 %v2796, %v2783
    %v4578 = vpack.c.b16 %v2797, %v2784
    %v4579 = vpack.c.b16 %v2798, %v2785
    %v4580 = vpack.c.b16 %v2799, %v2786
    %v4581 = vpack.c.b16 %v2800, %v2787
    %v4582 = vpack.c.b16 %v2801, %v2788
    %v4583 = vpack.c.b16 %v2815, %v2802
    %v4584 = vpack.c.b16 %v2816, %v2803
    %v4585 = vpack.c.b16 %v2817, %v2804
    %v4586 = vpack.c.b16 %v2818, %v2805
    %v4587 = vpack.c.b16 %v2819, %v2806
    %v4588 = vpack.c.b16 %v2820, %v2807
    %v4589 = vpack.c.b16 %v2821, %v2808
    %v4590 = vpack.c.b16 %v2822, %v2809
    %v4591 = vpack.c.b16 %v2823, %v2810
    %v4592 = vpack.c.b16 %v2824, %v2811
    %v4593 = vpack.c.b16 %v2825, %v2812
    %v4594 = vpack.c.b16 %v2826, %v2813
    %v4595 = vpack.c.b16 %v2827, %v2814
    %v4596 = vpack.c.b16 %v2841, %v2828
    %v4597 = vpack.c.b16 %v2842, %v2829
    %v4598 = vpack.c.b16 %v2843, %v2830
    %v4599 = vpack.c.b16 %v2844, %v2831
    %v4600 = vpack.c.b16 %v2845, %v2832
    %v4601 = vpack.c.b16 %v2846, %v2833
    %v4602 = vpack.c.b16 %v2847, %v2834
    %v4603 = vpack.c.b16 %v2848, %v2835
    %v4604 = vpack.c.b16 %v2849, %v2836
    %v4605 = vpack.c.b16 %v2850, %v2837
    %v4606 = vpack.c.b16 %v2851, %v2838
    %v4607 = vpack.c.b16 %v2852, %v2839
    %v4608 = vpack.c.b16 %v2853, %v2840
    %v4609 = vpack.c.b16 %v2867, %v2854
    %v4610 = vpack.c.b16 %v2868, %v2855
    %v4611 = vpack.c.b16 %v2869, %v2856
    %v4612 = vpack.c.b16 %v2870, %v2857
    %v4613 = vpack.c.b16 %v2871, %v2858
    %v4614 = vpack.c.b16 %v2872, %v2859
    %v4615 = vpack.c.b16 %v2873, %v2860
    %v4616 = vpack.c.b16 %v2874, %v2861
    %v4617 = vpack.c.b16 %v2875, %v2862
    %v4618 = vpack.c.b16 %v2876, %v2863
    %v4619 = vpack.c.b16 %v2877, %v2864
    %v4620 = vpack.c.b16 %v2878, %v2865
    %v4621 = vpack.c.b16 %v2879, %v2866
    %v4622 = vpack.c.b16 %v2893, %v2880
    %v4623 = vpack.c.b16 %v2894, %v2881
    %v4624 = vpack.c.b16 %v2895, %v2882
    %v4625 = vpack.c.b16 %v2896, %v2883
    %v4626 = vpack.c.b16 %v2897, %v2884
    %v4627 = vpack.c.b16 %v2898, %v2885
    %v4628 = vpack.c.b16 %v2899, %v2886
    %v4629 = vpack.c.b16 %v2900, %v2887
    %v4630 = vpack.c.b16 %v2901, %v2888
    %v4631 = vpack.c.b16 %v2902, %v2889
    %v4632 = vpack.c.b16 %v2903, %v2890
    %v4633 = vpack.c.b16 %v2904, %v2891
    %v4634 = vpack.c.b16 %v2905, %v2892
    %v4635 = vpack.c.b16 %v2919, %v2906
    %v4636 = vpack.c.b16 %v2920, %v2907
    %v4637 = vpack.c.b16 %v2921, %v2908
    %v4638 = vpack.c.b16 %v2922, %v2909
    %v4639 = vpack.c.b16 %v2923, %v2910
    %v4640 = vpack.c.b16 %v2924, %v2911
    %v4641 = vpack.c.b16 %v2925, %v2912
    %v4642 = vpack.c.b16 %v2926, %v2913
    %v4643 = vpack.c.b16 %v2927, %v2914
    %v4644 = vpack.c.b16 %v2928, %v2915
    %v4645 = vpack.c.b16 %v2929, %v2916
    %v4646 = vpack.c.b16 %v2930, %v2917
    %v4647 = vpack.c.b16 %v2931, %v2918
    %v4648 = vpack.c.b16 %v2945, %v2932
    %v4649 = vpack.c.b16 %v2946, %v2933
    %v4650 = vpack.c.b16 %v2947, %v2934
    %v4651 = vpack.c.b16 %v2948, %v2935
    %v4652 = vpack.c.b16 %v2949, %v2936
    %v4653 = vpack.c.b16 %v2950, %v2937
    %v4654 = vpack.c.b16 %v2951, %v2938
    %v4655 = vpack.c.b16 %v2952, %v2939
    %v4656 = vpack.c.b16 %v2953, %v2940
    %v4657 = vpack.c.b16 %v2954, %v2941
    %v4658 = vpack.c.b16 %v2955, %v2942
    %v4659 = vpack.c.b16 %v2956, %v2943
    %v4660 = vpack.c.b16 %v2957, %v2944
    %v4661 = vpack.c.b16 %v2971, %v2958
    %v4662 = vpack.c.b16 %v2972, %v2959
    %v4663 = vpack.c.b16 %v2973, %v2960
    %v4664 = vpack.c.b16 %v2974, %v2961
    %v4665 = vpack.c.b16 %v2975, %v2962
    %v4666 = vpack.c.b16 %v2976, %v2963
    %v4667 = vpack.c.b16 %v2977, %v2964
    %v4668 = vpack.c.b16 %v2978, %v2965
    %v4669 = vpack.c.b16 %v2979, %v2966
    %v4670 = vpack.c.b16 %v2980, %v2967
    %v4671 = vpack.c.b16 %v2981, %v2968
    %v4672 = vpack.c.b16 %v2982, %v2969
    %v4673 = vpack.c.b16 %v2983, %v2970
    %v4674 = vpack.c.b16 %v2997, %v2984
    %v4675 = vpack.c.b16 %v2998, %v2985
    %v4676 = vpack.c.b16 %v2999, %v2986
    %v4677 = vpack.c.b16 %v3000, %v2987
    %v4678 = vpack.c.b16 %v3001, %v2988
    %v4679 = vpack.c.b16 %v3002, %v2989
    %v4680 = vpack.c.b16 %v3003, %v2990
    %v4681 = vpack.c.b16 %v3004, %v2991
    %v4682 = vpack.c.b16 %v3005, %v2992
    %v4683 = vpack.c.b16 %v3006, %v2993
    %v4684 = vpack.c.b16 %v3007, %v2994
    %v4685 = vpack.c.b16 %v3008, %v2995
    %v4686 = vpack.c.b16 %v3009, %v2996
    %v4687 = vpack.c.b16 %v3023, %v3010
    %v4688 = vpack.c.b16 %v3024, %v3011
    %v4689 = vpack.c.b16 %v3025, %v3012
    %v4690 = vpack.c.b16 %v3026, %v3013
    %v4691 = vpack.c.b16 %v3027, %v3014
    %v4692 = vpack.c.b16 %v3028, %v3015
    %v4693 = vpack.c.b16 %v3029, %v3016
    %v4694 = vpack.c.b16 %v3030, %v3017
    %v4695 = vpack.c.b16 %v3031, %v3018
    %v4696 = vpack.c.b16 %v3032, %v3019
    %v4697 = vpack.c.b16 %v3033, %v3020
    %v4698 = vpack.c.b16 %v3034, %v3021
    %v4699 = vpack.c.b16 %v3035, %v3022
    %v4700 = vpack.c.b16 %v3049, %v3036
    %v4701 = vpack.c.b16 %v3050, %v3037
    %v4702 = vpack.c.b16 %v3051, %v3038
    %v4703 = vpack.c.b16 %v3052, %v3039
    %v4704 = vpack.c.b16 %v3053, %v3040
    %v4705 = vpack.c.b16 %v3054, %v3041
    %v4706 = vpack.c.b16 %v3055, %v3042
    %v4707 = vpack.c.b16 %v3056, %v3043
    %v4708 = vpack.c.b16 %v3057, %v3044
    %v4709 = vpack.c.b16 %v3058, %v3045
    %v4710 = vpack.c.b16 %v3059, %v3046
    %v4711 = vpack.c.b16 %v3060, %v3047
    %v4712 = vpack.c.b16 %v3061, %v3048
    %v4713 = vpack.c.b16 %v3075, %v3062
    %v4714 = vpack.c.b16 %v3076, %v3063
    %v4715 = vpack.c.b16 %v3077, %v3064
    %v4716 = vpack.c.b16 %v3078, %v3065
    %v4717 = vpack.c.b16 %v3079, %v3066
    %v4718 = vpack.c.b16 %v3080, %v3067
    %v4719 = vpack.c.b16 %v3081, %v3068
    %v4720 = vpack.c.b16 %v3082, %v3069
    %v4721 = vpack.c.b16 %v3083, %v3070
    %v4722 = vpack.c.b16 %v3084, %v3071
    %v4723 = vpack.c.b16 %v3085, %v3072
    %v4724 = vpack.c.b16 %v3086, %v3073
    %v4725 = vpack.c.b16 %v3087, %v3074
    %v4726 = vpack.c.b16 %v3101, %v3088
    %v4727 = vpack.c.b16 %v3102, %v3089
    %v4728 = vpack.c.b16 %v3103, %v3090
    %v4729 = vpack.c.b16 %v3104, %v3091
    %v4730 = vpack.c.b16 %v3105, %v3092
    %v4731 = vpack.c.b16 %v3106, %v3093
    %v4732 = vpack.c.b16 %v3107, %v3094
    %v4733 = vpack.c.b16 %v3108, %v3095
    %v4734 = vpack.c.b16 %v3109, %v3096
    %v4735 = vpack.c.b16 %v3110, %v3097
    %v4736 = vpack.c.b16 %v3111, %v3098
    %v4737 = vpack.c.b16 %v3112, %v3099
    %v4738 = vpack.c.b16 %v3113, %v3100
    %v4739 = vpack.c.b16 %v3127, %v3114
    %v4740 = vpack.c.b16 %v3128, %v3115
    %v4741 = vpack.c.b16 %v3129, %v3116
    %v4742 = vpack.c.b16 %v3130, %v3117
    %v4743 = vpack.c.b16 %v3131, %v3118
    %v4744 = vpack.c.b16 %v3132, %v3119
    %v4745 = vpack.c.b16 %v3133, %v3120
    %v4746 = vpack.c.b16 %v3134, %v3121
    %v4747 = vpack.c.b16 %v3135, %v3122
    %v4748 = vpack.c.b16 %v3136, %v3123
    %v4749 = vpack.c.b16 %v3137, %v3124
    %v4750 = vpack.c.b16 %v3138, %v3125
    %v4751 = vpack.c.b16 %v3139, %v3126
    %v4752 = vpack.c.b16 %v3153, %v3140
    %v4753 = vpack.c.b16 %v3154, %v3141
    %v4754 = vpack.c.b16 %v3155, %v3142
    %v4755 = vpack.c.b16 %v3156, %v3143
    %v4756 = vpack.c.b16 %v3157, %v3144
    %v4757 = vpack.c.b16 %v3158, %v3145
    %v4758 = vpack.c.b16 %v3159, %v3146
    %v4759 = vpack.c.b16 %v3160, %v3147
    %v4760 = vpack.c.b16 %v3161, %v3148
    %v4761 = vpack.c.b16 %v3162, %v3149
    %v4762 = vpack.c.b16 %v3163, %v3150
    %v4763 = vpack.c.b16 %v3164, %v3151
    %v4764 = vpack.c.b16 %v3165, %v3152
    %v4765 = vpack.c.b16 %v3179, %v3166
    %v4766 = vpack.c.b16 %v3180, %v3167
    %v4767 = vpack.c.b16 %v3181, %v3168
    %v4768 = vpack.c.b16 %v3182, %v3169
    %v4769 = vpack.c.b16 %v3183, %v3170
    %v4770 = vpack.c.b16 %v3184, %v3171
    %v4771 = vpack.c.b16 %v3185, %v3172
    %v4772 = vpack.c.b16 %v3186, %v3173
    %v4773 = vpack.c.b16 %v3187, %v3174
    %v4774 = vpack.c.b16 %v3188, %v3175
    %v4775 = vpack.c.b16 %v3189, %v3176
    %v4776 = vpack.c.b16 %v3190, %v3177
    %v4777 = vpack.c.b16 %v3191, %v3178
    %v4778 = vpack.c.b16 %v3205, %v3192
    %v4779 = vpack.c.b16 %v3206, %v3193
    %v4780 = vpack.c.b16 %v3207, %v3194
    %v4781 = vpack.c.b16 %v3208, %v3195
    %v4782 = vpack.c.b16 %v3209, %v3196
    %v4783 = vpack.c.b16 %v3210, %v3197
    %v4784 = vpack.c.b16 %v3211, %v3198
    %v4785 = vpack.c.b16 %v3212, %v3199
    %v4786 = vpack.c.b16 %v3213, %v3200
    %v4787 = vpack.c.b16 %v3214, %v3201
    %v4788 = vpack.c.b16 %v3215, %v3202
    %v4789 = vpack.c.b16 %v3216, %v3203
    %v4790 = vpack.c.b16 %v3217, %v3204
    %v4791 = vpack.c.b16 %v3231, %v3218
    %v4792 = vpack.c.b16 %v3232, %v3219
    %v4793 = vpack.c.b16 %v3233, %v3220
    %v4794 = vpack.c.b16 %v3234, %v3221
    %v4795 = vpack.c.b16 %v3235, %v3222
    %v4796 = vpack.c.b16 %v3236, %v3223
    %v4797 = vpack.c.b16 %v3237, %v3224
    %v4798 = vpack.c.b16 %v3238, %v3225
    %v4799 = vpack.c.b16 %v3239, %v3226
    %v4800 = vpack.c.b16 %v3240, %v3227
    %v4801 = vpack.c.b16 %v3241, %v3228
    %v4802 = vpack.c.b16 %v3242, %v3229
    %v4803 = vpack.c.b16 %v3243, %v3230
    %v4804 = vpack.c.b16 %v3257, %v3244
    %v4805 = vpack.c.b16 %v3258, %v3245
    %v4806 = vpack.c.b16 %v3259, %v3246
    %v4807 = vpack.c.b16 %v3260, %v3247
    %v4808 = vpack.c.b16 %v3261, %v3248
    %v4809 = vpack.c.b16 %v3262, %v3249
    %v4810 = vpack.c.b16 %v3263, %v3250
    %v4811 = vpack.c.b16 %v3264, %v3251
    %v4812 = vpack.c.b16 %v3265, %v3252
    %v4813 = vpack.c.b16 %v3266, %v3253
    %v4814 = vpack.c.b16 %v3267, %v3254
    %v4815 = vpack.c.b16 %v3268, %v3255
    %v4816 = vpack.c.b16 %v3269, %v3256
    %v4817 = vpack.c.b16 %v3283, %v3270
    %v4818 = vpack.c.b16 %v3284, %v3271
    %v4819 = vpack.c.b16 %v3285, %v3272
    %v4820 = vpack.c.b16 %v3286, %v3273
    %v4821 = vpack.c.b16 %v3287, %v3274
    %v4822 = vpack.c.b16 %v3288, %v3275
    %v4823 = vpack.c.b16 %v3289, %v3276
    %v4824 = vpack.c.b16 %v3290, %v3277
    %v4825 = vpack.c.b16 %v3291, %v3278
    %v4826 = vpack.c.b16 %v3292, %v3279
    %v4827 = vpack.c.b16 %v3293, %v3280
    %v4828 = vpack.c.b16 %v3294, %v3281
    %v4829 = vpack.c.b16 %v3295, %v3282
    %v4830 = vpack.c.b16 %v3309, %v3296
    %v4831 = vpack.c.b16 %v3310, %v3297
    %v4832 = vpack.c.b16 %v3311, %v3298
    %v4833 = vpack.c.b16 %v3312, %v3299
    %v4834 = vpack.c.b16 %v3313, %v3300
    %v4835 = vpack.c.b16 %v3314, %v3301
    %v4836 = vpack.c.b16 %v3315, %v3302
    %v4837 = vpack.c.b16 %v3316, %v3303
    %v4838 = vpack.c.b16 %v3317, %v3304
    %v4839 = vpack.c.b16 %v3318, %v3305
    %v4840 = vpack.c.b16 %v3319, %v3306
    %v4841 = vpack.c.b16 %v3320, %v3307
    %v4842 = vpack.c.b16 %v3321, %v3308
    %v4843 = vpack.c.b16 %v3335, %v3322
    %v4844 = vpack.c.b16 %v3336, %v3323
    %v4845 = vpack.c.b16 %v3337, %v3324
    %v4846 = vpack.c.b16 %v3338, %v3325
    %v4847 = vpack.c.b16 %v3339, %v3326
    %v4848 = vpack.c.b16 %v3340, %v3327
    %v4849 = vpack.c.b16 %v3341, %v3328
    %v4850 = vpack.c.b16 %v3342, %v3329
    %v4851 = vpack.c.b16 %v3343, %v3330
    %v4852 = vpack.c.b16 %v3344, %v3331
    %v4853 = vpack.c.b16 %v3345, %v3332
    %v4854 = vpack.c.b16 %v3346, %v3333
    %v4855 = vpack.c.b16 %v3347, %v3334
    %v4856 = vpack.c.b16 %v3361, %v3348
    %v4857 = vpack.c.b16 %v3362, %v3349
    %v4858 = vpack.c.b16 %v3363, %v3350
    %v4859 = vpack.c.b16 %v3364, %v3351
    %v4860 = vpack.c.b16 %v3365, %v3352
    %v4861 = vpack.c.b16 %v3366, %v3353
    %v4862 = vpack.c.b16 %v3367, %v3354
    %v4863 = vpack.c.b16 %v3368, %v3355
    %v4864 = vpack.c.b16 %v3369, %v3356
    %v4865 = vpack.c.b16 %v3370, %v3357
    %v4866 = vpack.c.b16 %v3371, %v3358
    %v4867 = vpack.c.b16 %v3372, %v3359
    %v4868 = vpack.c.b16 %v3373, %v3360
    %v4869 = vpack.c.b16 %v3387, %v3374
    %v4870 = vpack.c.b16 %v3388, %v3375
    %v4871 = vpack.c.b16 %v3389, %v3376
    %v4872 = vpack.c.b16 %v3390, %v3377
    %v4873 = vpack.c.b16 %v3391, %v3378
    %v4874 = vpack.c.b16 %v3392, %v3379
    %v4875 = vpack.c.b16 %v3393, %v3380
    %v4876 = vpack.c.b16 %v3394, %v3381
    %v4877 = vpack.c.b16 %v3395, %v3382
    %v4878 = vpack.c.b16 %v3396, %v3383
    %v4879 = vpack.c.b16 %v3397, %v3384
    %v4880 = vpack.c.b16 %v3398, %v3385
    %v4881 = vpack.c.b16 %v3399, %v3386
    %v4882 = vpack.c.b16 %v3413, %v3400
    %v4883 = vpack.c.b16 %v3414, %v3401
    %v4884 = vpack.c.b16 %v3415, %v3402
    %v4885 = vpack.c.b16 %v3416, %v3403
    %v4886 = vpack.c.b16 %v3417, %v3404
    %v4887 = vpack.c.b16 %v3418, %v3405
    %v4888 = vpack.c.b16 %v3419, %v3406
    %v4889 = vpack.c.b16 %v3420, %v3407
    %v4890 = vpack.c.b16 %v3421, %v3408
    %v4891 = vpack.c.b16 %v3422, %v3409
    %v4892 = vpack.c.b16 %v3423, %v3410
    %v4893 = vpack.c.b16 %v3424, %v3411
    %v4894 = vpack.c.b16 %v3425, %v3412
    %v4895 = vpack.c.b16 %v3439, %v3426
    %v4896 = vpack.c.b16 %v3440, %v3427
    %v4897 = vpack.c.b16 %v3441, %v3428
    %v4898 = vpack.c.b16 %v3442, %v3429
    %v4899 = vpack.c.b16 %v3443, %v3430
    %v4900 = vpack.c.b16 %v3444, %v3431
    %v4901 = vpack.c.b16 %v3445, %v3432
    %v4902 = vpack.c.b16 %v3446, %v3433
    %v4903 = vpack.c.b16 %v3447, %v3434
    %v4904 = vpack.c.b16 %v3448, %v3435
    %v4905 = vpack.c.b16 %v3449, %v3436
    %v4906 = vpack.c.b16 %v3450, %v3437
    %v4907 = vpack.c.b16 %v3451, %v3438
    %v4908 = vpack.c.b16 %v3465, %v3452
    %v4909 = vpack.c.b16 %v3466, %v3453
    %v4910 = vpack.c.b16 %v3467, %v3454
    %v4911 = vpack.c.b16 %v3468, %v3455
    %v4912 = vpack.c.b16 %v3469, %v3456
    %v4913 = vpack.c.b16 %v3470, %v3457
    %v4914 = vpack.c.b16 %v3471, %v3458
    %v4915 = vpack.c.b16 %v3472, %v3459
    %v4916 = vpack.c.b16 %v3473, %v3460
    %v4917 = vpack.c.b16 %v3474, %v3461
    %v4918 = vpack.c.b16 %v3475, %v3462
    %v4919 = vpack.c.b16 %v3476, %v3463
    %v4920 = vpack.c.b16 %v3477, %v3464
    %v4921 = vpack.c.b16 %v3491, %v3478
    %v4922 = vpack.c.b16 %v3492, %v3479
    %v4923 = vpack.c.b16 %v3493, %v3480
    %v4924 = vpack.c.b16 %v3494, %v3481
    %v4925 = vpack.c.b16 %v3495, %v3482
    %v4926 = vpack.c.b16 %v3496, %v3483
    %v4927 = vpack.c.b16 %v3497, %v3484
    %v4928 = vpack.c.b16 %v3498, %v3485
    %v4929 = vpack.c.b16 %v3499, %v3486
    %v4930 = vpack.c.b16 %v3500, %v3487
    %v4931 = vpack.c.b16 %v3501, %v3488
    %v4932 = vpack.c.b16 %v3502, %v3489
    %v4933 = vpack.c.b16 %v3503, %v3490
    %v4934 = vpack.c.b16 %v3517, %v3504
    %v4935 = vpack.c.b16 %v3518, %v3505
    %v4936 = vpack.c.b16 %v3519, %v3506
    %v4937 = vpack.c.b16 %v3520, %v3507
    %v4938 = vpack.c.b16 %v3521, %v3508
    %v4939 = vpack.c.b16 %v3522, %v3509
    %v4940 = vpack.c.b16 %v3523, %v3510
    %v4941 = vpack.c.b16 %v3524, %v3511
    %v4942 = vpack.c.b16 %v3525, %v3512
    %v4943 = vpack.c.b16 %v3526, %v3513
    %v4944 = vpack.c.b16 %v3527, %v3514
    %v4945 = vpack.c.b16 %v3528, %v3515
    %v4946 = vpack.c.b16 %v3529, %v3516
    %v4947 = vpack.c.b16 %v3543, %v3530
    %v4948 = vpack.c.b16 %v3544, %v3531
    %v4949 = vpack.c.b16 %v3545, %v3532
    %v4950 = vpack.c.b16 %v3546, %v3533
    %v4951 = vpack.c.b16 %v3547, %v3534
    %v4952 = vpack.c.b16 %v3548, %v3535
    %v4953 = vpack.c.b16 %v3549, %v3536
    %v4954 = vpack.c.b16 %v3550, %v3537
    %v4955 = vpack.c.b16 %v3551, %v3538
    %v4956 = vpack.c.b16 %v3552, %v3539
    %v4957 = vpack.c.b16 %v3553, %v3540
    %v4958 = vpack.c.b16 %v3554, %v3541
    %v4959 = vpack.c.b16 %v3555, %v3542
    %v4960 = vpack.c.b16 %v3569, %v3556
    %v4961 = vpack.c.b16 %v3570, %v3557
    %v4962 = vpack.c.b16 %v3571, %v3558
    %v4963 = vpack.c.b16 %v3572, %v3559
    %v4964 = vpack.c.b16 %v3573, %v3560
    %v4965 = vpack.c.b16 %v3574, %v3561
    %v4966 = vpack.c.b16 %v3575, %v3562
    %v4967 = vpack.c.b16 %v3576, %v3563
    %v4968 = vpack.c.b16 %v3577, %v3564
    %v4969 = vpack.c.b16 %v3578, %v3565
    %v4970 = vpack.c.b16 %v3579, %v3566
    %v4971 = vpack.c.b16 %v3580, %v3567
    %v4972 = vpack.c.b16 %v3581, %v3568
    %v4973 = vpack.c.b16 %v3595, %v3582
    %v4974 = vpack.c.b16 %v3596, %v3583
    %v4975 = vpack.c.b16 %v3597, %v3584
    %v4976 = vpack.c.b16 %v3598, %v3585
    %v4977 = vpack.c.b16 %v3599, %v3586
    %v4978 = vpack.c.b16 %v3600, %v3587
    %v4979 = vpack.c.b16 %v3601, %v3588
    %v4980 = vpack.c.b16 %v3602, %v3589
    %v4981 = vpack.c.b16 %v3603, %v3590
    %v4982 = vpack.c.b16 %v3604, %v3591
    %v4983 = vpack.c.b16 %v3605, %v3592
    %v4984 = vpack.c.b16 %v3606, %v3593
    %v4985 = vpack.c.b16 %v3607, %v3594
    %v4986 = vpack.c.b16 %v3621, %v3608
    %v4987 = vpack.c.b16 %v3622, %v3609
    %v4988 = vpack.c.b16 %v3623, %v3610
    %v4989 = vpack.c.b16 %v3624, %v3611
    %v4990 = vpack.c.b16 %v3625, %v3612
    %v4991 = vpack.c.b16 %v3626, %v3613
    %v4992 = vpack.c.b16 %v3627, %v3614
    %v4993 = vpack.c.b16 %v3628, %v3615
    %v4994 = vpack.c.b16 %v3629, %v3616
    %v4995 = vpack.c.b16 %v3630, %v3617
    %v4996 = vpack.c.b16 %v3631, %v3618
    %v4997 = vpack.c.b16 %v3632, %v3619
    %v4998 = vpack.c.b16 %v3633, %v3620
    %v4999 = vpack.c.b16 %v3647, %v3634
    %v5000 = vpack.c.b16 %v3648, %v3635
    %v5001 = vpack.c.b16 %v3649, %v3636
    %v5002 = vpack.c.b16 %v3650, %v3637
    %v5003 = vpack.c.b16 %v3651, %v3638
    %v5004 = vpack.c.b16 %v3652, %v3639
    %v5005 = vpack.c.b16 %v3653, %v3640
    %v5006 = vpack.c.b16 %v3654, %v3641
    %v5007 = vpack.c.b16 %v3655, %v3642
    %v5008 = vpack.c.b16 %v3656, %v3643
    %v5009 = vpack.c.b16 %v3657, %v3644
    %v5010 = vpack.c.b16 %v3658, %v3645
    %v5011 = vpack.c.b16 %v3659, %v3646
    %v5012 = vpack.c.b16 %v3673, %v3660
    %v5013 = vpack.c.b16 %v3674, %v3661
    %v5014 = vpack.c.b16 %v3675, %v3662
    %v5015 = vpack.c.b16 %v3676, %v3663
    %v5016 = vpack.c.b16 %v3677, %v3664
    %v5017 = vpack.c.b16 %v3678, %v3665
    %v5018 = vpack.c.b16 %v3679, %v3666
    %v5019 = vpack.c.b16 %v3680, %v3667
    %v5020 = vpack.c.b16 %v3681, %v3668
    %v5021 = vpack.c.b16 %v3682, %v3669
    %v5022 = vpack.c.b16 %v3683, %v3670
    %v5023 = vpack.c.b16 %v3684, %v3671
    %v5024 = vpack.c.b16 %v3685, %v3672
    %v5025 = vpack.c.b16 %v3699, %v3686
    %v5026 = vpack.c.b16 %v3700, %v3687
    %v5027 = vpack.c.b16 %v3701, %v3688
    %v5028 = vpack.c.b16 %v3702, %v3689
    %v5029 = vpack.c.b16 %v3703, %v3690
    %v5030 = vpack.c.b16 %v3704, %v3691
    %v5031 = vpack.c.b16 %v3705, %v3692
    %v5032 = vpack.c.b16 %v3706, %v3693
    %v5033 = vpack.c.b16 %v3707, %v3694
    %v5034 = vpack.c.b16 %v3708, %v3695
    %v5035 = vpack.c.b16 %v3709, %v3696
    %v5036 = vpack.c.b16 %v3710, %v3697
    %v5037 = vpack.c.b16 %v3711, %v3698
    %v5038 = vpack.c.b16 %v3725, %v3712
    %v5039 = vpack.c.b16 %v3726, %v3713
    %v5040 = vpack.c.b16 %v3727, %v3714
    %v5041 = vpack.c.b16 %v3728, %v3715
    %v5042 = vpack.c.b16 %v3729, %v3716
    %v5043 = vpack.c.b16 %v3730, %v3717
    %v5044 = vpack.c.b16 %v3731, %v3718
    %v5045 = vpack.c.b16 %v3732, %v3719
    %v5046 = vpack.c.b16 %v3733, %v3720
    %v5047 = vpack.c.b16 %v3734, %v3721
    %v5048 = vpack.c.b16 %v3735, %v3722
    %v5049 = vpack.c.b16 %v3736, %v3723
    %v5050 = vpack.c.b16 %v3737, %v3724
    %v5051 = vpack.c.b16 %v3751, %v3738
    %v5052 = vpack.c.b16 %v3752, %v3739
    %v5053 = vpack.c.b16 %v3753, %v3740
    %v5054 = vpack.c.b16 %v3754, %v3741
    %v5055 = vpack.c.b16 %v3755, %v3742
    %v5056 = vpack.c.b16 %v3756, %v3743
    %v5057 = vpack.c.b16 %v3757, %v3744
    %v5058 = vpack.c.b16 %v3758, %v3745
    %v5059 = vpack.c.b16 %v3759, %v3746
    %v5060 = vpack.c.b16 %v3760, %v3747
    %v5061 = vpack.c.b16 %v3761, %v3748
    %v5062 = vpack.c.b16 %v3762, %v3749
    %v5063 = vpack.c.b16 %v3763, %v3750
    %v5064 = vpack.c.b16 %v3777, %v3764
    %v5065 = vpack.c.b16 %v3778, %v3765
    %v5066 = vpack.c.b16 %v3779, %v3766
    %v5067 = vpack.c.b16 %v3780, %v3767
    %v5068 = vpack.c.b16 %v3781, %v3768
    %v5069 = vpack.c.b16 %v3782, %v3769
    %v5070 = vpack.c.b16 %v3783, %v3770
    %v5071 = vpack.c.b16 %v3784, %v3771
    %v5072 = vpack.c.b16 %v3785, %v3772
    %v5073 = vpack.c.b16 %v3786, %v3773
    %v5074 = vpack.c.b16 %v3787, %v3774
    %v5075 = vpack.c.b16 %v3788, %v3775
    %v5076 = vpack.c.b16 %v3789, %v3776
    %v5077 = vpack.c.b16 %v3803, %v3790
    %v5078 = vpack.c.b16 %v3804, %v3791
    %v5079 = vpack.c.b16 %v3805, %v3792
    %v5080 = vpack.c.b16 %v3806, %v3793
    %v5081 = vpack.c.b16 %v3807, %v3794
    %v5082 = vpack.c.b16 %v3808, %v3795
    %v5083 = vpack.c.b16 %v3809, %v3796
    %v5084 = vpack.c.b16 %v3810, %v3797
    %v5085 = vpack.c.b16 %v3811, %v3798
    %v5086 = vpack.c.b16 %v3812, %v3799
    %v5087 = vpack.c.b16 %v3813, %v3800
    %v5088 = vpack.c.b16 %v3814, %v3801
    %v5089 = vpack.c.b16 %v3815, %v3802
    %v5090 = vpack.c.b16 %v3829, %v3816
    %v5091 = vpack.c.b16 %v3830, %v3817
    %v5092 = vpack.c.b16 %v3831, %v3818
    %v5093 = vpack.c.b16 %v3832, %v3819
    %v5094 = vpack.c.b16 %v3833, %v3820
    %v5095 = vpack.c.b16 %v3834, %v3821
    %v5096 = vpack.c.b16 %v3835, %v3822
    %v5097 = vpack.c.b16 %v3836, %v3823
    %v5098 = vpack.c.b16 %v3837, %v3824
    %v5099 = vpack.c.b16 %v3838, %v3825
    %v5100 = vpack.c.b16 %v3839, %v3826
    %v5101 = vpack.c.b16 %v3840, %v3827
    %v5102 = vpack.c.b16 %v3841, %v3828
    %v5103 = vpack.c.b16 %v3855, %v3842
    %v5104 = vpack.c.b16 %v3856, %v3843
    %v5105 = vpack.c.b16 %v3857, %v3844
    %v5106 = vpack.c.b16 %v3858, %v3845
    %v5107 = vpack.c.b16 %v3859, %v3846
    %v5108 = vpack.c.b16 %v3860, %v3847
    %v5109 = vpack.c.b16 %v3861, %v3848
    %v5110 = vpack.c.b16 %v3862, %v3849
    %v5111 = vpack.c.b16 %v3863, %v3850
    %v5112 = vpack.c.b16 %v3864, %v3851
    %v5113 = vpack.c.b16 %v3865, %v3852
    %v5114 = vpack.c.b16 %v3866, %v3853
    %v5115 = vpack.c.b16 %v3867, %v3854
    %v5116 = vpack.c.b16 %v3881, %v3868
    %v5117 = vpack.c.b16 %v3882, %v3869
    %v5118 = vpack.c.b16 %v3883, %v3870
    %v5119 = vpack.c.b16 %v3884, %v3871
    %v5120 = vpack.c.b16 %v3885, %v3872
    %v5121 = vpack.c.b16 %v3886, %v3873
    %v5122 = vpack.c.b16 %v3887, %v3874
    %v5123 = vpack.c.b16 %v3888, %v3875
    %v5124 = vpack.c.b16 %v3889, %v3876
    %v5125 = vpack.c.b16 %v3890, %v3877
    %v5126 = vpack.c.b16 %v3891, %v3878
    %v5127 = vpack.c.b16 %v3892, %v3879
    %v5128 = vpack.c.b16 %v3893, %v3880
    %v5129 = vpack.c.b16 %v3907, %v3894
    %v5130 = vpack.c.b16 %v3908, %v3895
    %v5131 = vpack.c.b16 %v3909, %v3896
    %v5132 = vpack.c.b16 %v3910, %v3897
    %v5133 = vpack.c.b16 %v3911, %v3898
    %v5134 = vpack.c.b16 %v3912, %v3899
    %v5135 = vpack.c.b16 %v3913, %v3900
    %v5136 = vpack.c.b16 %v3914, %v3901
    %v5137 = vpack.c.b16 %v3915, %v3902
    %v5138 = vpack.c.b16 %v3916, %v3903
    %v5139 = vpack.c.b16 %v3917, %v3904
    %v5140 = vpack.c.b16 %v3918, %v3905
    %v5141 = vpack.c.b16 %v3919, %v3906
    %v5142 = vpack.c.b16 %v3933, %v3920
    %v5143 = vpack.c.b16 %v3934, %v3921
    %v5144 = vpack.c.b16 %v3935, %v3922
    %v5145 = vpack.c.b16 %v3936, %v3923
    %v5146 = vpack.c.b16 %v3937, %v3924
    %v5147 = vpack.c.b16 %v3938, %v3925
    %v5148 = vpack.c.b16 %v3939, %v3926
    %v5149 = vpack.c.b16 %v3940, %v3927
    %v5150 = vpack.c.b16 %v3941, %v3928
    %v5151 = vpack.c.b16 %v3942, %v3929
    %v5152 = vpack.c.b16 %v3943, %v3930
    %v5153 = vpack.c.b16 %v3944, %v3931
    %v5154 = vpack.c.b16 %v3945, %v3932
    %v5155 = vpack.c.b16 %v3959, %v3946
    %v5156 = vpack.c.b16 %v3960, %v3947
    %v5157 = vpack.c.b16 %v3961, %v3948
    %v5158 = vpack.c.b16 %v3962, %v3949
    %v5159 = vpack.c.b16 %v3963, %v3950
    %v5160 = vpack.c.b16 %v3964, %v3951
    %v5161 = vpack.c.b16 %v3965, %v3952
    %v5162 = vpack.c.b16 %v3966, %v3953
    %v5163 = vpack.c.b16 %v3967, %v3954
    %v5164 = vpack.c.b16 %v3968, %v3955
    %v5165 = vpack.c.b16 %v3969, %v3956
    %v5166 = vpack.c.b16 %v3970, %v3957
    %v5167 = vpack.c.b16 %v3971, %v3958
    %v5168 = vpack.c.b16 %v3985, %v3972
    %v5169 = vpack.c.b16 %v3986, %v3973
    %v5170 = vpack.c.b16 %v3987, %v3974
    %v5171 = vpack.c.b16 %v3988, %v3975
    %v5172 = vpack.c.b16 %v3989, %v3976
    %v5173 = vpack.c.b16 %v3990, %v3977
    %v5174 = vpack.c.b16 %v3991, %v3978
    %v5175 = vpack.c.b16 %v3992, %v3979
    %v5176 = vpack.c.b16 %v3993, %v3980
    %v5177 = vpack.c.b16 %v3994, %v3981
    %v5178 = vpack.c.b16 %v3995, %v3982
    %v5179 = vpack.c.b16 %v3996, %v3983
    %v5180 = vpack.c.b16 %v3997, %v3984
    %v5181 = vpack.c.b16 %v4011, %v3998
    %v5182 = vpack.c.b16 %v4012, %v3999
    %v5183 = vpack.c.b16 %v4013, %v4000
    %v5184 = vpack.c.b16 %v4014, %v4001
    %v5185 = vpack.c.b16 %v4015, %v4002
    %v5186 = vpack.c.b16 %v4016, %v4003
    %v5187 = vpack.c.b16 %v4017, %v4004
    %v5188 = vpack.c.b16 %v4018, %v4005
    %v5189 = vpack.c.b16 %v4019, %v4006
    %v5190 = vpack.c.b16 %v4020, %v4007
    %v5191 = vpack.c.b16 %v4021, %v4008
    %v5192 = vpack.c.b16 %v4022, %v4009
    %v5193 = vpack.c.b16 %v4023, %v4010
    %v5194 = vpack.c.b16 %v4037, %v4024
    %v5195 = vpack.c.b16 %v4038, %v4025
    %v5196 = vpack.c.b16 %v4039, %v4026
    %v5197 = vpack.c.b16 %v4040, %v4027
    %v5198 = vpack.c.b16 %v4041, %v4028
    %v5199 = vpack.c.b16 %v4042, %v4029
    %v5200 = vpack.c.b16 %v4043, %v4030
    %v5201 = vpack.c.b16 %v4044, %v4031
    %v5202 = vpack.c.b16 %v4045, %v4032
    %v5203 = vpack.c.b16 %v4046, %v4033
    %v5204 = vpack.c.b16 %v4047, %v4034
    %v5205 = vpack.c.b16 %v4048, %v4035
    %v5206 = vpack.c.b16 %v4049, %v4036
    %v5207 = vpack.c.b16 %v4063, %v4050
    %v5208 = vpack.c.b16 %v4064, %v4051
    %v5209 = vpack.c.b16 %v4065, %v4052
    %v5210 = vpack.c.b16 %v4066, %v4053
    %v5211 = vpack.c.b16 %v4067, %v4054
    %v5212 = vpack.c.b16 %v4068, %v4055
    %v5213 = vpack.c.b16 %v4069, %v4056
    %v5214 = vpack.c.b16 %v4070, %v4057
    %v5215 = vpack.c.b16 %v4071, %v4058
    %v5216 = vpack.c.b16 %v4072, %v4059
    %v5217 = vpack.c.b16 %v4073, %v4060
    %v5218 = vpack.c.b16 %v4074, %v4061
    %v5219 = vpack.c.b16 %v4075, %v4062
    %v5220 = vpack.c.b16 %v4089, %v4076
    %v5221 = vpack.c.b16 %v4090, %v4077
    %v5222 = vpack.c.b16 %v4091, %v4078
    %v5223 = vpack.c.b16 %v4092, %v4079
    %v5224 = vpack.c.b16 %v4093, %v4080
    %v5225 = vpack.c.b16 %v4094, %v4081
    %v5226 = vpack.c.b16 %v4095, %v4082
    %v5227 = vpack.c.b16 %v4096, %v4083
    %v5228 = vpack.c.b16 %v4097, %v4084
    %v5229 = vpack.c.b16 %v4098, %v4085
    %v5230 = vpack.c.b16 %v4099, %v4086
    %v5231 = vpack.c.b16 %v4100, %v4087
    %v5232 = vpack.c.b16 %v4101, %v4088
    %v5233 = vpack.c.b16 %v4115, %v4102
    %v5234 = vpack.c.b16 %v4116, %v4103
    %v5235 = vpack.c.b16 %v4117, %v4104
    %v5236 = vpack.c.b16 %v4118, %v4105
    %v5237 = vpack.c.b16 %v4119, %v4106
    %v5238 = vpack.c.b16 %v4120, %v4107
    %v5239 = vpack.c.b16 %v4121, %v4108
    %v5240 = vpack.c.b16 %v4122, %v4109
    %v5241 = vpack.c.b16 %v4123, %v4110
    %v5242 = vpack.c.b16 %v4124, %v4111
    %v5243 = vpack.c.b16 %v4125, %v4112
    %v5244 = vpack.c.b16 %v4126, %v4113
    %v5245 = vpack.c.b16 %v4127, %v4114
    %v5246 = vpack.c.b16 %v4141, %v4128
    %v5247 = vpack.c.b16 %v4142, %v4129
    %v5248 = vpack.c.b16 %v4143, %v4130
    %v5249 = vpack.c.b16 %v4144, %v4131
    %v5250 = vpack.c.b16 %v4145, %v4132
    %v5251 = vpack.c.b16 %v4146, %v4133
    %v5252 = vpack.c.b16 %v4147, %v4134
    %v5253 = vpack.c.b16 %v4148, %v4135
    %v5254 = vpack.c.b16 %v4149, %v4136
    %v5255 = vpack.c.b16 %v4150, %v4137
    %v5256 = vpack.c.b16 %v4151, %v4138
    %v5257 = vpack.c.b16 %v4152, %v4139
    %v5258 = vpack.c.b16 %v4153, %v4140
    %v5259 = vpack.c.b16 %v4167, %v4154
    %v5260 = vpack.c.b16 %v4168, %v4155
    %v5261 = vpack.c.b16 %v4169, %v4156
    %v5262 = vpack.c.b16 %v4170, %v4157
    %v5263 = vpack.c.b16 %v4171, %v4158
    %v5264 = vpack.c.b16 %v4172, %v4159
    %v5265 = vpack.c.b16 %v4173, %v4160
    %v5266 = vpack.c.b16 %v4174, %v4161
    %v5267 = vpack.c.b16 %v4175, %v4162
    %v5268 = vpack.c.b16 %v4176, %v4163
    %v5269 = vpack.c.b16 %v4177, %v4164
    %v5270 = vpack.c.b16 %v4178, %v4165
    %v5271 = vpack.c.b16 %v4179, %v4166
    %v5272 = vpack.c.b16 %v4193, %v4180
    %v5273 = vpack.c.b16 %v4194, %v4181
    %v5274 = vpack.c.b16 %v4195, %v4182
    %v5275 = vpack.c.b16 %v4196, %v4183
    %v5276 = vpack.c.b16 %v4197, %v4184
    %v5277 = vpack.c.b16 %v4198, %v4185
    %v5278 = vpack.c.b16 %v4199, %v4186
    %v5279 = vpack.c.b16 %v4200, %v4187
    %v5280 = vpack.c.b16 %v4201, %v4188
    %v5281 = vpack.c.b16 %v4202, %v4189
    %v5282 = vpack.c.b16 %v4203, %v4190
    %v5283 = vpack.c.b16 %v4204, %v4191
    %v5284 = vpack.c.b16 %v4205, %v4192
    %v5285 = vpack.c.b16 %v4219, %v4206
    %v5286 = vpack.c.b16 %v4220, %v4207
    %v5287 = vpack.c.b16 %v4221, %v4208
    %v5288 = vpack.c.b16 %v4222, %v4209
    %v5289 = vpack.c.b16 %v4223, %v4210
    %v5290 = vpack.c.b16 %v4224, %v4211
    %v5291 = vpack.c.b16 %v4225, %v4212
    %v5292 = vpack.c.b16 %v4226, %v4213
    %v5293 = vpack.c.b16 %v4227, %v4214
    %v5294 = vpack.c.b16 %v4228, %v4215
    %v5295 = vpack.c.b16 %v4229, %v4216
    %v5296 = vpack.c.b16 %v4230, %v4217
    %v5297 = vpack.c.b16 %v4231, %v4218
    %v5298 = vpack.c.b16 %v4245, %v4232
    %v5299 = vpack.c.b16 %v4246, %v4233
    %v5300 = vpack.c.b16 %v4247, %v4234
    %v5301 = vpack.c.b16 %v4248, %v4235
    %v5302 = vpack.c.b16 %v4249, %v4236
    %v5303 = vpack.c.b16 %v4250, %v4237
    %v5304 = vpack.c.b16 %v4251, %v4238
    %v5305 = vpack.c.b16 %v4252, %v4239
    %v5306 = vpack.c.b16 %v4253, %v4240
    %v5307 = vpack.c.b16 %v4254, %v4241
    %v5308 = vpack.c.b16 %v4255, %v4242
    %v5309 = vpack.c.b16 %v4256, %v4243
    %v5310 = vpack.c.b16 %v4257, %v4244
    %v5311 = vpack.c.b16 %v4271, %v4258
    %v5312 = vpack.c.b16 %v4272, %v4259
    %v5313 = vpack.c.b16 %v4273, %v4260
    %v5314 = vpack.c.b16 %v4274, %v4261
    %v5315 = vpack.c.b16 %v4275, %v4262
    %v5316 = vpack.c.b16 %v4276, %v4263
    %v5317 = vpack.c.b16 %v4277, %v4264
    %v5318 = vpack.c.b16 %v4278, %v4265
    %v5319 = vpack.c.b16 %v4279, %v4266
    %v5320 = vpack.c.b16 %v4280, %v4267
    %v5321 = vpack.c.b16 %v4281, %v4268
    %v5322 = vpack.c.b16 %v4282, %v4269
    %v5323 = vpack.c.b16 %v4283, %v4270
    %v5324 = vpack.c.b16 %v4297, %v4284
    %v5325 = vpack.c.b16 %v4298, %v4285
    %v5326 = vpack.c.b16 %v4299, %v4286
    %v5327 = vpack.c.b16 %v4300, %v4287
    %v5328 = vpack.c.b16 %v4301, %v4288
    %v5329 = vpack.c.b16 %v4302, %v4289
    %v5330 = vpack.c.b16 %v4303, %v4290
    %v5331 = vpack.c.b16 %v4304, %v4291
    %v5332 = vpack.c.b16 %v4305, %v4292
    %v5333 = vpack.c.b16 %v4306, %v4293
    %v5334 = vpack.c.b16 %v4307, %v4294
    %v5335 = vpack.c.b16 %v4308, %v4295
    %v5336 = vpack.c.b16 %v4309, %v4296
    %v5337 = vpack.c.b16 %v4323, %v4310
    %v5338 = vpack.c.b16 %v4324, %v4311
    %v5339 = vpack.c.b16 %v4325, %v4312
    %v5340 = vpack.c.b16 %v4326, %v4313
    %v5341 = vpack.c.b16 %v4327, %v4314
    %v5342 = vpack.c.b16 %v4328, %v4315
    %v5343 = vpack.c.b16 %v4329, %v4316
    %v5344 = vpack.c.b16 %v4330, %v4317
    %v5345 = vpack.c.b16 %v4331, %v4318
    %v5346 = vpack.c.b16 %v4332, %v4319
    %v5347 = vpack.c.b16 %v4333, %v4320
    %v5348 = vpack.c.b16 %v4334, %v4321
    %v5349 = vpack.c.b16 %v4335, %v4322
    %v5350 = vpack.c.b16 %v4349, %v4336
    %v5351 = vpack.c.b16 %v4350, %v4337
    %v5352 = vpack.c.b16 %v4351, %v4338
    %v5353 = vpack.c.b16 %v4352, %v4339
    %v5354 = vpack.c.b16 %v4353, %v4340
    %v5355 = vpack.c.b16 %v4354, %v4341
    %v5356 = vpack.c.b16 %v4355, %v4342
    %v5357 = vpack.c.b16 %v4356, %v4343
    %v5358 = vpack.c.b16 %v4357, %v4344
    %v5359 = vpack.c.b16 %v4358, %v4345
    %v5360 = vpack.c.b16 %v4359, %v4346
    %v5361 = vpack.c.b16 %v4360, %v4347
    %v5362 = vpack.c.b16 %v4361, %v4348
    %v5363 = vpack.c.b16 %v4375, %v4362
    %v5364 = vpack.c.b16 %v4376, %v4363
    %v5365 = vpack.c.b16 %v4377, %v4364
    %v5366 = vpack.c.b16 %v4378, %v4365
    %v5367 = vpack.c.b16 %v4379, %v4366
    %v5368 = vpack.c.b16 %v4380, %v4367
    %v5369 = vpack.c.b16 %v4381, %v4368
    %v5370 = vpack.c.b16 %v4382, %v4369
    %v5371 = vpack.c.b16 %v4383, %v4370
    %v5372 = vpack.c.b16 %v4384, %v4371
    %v5373 = vpack.c.b16 %v4385, %v4372
    %v5374 = vpack.c.b16 %v4386, %v4373
    %v5375 = vpack.c.b16 %v4387, %v4374
    %v5376 = vpack.c.b16 %v4401, %v4388
    %v5377 = vpack.c.b16 %v4402, %v4389
    %v5378 = vpack.c.b16 %v4403, %v4390
    %v5379 = vpack.c.b16 %v4404, %v4391
    %v5380 = vpack.c.b16 %v4405, %v4392
    %v5381 = vpack.c.b16 %v4406, %v4393
    %v5382 = vpack.c.b16 %v4407, %v4394
    %v5383 = vpack.c.b16 %v4408, %v4395
    %v5384 = vpack.c.b16 %v4409, %v4396
    %v5385 = vpack.c.b16 %v4410, %v4397
    %v5386 = vpack.c.b16 %v4411, %v4398
    %v5387 = vpack.c.b16 %v4412, %v4399
    %v5388 = vpack.c.b16 %v4413, %v4400
    %v5389 = vpack.c.b16 %v4427, %v4414
    %v5390 = vpack.c.b16 %v4428, %v4415
    %v5391 = vpack.c.b16 %v4429, %v4416
    %v5392 = vpack.c.b16 %v4430, %v4417
    %v5393 = vpack.c.b16 %v4431, %v4418
    %v5394 = vpack.c.b16 %v4432, %v4419
    %v5395 = vpack.c.b16 %v4433, %v4420
    %v5396 = vpack.c.b16 %v4434, %v4421
    %v5397 = vpack.c.b16 %v4435, %v4422
    %v5398 = vpack.c.b16 %v4436, %v4423
    %v5399 = vpack.c.b16 %v4437, %v4424
    %v5400 = vpack.c.b16 %v4438, %v4425
    %v5401 = vpack.c.b16 %v4439, %v4426
    %v5402 = vpack.c.b16 %v4453, %v4440
    %v5403 = vpack.c.b16 %v4454, %v4441
    %v5404 = vpack.c.b16 %v4455, %v4442
    %v5405 = vpack.c.b16 %v4456, %v4443
    %v5406 = vpack.c.b16 %v4457, %v4444
    %v5407 = vpack.c.b16 %v4458, %v4445
    %v5408 = vpack.c.b16 %v4459, %v4446
    %v5409 = vpack.c.b16 %v4460, %v4447
    %v5410 = vpack.c.b16 %v4461, %v4448
    %v5411 = vpack.c.b16 %v4462, %v4449
    %v5412 = vpack.c.b16 %v4463, %v4450
    %v5413 = vpack.c.b16 %v4464, %v4451
    %v5414 = vpack.c.b16 %v4465, %v4452
    %v5415 = vpack.c.b16 %v4479, %v4466
    %v5416 = vpack.c.b16 %v4480, %v4467
    %v5417 = vpack.c.b16 %v4481, %v4468
    %v5418 = vpack.c.b16 %v4482, %v4469
    %v5419 = vpack.c.b16 %v4483, %v4470
    %v5420 = vpack.c.b16 %v4484, %v4471
    %v5421 = vpack.c.b16 %v4485, %v4472
    %v5422 = vpack.c.b16 %v4486, %v4473
    %v5423 = vpack.c.b16 %v4487, %v4474
    %v5424 = vpack.c.b16 %v4488, %v4475
    %v5425 = vpack.c.b16 %v4489, %v4476
    %v5426 = vpack.c.b16 %v4490, %v4477
    %v5427 = vpack.c.b16 %v4491, %v4478
    %6364 = vmatprep.subr.bf16.mxu0 %v4584
    %6365 = vmatpush1.bf16.msra.mxu0 %v4583
    %6366 = vmatprep.subr.bf16.mxu0 %v4571
    %6367 = vmatpush1.bf16.msra.mxu0 %v4570
    %6368 = vmatprep.subr.bf16.mxu0 %v4558
    %6369 = vmatpush1.bf16.msra.mxu0 %v4557
    %6370 = vmatprep.subr.bf16.mxu0 %v4545
    %6371 = vmatpush1.bf16.msra.mxu0 %v4544
    %6372 = vmatprep.subr.bf16.mxu0 %v4532
    %6373 = vmatpush1.bf16.msra.mxu0 %v4531
    %6374 = vmatprep.subr.bf16.mxu0 %v4519
    %6375 = vmatpush1.bf16.msra.mxu0 %v4518
    %6376 = vmatprep.subr.bf16.mxu0 %v4506
    %6377 = vmatpush1.bf16.msra.mxu0 %v4505
    %6378 = vmatprep.subr.bf16.mxu0 %v4493
    %6379 = vmatpush1.bf16.msra.mxu0 %v4492
    %6380 = vmatprep.subr.bf16.mxu0 %v4688
    %6381 = vmatpush2.bf16.msra.mxu0 %v4687
    %6382 = vmatprep.subr.bf16.mxu0 %v4675
    %6383 = vmatpush2.bf16.msra.mxu0 %v4674
    %6384 = vmatprep.subr.bf16.mxu0 %v4662
    %6385 = vmatpush2.bf16.msra.mxu0 %v4661
    %6386 = vmatprep.subr.bf16.mxu0 %v4649
    %6387 = vmatpush2.bf16.msra.mxu0 %v4648
    %6388 = vmatprep.subr.bf16.mxu0 %v4636
    %6389 = vmatpush2.bf16.msra.mxu0 %v4635
    %6390 = vmatprep.subr.bf16.mxu0 %v4623
    %6391 = vmatpush2.bf16.msra.mxu0 %v4622
    %6392 = vmatprep.subr.bf16.mxu0 %v4610
    %6393 = vmatpush2.bf16.msra.mxu0 %v4609
    %6394 = vmatprep.subr.bf16.mxu0 %v4597
    %6395 = vmatpush2.bf16.msra.mxu0 %v4596
    %6396 = vmatprep.mubr.bf16.mxu0 %v527
    %6397 = vmatmul.mubr.bf16.gmra.mxu0 %v526
    %v6398 = vpop.f32.mrf.mxu0
    %v6399 = vadd.f32 %v1550, %v6398
    %v6400 = vpop.f32.mrf.mxu0
    %v6401 = vadd.f32 %v1554, %v6400
    %v6402 = vpop.f32.mrf.mxu0
    %v6403 = vpop.f32.mrf.mxu0
    %6404 = vdwg.mxu0
    %6405 = vmatprep.subr.bf16.mxu0 %v4792
    %6406 = vmatpush1.bf16.msra.mxu0 %v4791
    %6407 = vmatprep.subr.bf16.mxu0 %v4779
    %6408 = vmatpush1.bf16.msra.mxu0 %v4778
    %6409 = vmatprep.subr.bf16.mxu0 %v4766
    %6410 = vmatpush1.bf16.msra.mxu0 %v4765
    %6411 = vmatprep.subr.bf16.mxu0 %v4753
    %6412 = vmatpush1.bf16.msra.mxu0 %v4752
    %6413 = vmatprep.subr.bf16.mxu0 %v4740
    %6414 = vmatpush1.bf16.msra.mxu0 %v4739
    %6415 = vmatprep.subr.bf16.mxu0 %v4727
    %6416 = vmatpush1.bf16.msra.mxu0 %v4726
    %6417 = vmatprep.subr.bf16.mxu0 %v4714
    %6418 = vmatpush1.bf16.msra.mxu0 %v4713
    %6419 = vmatprep.subr.bf16.mxu0 %v4701
    %6420 = vmatpush1.bf16.msra.mxu0 %v4700
    %6421 = vmatprep.subr.bf16.mxu0 %v4896
    %6422 = vmatpush2.bf16.msra.mxu0 %v4895
    %6423 = vmatprep.subr.bf16.mxu0 %v4883
    %6424 = vmatpush2.bf16.msra.mxu0 %v4882
    %6425 = vmatprep.subr.bf16.mxu0 %v4870
    %6426 = vmatpush2.bf16.msra.mxu0 %v4869
    %6427 = vmatprep.subr.bf16.mxu0 %v4857
    %6428 = vmatpush2.bf16.msra.mxu0 %v4856
    %6429 = vmatprep.subr.bf16.mxu0 %v4844
    %6430 = vmatpush2.bf16.msra.mxu0 %v4843
    %6431 = vmatprep.subr.bf16.mxu0 %v4831
    %6432 = vmatpush2.bf16.msra.mxu0 %v4830
    %6433 = vmatprep.subr.bf16.mxu0 %v4818
    %6434 = vmatpush2.bf16.msra.mxu0 %v4817
    %6435 = vmatprep.subr.bf16.mxu0 %v4805
    %6436 = vmatpush2.bf16.msra.mxu0 %v4804
    %6437 = vmatprep.mubr.bf16.mxu0 %v529
    %6438 = vmatmul.mubr.bf16.gmra.mxu0 %v528
    %v6439 = vpop.f32.mrf.mxu0
    %v6440 = vadd.f32 %v6399, %v6439
    %v6441 = vpop.f32.mrf.mxu0
    %v6442 = vadd.f32 %v6401, %v6441
    %v6443 = vpop.f32.mrf.mxu0
    %v6444 = vpop.f32.mrf.mxu0
    %6445 = vdwg.mxu0
    %6446 = vmatprep.subr.bf16.mxu0 %v5000
    %6447 = vmatpush1.bf16.msra.mxu0 %v4999
    %6448 = vmatprep.subr.bf16.mxu0 %v4987
    %6449 = vmatpush1.bf16.msra.mxu0 %v4986
    %6450 = vmatprep.subr.bf16.mxu0 %v4974
    %6451 = vmatpush1.bf16.msra.mxu0 %v4973
    %6452 = vmatprep.subr.bf16.mxu0 %v4961
    %6453 = vmatpush1.bf16.msra.mxu0 %v4960
    %6454 = vmatprep.subr.bf16.mxu0 %v4948
    %6455 = vmatpush1.bf16.msra.mxu0 %v4947
    %6456 = vmatprep.subr.bf16.mxu0 %v4935
    %6457 = vmatpush1.bf16.msra.mxu0 %v4934
    %6458 = vmatprep.subr.bf16.mxu0 %v4922
    %6459 = vmatpush1.bf16.msra.mxu0 %v4921
    %6460 = vmatprep.subr.bf16.mxu0 %v4909
    %6461 = vmatpush1.bf16.msra.mxu0 %v4908
    %6462 = vmatprep.subr.bf16.mxu0 %v5104
    %6463 = vmatpush2.bf16.msra.mxu0 %v5103
    %6464 = vmatprep.subr.bf16.mxu0 %v5091
    %6465 = vmatpush2.bf16.msra.mxu0 %v5090
    %6466 = vmatprep.subr.bf16.mxu0 %v5078
    %6467 = vmatpush2.bf16.msra.mxu0 %v5077
    %6468 = vmatprep.subr.bf16.mxu0 %v5065
    %6469 = vmatpush2.bf16.msra.mxu0 %v5064
    %6470 = vmatprep.subr.bf16.mxu0 %v5052
    %6471 = vmatpush2.bf16.msra.mxu0 %v5051
    %6472 = vmatprep.subr.bf16.mxu0 %v5039
    %6473 = vmatpush2.bf16.msra.mxu0 %v5038
    %6474 = vmatprep.subr.bf16.mxu0 %v5026
    %6475 = vmatpush2.bf16.msra.mxu0 %v5025
    %6476 = vmatprep.subr.bf16.mxu0 %v5013
    %6477 = vmatpush2.bf16.msra.mxu0 %v5012
    %6478 = vmatprep.mubr.bf16.mxu0 %v531
    %6479 = vmatmul.mubr.bf16.gmra.mxu0 %v530
    %v6480 = vpop.f32.mrf.mxu0
    %v6481 = vadd.f32 %v6440, %v6480
    %v6482 = vpop.f32.mrf.mxu0
    %v6483 = vadd.f32 %v6442, %v6482
    %v6484 = vpop.f32.mrf.mxu0
    %v6485 = vpop.f32.mrf.mxu0
    %6486 = vdwg.mxu0
    %6487 = vmatprep.subr.bf16.mxu0 %v5208
    %6488 = vmatpush1.bf16.msra.mxu0 %v5207
    %6489 = vmatprep.subr.bf16.mxu0 %v5195
    %6490 = vmatpush1.bf16.msra.mxu0 %v5194
    %6491 = vmatprep.subr.bf16.mxu0 %v5182
    %6492 = vmatpush1.bf16.msra.mxu0 %v5181
    %6493 = vmatprep.subr.bf16.mxu0 %v5169
    %6494 = vmatpush1.bf16.msra.mxu0 %v5168
    %6495 = vmatprep.subr.bf16.mxu0 %v5156
    %6496 = vmatpush1.bf16.msra.mxu0 %v5155
    %6497 = vmatprep.subr.bf16.mxu0 %v5143
    %6498 = vmatpush1.bf16.msra.mxu0 %v5142
    %6499 = vmatprep.subr.bf16.mxu0 %v5130
    %6500 = vmatpush1.bf16.msra.mxu0 %v5129
    %6501 = vmatprep.subr.bf16.mxu0 %v5117
    %6502 = vmatpush1.bf16.msra.mxu0 %v5116
    %6503 = vmatprep.subr.bf16.mxu0 %v5312
    %6504 = vmatpush2.bf16.msra.mxu0 %v5311
    %6505 = vmatprep.subr.bf16.mxu0 %v5299
    %6506 = vmatpush2.bf16.msra.mxu0 %v5298
    %6507 = vmatprep.subr.bf16.mxu0 %v5286
    %6508 = vmatpush2.bf16.msra.mxu0 %v5285
    %6509 = vmatprep.subr.bf16.mxu0 %v5273
    %6510 = vmatpush2.bf16.msra.mxu0 %v5272
    %6511 = vmatprep.subr.bf16.mxu0 %v5260
    %6512 = vmatpush2.bf16.msra.mxu0 %v5259
    %6513 = vmatprep.subr.bf16.mxu0 %v5247
    %6514 = vmatpush2.bf16.msra.mxu0 %v5246
    %6515 = vmatprep.subr.bf16.mxu0 %v5234
    %6516 = vmatpush2.bf16.msra.mxu0 %v5233
    %6517 = vmatprep.subr.bf16.mxu0 %v5221
    %6518 = vmatpush2.bf16.msra.mxu0 %v5220
    %6519 = vmatprep.mubr.bf16.mxu0 %v533
    %6520 = vmatmul.mubr.bf16.gmra.mxu0 %v532
    %v6521 = vpop.f32.mrf.mxu0
    %v6522 = vadd.f32 %v6481, %v6521
    %v6523 = vpop.f32.mrf.mxu0
    %v6524 = vadd.f32 %v6483, %v6523
    %v6525 = vpop.f32.mrf.mxu0
    %v6526 = vpop.f32.mrf.mxu0
    %6527 = vdwg.mxu0
    %6528 = vmatprep.subr.bf16.mxu0 %v5416
    %6529 = vmatpush1.bf16.msra.mxu0 %v5415
    %6530 = vmatprep.subr.bf16.mxu0 %v5403
    %6531 = vmatpush1.bf16.msra.mxu0 %v5402
    %6532 = vmatprep.subr.bf16.mxu0 %v5390
    %6533 = vmatpush1.bf16.msra.mxu0 %v5389
    %6534 = vmatprep.subr.bf16.mxu0 %v5377
    %6535 = vmatpush1.bf16.msra.mxu0 %v5376
    %6536 = vmatprep.subr.bf16.mxu0 %v5364
    %6537 = vmatpush1.bf16.msra.mxu0 %v5363
    %6538 = vmatprep.subr.bf16.mxu0 %v5351
    %6539 = vmatpush1.bf16.msra.mxu0 %v5350
    %6540 = vmatprep.subr.bf16.mxu0 %v5338
    %6541 = vmatpush1.bf16.msra.mxu0 %v5337
    %6542 = vmatprep.subr.bf16.mxu0 %v5325
    %6543 = vmatpush1.bf16.msra.mxu0 %v5324
    %6544 = vmatprep.subr.bf16.mxu0 0
    %6545 = vmatpush2.bf16.msra.mxu0 0
    %6546 = vmatprep.subr.bf16.mxu0 0
    %6547 = vmatpush2.bf16.msra.mxu0 0
    %6548 = vmatprep.subr.bf16.mxu0 0
    %6549 = vmatpush2.bf16.msra.mxu0 0
    %6550 = vmatprep.subr.bf16.mxu0 0
    %6551 = vmatpush2.bf16.msra.mxu0 0
    %6552 = vmatprep.subr.bf16.mxu0 0
    %6553 = vmatpush2.bf16.msra.mxu0 0
    %6554 = vmatprep.subr.bf16.mxu0 0
    %6555 = vmatpush2.bf16.msra.mxu0 0
    %6556 = vmatprep.subr.bf16.mxu0 0
    %6557 = vmatpush2.bf16.msra.mxu0 0
    %6558 = vmatprep.subr.bf16.mxu0 0
    %6559 = vmatpush2.bf16.msra.mxu0 0
    %6560 = vmatprep.mubr.bf16.mxu0 0
    %6561 = vmatmul.mubr.bf16.gmra.mxu0 %v534
    %v6562 = vpop.f32.mrf.mxu0
    %v6563 = vadd.f32 %v6522, %v6562
    %v6564 = vpop.f32.mrf.mxu0
    %v6565 = vadd.f32 %v6524, %v6564
    %v6566 = vpop.f32.mrf.mxu0
    %v6567 = vpop.f32.mrf.mxu0
    %6568 = vdwg.mxu0
    %6569 = vmatprep.subr.bf16.mxu0 %v4586
    %6570 = vmatpush1.bf16.msra.mxu0 %v4585
    %6571 = vmatprep.subr.bf16.mxu0 %v4573
    %6572 = vmatpush1.bf16.msra.mxu0 %v4572
    %6573 = vmatprep.subr.bf16.mxu0 %v4560
    %6574 = vmatpush1.bf16.msra.mxu0 %v4559
    %6575 = vmatprep.subr.bf16.mxu0 %v4547
    %6576 = vmatpush1.bf16.msra.mxu0 %v4546
    %6577 = vmatprep.subr.bf16.mxu0 %v4534
    %6578 = vmatpush1.bf16.msra.mxu0 %v4533
    %6579 = vmatprep.subr.bf16.mxu0 %v4521
    %6580 = vmatpush1.bf16.msra.mxu0 %v4520
    %6581 = vmatprep.subr.bf16.mxu0 %v4508
    %6582 = vmatpush1.bf16.msra.mxu0 %v4507
    %6583 = vmatprep.subr.bf16.mxu0 %v4495
    %6584 = vmatpush1.bf16.msra.mxu0 %v4494
    %6585 = vmatprep.subr.bf16.mxu0 %v4690
    %6586 = vmatpush2.bf16.msra.mxu0 %v4689
    %6587 = vmatprep.subr.bf16.mxu0 %v4677
    %6588 = vmatpush2.bf16.msra.mxu0 %v4676
    %6589 = vmatprep.subr.bf16.mxu0 %v4664
    %6590 = vmatpush2.bf16.msra.mxu0 %v4663
    %6591 = vmatprep.subr.bf16.mxu0 %v4651
    %6592 = vmatpush2.bf16.msra.mxu0 %v4650
    %6593 = vmatprep.subr.bf16.mxu0 %v4638
    %6594 = vmatpush2.bf16.msra.mxu0 %v4637
    %6595 = vmatprep.subr.bf16.mxu0 %v4625
    %6596 = vmatpush2.bf16.msra.mxu0 %v4624
    %6597 = vmatprep.subr.bf16.mxu0 %v4612
    %6598 = vmatpush2.bf16.msra.mxu0 %v4611
    %6599 = vmatprep.subr.bf16.mxu0 %v4599
    %6600 = vmatpush2.bf16.msra.mxu0 %v4598
    %6601 = vmatprep.mubr.bf16.mxu0 %v527
    %6602 = vmatmul.mubr.bf16.gmra.mxu0 %v526
    %v6603 = vpop.f32.mrf.mxu0
    %v6604 = vadd.f32 %v1558, %v6603
    %v6605 = vpop.f32.mrf.mxu0
    %v6606 = vadd.f32 %v1562, %v6605
    %v6607 = vpop.f32.mrf.mxu0
    %v6608 = vpop.f32.mrf.mxu0
    %6609 = vdwg.mxu0
    %6610 = vmatprep.subr.bf16.mxu0 %v4794
    %6611 = vmatpush1.bf16.msra.mxu0 %v4793
    %6612 = vmatprep.subr.bf16.mxu0 %v4781
    %6613 = vmatpush1.bf16.msra.mxu0 %v4780
    %6614 = vmatprep.subr.bf16.mxu0 %v4768
    %6615 = vmatpush1.bf16.msra.mxu0 %v4767
    %6616 = vmatprep.subr.bf16.mxu0 %v4755
    %6617 = vmatpush1.bf16.msra.mxu0 %v4754
    %6618 = vmatprep.subr.bf16.mxu0 %v4742
    %6619 = vmatpush1.bf16.msra.mxu0 %v4741
    %6620 = vmatprep.subr.bf16.mxu0 %v4729
    %6621 = vmatpush1.bf16.msra.mxu0 %v4728
    %6622 = vmatprep.subr.bf16.mxu0 %v4716
    %6623 = vmatpush1.bf16.msra.mxu0 %v4715
    %6624 = vmatprep.subr.bf16.mxu0 %v4703
    %6625 = vmatpush1.bf16.msra.mxu0 %v4702
    %6626 = vmatprep.subr.bf16.mxu0 %v4898
    %6627 = vmatpush2.bf16.msra.mxu0 %v4897
    %6628 = vmatprep.subr.bf16.mxu0 %v4885
    %6629 = vmatpush2.bf16.msra.mxu0 %v4884
    %6630 = vmatprep.subr.bf16.mxu0 %v4872
    %6631 = vmatpush2.bf16.msra.mxu0 %v4871
    %6632 = vmatprep.subr.bf16.mxu0 %v4859
    %6633 = vmatpush2.bf16.msra.mxu0 %v4858
    %6634 = vmatprep.subr.bf16.mxu0 %v4846
    %6635 = vmatpush2.bf16.msra.mxu0 %v4845
    %6636 = vmatprep.subr.bf16.mxu0 %v4833
    %6637 = vmatpush2.bf16.msra.mxu0 %v4832
    %6638 = vmatprep.subr.bf16.mxu0 %v4820
    %6639 = vmatpush2.bf16.msra.mxu0 %v4819
    %6640 = vmatprep.subr.bf16.mxu0 %v4807
    %6641 = vmatpush2.bf16.msra.mxu0 %v4806
    %6642 = vmatprep.mubr.bf16.mxu0 %v529
    %6643 = vmatmul.mubr.bf16.gmra.mxu0 %v528
    %v6644 = vpop.f32.mrf.mxu0
    %v6645 = vadd.f32 %v6604, %v6644
    %v6646 = vpop.f32.mrf.mxu0
    %v6647 = vadd.f32 %v6606, %v6646
    %v6648 = vpop.f32.mrf.mxu0
    %v6649 = vpop.f32.mrf.mxu0
    %6650 = vdwg.mxu0
    %6651 = vmatprep.subr.bf16.mxu0 %v5002
    %6652 = vmatpush1.bf16.msra.mxu0 %v5001
    %6653 = vmatprep.subr.bf16.mxu0 %v4989
    %6654 = vmatpush1.bf16.msra.mxu0 %v4988
    %6655 = vmatprep.subr.bf16.mxu0 %v4976
    %6656 = vmatpush1.bf16.msra.mxu0 %v4975
    %6657 = vmatprep.subr.bf16.mxu0 %v4963
    %6658 = vmatpush1.bf16.msra.mxu0 %v4962
    %6659 = vmatprep.subr.bf16.mxu0 %v4950
    %6660 = vmatpush1.bf16.msra.mxu0 %v4949
    %6661 = vmatprep.subr.bf16.mxu0 %v4937
    %6662 = vmatpush1.bf16.msra.mxu0 %v4936
    %6663 = vmatprep.subr.bf16.mxu0 %v4924
    %6664 = vmatpush1.bf16.msra.mxu0 %v4923
    %6665 = vmatprep.subr.bf16.mxu0 %v4911
    %6666 = vmatpush1.bf16.msra.mxu0 %v4910
    %6667 = vmatprep.subr.bf16.mxu0 %v5106
    %6668 = vmatpush2.bf16.msra.mxu0 %v5105
    %6669 = vmatprep.subr.bf16.mxu0 %v5093
    %6670 = vmatpush2.bf16.msra.mxu0 %v5092
    %6671 = vmatprep.subr.bf16.mxu0 %v5080
    %6672 = vmatpush2.bf16.msra.mxu0 %v5079
    %6673 = vmatprep.subr.bf16.mxu0 %v5067
    %6674 = vmatpush2.bf16.msra.mxu0 %v5066
    %6675 = vmatprep.subr.bf16.mxu0 %v5054
    %6676 = vmatpush2.bf16.msra.mxu0 %v5053
    %6677 = vmatprep.subr.bf16.mxu0 %v5041
    %6678 = vmatpush2.bf16.msra.mxu0 %v5040
    %6679 = vmatprep.subr.bf16.mxu0 %v5028
    %6680 = vmatpush2.bf16.msra.mxu0 %v5027
    %6681 = vmatprep.subr.bf16.mxu0 %v5015
    %6682 = vmatpush2.bf16.msra.mxu0 %v5014
    %6683 = vmatprep.mubr.bf16.mxu0 %v531
    %6684 = vmatmul.mubr.bf16.gmra.mxu0 %v530
    %v6685 = vpop.f32.mrf.mxu0
    %v6686 = vadd.f32 %v6645, %v6685
    %v6687 = vpop.f32.mrf.mxu0
    %v6688 = vadd.f32 %v6647, %v6687
    %v6689 = vpop.f32.mrf.mxu0
    %v6690 = vpop.f32.mrf.mxu0
    %6691 = vdwg.mxu0
    %6692 = vmatprep.subr.bf16.mxu0 %v5210
    %6693 = vmatpush1.bf16.msra.mxu0 %v5209
    %6694 = vmatprep.subr.bf16.mxu0 %v5197
    %6695 = vmatpush1.bf16.msra.mxu0 %v5196
    %6696 = vmatprep.subr.bf16.mxu0 %v5184
    %6697 = vmatpush1.bf16.msra.mxu0 %v5183
    %6698 = vmatprep.subr.bf16.mxu0 %v5171
    %6699 = vmatpush1.bf16.msra.mxu0 %v5170
    %6700 = vmatprep.subr.bf16.mxu0 %v5158
    %6701 = vmatpush1.bf16.msra.mxu0 %v5157
    %6702 = vmatprep.subr.bf16.mxu0 %v5145
    %6703 = vmatpush1.bf16.msra.mxu0 %v5144
    %6704 = vmatprep.subr.bf16.mxu0 %v5132
    %6705 = vmatpush1.bf16.msra.mxu0 %v5131
    %6706 = vmatprep.subr.bf16.mxu0 %v5119
    %6707 = vmatpush1.bf16.msra.mxu0 %v5118
    %6708 = vmatprep.subr.bf16.mxu0 %v5314
    %6709 = vmatpush2.bf16.msra.mxu0 %v5313
    %6710 = vmatprep.subr.bf16.mxu0 %v5301
    %6711 = vmatpush2.bf16.msra.mxu0 %v5300
    %6712 = vmatprep.subr.bf16.mxu0 %v5288
    %6713 = vmatpush2.bf16.msra.mxu0 %v5287
    %6714 = vmatprep.subr.bf16.mxu0 %v5275
    %6715 = vmatpush2.bf16.msra.mxu0 %v5274
    %6716 = vmatprep.subr.bf16.mxu0 %v5262
    %6717 = vmatpush2.bf16.msra.mxu0 %v5261
    %6718 = vmatprep.subr.bf16.mxu0 %v5249
    %6719 = vmatpush2.bf16.msra.mxu0 %v5248
    %6720 = vmatprep.subr.bf16.mxu0 %v5236
    %6721 = vmatpush2.bf16.msra.mxu0 %v5235
    %6722 = vmatprep.subr.bf16.mxu0 %v5223
    %6723 = vmatpush2.bf16.msra.mxu0 %v5222
    %6724 = vmatprep.mubr.bf16.mxu0 %v533
    %6725 = vmatmul.mubr.bf16.gmra.mxu0 %v532
    %v6726 = vpop.f32.mrf.mxu0
    %v6727 = vadd.f32 %v6686, %v6726
    %v6728 = vpop.f32.mrf.mxu0
    %v6729 = vadd.f32 %v6688, %v6728
    %v6730 = vpop.f32.mrf.mxu0
    %v6731 = vpop.f32.mrf.mxu0
    %6732 = vdwg.mxu0
    %6733 = vmatprep.subr.bf16.mxu0 %v5418
    %6734 = vmatpush1.bf16.msra.mxu0 %v5417
    %6735 = vmatprep.subr.bf16.mxu0 %v5405
    %6736 = vmatpush1.bf16.msra.mxu0 %v5404
    %6737 = vmatprep.subr.bf16.mxu0 %v5392
    %6738 = vmatpush1.bf16.msra.mxu0 %v5391
    %6739 = vmatprep.subr.bf16.mxu0 %v5379
    %6740 = vmatpush1.bf16.msra.mxu0 %v5378
    %6741 = vmatprep.subr.bf16.mxu0 %v5366
    %6742 = vmatpush1.bf16.msra.mxu0 %v5365
    %6743 = vmatprep.subr.bf16.mxu0 %v5353
    %6744 = vmatpush1.bf16.msra.mxu0 %v5352
    %6745 = vmatprep.subr.bf16.mxu0 %v5340
    %6746 = vmatpush1.bf16.msra.mxu0 %v5339
    %6747 = vmatprep.subr.bf16.mxu0 %v5327
    %6748 = vmatpush1.bf16.msra.mxu0 %v5326
    %6749 = vmatprep.subr.bf16.mxu0 0
    %6750 = vmatpush2.bf16.msra.mxu0 0
    %6751 = vmatprep.subr.bf16.mxu0 0
    %6752 = vmatpush2.bf16.msra.mxu0 0
    %6753 = vmatprep.subr.bf16.mxu0 0
    %6754 = vmatpush2.bf16.msra.mxu0 0
    %6755 = vmatprep.subr.bf16.mxu0 0
    %6756 = vmatpush2.bf16.msra.mxu0 0
    %6757 = vmatprep.subr.bf16.mxu0 0
    %6758 = vmatpush2.bf16.msra.mxu0 0
    %6759 = vmatprep.subr.bf16.mxu0 0
    %6760 = vmatpush2.bf16.msra.mxu0 0
    %6761 = vmatprep.subr.bf16.mxu0 0
    %6762 = vmatpush2.bf16.msra.mxu0 0
    %6763 = vmatprep.subr.bf16.mxu0 0
    %6764 = vmatpush2.bf16.msra.mxu0 0
    %6765 = vmatprep.mubr.bf16.mxu0 0
    %6766 = vmatmul.mubr.bf16.gmra.mxu0 %v534
    %v6767 = vpop.f32.mrf.mxu0
    %v6768 = vadd.f32 %v6727, %v6767
    %v6769 = vpop.f32.mrf.mxu0
    %v6770 = vadd.f32 %v6729, %v6769
    %v6771 = vpop.f32.mrf.mxu0
    %v6772 = vpop.f32.mrf.mxu0
    %6773 = vdwg.mxu0
    %6774 = vmatprep.subr.bf16.mxu0 %v4588
    %6775 = vmatpush1.bf16.msra.mxu0 %v4587
    %6776 = vmatprep.subr.bf16.mxu0 %v4575
    %6777 = vmatpush1.bf16.msra.mxu0 %v4574
    %6778 = vmatprep.subr.bf16.mxu0 %v4562
    %6779 = vmatpush1.bf16.msra.mxu0 %v4561
    %6780 = vmatprep.subr.bf16.mxu0 %v4549
    %6781 = vmatpush1.bf16.msra.mxu0 %v4548
    %6782 = vmatprep.subr.bf16.mxu0 %v4536
    %6783 = vmatpush1.bf16.msra.mxu0 %v4535
    %6784 = vmatprep.subr.bf16.mxu0 %v4523
    %6785 = vmatpush1.bf16.msra.mxu0 %v4522
    %6786 = vmatprep.subr.bf16.mxu0 %v4510
    %6787 = vmatpush1.bf16.msra.mxu0 %v4509
    %6788 = vmatprep.subr.bf16.mxu0 %v4497
    %6789 = vmatpush1.bf16.msra.mxu0 %v4496
    %6790 = vmatprep.subr.bf16.mxu0 %v4692
    %6791 = vmatpush2.bf16.msra.mxu0 %v4691
    %6792 = vmatprep.subr.bf16.mxu0 %v4679
    %6793 = vmatpush2.bf16.msra.mxu0 %v4678
    %6794 = vmatprep.subr.bf16.mxu0 %v4666
    %6795 = vmatpush2.bf16.msra.mxu0 %v4665
    %6796 = vmatprep.subr.bf16.mxu0 %v4653
    %6797 = vmatpush2.bf16.msra.mxu0 %v4652
    %6798 = vmatprep.subr.bf16.mxu0 %v4640
    %6799 = vmatpush2.bf16.msra.mxu0 %v4639
    %6800 = vmatprep.subr.bf16.mxu0 %v4627
    %6801 = vmatpush2.bf16.msra.mxu0 %v4626
    %6802 = vmatprep.subr.bf16.mxu0 %v4614
    %6803 = vmatpush2.bf16.msra.mxu0 %v4613
    %6804 = vmatprep.subr.bf16.mxu0 %v4601
    %6805 = vmatpush2.bf16.msra.mxu0 %v4600
    %6806 = vmatprep.mubr.bf16.mxu0 %v527
    %6807 = vmatmul.mubr.bf16.gmra.mxu0 %v526
    %v6808 = vpop.f32.mrf.mxu0
    %v6809 = vadd.f32 %v1566, %v6808
    %v6810 = vpop.f32.mrf.mxu0
    %v6811 = vadd.f32 %v1570, %v6810
    %v6812 = vpop.f32.mrf.mxu0
    %v6813 = vpop.f32.mrf.mxu0
    %6814 = vdwg.mxu0
    %6815 = vmatprep.subr.bf16.mxu0 %v4796
    %6816 = vmatpush1.bf16.msra.mxu0 %v4795
    %6817 = vmatprep.subr.bf16.mxu0 %v4783
    %6818 = vmatpush1.bf16.msra.mxu0 %v4782
    %6819 = vmatprep.subr.bf16.mxu0 %v4770
    %6820 = vmatpush1.bf16.msra.mxu0 %v4769
    %6821 = vmatprep.subr.bf16.mxu0 %v4757
    %6822 = vmatpush1.bf16.msra.mxu0 %v4756
    %6823 = vmatprep.subr.bf16.mxu0 %v4744
    %6824 = vmatpush1.bf16.msra.mxu0 %v4743
    %6825 = vmatprep.subr.bf16.mxu0 %v4731
    %6826 = vmatpush1.bf16.msra.mxu0 %v4730
    %6827 = vmatprep.subr.bf16.mxu0 %v4718
    %6828 = vmatpush1.bf16.msra.mxu0 %v4717
    %6829 = vmatprep.subr.bf16.mxu0 %v4705
    %6830 = vmatpush1.bf16.msra.mxu0 %v4704
    %6831 = vmatprep.subr.bf16.mxu0 %v4900
    %6832 = vmatpush2.bf16.msra.mxu0 %v4899
    %6833 = vmatprep.subr.bf16.mxu0 %v4887
    %6834 = vmatpush2.bf16.msra.mxu0 %v4886
    %6835 = vmatprep.subr.bf16.mxu0 %v4874
    %6836 = vmatpush2.bf16.msra.mxu0 %v4873
    %6837 = vmatprep.subr.bf16.mxu0 %v4861
    %6838 = vmatpush2.bf16.msra.mxu0 %v4860
    %6839 = vmatprep.subr.bf16.mxu0 %v4848
    %6840 = vmatpush2.bf16.msra.mxu0 %v4847
    %6841 = vmatprep.subr.bf16.mxu0 %v4835
    %6842 = vmatpush2.bf16.msra.mxu0 %v4834
    %6843 = vmatprep.subr.bf16.mxu0 %v4822
    %6844 = vmatpush2.bf16.msra.mxu0 %v4821
    %6845 = vmatprep.subr.bf16.mxu0 %v4809
    %6846 = vmatpush2.bf16.msra.mxu0 %v4808
    %6847 = vmatprep.mubr.bf16.mxu0 %v529
    %6848 = vmatmul.mubr.bf16.gmra.mxu0 %v528
    %v6849 = vpop.f32.mrf.mxu0
    %v6850 = vadd.f32 %v6809, %v6849
    %v6851 = vpop.f32.mrf.mxu0
    %v6852 = vadd.f32 %v6811, %v6851
    %v6853 = vpop.f32.mrf.mxu0
    %v6854 = vpop.f32.mrf.mxu0
    %6855 = vdwg.mxu0
    %6856 = vmatprep.subr.bf16.mxu0 %v5004
    %6857 = vmatpush1.bf16.msra.mxu0 %v5003
    %6858 = vmatprep.subr.bf16.mxu0 %v4991
    %6859 = vmatpush1.bf16.msra.mxu0 %v4990
    %6860 = vmatprep.subr.bf16.mxu0 %v4978
    %6861 = vmatpush1.bf16.msra.mxu0 %v4977
    %6862 = vmatprep.subr.bf16.mxu0 %v4965
    %6863 = vmatpush1.bf16.msra.mxu0 %v4964
    %6864 = vmatprep.subr.bf16.mxu0 %v4952
    %6865 = vmatpush1.bf16.msra.mxu0 %v4951
    %6866 = vmatprep.subr.bf16.mxu0 %v4939
    %6867 = vmatpush1.bf16.msra.mxu0 %v4938
    %6868 = vmatprep.subr.bf16.mxu0 %v4926
    %6869 = vmatpush1.bf16.msra.mxu0 %v4925
    %6870 = vmatprep.subr.bf16.mxu0 %v4913
    %6871 = vmatpush1.bf16.msra.mxu0 %v4912
    %6872 = vmatprep.subr.bf16.mxu0 %v5108
    %6873 = vmatpush2.bf16.msra.mxu0 %v5107
    %6874 = vmatprep.subr.bf16.mxu0 %v5095
    %6875 = vmatpush2.bf16.msra.mxu0 %v5094
    %6876 = vmatprep.subr.bf16.mxu0 %v5082
    %6877 = vmatpush2.bf16.msra.mxu0 %v5081
    %6878 = vmatprep.subr.bf16.mxu0 %v5069
    %6879 = vmatpush2.bf16.msra.mxu0 %v5068
    %6880 = vmatprep.subr.bf16.mxu0 %v5056
    %6881 = vmatpush2.bf16.msra.mxu0 %v5055
    %6882 = vmatprep.subr.bf16.mxu0 %v5043
    %6883 = vmatpush2.bf16.msra.mxu0 %v5042
    %6884 = vmatprep.subr.bf16.mxu0 %v5030
    %6885 = vmatpush2.bf16.msra.mxu0 %v5029
    %6886 = vmatprep.subr.bf16.mxu0 %v5017
    %6887 = vmatpush2.bf16.msra.mxu0 %v5016
    %6888 = vmatprep.mubr.bf16.mxu0 %v531
    %6889 = vmatmul.mubr.bf16.gmra.mxu0 %v530
    %v6890 = vpop.f32.mrf.mxu0
    %v6891 = vadd.f32 %v6850, %v6890
    %v6892 = vpop.f32.mrf.mxu0
    %v6893 = vadd.f32 %v6852, %v6892
    %v6894 = vpop.f32.mrf.mxu0
    %v6895 = vpop.f32.mrf.mxu0
    %6896 = vdwg.mxu0
    %6897 = vmatprep.subr.bf16.mxu0 %v5212
    %6898 = vmatpush1.bf16.msra.mxu0 %v5211
    %6899 = vmatprep.subr.bf16.mxu0 %v5199
    %6900 = vmatpush1.bf16.msra.mxu0 %v5198
    %6901 = vmatprep.subr.bf16.mxu0 %v5186
    %6902 = vmatpush1.bf16.msra.mxu0 %v5185
    %6903 = vmatprep.subr.bf16.mxu0 %v5173
    %6904 = vmatpush1.bf16.msra.mxu0 %v5172
    %6905 = vmatprep.subr.bf16.mxu0 %v5160
    %6906 = vmatpush1.bf16.msra.mxu0 %v5159
    %6907 = vmatprep.subr.bf16.mxu0 %v5147
    %6908 = vmatpush1.bf16.msra.mxu0 %v5146
    %6909 = vmatprep.subr.bf16.mxu0 %v5134
    %6910 = vmatpush1.bf16.msra.mxu0 %v5133
    %6911 = vmatprep.subr.bf16.mxu0 %v5121
    %6912 = vmatpush1.bf16.msra.mxu0 %v5120
    %6913 = vmatprep.subr.bf16.mxu0 %v5316
    %6914 = vmatpush2.bf16.msra.mxu0 %v5315
    %6915 = vmatprep.subr.bf16.mxu0 %v5303
    %6916 = vmatpush2.bf16.msra.mxu0 %v5302
    %6917 = vmatprep.subr.bf16.mxu0 %v5290
    %6918 = vmatpush2.bf16.msra.mxu0 %v5289
    %6919 = vmatprep.subr.bf16.mxu0 %v5277
    %6920 = vmatpush2.bf16.msra.mxu0 %v5276
    %6921 = vmatprep.subr.bf16.mxu0 %v5264
    %6922 = vmatpush2.bf16.msra.mxu0 %v5263
    %6923 = vmatprep.subr.bf16.mxu0 %v5251
    %6924 = vmatpush2.bf16.msra.mxu0 %v5250
    %6925 = vmatprep.subr.bf16.mxu0 %v5238
    %6926 = vmatpush2.bf16.msra.mxu0 %v5237
    %6927 = vmatprep.subr.bf16.mxu0 %v5225
    %6928 = vmatpush2.bf16.msra.mxu0 %v5224
    %6929 = vmatprep.mubr.bf16.mxu0 %v533
    %6930 = vmatmul.mubr.bf16.gmra.mxu0 %v532
    %v6931 = vpop.f32.mrf.mxu0
    %v6932 = vadd.f32 %v6891, %v6931
    %v6933 = vpop.f32.mrf.mxu0
    %v6934 = vadd.f32 %v6893, %v6933
    %v6935 = vpop.f32.mrf.mxu0
    %v6936 = vpop.f32.mrf.mxu0
    %6937 = vdwg.mxu0
    %6938 = vmatprep.subr.bf16.mxu0 %v5420
    %6939 = vmatpush1.bf16.msra.mxu0 %v5419
    %6940 = vmatprep.subr.bf16.mxu0 %v5407
    %6941 = vmatpush1.bf16.msra.mxu0 %v5406
    %6942 = vmatprep.subr.bf16.mxu0 %v5394
    %6943 = vmatpush1.bf16.msra.mxu0 %v5393
    %6944 = vmatprep.subr.bf16.mxu0 %v5381
    %6945 = vmatpush1.bf16.msra.mxu0 %v5380
    %6946 = vmatprep.subr.bf16.mxu0 %v5368
    %6947 = vmatpush1.bf16.msra.mxu0 %v5367
    %6948 = vmatprep.subr.bf16.mxu0 %v5355
    %6949 = vmatpush1.bf16.msra.mxu0 %v5354
    %6950 = vmatprep.subr.bf16.mxu0 %v5342
    %6951 = vmatpush1.bf16.msra.mxu0 %v5341
    %6952 = vmatprep.subr.bf16.mxu0 %v5329
    %6953 = vmatpush1.bf16.msra.mxu0 %v5328
    %6954 = vmatprep.subr.bf16.mxu0 0
    %6955 = vmatpush2.bf16.msra.mxu0 0
    %6956 = vmatprep.subr.bf16.mxu0 0
    %6957 = vmatpush2.bf16.msra.mxu0 0
    %6958 = vmatprep.subr.bf16.mxu0 0
    %6959 = vmatpush2.bf16.msra.mxu0 0
    %6960 = vmatprep.subr.bf16.mxu0 0
    %6961 = vmatpush2.bf16.msra.mxu0 0
    %6962 = vmatprep.subr.bf16.mxu0 0
    %6963 = vmatpush2.bf16.msra.mxu0 0
    %6964 = vmatprep.subr.bf16.mxu0 0
    %6965 = vmatpush2.bf16.msra.mxu0 0
    %6966 = vmatprep.subr.bf16.mxu0 0
    %6967 = vmatpush2.bf16.msra.mxu0 0
    %6968 = vmatprep.subr.bf16.mxu0 0
    %6969 = vmatpush2.bf16.msra.mxu0 0
    %6970 = vmatprep.mubr.bf16.mxu0 0
    %6971 = vmatmul.mubr.bf16.gmra.mxu0 %v534
    %v6972 = vpop.f32.mrf.mxu0
    %v6973 = vadd.f32 %v6932, %v6972
    %v6974 = vpop.f32.mrf.mxu0
    %v6975 = vadd.f32 %v6934, %v6974
    %v6976 = vpop.f32.mrf.mxu0
    %v6977 = vpop.f32.mrf.mxu0
    %6978 = vdwg.mxu0
    %6979 = vmatprep.subr.bf16.mxu0 %v4590
    %6980 = vmatpush1.bf16.msra.mxu0 %v4589
    %6981 = vmatprep.subr.bf16.mxu0 %v4577
    %6982 = vmatpush1.bf16.msra.mxu0 %v4576
    %6983 = vmatprep.subr.bf16.mxu0 %v4564
    %6984 = vmatpush1.bf16.msra.mxu0 %v4563
    %6985 = vmatprep.subr.bf16.mxu0 %v4551
    %6986 = vmatpush1.bf16.msra.mxu0 %v4550
    %6987 = vmatprep.subr.bf16.mxu0 %v4538
    %6988 = vmatpush1.bf16.msra.mxu0 %v4537
    %6989 = vmatprep.subr.bf16.mxu0 %v4525
    %6990 = vmatpush1.bf16.msra.mxu0 %v4524
    %6991 = vmatprep.subr.bf16.mxu0 %v4512
    %6992 = vmatpush1.bf16.msra.mxu0 %v4511
    %6993 = vmatprep.subr.bf16.mxu0 %v4499
    %6994 = vmatpush1.bf16.msra.mxu0 %v4498
    %6995 = vmatprep.subr.bf16.mxu0 %v4694
    %6996 = vmatpush2.bf16.msra.mxu0 %v4693
    %6997 = vmatprep.subr.bf16.mxu0 %v4681
    %6998 = vmatpush2.bf16.msra.mxu0 %v4680
    %6999 = vmatprep.subr.bf16.mxu0 %v4668
    %7000 = vmatpush2.bf16.msra.mxu0 %v4667
    %7001 = vmatprep.subr.bf16.mxu0 %v4655
    %7002 = vmatpush2.bf16.msra.mxu0 %v4654
    %7003 = vmatprep.subr.bf16.mxu0 %v4642
    %7004 = vmatpush2.bf16.msra.mxu0 %v4641
    %7005 = vmatprep.subr.bf16.mxu0 %v4629
    %7006 = vmatpush2.bf16.msra.mxu0 %v4628
    %7007 = vmatprep.subr.bf16.mxu0 %v4616
    %7008 = vmatpush2.bf16.msra.mxu0 %v4615
    %7009 = vmatprep.subr.bf16.mxu0 %v4603
    %7010 = vmatpush2.bf16.msra.mxu0 %v4602
    %7011 = vmatprep.mubr.bf16.mxu0 %v527
    %7012 = vmatmul.mubr.bf16.gmra.mxu0 %v526
    %v7013 = vpop.f32.mrf.mxu0
    %v7014 = vadd.f32 %v1574, %v7013
    %v7015 = vpop.f32.mrf.mxu0
    %v7016 = vadd.f32 %v1578, %v7015
    %v7017 = vpop.f32.mrf.mxu0
    %v7018 = vpop.f32.mrf.mxu0
    %7019 = vdwg.mxu0
    %7020 = vmatprep.subr.bf16.mxu0 %v4798
    %7021 = vmatpush1.bf16.msra.mxu0 %v4797
    %7022 = vmatprep.subr.bf16.mxu0 %v4785
    %7023 = vmatpush1.bf16.msra.mxu0 %v4784
    %7024 = vmatprep.subr.bf16.mxu0 %v4772
    %7025 = vmatpush1.bf16.msra.mxu0 %v4771
    %7026 = vmatprep.subr.bf16.mxu0 %v4759
    %7027 = vmatpush1.bf16.msra.mxu0 %v4758
    %7028 = vmatprep.subr.bf16.mxu0 %v4746
    %7029 = vmatpush1.bf16.msra.mxu0 %v4745
    %7030 = vmatprep.subr.bf16.mxu0 %v4733
    %7031 = vmatpush1.bf16.msra.mxu0 %v4732
    %7032 = vmatprep.subr.bf16.mxu0 %v4720
    %7033 = vmatpush1.bf16.msra.mxu0 %v4719
    %7034 = vmatprep.subr.bf16.mxu0 %v4707
    %7035 = vmatpush1.bf16.msra.mxu0 %v4706
    %7036 = vmatprep.subr.bf16.mxu0 %v4902
    %7037 = vmatpush2.bf16.msra.mxu0 %v4901
    %7038 = vmatprep.subr.bf16.mxu0 %v4889
    %7039 = vmatpush2.bf16.msra.mxu0 %v4888
    %7040 = vmatprep.subr.bf16.mxu0 %v4876
    %7041 = vmatpush2.bf16.msra.mxu0 %v4875
    %7042 = vmatprep.subr.bf16.mxu0 %v4863
    %7043 = vmatpush2.bf16.msra.mxu0 %v4862
    %7044 = vmatprep.subr.bf16.mxu0 %v4850
    %7045 = vmatpush2.bf16.msra.mxu0 %v4849
    %7046 = vmatprep.subr.bf16.mxu0 %v4837
    %7047 = vmatpush2.bf16.msra.mxu0 %v4836
    %7048 = vmatprep.subr.bf16.mxu0 %v4824
    %7049 = vmatpush2.bf16.msra.mxu0 %v4823
    %7050 = vmatprep.subr.bf16.mxu0 %v4811
    %7051 = vmatpush2.bf16.msra.mxu0 %v4810
    %7052 = vmatprep.mubr.bf16.mxu0 %v529
    %7053 = vmatmul.mubr.bf16.gmra.mxu0 %v528
    %v7054 = vpop.f32.mrf.mxu0
    %v7055 = vadd.f32 %v7014, %v7054
    %v7056 = vpop.f32.mrf.mxu0
    %v7057 = vadd.f32 %v7016, %v7056
    %v7058 = vpop.f32.mrf.mxu0
    %v7059 = vpop.f32.mrf.mxu0
    %7060 = vdwg.mxu0
    %7061 = vmatprep.subr.bf16.mxu0 %v5006
    %7062 = vmatpush1.bf16.msra.mxu0 %v5005
    %7063 = vmatprep.subr.bf16.mxu0 %v4993
    %7064 = vmatpush1.bf16.msra.mxu0 %v4992
    %7065 = vmatprep.subr.bf16.mxu0 %v4980
    %7066 = vmatpush1.bf16.msra.mxu0 %v4979
    %7067 = vmatprep.subr.bf16.mxu0 %v4967
    %7068 = vmatpush1.bf16.msra.mxu0 %v4966
    %7069 = vmatprep.subr.bf16.mxu0 %v4954
    %7070 = vmatpush1.bf16.msra.mxu0 %v4953
    %7071 = vmatprep.subr.bf16.mxu0 %v4941
    %7072 = vmatpush1.bf16.msra.mxu0 %v4940
    %7073 = vmatprep.subr.bf16.mxu0 %v4928
    %7074 = vmatpush1.bf16.msra.mxu0 %v4927
    %7075 = vmatprep.subr.bf16.mxu0 %v4915
    %7076 = vmatpush1.bf16.msra.mxu0 %v4914
    %7077 = vmatprep.subr.bf16.mxu0 %v5110
    %7078 = vmatpush2.bf16.msra.mxu0 %v5109
    %7079 = vmatprep.subr.bf16.mxu0 %v5097
    %7080 = vmatpush2.bf16.msra.mxu0 %v5096
    %7081 = vmatprep.subr.bf16.mxu0 %v5084
    %7082 = vmatpush2.bf16.msra.mxu0 %v5083
    %7083 = vmatprep.subr.bf16.mxu0 %v5071
    %7084 = vmatpush2.bf16.msra.mxu0 %v5070
    %7085 = vmatprep.subr.bf16.mxu0 %v5058
    %7086 = vmatpush2.bf16.msra.mxu0 %v5057
    %7087 = vmatprep.subr.bf16.mxu0 %v5045
    %7088 = vmatpush2.bf16.msra.mxu0 %v5044
    %7089 = vmatprep.subr.bf16.mxu0 %v5032
    %7090 = vmatpush2.bf16.msra.mxu0 %v5031
    %7091 = vmatprep.subr.bf16.mxu0 %v5019
    %7092 = vmatpush2.bf16.msra.mxu0 %v5018
    %7093 = vmatprep.mubr.bf16.mxu0 %v531
    %7094 = vmatmul.mubr.bf16.gmra.mxu0 %v530
    %v7095 = vpop.f32.mrf.mxu0
    %v7096 = vadd.f32 %v7055, %v7095
    %v7097 = vpop.f32.mrf.mxu0
    %v7098 = vadd.f32 %v7057, %v7097
    %v7099 = vpop.f32.mrf.mxu0
    %v7100 = vpop.f32.mrf.mxu0
    %7101 = vdwg.mxu0
    %7102 = vmatprep.subr.bf16.mxu0 %v5214
    %7103 = vmatpush1.bf16.msra.mxu0 %v5213
    %7104 = vmatprep.subr.bf16.mxu0 %v5201
    %7105 = vmatpush1.bf16.msra.mxu0 %v5200
    %7106 = vmatprep.subr.bf16.mxu0 %v5188
    %7107 = vmatpush1.bf16.msra.mxu0 %v5187
    %7108 = vmatprep.subr.bf16.mxu0 %v5175
    %7109 = vmatpush1.bf16.msra.mxu0 %v5174
    %7110 = vmatprep.subr.bf16.mxu0 %v5162
    %7111 = vmatpush1.bf16.msra.mxu0 %v5161
    %7112 = vmatprep.subr.bf16.mxu0 %v5149
    %7113 = vmatpush1.bf16.msra.mxu0 %v5148
    %7114 = vmatprep.subr.bf16.mxu0 %v5136
    %7115 = vmatpush1.bf16.msra.mxu0 %v5135
    %7116 = vmatprep.subr.bf16.mxu0 %v5123
    %7117 = vmatpush1.bf16.msra.mxu0 %v5122
    %7118 = vmatprep.subr.bf16.mxu0 %v5318
    %7119 = vmatpush2.bf16.msra.mxu0 %v5317
    %7120 = vmatprep.subr.bf16.mxu0 %v5305
    %7121 = vmatpush2.bf16.msra.mxu0 %v5304
    %7122 = vmatprep.subr.bf16.mxu0 %v5292
    %7123 = vmatpush2.bf16.msra.mxu0 %v5291
    %7124 = vmatprep.subr.bf16.mxu0 %v5279
    %7125 = vmatpush2.bf16.msra.mxu0 %v5278
    %7126 = vmatprep.subr.bf16.mxu0 %v5266
    %7127 = vmatpush2.bf16.msra.mxu0 %v5265
    %7128 = vmatprep.subr.bf16.mxu0 %v5253
    %7129 = vmatpush2.bf16.msra.mxu0 %v5252
    %7130 = vmatprep.subr.bf16.mxu0 %v5240
    %7131 = vmatpush2.bf16.msra.mxu0 %v5239
    %7132 = vmatprep.subr.bf16.mxu0 %v5227
    %7133 = vmatpush2.bf16.msra.mxu0 %v5226
    %7134 = vmatprep.mubr.bf16.mxu0 %v533
    %7135 = vmatmul.mubr.bf16.gmra.mxu0 %v532
    %v7136 = vpop.f32.mrf.mxu0
    %v7137 = vadd.f32 %v7096, %v7136
    %v7138 = vpop.f32.mrf.mxu0
    %v7139 = vadd.f32 %v7098, %v7138
    %v7140 = vpop.f32.mrf.mxu0
    %v7141 = vpop.f32.mrf.mxu0
    %7142 = vdwg.mxu0
    %7143 = vmatprep.subr.bf16.mxu0 %v5422
    %7144 = vmatpush1.bf16.msra.mxu0 %v5421
    %7145 = vmatprep.subr.bf16.mxu0 %v5409
    %7146 = vmatpush1.bf16.msra.mxu0 %v5408
    %7147 = vmatprep.subr.bf16.mxu0 %v5396
    %7148 = vmatpush1.bf16.msra.mxu0 %v5395
    %7149 = vmatprep.subr.bf16.mxu0 %v5383
    %7150 = vmatpush1.bf16.msra.mxu0 %v5382
    %7151 = vmatprep.subr.bf16.mxu0 %v5370
    %7152 = vmatpush1.bf16.msra.mxu0 %v5369
    %7153 = vmatprep.subr.bf16.mxu0 %v5357
    %7154 = vmatpush1.bf16.msra.mxu0 %v5356
    %7155 = vmatprep.subr.bf16.mxu0 %v5344
    %7156 = vmatpush1.bf16.msra.mxu0 %v5343
    %7157 = vmatprep.subr.bf16.mxu0 %v5331
    %7158 = vmatpush1.bf16.msra.mxu0 %v5330
    %7159 = vmatprep.subr.bf16.mxu0 0
    %7160 = vmatpush2.bf16.msra.mxu0 0
    %7161 = vmatprep.subr.bf16.mxu0 0
    %7162 = vmatpush2.bf16.msra.mxu0 0
    %7163 = vmatprep.subr.bf16.mxu0 0
    %7164 = vmatpush2.bf16.msra.mxu0 0
    %7165 = vmatprep.subr.bf16.mxu0 0
    %7166 = vmatpush2.bf16.msra.mxu0 0
    %7167 = vmatprep.subr.bf16.mxu0 0
    %7168 = vmatpush2.bf16.msra.mxu0 0
    %7169 = vmatprep.subr.bf16.mxu0 0
    %7170 = vmatpush2.bf16.msra.mxu0 0
    %7171 = vmatprep.subr.bf16.mxu0 0
    %7172 = vmatpush2.bf16.msra.mxu0 0
    %7173 = vmatprep.subr.bf16.mxu0 0
    %7174 = vmatpush2.bf16.msra.mxu0 0
    %7175 = vmatprep.mubr.bf16.mxu0 0
    %7176 = vmatmul.mubr.bf16.gmra.mxu0 %v534
    %v7177 = vpop.f32.mrf.mxu0
    %v7178 = vadd.f32 %v7137, %v7177
    %v7179 = vpop.f32.mrf.mxu0
    %v7180 = vadd.f32 %v7139, %v7179
    %v7181 = vpop.f32.mrf.mxu0
    %v7182 = vpop.f32.mrf.mxu0
    %7183 = vdwg.mxu0
    %7184 = vmatprep.subr.bf16.mxu0 %v4592
    %7185 = vmatpush1.bf16.msra.mxu0 %v4591
    %7186 = vmatprep.subr.bf16.mxu0 %v4579
    %7187 = vmatpush1.bf16.msra.mxu0 %v4578
    %7188 = vmatprep.subr.bf16.mxu0 %v4566
    %7189 = vmatpush1.bf16.msra.mxu0 %v4565
    %7190 = vmatprep.subr.bf16.mxu0 %v4553
    %7191 = vmatpush1.bf16.msra.mxu0 %v4552
    %7192 = vmatprep.subr.bf16.mxu0 %v4540
    %7193 = vmatpush1.bf16.msra.mxu0 %v4539
    %7194 = vmatprep.subr.bf16.mxu0 %v4527
    %7195 = vmatpush1.bf16.msra.mxu0 %v4526
    %7196 = vmatprep.subr.bf16.mxu0 %v4514
    %7197 = vmatpush1.bf16.msra.mxu0 %v4513
    %7198 = vmatprep.subr.bf16.mxu0 %v4501
    %7199 = vmatpush1.bf16.msra.mxu0 %v4500
    %7200 = vmatprep.subr.bf16.mxu0 %v4696
    %7201 = vmatpush2.bf16.msra.mxu0 %v4695
    %7202 = vmatprep.subr.bf16.mxu0 %v4683
    %7203 = vmatpush2.bf16.msra.mxu0 %v4682
    %7204 = vmatprep.subr.bf16.mxu0 %v4670
    %7205 = vmatpush2.bf16.msra.mxu0 %v4669
    %7206 = vmatprep.subr.bf16.mxu0 %v4657
    %7207 = vmatpush2.bf16.msra.mxu0 %v4656
    %7208 = vmatprep.subr.bf16.mxu0 %v4644
    %7209 = vmatpush2.bf16.msra.mxu0 %v4643
    %7210 = vmatprep.subr.bf16.mxu0 %v4631
    %7211 = vmatpush2.bf16.msra.mxu0 %v4630
    %7212 = vmatprep.subr.bf16.mxu0 %v4618
    %7213 = vmatpush2.bf16.msra.mxu0 %v4617
    %7214 = vmatprep.subr.bf16.mxu0 %v4605
    %7215 = vmatpush2.bf16.msra.mxu0 %v4604
    %7216 = vmatprep.mubr.bf16.mxu0 %v527
    %7217 = vmatmul.mubr.bf16.gmra.mxu0 %v526
    %v7218 = vpop.f32.mrf.mxu0
    %v7219 = vadd.f32 %v1582, %v7218
    %v7220 = vpop.f32.mrf.mxu0
    %v7221 = vadd.f32 %v1586, %v7220
    %v7222 = vpop.f32.mrf.mxu0
    %v7223 = vpop.f32.mrf.mxu0
    %7224 = vdwg.mxu0
    %7225 = vmatprep.subr.bf16.mxu0 %v4800
    %7226 = vmatpush1.bf16.msra.mxu0 %v4799
    %7227 = vmatprep.subr.bf16.mxu0 %v4787
    %7228 = vmatpush1.bf16.msra.mxu0 %v4786
    %7229 = vmatprep.subr.bf16.mxu0 %v4774
    %7230 = vmatpush1.bf16.msra.mxu0 %v4773
    %7231 = vmatprep.subr.bf16.mxu0 %v4761
    %7232 = vmatpush1.bf16.msra.mxu0 %v4760
    %7233 = vmatprep.subr.bf16.mxu0 %v4748
    %7234 = vmatpush1.bf16.msra.mxu0 %v4747
    %7235 = vmatprep.subr.bf16.mxu0 %v4735
    %7236 = vmatpush1.bf16.msra.mxu0 %v4734
    %7237 = vmatprep.subr.bf16.mxu0 %v4722
    %7238 = vmatpush1.bf16.msra.mxu0 %v4721
    %7239 = vmatprep.subr.bf16.mxu0 %v4709
    %7240 = vmatpush1.bf16.msra.mxu0 %v4708
    %7241 = vmatprep.subr.bf16.mxu0 %v4904
    %7242 = vmatpush2.bf16.msra.mxu0 %v4903
    %7243 = vmatprep.subr.bf16.mxu0 %v4891
    %7244 = vmatpush2.bf16.msra.mxu0 %v4890
    %7245 = vmatprep.subr.bf16.mxu0 %v4878
    %7246 = vmatpush2.bf16.msra.mxu0 %v4877
    %7247 = vmatprep.subr.bf16.mxu0 %v4865
    %7248 = vmatpush2.bf16.msra.mxu0 %v4864
    %7249 = vmatprep.subr.bf16.mxu0 %v4852
    %7250 = vmatpush2.bf16.msra.mxu0 %v4851
    %7251 = vmatprep.subr.bf16.mxu0 %v4839
    %7252 = vmatpush2.bf16.msra.mxu0 %v4838
    %7253 = vmatprep.subr.bf16.mxu0 %v4826
    %7254 = vmatpush2.bf16.msra.mxu0 %v4825
    %7255 = vmatprep.subr.bf16.mxu0 %v4813
    %7256 = vmatpush2.bf16.msra.mxu0 %v4812
    %7257 = vmatprep.mubr.bf16.mxu0 %v529
    %7258 = vmatmul.mubr.bf16.gmra.mxu0 %v528
    %v7259 = vpop.f32.mrf.mxu0
    %v7260 = vadd.f32 %v7219, %v7259
    %v7261 = vpop.f32.mrf.mxu0
    %v7262 = vadd.f32 %v7221, %v7261
    %v7263 = vpop.f32.mrf.mxu0
    %v7264 = vpop.f32.mrf.mxu0
    %7265 = vdwg.mxu0
    %7266 = vmatprep.subr.bf16.mxu0 %v5008
    %7267 = vmatpush1.bf16.msra.mxu0 %v5007
    %7268 = vmatprep.subr.bf16.mxu0 %v4995
    %7269 = vmatpush1.bf16.msra.mxu0 %v4994
    %7270 = vmatprep.subr.bf16.mxu0 %v4982
    %7271 = vmatpush1.bf16.msra.mxu0 %v4981
    %7272 = vmatprep.subr.bf16.mxu0 %v4969
    %7273 = vmatpush1.bf16.msra.mxu0 %v4968
    %7274 = vmatprep.subr.bf16.mxu0 %v4956
    %7275 = vmatpush1.bf16.msra.mxu0 %v4955
    %7276 = vmatprep.subr.bf16.mxu0 %v4943
    %7277 = vmatpush1.bf16.msra.mxu0 %v4942
    %7278 = vmatprep.subr.bf16.mxu0 %v4930
    %7279 = vmatpush1.bf16.msra.mxu0 %v4929
    %7280 = vmatprep.subr.bf16.mxu0 %v4917
    %7281 = vmatpush1.bf16.msra.mxu0 %v4916
    %7282 = vmatprep.subr.bf16.mxu0 %v5112
    %7283 = vmatpush2.bf16.msra.mxu0 %v5111
    %7284 = vmatprep.subr.bf16.mxu0 %v5099
    %7285 = vmatpush2.bf16.msra.mxu0 %v5098
    %7286 = vmatprep.subr.bf16.mxu0 %v5086
    %7287 = vmatpush2.bf16.msra.mxu0 %v5085
    %7288 = vmatprep.subr.bf16.mxu0 %v5073
    %7289 = vmatpush2.bf16.msra.mxu0 %v5072
    %7290 = vmatprep.subr.bf16.mxu0 %v5060
    %7291 = vmatpush2.bf16.msra.mxu0 %v5059
    %7292 = vmatprep.subr.bf16.mxu0 %v5047
    %7293 = vmatpush2.bf16.msra.mxu0 %v5046
    %7294 = vmatprep.subr.bf16.mxu0 %v5034
    %7295 = vmatpush2.bf16.msra.mxu0 %v5033
    %7296 = vmatprep.subr.bf16.mxu0 %v5021
    %7297 = vmatpush2.bf16.msra.mxu0 %v5020
    %7298 = vmatprep.mubr.bf16.mxu0 %v531
    %7299 = vmatmul.mubr.bf16.gmra.mxu0 %v530
    %v7300 = vpop.f32.mrf.mxu0
    %v7301 = vadd.f32 %v7260, %v7300
    %v7302 = vpop.f32.mrf.mxu0
    %v7303 = vadd.f32 %v7262, %v7302
    %v7304 = vpop.f32.mrf.mxu0
    %v7305 = vpop.f32.mrf.mxu0
    %7306 = vdwg.mxu0
    %7307 = vmatprep.subr.bf16.mxu0 %v5216
    %7308 = vmatpush1.bf16.msra.mxu0 %v5215
    %7309 = vmatprep.subr.bf16.mxu0 %v5203
    %7310 = vmatpush1.bf16.msra.mxu0 %v5202
    %7311 = vmatprep.subr.bf16.mxu0 %v5190
    %7312 = vmatpush1.bf16.msra.mxu0 %v5189
    %7313 = vmatprep.subr.bf16.mxu0 %v5177
    %7314 = vmatpush1.bf16.msra.mxu0 %v5176
    %7315 = vmatprep.subr.bf16.mxu0 %v5164
    %7316 = vmatpush1.bf16.msra.mxu0 %v5163
    %7317 = vmatprep.subr.bf16.mxu0 %v5151
    %7318 = vmatpush1.bf16.msra.mxu0 %v5150
    %7319 = vmatprep.subr.bf16.mxu0 %v5138
    %7320 = vmatpush1.bf16.msra.mxu0 %v5137
    %7321 = vmatprep.subr.bf16.mxu0 %v5125
    %7322 = vmatpush1.bf16.msra.mxu0 %v5124
    %7323 = vmatprep.subr.bf16.mxu0 %v5320
    %7324 = vmatpush2.bf16.msra.mxu0 %v5319
    %7325 = vmatprep.subr.bf16.mxu0 %v5307
    %7326 = vmatpush2.bf16.msra.mxu0 %v5306
    %7327 = vmatprep.subr.bf16.mxu0 %v5294
    %7328 = vmatpush2.bf16.msra.mxu0 %v5293
    %7329 = vmatprep.subr.bf16.mxu0 %v5281
    %7330 = vmatpush2.bf16.msra.mxu0 %v5280
    %7331 = vmatprep.subr.bf16.mxu0 %v5268
    %7332 = vmatpush2.bf16.msra.mxu0 %v5267
    %7333 = vmatprep.subr.bf16.mxu0 %v5255
    %7334 = vmatpush2.bf16.msra.mxu0 %v5254
    %7335 = vmatprep.subr.bf16.mxu0 %v5242
    %7336 = vmatpush2.bf16.msra.mxu0 %v5241
    %7337 = vmatprep.subr.bf16.mxu0 %v5229
    %7338 = vmatpush2.bf16.msra.mxu0 %v5228
    %7339 = vmatprep.mubr.bf16.mxu0 %v533
    %7340 = vmatmul.mubr.bf16.gmra.mxu0 %v532
    %v7341 = vpop.f32.mrf.mxu0
    %v7342 = vadd.f32 %v7301, %v7341
    %v7343 = vpop.f32.mrf.mxu0
    %v7344 = vadd.f32 %v7303, %v7343
    %v7345 = vpop.f32.mrf.mxu0
    %v7346 = vpop.f32.mrf.mxu0
    %7347 = vdwg.mxu0
    %7348 = vmatprep.subr.bf16.mxu0 %v5424
    %7349 = vmatpush1.bf16.msra.mxu0 %v5423
    %7350 = vmatprep.subr.bf16.mxu0 %v5411
    %7351 = vmatpush1.bf16.msra.mxu0 %v5410
    %7352 = vmatprep.subr.bf16.mxu0 %v5398
    %7353 = vmatpush1.bf16.msra.mxu0 %v5397
    %7354 = vmatprep.subr.bf16.mxu0 %v5385
    %7355 = vmatpush1.bf16.msra.mxu0 %v5384
    %7356 = vmatprep.subr.bf16.mxu0 %v5372
    %7357 = vmatpush1.bf16.msra.mxu0 %v5371
    %7358 = vmatprep.subr.bf16.mxu0 %v5359
    %7359 = vmatpush1.bf16.msra.mxu0 %v5358
    %7360 = vmatprep.subr.bf16.mxu0 %v5346
    %7361 = vmatpush1.bf16.msra.mxu0 %v5345
    %7362 = vmatprep.subr.bf16.mxu0 %v5333
    %7363 = vmatpush1.bf16.msra.mxu0 %v5332
    %7364 = vmatprep.subr.bf16.mxu0 0
    %7365 = vmatpush2.bf16.msra.mxu0 0
    %7366 = vmatprep.subr.bf16.mxu0 0
    %7367 = vmatpush2.bf16.msra.mxu0 0
    %7368 = vmatprep.subr.bf16.mxu0 0
    %7369 = vmatpush2.bf16.msra.mxu0 0
    %7370 = vmatprep.subr.bf16.mxu0 0
    %7371 = vmatpush2.bf16.msra.mxu0 0
    %7372 = vmatprep.subr.bf16.mxu0 0
    %7373 = vmatpush2.bf16.msra.mxu0 0
    %7374 = vmatprep.subr.bf16.mxu0 0
    %7375 = vmatpush2.bf16.msra.mxu0 0
    %7376 = vmatprep.subr.bf16.mxu0 0
    %7377 = vmatpush2.bf16.msra.mxu0 0
    %7378 = vmatprep.subr.bf16.mxu0 0
    %7379 = vmatpush2.bf16.msra.mxu0 0
    %7380 = vmatprep.mubr.bf16.mxu0 0
    %7381 = vmatmul.mubr.bf16.gmra.mxu0 %v534
    %v7382 = vpop.f32.mrf.mxu0
    %v7383 = vadd.f32 %v7342, %v7382
    %v7384 = vpop.f32.mrf.mxu0
    %v7385 = vadd.f32 %v7344, %v7384
    %v7386 = vpop.f32.mrf.mxu0
    %v7387 = vpop.f32.mrf.mxu0
    %7388 = vdwg.mxu0
    %7389 = vmatprep.subr.bf16.mxu0 %v4594
    %7390 = vmatpush1.bf16.msra.mxu0 %v4593
    %7391 = vmatprep.subr.bf16.mxu0 %v4581
    %7392 = vmatpush1.bf16.msra.mxu0 %v4580
    %7393 = vmatprep.subr.bf16.mxu0 %v4568
    %7394 = vmatpush1.bf16.msra.mxu0 %v4567
    %7395 = vmatprep.subr.bf16.mxu0 %v4555
    %7396 = vmatpush1.bf16.msra.mxu0 %v4554
    %7397 = vmatprep.subr.bf16.mxu0 %v4542
    %7398 = vmatpush1.bf16.msra.mxu0 %v4541
    %7399 = vmatprep.subr.bf16.mxu0 %v4529
    %7400 = vmatpush1.bf16.msra.mxu0 %v4528
    %7401 = vmatprep.subr.bf16.mxu0 %v4516
    %7402 = vmatpush1.bf16.msra.mxu0 %v4515
    %7403 = vmatprep.subr.bf16.mxu0 %v4503
    %7404 = vmatpush1.bf16.msra.mxu0 %v4502
    %7405 = vmatprep.subr.bf16.mxu0 %v4698
    %7406 = vmatpush2.bf16.msra.mxu0 %v4697
    %7407 = vmatprep.subr.bf16.mxu0 %v4685
    %7408 = vmatpush2.bf16.msra.mxu0 %v4684
    %7409 = vmatprep.subr.bf16.mxu0 %v4672
    %7410 = vmatpush2.bf16.msra.mxu0 %v4671
    %7411 = vmatprep.subr.bf16.mxu0 %v4659
    %7412 = vmatpush2.bf16.msra.mxu0 %v4658
    %7413 = vmatprep.subr.bf16.mxu0 %v4646
    %7414 = vmatpush2.bf16.msra.mxu0 %v4645
    %7415 = vmatprep.subr.bf16.mxu0 %v4633
    %7416 = vmatpush2.bf16.msra.mxu0 %v4632
    %7417 = vmatprep.subr.bf16.mxu0 %v4620
    %7418 = vmatpush2.bf16.msra.mxu0 %v4619
    %7419 = vmatprep.subr.bf16.mxu0 %v4607
    %7420 = vmatpush2.bf16.msra.mxu0 %v4606
    %7421 = vmatprep.mubr.bf16.mxu0 %v527
    %7422 = vmatmul.mubr.bf16.gmra.mxu0 %v526
    %v7423 = vpop.f32.mrf.mxu0
    %v7424 = vadd.f32 %v1590, %v7423
    %v7425 = vpop.f32.mrf.mxu0
    %v7426 = vadd.f32 %v1594, %v7425
    %v7427 = vpop.f32.mrf.mxu0
    %v7428 = vpop.f32.mrf.mxu0
    %7429 = vdwg.mxu0
    %7430 = vmatprep.subr.bf16.mxu0 %v4802
    %7431 = vmatpush1.bf16.msra.mxu0 %v4801
    %7432 = vmatprep.subr.bf16.mxu0 %v4789
    %7433 = vmatpush1.bf16.msra.mxu0 %v4788
    %7434 = vmatprep.subr.bf16.mxu0 %v4776
    %7435 = vmatpush1.bf16.msra.mxu0 %v4775
    %7436 = vmatprep.subr.bf16.mxu0 %v4763
    %7437 = vmatpush1.bf16.msra.mxu0 %v4762
    %7438 = vmatprep.subr.bf16.mxu0 %v4750
    %7439 = vmatpush1.bf16.msra.mxu0 %v4749
    %7440 = vmatprep.subr.bf16.mxu0 %v4737
    %7441 = vmatpush1.bf16.msra.mxu0 %v4736
    %7442 = vmatprep.subr.bf16.mxu0 %v4724
    %7443 = vmatpush1.bf16.msra.mxu0 %v4723
    %7444 = vmatprep.subr.bf16.mxu0 %v4711
    %7445 = vmatpush1.bf16.msra.mxu0 %v4710
    %7446 = vmatprep.subr.bf16.mxu0 %v4906
    %7447 = vmatpush2.bf16.msra.mxu0 %v4905
    %7448 = vmatprep.subr.bf16.mxu0 %v4893
    %7449 = vmatpush2.bf16.msra.mxu0 %v4892
    %7450 = vmatprep.subr.bf16.mxu0 %v4880
    %7451 = vmatpush2.bf16.msra.mxu0 %v4879
    %7452 = vmatprep.subr.bf16.mxu0 %v4867
    %7453 = vmatpush2.bf16.msra.mxu0 %v4866
    %7454 = vmatprep.subr.bf16.mxu0 %v4854
    %7455 = vmatpush2.bf16.msra.mxu0 %v4853
    %7456 = vmatprep.subr.bf16.mxu0 %v4841
    %7457 = vmatpush2.bf16.msra.mxu0 %v4840
    %7458 = vmatprep.subr.bf16.mxu0 %v4828
    %7459 = vmatpush2.bf16.msra.mxu0 %v4827
    %7460 = vmatprep.subr.bf16.mxu0 %v4815
    %7461 = vmatpush2.bf16.msra.mxu0 %v4814
    %7462 = vmatprep.mubr.bf16.mxu0 %v529
    %7463 = vmatmul.mubr.bf16.gmra.mxu0 %v528
    %v7464 = vpop.f32.mrf.mxu0
    %v7465 = vadd.f32 %v7424, %v7464
    %v7466 = vpop.f32.mrf.mxu0
    %v7467 = vadd.f32 %v7426, %v7466
    %v7468 = vpop.f32.mrf.mxu0
    %v7469 = vpop.f32.mrf.mxu0
    %7470 = vdwg.mxu0
    %7471 = vmatprep.subr.bf16.mxu0 %v5010
    %7472 = vmatpush1.bf16.msra.mxu0 %v5009
    %7473 = vmatprep.subr.bf16.mxu0 %v4997
    %7474 = vmatpush1.bf16.msra.mxu0 %v4996
    %7475 = vmatprep.subr.bf16.mxu0 %v4984
    %7476 = vmatpush1.bf16.msra.mxu0 %v4983
    %7477 = vmatprep.subr.bf16.mxu0 %v4971
    %7478 = vmatpush1.bf16.msra.mxu0 %v4970
    %7479 = vmatprep.subr.bf16.mxu0 %v4958
    %7480 = vmatpush1.bf16.msra.mxu0 %v4957
    %7481 = vmatprep.subr.bf16.mxu0 %v4945
    %7482 = vmatpush1.bf16.msra.mxu0 %v4944
    %7483 = vmatprep.subr.bf16.mxu0 %v4932
    %7484 = vmatpush1.bf16.msra.mxu0 %v4931
    %7485 = vmatprep.subr.bf16.mxu0 %v4919
    %7486 = vmatpush1.bf16.msra.mxu0 %v4918
    %7487 = vmatprep.subr.bf16.mxu0 %v5114
    %7488 = vmatpush2.bf16.msra.mxu0 %v5113
    %7489 = vmatprep.subr.bf16.mxu0 %v5101
    %7490 = vmatpush2.bf16.msra.mxu0 %v5100
    %7491 = vmatprep.subr.bf16.mxu0 %v5088
    %7492 = vmatpush2.bf16.msra.mxu0 %v5087
    %7493 = vmatprep.subr.bf16.mxu0 %v5075
    %7494 = vmatpush2.bf16.msra.mxu0 %v5074
    %7495 = vmatprep.subr.bf16.mxu0 %v5062
    %7496 = vmatpush2.bf16.msra.mxu0 %v5061
    %7497 = vmatprep.subr.bf16.mxu0 %v5049
    %7498 = vmatpush2.bf16.msra.mxu0 %v5048
    %7499 = vmatprep.subr.bf16.mxu0 %v5036
    %7500 = vmatpush2.bf16.msra.mxu0 %v5035
    %7501 = vmatprep.subr.bf16.mxu0 %v5023
    %7502 = vmatpush2.bf16.msra.mxu0 %v5022
    %7503 = vmatprep.mubr.bf16.mxu0 %v531
    %7504 = vmatmul.mubr.bf16.gmra.mxu0 %v530
    %v7505 = vpop.f32.mrf.mxu0
    %v7506 = vadd.f32 %v7465, %v7505
    %v7507 = vpop.f32.mrf.mxu0
    %v7508 = vadd.f32 %v7467, %v7507
    %v7509 = vpop.f32.mrf.mxu0
    %v7510 = vpop.f32.mrf.mxu0
    %7511 = vdwg.mxu0
    %7512 = vmatprep.subr.bf16.mxu0 %v5218
    %7513 = vmatpush1.bf16.msra.mxu0 %v5217
    %7514 = vmatprep.subr.bf16.mxu0 %v5205
    %7515 = vmatpush1.bf16.msra.mxu0 %v5204
    %7516 = vmatprep.subr.bf16.mxu0 %v5192
    %7517 = vmatpush1.bf16.msra.mxu0 %v5191
    %7518 = vmatprep.subr.bf16.mxu0 %v5179
    %7519 = vmatpush1.bf16.msra.mxu0 %v5178
    %7520 = vmatprep.subr.bf16.mxu0 %v5166
    %7521 = vmatpush1.bf16.msra.mxu0 %v5165
    %7522 = vmatprep.subr.bf16.mxu0 %v5153
    %7523 = vmatpush1.bf16.msra.mxu0 %v5152
    %7524 = vmatprep.subr.bf16.mxu0 %v5140
    %7525 = vmatpush1.bf16.msra.mxu0 %v5139
    %7526 = vmatprep.subr.bf16.mxu0 %v5127
    %7527 = vmatpush1.bf16.msra.mxu0 %v5126
    %7528 = vmatprep.subr.bf16.mxu0 %v5322
    %7529 = vmatpush2.bf16.msra.mxu0 %v5321
    %7530 = vmatprep.subr.bf16.mxu0 %v5309
    %7531 = vmatpush2.bf16.msra.mxu0 %v5308
    %7532 = vmatprep.subr.bf16.mxu0 %v5296
    %7533 = vmatpush2.bf16.msra.mxu0 %v5295
    %7534 = vmatprep.subr.bf16.mxu0 %v5283
    %7535 = vmatpush2.bf16.msra.mxu0 %v5282
    %7536 = vmatprep.subr.bf16.mxu0 %v5270
    %7537 = vmatpush2.bf16.msra.mxu0 %v5269
    %7538 = vmatprep.subr.bf16.mxu0 %v5257
    %7539 = vmatpush2.bf16.msra.mxu0 %v5256
    %7540 = vmatprep.subr.bf16.mxu0 %v5244
    %7541 = vmatpush2.bf16.msra.mxu0 %v5243
    %7542 = vmatprep.subr.bf16.mxu0 %v5231
    %7543 = vmatpush2.bf16.msra.mxu0 %v5230
    %7544 = vmatprep.mubr.bf16.mxu0 %v533
    %7545 = vmatmul.mubr.bf16.gmra.mxu0 %v532
    %v7546 = vpop.f32.mrf.mxu0
    %v7547 = vadd.f32 %v7506, %v7546
    %v7548 = vpop.f32.mrf.mxu0
    %v7549 = vadd.f32 %v7508, %v7548
    %v7550 = vpop.f32.mrf.mxu0
    %v7551 = vpop.f32.mrf.mxu0
    %7552 = vdwg.mxu0
    %7553 = vmatprep.subr.bf16.mxu0 %v5426
    %7554 = vmatpush1.bf16.msra.mxu0 %v5425
    %7555 = vmatprep.subr.bf16.mxu0 %v5413
    %7556 = vmatpush1.bf16.msra.mxu0 %v5412
    %7557 = vmatprep.subr.bf16.mxu0 %v5400
    %7558 = vmatpush1.bf16.msra.mxu0 %v5399
    %7559 = vmatprep.subr.bf16.mxu0 %v5387
    %7560 = vmatpush1.bf16.msra.mxu0 %v5386
    %7561 = vmatprep.subr.bf16.mxu0 %v5374
    %7562 = vmatpush1.bf16.msra.mxu0 %v5373
    %7563 = vmatprep.subr.bf16.mxu0 %v5361
    %7564 = vmatpush1.bf16.msra.mxu0 %v5360
    %7565 = vmatprep.subr.bf16.mxu0 %v5348
    %7566 = vmatpush1.bf16.msra.mxu0 %v5347
    %7567 = vmatprep.subr.bf16.mxu0 %v5335
    %7568 = vmatpush1.bf16.msra.mxu0 %v5334
    %7569 = vmatprep.subr.bf16.mxu0 0
    %7570 = vmatpush2.bf16.msra.mxu0 0
    %7571 = vmatprep.subr.bf16.mxu0 0
    %7572 = vmatpush2.bf16.msra.mxu0 0
    %7573 = vmatprep.subr.bf16.mxu0 0
    %7574 = vmatpush2.bf16.msra.mxu0 0
    %7575 = vmatprep.subr.bf16.mxu0 0
    %7576 = vmatpush2.bf16.msra.mxu0 0
    %7577 = vmatprep.subr.bf16.mxu0 0
    %7578 = vmatpush2.bf16.msra.mxu0 0
    %7579 = vmatprep.subr.bf16.mxu0 0
    %7580 = vmatpush2.bf16.msra.mxu0 0
    %7581 = vmatprep.subr.bf16.mxu0 0
    %7582 = vmatpush2.bf16.msra.mxu0 0
    %7583 = vmatprep.subr.bf16.mxu0 0
    %7584 = vmatpush2.bf16.msra.mxu0 0
    %7585 = vmatprep.mubr.bf16.mxu0 0
    %7586 = vmatmul.mubr.bf16.gmra.mxu0 %v534
    %v7587 = vpop.f32.mrf.mxu0
    %v7588 = vadd.f32 %v7547, %v7587
    %v7589 = vpop.f32.mrf.mxu0
    %v7590 = vadd.f32 %v7549, %v7589
    %v7591 = vpop.f32.mrf.mxu0
    %v7592 = vpop.f32.mrf.mxu0
    %7593 = vdwg.mxu0
    %7594 = vmatprep.subr.bf16.mxu0 0
    %7595 = vmatpush1.bf16.msra.mxu0 %v4595
    %7596 = vmatprep.subr.bf16.mxu0 0
    %7597 = vmatpush1.bf16.msra.mxu0 %v4582
    %7598 = vmatprep.subr.bf16.mxu0 0
    %7599 = vmatpush1.bf16.msra.mxu0 %v4569
    %7600 = vmatprep.subr.bf16.mxu0 0
    %7601 = vmatpush1.bf16.msra.mxu0 %v4556
    %7602 = vmatprep.subr.bf16.mxu0 0
    %7603 = vmatpush1.bf16.msra.mxu0 %v4543
    %7604 = vmatprep.subr.bf16.mxu0 0
    %7605 = vmatpush1.bf16.msra.mxu0 %v4530
    %7606 = vmatprep.subr.bf16.mxu0 0
    %7607 = vmatpush1.bf16.msra.mxu0 %v4517
    %7608 = vmatprep.subr.bf16.mxu0 0
    %7609 = vmatpush1.bf16.msra.mxu0 %v4504
    %7610 = vmatprep.subr.bf16.mxu0 0
    %7611 = vmatpush2.bf16.msra.mxu0 %v4699
    %7612 = vmatprep.subr.bf16.mxu0 0
    %7613 = vmatpush2.bf16.msra.mxu0 %v4686
    %7614 = vmatprep.subr.bf16.mxu0 0
    %7615 = vmatpush2.bf16.msra.mxu0 %v4673
    %7616 = vmatprep.subr.bf16.mxu0 0
    %7617 = vmatpush2.bf16.msra.mxu0 %v4660
    %7618 = vmatprep.subr.bf16.mxu0 0
    %7619 = vmatpush2.bf16.msra.mxu0 %v4647
    %7620 = vmatprep.subr.bf16.mxu0 0
    %7621 = vmatpush2.bf16.msra.mxu0 %v4634
    %7622 = vmatprep.subr.bf16.mxu0 0
    %7623 = vmatpush2.bf16.msra.mxu0 %v4621
    %7624 = vmatprep.subr.bf16.mxu0 0
    %7625 = vmatpush2.bf16.msra.mxu0 %v4608
    %7626 = vmatprep.mubr.bf16.mxu0 %v527
    %7627 = vmatmul.mubr.bf16.gmra.mxu0 %v526
    %v7628 = vpop.f32.mrf.mxu0
    %v7629 = vadd.f32 %v1598, %v7628
    %v7630 = vpop.f32.mrf.mxu0
    %v7631 = vpop.f32.mrf.mxu0
    %v7632 = vpop.f32.mrf.mxu0
    %7633 = vdwg.mxu0
    %7634 = vmatprep.subr.bf16.mxu0 0
    %7635 = vmatpush1.bf16.msra.mxu0 %v4803
    %7636 = vmatprep.subr.bf16.mxu0 0
    %7637 = vmatpush1.bf16.msra.mxu0 %v4790
    %7638 = vmatprep.subr.bf16.mxu0 0
    %7639 = vmatpush1.bf16.msra.mxu0 %v4777
    %7640 = vmatprep.subr.bf16.mxu0 0
    %7641 = vmatpush1.bf16.msra.mxu0 %v4764
    %7642 = vmatprep.subr.bf16.mxu0 0
    %7643 = vmatpush1.bf16.msra.mxu0 %v4751
    %7644 = vmatprep.subr.bf16.mxu0 0
    %7645 = vmatpush1.bf16.msra.mxu0 %v4738
    %7646 = vmatprep.subr.bf16.mxu0 0
    %7647 = vmatpush1.bf16.msra.mxu0 %v4725
    %7648 = vmatprep.subr.bf16.mxu0 0
    %7649 = vmatpush1.bf16.msra.mxu0 %v4712
    %7650 = vmatprep.subr.bf16.mxu0 0
    %7651 = vmatpush2.bf16.msra.mxu0 %v4907
    %7652 = vmatprep.subr.bf16.mxu0 0
    %7653 = vmatpush2.bf16.msra.mxu0 %v4894
    %7654 = vmatprep.subr.bf16.mxu0 0
    %7655 = vmatpush2.bf16.msra.mxu0 %v4881
    %7656 = vmatprep.subr.bf16.mxu0 0
    %7657 = vmatpush2.bf16.msra.mxu0 %v4868
    %7658 = vmatprep.subr.bf16.mxu0 0
    %7659 = vmatpush2.bf16.msra.mxu0 %v4855
    %7660 = vmatprep.subr.bf16.mxu0 0
    %7661 = vmatpush2.bf16.msra.mxu0 %v4842
    %7662 = vmatprep.subr.bf16.mxu0 0
    %7663 = vmatpush2.bf16.msra.mxu0 %v4829
    %7664 = vmatprep.subr.bf16.mxu0 0
    %7665 = vmatpush2.bf16.msra.mxu0 %v4816
    %7666 = vmatprep.mubr.bf16.mxu0 %v529
    %7667 = vmatmul.mubr.bf16.gmra.mxu0 %v528
    %v7668 = vpop.f32.mrf.mxu0
    %v7669 = vadd.f32 %v7629, %v7668
    %v7670 = vpop.f32.mrf.mxu0
    %v7671 = vpop.f32.mrf.mxu0
    %v7672 = vpop.f32.mrf.mxu0
    %7673 = vdwg.mxu0
    %7674 = vmatprep.subr.bf16.mxu0 0
    %7675 = vmatpush1.bf16.msra.mxu0 %v5011
    %7676 = vmatprep.subr.bf16.mxu0 0
    %7677 = vmatpush1.bf16.msra.mxu0 %v4998
    %7678 = vmatprep.subr.bf16.mxu0 0
    %7679 = vmatpush1.bf16.msra.mxu0 %v4985
    %7680 = vmatprep.subr.bf16.mxu0 0
    %7681 = vmatpush1.bf16.msra.mxu0 %v4972
    %7682 = vmatprep.subr.bf16.mxu0 0
    %7683 = vmatpush1.bf16.msra.mxu0 %v4959
    %7684 = vmatprep.subr.bf16.mxu0 0
    %7685 = vmatpush1.bf16.msra.mxu0 %v4946
    %7686 = vmatprep.subr.bf16.mxu0 0
    %7687 = vmatpush1.bf16.msra.mxu0 %v4933
    %7688 = vmatprep.subr.bf16.mxu0 0
    %7689 = vmatpush1.bf16.msra.mxu0 %v4920
    %7690 = vmatprep.subr.bf16.mxu0 0
    %7691 = vmatpush2.bf16.msra.mxu0 %v5115
    %7692 = vmatprep.subr.bf16.mxu0 0
    %7693 = vmatpush2.bf16.msra.mxu0 %v5102
    %7694 = vmatprep.subr.bf16.mxu0 0
    %7695 = vmatpush2.bf16.msra.mxu0 %v5089
    %7696 = vmatprep.subr.bf16.mxu0 0
    %7697 = vmatpush2.bf16.msra.mxu0 %v5076
    %7698 = vmatprep.subr.bf16.mxu0 0
    %7699 = vmatpush2.bf16.msra.mxu0 %v5063
    %7700 = vmatprep.subr.bf16.mxu0 0
    %7701 = vmatpush2.bf16.msra.mxu0 %v5050
    %7702 = vmatprep.subr.bf16.mxu0 0
    %7703 = vmatpush2.bf16.msra.mxu0 %v5037
    %7704 = vmatprep.subr.bf16.mxu0 0
    %7705 = vmatpush2.bf16.msra.mxu0 %v5024
    %7706 = vmatprep.mubr.bf16.mxu0 %v531
    %7707 = vmatmul.mubr.bf16.gmra.mxu0 %v530
    %v7708 = vpop.f32.mrf.mxu0
    %v7709 = vadd.f32 %v7669, %v7708
    %v7710 = vpop.f32.mrf.mxu0
    %v7711 = vpop.f32.mrf.mxu0
    %v7712 = vpop.f32.mrf.mxu0
    %7713 = vdwg.mxu0
    %7714 = vmatprep.subr.bf16.mxu0 0
    %7715 = vmatpush1.bf16.msra.mxu0 %v5219
    %7716 = vmatprep.subr.bf16.mxu0 0
    %7717 = vmatpush1.bf16.msra.mxu0 %v5206
    %7718 = vmatprep.subr.bf16.mxu0 0
    %7719 = vmatpush1.bf16.msra.mxu0 %v5193
    %7720 = vmatprep.subr.bf16.mxu0 0
    %7721 = vmatpush1.bf16.msra.mxu0 %v5180
    %7722 = vmatprep.subr.bf16.mxu0 0
    %7723 = vmatpush1.bf16.msra.mxu0 %v5167
    %7724 = vmatprep.subr.bf16.mxu0 0
    %7725 = vmatpush1.bf16.msra.mxu0 %v5154
    %7726 = vmatprep.subr.bf16.mxu0 0
    %7727 = vmatpush1.bf16.msra.mxu0 %v5141
    %7728 = vmatprep.subr.bf16.mxu0 0
    %7729 = vmatpush1.bf16.msra.mxu0 %v5128
    %7730 = vmatprep.subr.bf16.mxu0 0
    %7731 = vmatpush2.bf16.msra.mxu0 %v5323
    %7732 = vmatprep.subr.bf16.mxu0 0
    %7733 = vmatpush2.bf16.msra.mxu0 %v5310
    %7734 = vmatprep.subr.bf16.mxu0 0
    %7735 = vmatpush2.bf16.msra.mxu0 %v5297
    %7736 = vmatprep.subr.bf16.mxu0 0
    %7737 = vmatpush2.bf16.msra.mxu0 %v5284
    %7738 = vmatprep.subr.bf16.mxu0 0
    %7739 = vmatpush2.bf16.msra.mxu0 %v5271
    %7740 = vmatprep.subr.bf16.mxu0 0
    %7741 = vmatpush2.bf16.msra.mxu0 %v5258
    %7742 = vmatprep.subr.bf16.mxu0 0
    %7743 = vmatpush2.bf16.msra.mxu0 %v5245
    %7744 = vmatprep.subr.bf16.mxu0 0
    %7745 = vmatpush2.bf16.msra.mxu0 %v5232
    %7746 = vmatprep.mubr.bf16.mxu0 %v533
    %7747 = vmatmul.mubr.bf16.gmra.mxu0 %v532
    %v7748 = vpop.f32.mrf.mxu0
    %v7749 = vadd.f32 %v7709, %v7748
    %v7750 = vpop.f32.mrf.mxu0
    %v7751 = vpop.f32.mrf.mxu0
    %v7752 = vpop.f32.mrf.mxu0
    %7753 = vdwg.mxu0
    %7754 = vmatprep.subr.bf16.mxu0 0
    %7755 = vmatpush1.bf16.msra.mxu0 %v5427
    %7756 = vmatprep.subr.bf16.mxu0 0
    %7757 = vmatpush1.bf16.msra.mxu0 %v5414
    %7758 = vmatprep.subr.bf16.mxu0 0
    %7759 = vmatpush1.bf16.msra.mxu0 %v5401
    %7760 = vmatprep.subr.bf16.mxu0 0
    %7761 = vmatpush1.bf16.msra.mxu0 %v5388
    %7762 = vmatprep.subr.bf16.mxu0 0
    %7763 = vmatpush1.bf16.msra.mxu0 %v5375
    %7764 = vmatprep.subr.bf16.mxu0 0
    %7765 = vmatpush1.bf16.msra.mxu0 %v5362
    %7766 = vmatprep.subr.bf16.mxu0 0
    %7767 = vmatpush1.bf16.msra.mxu0 %v5349
    %7768 = vmatprep.subr.bf16.mxu0 0
    %7769 = vmatpush1.bf16.msra.mxu0 %v5336
    %7770 = vmatprep.subr.bf16.mxu0 0
    %7771 = vmatpush2.bf16.msra.mxu0 0
    %7772 = vmatprep.subr.bf16.mxu0 0
    %7773 = vmatpush2.bf16.msra.mxu0 0
    %7774 = vmatprep.subr.bf16.mxu0 0
    %7775 = vmatpush2.bf16.msra.mxu0 0
    %7776 = vmatprep.subr.bf16.mxu0 0
    %7777 = vmatpush2.bf16.msra.mxu0 0
    %7778 = vmatprep.subr.bf16.mxu0 0
    %7779 = vmatpush2.bf16.msra.mxu0 0
    %7780 = vmatprep.subr.bf16.mxu0 0
    %7781 = vmatpush2.bf16.msra.mxu0 0
    %7782 = vmatprep.subr.bf16.mxu0 0
    %7783 = vmatpush2.bf16.msra.mxu0 0
    %7784 = vmatprep.subr.bf16.mxu0 0
    %7785 = vmatpush2.bf16.msra.mxu0 0
    %7786 = vmatprep.mubr.bf16.mxu0 0
    %7787 = vmatmul.mubr.bf16.gmra.mxu0 %v534
    %v7788 = vpop.f32.mrf.mxu0
    %v7789 = vadd.f32 %v7749, %v7788
    %v7790 = vpop.f32.mrf.mxu0
    %v7791 = vpop.f32.mrf.mxu0
    %v7792 = vpop.f32.mrf.mxu0
    %7793 = vdwg.mxu0
    %v7794 = vmax.f32 %v6563, 0.0
    %v7795 = vmax.f32 %v6565, 0.0
    %v7796 = vmax.f32 %v6768, 0.0
    %v7797 = vmax.f32 %v6770, 0.0
    %v7798 = vmax.f32 %v6973, 0.0
    %v7799 = vmax.f32 %v6975, 0.0
    %v7800 = vmax.f32 %v7178, 0.0
    %v7801 = vmax.f32 %v7180, 0.0
    %v7802 = vmax.f32 %v7383, 0.0
    %v7803 = vmax.f32 %v7385, 0.0
    %v7804 = vmax.f32 %v7588, 0.0
    %v7805 = vmax.f32 %v7590, 0.0
    %v7806 = vmax.f32 %v7789, 0.0
    %v7807 = vpack.c.bf16 %v7794, %v7794
    %v7808 = vpack.c.bf16 %v7795, %v7795
    %v7809 = vpack.c.bf16 %v7796, %v7796
    %v7810 = vpack.c.bf16 %v7797, %v7797
    %v7811 = vpack.c.bf16 %v7798, %v7798
    %v7812 = vpack.c.bf16 %v7799, %v7799
    %v7813 = vpack.c.bf16 %v7800, %v7800
    %v7814 = vpack.c.bf16 %v7801, %v7801
    %v7815 = vpack.c.bf16 %v7802, %v7802
    %v7816 = vpack.c.bf16 %v7803, %v7803
    %v7817 = vpack.c.bf16 %v7804, %v7804
    %v7818 = vpack.c.bf16 %v7805, %v7805
    %v7819 = vpack.c.bf16 %v7806, %v7806
    %v7820 = vld [vmem:[%s5] sm:$0xff]
    %v7821 = vld [vmem:[%s5 + $0x8] sm:$0xff]
    %v7822 = vld [vmem:[%s5 + $0x10] sm:$0xff]
    %v7823 = vld [vmem:[%s5 + $0x18] sm:$0xff]
    %v7824 = vld [vmem:[%s5 + $0x20] sm:$0xff]
    %v7825 = vld [vmem:[%s5 + $0x28] sm:$0xff]
    %v7826 = vld [vmem:[%s5 + $0x30] sm:$0xff]
    %v7827 = vld [vmem:[%s5 + $0x38] sm:$0xff]
    %v7828 = vld [vmem:[%s5 + $0x40] sm:$0xff]
    %v7829 = vld [vmem:[%s5 + $0x48] sm:$0xff]
    %v7830 = vld [vmem:[%s5 + $0x50] sm:$0xff]
    %v7831 = vld [vmem:[%s5 + $0x58] sm:$0xff]
    %v7832 = vld [vmem:[%s5 + $0x60] sm:$0xff]
    %v7833 = vld [vmem:[%s5 + $0x68] sm:$0xff]
    %v7834 = vld [vmem:[%s5 + $0x70] sm:$0xff]
    %v7835 = vld [vmem:[%s5 + $0x78] sm:$0xff]
    %v7836 = vld [vmem:[%s5 + $0x80] sm:$0xff]
    %v7837 = vld [vmem:[%s5 + $0x88] sm:$0xff]
    %v7838 = vld [vmem:[%s5 + $0x90] sm:$0xff]
    %v7839 = vld [vmem:[%s5 + $0x98] sm:$0xff]
    %v7840 = vld [vmem:[%s5 + $0xa0] sm:$0xff]
    %v7841 = vld [vmem:[%s5 + $0xa8] sm:$0xff]
    %v7842 = vld [vmem:[%s5 + $0xb0] sm:$0xff]
    %v7843 = vld [vmem:[%s5 + $0xb8] sm:$0xff]
    %v7844 = vld [vmem:[%s5 + $0xc0] sm:$0xff]
    %v7845 = vld [vmem:[%s5 + $0xc8] sm:$0xff]
    %v7846 = vld [vmem:[%s5 + $0xd0] sm:$0xff]
    %v7847 = vld [vmem:[%s5 + $0xd8] sm:$0xff]
    %v7848 = vld [vmem:[%s5 + $0xe0] sm:$0xff]
    %v7849 = vld [vmem:[%s5 + $0xe8] sm:$0xff]
    %v7850 = vld [vmem:[%s5 + $0xf0] sm:$0xff]
    %v7851 = vld [vmem:[%s5 + $0xf8] sm:$0xff]
    %v7852 = vld [vmem:[%s5 + $0x100] sm:$0xff]
    %v7853 = vld [vmem:[%s5 + $0x108] sm:$0xff]
    %v7854 = vld [vmem:[%s5 + $0x110] sm:$0xff]
    %v7855 = vld [vmem:[%s5 + $0x118] sm:$0xff]
    %v7856 = vld [vmem:[%s5 + $0x120] sm:$0xff]
    %v7857 = vld [vmem:[%s5 + $0x128] sm:$0xff]
    %v7858 = vld [vmem:[%s5 + $0x130] sm:$0xff]
    %v7859 = vld [vmem:[%s5 + $0x138] sm:$0xff]
    %v7860 = vld [vmem:[%s5 + $0x140] sm:$0xff]
    %v7861 = vld [vmem:[%s5 + $0x148] sm:$0xff]
    %v7862 = vld [vmem:[%s5 + $0x150] sm:$0xff]
    %v7863 = vld [vmem:[%s5 + $0x158] sm:$0xff]
    %v7864 = vld [vmem:[%s5 + $0x160] sm:$0xff]
    %v7865 = vld [vmem:[%s5 + $0x168] sm:$0xff]
    %v7866 = vld [vmem:[%s5 + $0x170] sm:$0xff]
    %v7867 = vld [vmem:[%s5 + $0x178] sm:$0xff]
    %v7868 = vld [vmem:[%s5 + $0x180] sm:$0xff]
    %v7869 = vld [vmem:[%s5 + $0x188] sm:$0xff]
    %v7870 = vld [vmem:[%s5 + $0x190] sm:$0xff]
    %v7871 = vld [vmem:[%s5 + $0x198] sm:$0xff]
    %v7872 = vld [vmem:[%s5 + $0x1a0] sm:$0xff]
    %v7873 = vld [vmem:[%s5 + $0x1a8] sm:$0xff]
    %v7874 = vld [vmem:[%s5 + $0x1b0] sm:$0xff]
    %v7875 = vld [vmem:[%s5 + $0x1b8] sm:$0xff]
    %v7876 = vld [vmem:[%s5 + $0x1c0] sm:$0xff]
    %v7877 = vld [vmem:[%s5 + $0x1c8] sm:$0xff]
    %v7878 = vld [vmem:[%s5 + $0x1d0] sm:$0xff]
    %v7879 = vld [vmem:[%s5 + $0x1d8] sm:$0xff]
    %v7880 = vld [vmem:[%s5 + $0x1e0] sm:$0xff]
    %v7881 = vld [vmem:[%s5 + $0x1e8] sm:$0xff]
    %v7882 = vld [vmem:[%s5 + $0x1f0] sm:$0xff]
    %v7883 = vld [vmem:[%s5 + $0x1f8] sm:$0xff]
    %v7884 = vld [vmem:[%s5 + $0x200] sm:$0xff]
    %v7885 = vld [vmem:[%s5 + $0x208] sm:$0xff]
    %v7886 = vld [vmem:[%s5 + $0x210] sm:$0xff]
    %v7887 = vld [vmem:[%s5 + $0x218] sm:$0xff]
    %v7888 = vld [vmem:[%s5 + $0x220] sm:$0xff]
    %v7889 = vld [vmem:[%s5 + $0x228] sm:$0xff]
    %v7890 = vld [vmem:[%s5 + $0x230] sm:$0xff]
    %v7891 = vld [vmem:[%s5 + $0x238] sm:$0xff]
    %v7892 = vld [vmem:[%s5 + $0x240] sm:$0xff]
    %v7893 = vld [vmem:[%s5 + $0x248] sm:$0xff]
    %v7894 = vld [vmem:[%s5 + $0x250] sm:$0xff]
    %v7895 = vld [vmem:[%s5 + $0x258] sm:$0xff]
    %v7896 = vld [vmem:[%s5 + $0x260] sm:$0xff]
    %v7897 = vld [vmem:[%s5 + $0x268] sm:$0xff]
    %v7898 = vld [vmem:[%s5 + $0x270] sm:$0xff]
    %v7899 = vld [vmem:[%s5 + $0x278] sm:$0xff]
    %v7900 = vld [vmem:[%s5 + $0x280] sm:$0xff]
    %v7901 = vld [vmem:[%s5 + $0x288] sm:$0xff]
    %v7902 = vld [vmem:[%s5 + $0x290] sm:$0xff]
    %v7903 = vld [vmem:[%s5 + $0x298] sm:$0xff]
    %v7904 = vld [vmem:[%s5 + $0x2a0] sm:$0xff]
    %v7905 = vld [vmem:[%s5 + $0x2a8] sm:$0xff]
    %v7906 = vld [vmem:[%s5 + $0x2b0] sm:$0xff]
    %v7907 = vld [vmem:[%s5 + $0x2b8] sm:$0xff]
    %v7908 = vld [vmem:[%s5 + $0x2c0] sm:$0xff]
    %v7909 = vld [vmem:[%s5 + $0x2c8] sm:$0xff]
    %v7910 = vld [vmem:[%s5 + $0x2d0] sm:$0xff]
    %v7911 = vld [vmem:[%s5 + $0x2d8] sm:$0xff]
    %v7912 = vld [vmem:[%s5 + $0x2e0] sm:$0xff]
    %v7913 = vld [vmem:[%s5 + $0x2e8] sm:$0xff]
    %v7914 = vld [vmem:[%s5 + $0x2f0] sm:$0xff]
    %v7915 = vld [vmem:[%s5 + $0x2f8] sm:$0xff]
    %v7916 = vld [vmem:[%s5 + $0x300] sm:$0xff]
    %v7917 = vld [vmem:[%s5 + $0x308] sm:$0xff]
    %v7918 = vld [vmem:[%s5 + $0x310] sm:$0xff]
    %v7919 = vld [vmem:[%s5 + $0x318] sm:$0xff]
    %v7920 = vld [vmem:[%s5 + $0x320] sm:$0xff]
    %v7921 = vld [vmem:[%s5 + $0x328] sm:$0xff]
    %v7922 = vld [vmem:[%s5 + $0x330] sm:$0xff]
    %v7923 = vld [vmem:[%s5 + $0x338] sm:$0xff]
    %v7924 = vld [vmem:[%s5 + $0x340] sm:$0xff]
    %v7925 = vld [vmem:[%s5 + $0x348] sm:$0xff]
    %v7926 = vld [vmem:[%s5 + $0x350] sm:$0xff]
    %v7927 = vld [vmem:[%s5 + $0x358] sm:$0xff]
    %v7928 = vld [vmem:[%s5 + $0x360] sm:$0xff]
    %v7929 = vld [vmem:[%s5 + $0x368] sm:$0xff]
    %v7930 = vld [vmem:[%s5 + $0x370] sm:$0xff]
    %v7931 = vld [vmem:[%s5 + $0x378] sm:$0xff]
    %v7932 = vld [vmem:[%s5 + $0x380] sm:$0xff]
    %v7933 = vld [vmem:[%s5 + $0x388] sm:$0xff]
    %v7934 = vld [vmem:[%s5 + $0x390] sm:$0xff]
    %v7935 = vld [vmem:[%s5 + $0x398] sm:$0xff]
    %v7936 = vld [vmem:[%s5 + $0x3a0] sm:$0xff]
    %v7937 = vld [vmem:[%s5 + $0x3a8] sm:$0xff]
    %v7938 = vld [vmem:[%s5 + $0x3b0] sm:$0xff]
    %v7939 = vld [vmem:[%s5 + $0x3b8] sm:$0xff]
    %v7940 = vld [vmem:[%s5 + $0x3c0] sm:$0xff]
    %v7941 = vld [vmem:[%s5 + $0x3c8] sm:$0xff]
    %v7942 = vld [vmem:[%s5 + $0x3d0] sm:$0xff]
    %v7943 = vld [vmem:[%s5 + $0x3d8] sm:$0xff]
    %v7944 = vld [vmem:[%s5 + $0x3e0] sm:$0xff]
    %v7945 = vld [vmem:[%s5 + $0x3e8] sm:$0xff]
    %v7946 = vld [vmem:[%s5 + $0x3f0] sm:$0xff]
    %v7947 = vld [vmem:[%s5 + $0x3f8] sm:$0xff]
    %v7948 = vld [vmem:[%s5 + $0x400] sm:$0xff]
    %v7949 = vld [vmem:[%s5 + $0x408] sm:$0xff]
    %v7950 = vld [vmem:[%s5 + $0x410] sm:$0xff]
    %v7951 = vld [vmem:[%s5 + $0x418] sm:$0xff]
    %v7952 = vld [vmem:[%s5 + $0x420] sm:$0xff]
    %v7953 = vld [vmem:[%s5 + $0x428] sm:$0xff]
    %v7954 = vld [vmem:[%s5 + $0x430] sm:$0xff]
    %v7955 = vld [vmem:[%s5 + $0x438] sm:$0xff]
    %v7956 = vld [vmem:[%s5 + $0x440] sm:$0xff]
    %v7957 = vld [vmem:[%s5 + $0x448] sm:$0xff]
    %v7958 = vld [vmem:[%s5 + $0x450] sm:$0xff]
    %v7959 = vld [vmem:[%s5 + $0x458] sm:$0xff]
    %v7960 = vld [vmem:[%s5 + $0x460] sm:$0xff]
    %v7961 = vld [vmem:[%s5 + $0x468] sm:$0xff]
    %v7962 = vld [vmem:[%s5 + $0x470] sm:$0xff]
    %v7963 = vld [vmem:[%s5 + $0x478] sm:$0xff]
    %v7964 = vld [vmem:[%s5 + $0x480] sm:$0xff]
    %v7965 = vld [vmem:[%s5 + $0x488] sm:$0xff]
    %v7966 = vld [vmem:[%s5 + $0x490] sm:$0xff]
    %v7967 = vld [vmem:[%s5 + $0x498] sm:$0xff]
    %v7968 = vld [vmem:[%s5 + $0x4a0] sm:$0xff]
    %v7969 = vld [vmem:[%s5 + $0x4a8] sm:$0xff]
    %v7970 = vld [vmem:[%s5 + $0x4b0] sm:$0xff]
    %v7971 = vld [vmem:[%s5 + $0x4b8] sm:$0xff]
    %v7972 = vld [vmem:[%s5 + $0x4c0] sm:$0xff]
    %v7973 = vld [vmem:[%s5 + $0x4c8] sm:$0xff]
    %v7974 = vld [vmem:[%s5 + $0x4d0] sm:$0xff]
    %v7975 = vld [vmem:[%s5 + $0x4d8] sm:$0xff]
    %v7976 = vld [vmem:[%s5 + $0x4e0] sm:$0xff]
    %v7977 = vld [vmem:[%s5 + $0x4e8] sm:$0xff]
    %v7978 = vld [vmem:[%s5 + $0x4f0] sm:$0xff]
    %v7979 = vld [vmem:[%s5 + $0x4f8] sm:$0xff]
    %v7980 = vld [vmem:[%s5 + $0x500] sm:$0xff]
    %v7981 = vld [vmem:[%s5 + $0x508] sm:$0xff]
    %v7982 = vld [vmem:[%s5 + $0x510] sm:$0xff]
    %v7983 = vld [vmem:[%s5 + $0x518] sm:$0xff]
    %v7984 = vld [vmem:[%s5 + $0x520] sm:$0xff]
    %v7985 = vld [vmem:[%s5 + $0x528] sm:$0xff]
    %v7986 = vld [vmem:[%s5 + $0x530] sm:$0xff]
    %v7987 = vld [vmem:[%s5 + $0x538] sm:$0xff]
    %v7988 = vld [vmem:[%s5 + $0x540] sm:$0xff]
    %v7989 = vld [vmem:[%s5 + $0x548] sm:$0xff]
    %v7990 = vld [vmem:[%s5 + $0x550] sm:$0xff]
    %v7991 = vld [vmem:[%s5 + $0x558] sm:$0xff]
    %v7992 = vld [vmem:[%s5 + $0x560] sm:$0xff]
    %v7993 = vld [vmem:[%s5 + $0x568] sm:$0xff]
    %v7994 = vld [vmem:[%s5 + $0x570] sm:$0xff]
    %v7995 = vld [vmem:[%s5 + $0x578] sm:$0xff]
    %v7996 = vld [vmem:[%s5 + $0x580] sm:$0xff]
    %v7997 = vld [vmem:[%s5 + $0x588] sm:$0xff]
    %v7998 = vld [vmem:[%s5 + $0x590] sm:$0xff]
    %v7999 = vld [vmem:[%s5 + $0x598] sm:$0xff]
    %v8000 = vld [vmem:[%s5 + $0x5a0] sm:$0xff]
    %v8001 = vld [vmem:[%s5 + $0x5a8] sm:$0xff]
    %v8002 = vld [vmem:[%s5 + $0x5b0] sm:$0xff]
    %v8003 = vld [vmem:[%s5 + $0x5b8] sm:$0xff]
    %v8004 = vld [vmem:[%s5 + $0x5c0] sm:$0xff]
    %v8005 = vld [vmem:[%s5 + $0x5c8] sm:$0xff]
    %v8006 = vld [vmem:[%s5 + $0x5d0] sm:$0xff]
    %v8007 = vld [vmem:[%s5 + $0x5d8] sm:$0xff]
    %v8008 = vld [vmem:[%s5 + $0x5e0] sm:$0xff]
    %v8009 = vld [vmem:[%s5 + $0x5e8] sm:$0xff]
    %v8010 = vld [vmem:[%s5 + $0x5f0] sm:$0xff]
    %v8011 = vld [vmem:[%s5 + $0x5f8] sm:$0xff]
    %v8012 = vld [vmem:[%s5 + $0x600] sm:$0xff]
    %v8013 = vld [vmem:[%s5 + $0x608] sm:$0xff]
    %v8014 = vld [vmem:[%s5 + $0x610] sm:$0xff]
    %v8015 = vld [vmem:[%s5 + $0x618] sm:$0xff]
    %v8016 = vld [vmem:[%s5 + $0x620] sm:$0xff]
    %v8017 = vld [vmem:[%s5 + $0x628] sm:$0xff]
    %v8018 = vld [vmem:[%s5 + $0x630] sm:$0xff]
    %v8019 = vld [vmem:[%s5 + $0x638] sm:$0xff]
    %v8020 = vld [vmem:[%s5 + $0x640] sm:$0xff]
    %v8021 = vld [vmem:[%s5 + $0x648] sm:$0xff]
    %v8022 = vld [vmem:[%s5 + $0x650] sm:$0xff]
    %v8023 = vld [vmem:[%s5 + $0x658] sm:$0xff]
    %v8024 = vld [vmem:[%s5 + $0x660] sm:$0xff]
    %v8025 = vld [vmem:[%s5 + $0x668] sm:$0xff]
    %v8026 = vld [vmem:[%s5 + $0x670] sm:$0xff]
    %v8027 = vld [vmem:[%s5 + $0x678] sm:$0xff]
    %v8028 = vld [vmem:[%s5 + $0x680] sm:$0xff]
    %v8029 = vld [vmem:[%s5 + $0x688] sm:$0xff]
    %v8030 = vld [vmem:[%s5 + $0x690] sm:$0xff]
    %v8031 = vld [vmem:[%s5 + $0x698] sm:$0xff]
    %v8032 = vld [vmem:[%s5 + $0x6a0] sm:$0xff]
    %v8033 = vld [vmem:[%s5 + $0x6a8] sm:$0xff]
    %v8034 = vld [vmem:[%s5 + $0x6b0] sm:$0xff]
    %v8035 = vld [vmem:[%s5 + $0x6b8] sm:$0xff]
    %v8036 = vld [vmem:[%s5 + $0x6c0] sm:$0xff]
    %v8037 = vld [vmem:[%s5 + $0x6c8] sm:$0xff]
    %v8038 = vld [vmem:[%s5 + $0x6d0] sm:$0xff]
    %v8039 = vld [vmem:[%s5 + $0x6d8] sm:$0xff]
    %v8040 = vld [vmem:[%s5 + $0x6e0] sm:$0xff]
    %v8041 = vld [vmem:[%s5 + $0x6e8] sm:$0xff]
    %v8042 = vld [vmem:[%s5 + $0x6f0] sm:$0xff]
    %v8043 = vld [vmem:[%s5 + $0x6f8] sm:$0xff]
    %v8044 = vld [vmem:[%s5 + $0x700] sm:$0xff]
    %v8045 = vld [vmem:[%s5 + $0x708] sm:$0xff]
    %v8046 = vld [vmem:[%s5 + $0x710] sm:$0xff]
    %v8047 = vld [vmem:[%s5 + $0x718] sm:$0xff]
    %v8048 = vld [vmem:[%s5 + $0x720] sm:$0xff]
    %v8049 = vld [vmem:[%s5 + $0x728] sm:$0xff]
    %v8050 = vld [vmem:[%s5 + $0x730] sm:$0xff]
    %v8051 = vld [vmem:[%s5 + $0x738] sm:$0xff]
    %v8052 = vld [vmem:[%s5 + $0x740] sm:$0xff]
    %v8053 = vld [vmem:[%s5 + $0x748] sm:$0xff]
    %v8054 = vld [vmem:[%s5 + $0x750] sm:$0xff]
    %v8055 = vld [vmem:[%s5 + $0x758] sm:$0xff]
    %v8056 = vld [vmem:[%s5 + $0x760] sm:$0xff]
    %v8057 = vld [vmem:[%s5 + $0x768] sm:$0xff]
    %v8058 = vld [vmem:[%s5 + $0x770] sm:$0xff]
    %v8059 = vld [vmem:[%s5 + $0x778] sm:$0xff]
    %v8060 = vld [vmem:[%s5 + $0x780] sm:$0xff]
    %v8061 = vld [vmem:[%s5 + $0x788] sm:$0xff]
    %v8062 = vld [vmem:[%s5 + $0x790] sm:$0xff]
    %v8063 = vld [vmem:[%s5 + $0x798] sm:$0xff]
    %v8064 = vld [vmem:[%s5 + $0x7a0] sm:$0xff]
    %v8065 = vld [vmem:[%s5 + $0x7a8] sm:$0xff]
    %v8066 = vld [vmem:[%s5 + $0x7b0] sm:$0xff]
    %v8067 = vld [vmem:[%s5 + $0x7b8] sm:$0xff]
    %v8068 = vld [vmem:[%s5 + $0x7c0] sm:$0xff]
    %v8069 = vld [vmem:[%s5 + $0x7c8] sm:$0xff]
    %v8070 = vld [vmem:[%s5 + $0x7d0] sm:$0xff]
    %v8071 = vld [vmem:[%s5 + $0x7d8] sm:$0xff]
    %v8072 = vld [vmem:[%s5 + $0x7e0] sm:$0xff]
    %v8073 = vld [vmem:[%s5 + $0x7e8] sm:$0xff]
    %v8074 = vld [vmem:[%s5 + $0x7f0] sm:$0xff]
    %v8075 = vld [vmem:[%s5 + $0x7f8] sm:$0xff]
    %v8076 = vld [vmem:[%s5 + $0x800] sm:$0xff]
    %v8077 = vld [vmem:[%s5 + $0x808] sm:$0xff]
    %v8078 = vld [vmem:[%s5 + $0x810] sm:$0xff]
    %v8079 = vld [vmem:[%s5 + $0x818] sm:$0xff]
    %v8080 = vld [vmem:[%s5 + $0x820] sm:$0xff]
    %v8081 = vld [vmem:[%s5 + $0x828] sm:$0xff]
    %v8082 = vld [vmem:[%s5 + $0x830] sm:$0xff]
    %v8083 = vld [vmem:[%s5 + $0x838] sm:$0xff]
    %v8084 = vld [vmem:[%s5 + $0x840] sm:$0xff]
    %v8085 = vld [vmem:[%s5 + $0x848] sm:$0xff]
    %v8086 = vld [vmem:[%s5 + $0x850] sm:$0xff]
    %v8087 = vld [vmem:[%s5 + $0x858] sm:$0xff]
    %v8088 = vld [vmem:[%s5 + $0x860] sm:$0xff]
    %v8089 = vld [vmem:[%s5 + $0x868] sm:$0xff]
    %v8090 = vld [vmem:[%s5 + $0x870] sm:$0xff]
    %v8091 = vld [vmem:[%s5 + $0x878] sm:$0xff]
    %v8092 = vld [vmem:[%s5 + $0x880] sm:$0xff]
    %v8093 = vld [vmem:[%s5 + $0x888] sm:$0xff]
    %v8094 = vld [vmem:[%s5 + $0x890] sm:$0xff]
    %v8095 = vld [vmem:[%s5 + $0x898] sm:$0xff]
    %v8096 = vld [vmem:[%s5 + $0x8a0] sm:$0xff]
    %v8097 = vld [vmem:[%s5 + $0x8a8] sm:$0xff]
    %v8098 = vld [vmem:[%s5 + $0x8b0] sm:$0xff]
    %v8099 = vld [vmem:[%s5 + $0x8b8] sm:$0xff]
    %v8100 = vld [vmem:[%s5 + $0x8c0] sm:$0xff]
    %v8101 = vld [vmem:[%s5 + $0x8c8] sm:$0xff]
    %v8102 = vld [vmem:[%s5 + $0x8d0] sm:$0xff]
    %v8103 = vld [vmem:[%s5 + $0x8d8] sm:$0xff]
    %v8104 = vld [vmem:[%s5 + $0x8e0] sm:$0xff]
    %v8105 = vld [vmem:[%s5 + $0x8e8] sm:$0xff]
    %v8106 = vld [vmem:[%s5 + $0x8f0] sm:$0xff]
    %v8107 = vld [vmem:[%s5 + $0x8f8] sm:$0xff]
    %v8108 = vld [vmem:[%s5 + $0x900] sm:$0xff]
    %v8109 = vld [vmem:[%s5 + $0x908] sm:$0xff]
    %v8110 = vld [vmem:[%s5 + $0x910] sm:$0xff]
    %v8111 = vld [vmem:[%s5 + $0x918] sm:$0xff]
    %v8112 = vld [vmem:[%s5 + $0x920] sm:$0xff]
    %v8113 = vld [vmem:[%s5 + $0x928] sm:$0xff]
    %v8114 = vld [vmem:[%s5 + $0x930] sm:$0xff]
    %v8115 = vld [vmem:[%s5 + $0x938] sm:$0xff]
    %v8116 = vld [vmem:[%s5 + $0x940] sm:$0xff]
    %v8117 = vld [vmem:[%s5 + $0x948] sm:$0xff]
    %v8118 = vld [vmem:[%s5 + $0x950] sm:$0xff]
    %v8119 = vld [vmem:[%s5 + $0x958] sm:$0xff]
    %v8120 = vld [vmem:[%s5 + $0x960] sm:$0xff]
    %v8121 = vld [vmem:[%s5 + $0x968] sm:$0xff]
    %v8122 = vld [vmem:[%s5 + $0x970] sm:$0xff]
    %v8123 = vld [vmem:[%s5 + $0x978] sm:$0xff]
    %v8124 = vld [vmem:[%s5 + $0x980] sm:$0xff]
    %v8125 = vld [vmem:[%s5 + $0x988] sm:$0xff]
    %v8126 = vld [vmem:[%s5 + $0x990] sm:$0xff]
    %v8127 = vld [vmem:[%s5 + $0x998] sm:$0xff]
    %v8128 = vld [vmem:[%s5 + $0x9a0] sm:$0xff]
    %v8129 = vld [vmem:[%s5 + $0x9a8] sm:$0xff]
    %v8130 = vld [vmem:[%s5 + $0x9b0] sm:$0xff]
    %v8131 = vld [vmem:[%s5 + $0x9b8] sm:$0xff]
    %v8132 = vld [vmem:[%s5 + $0x9c0] sm:$0xff]
    %v8133 = vld [vmem:[%s5 + $0x9c8] sm:$0xff]
    %v8134 = vld [vmem:[%s5 + $0x9d0] sm:$0xff]
    %v8135 = vld [vmem:[%s5 + $0x9d8] sm:$0xff]
    %v8136 = vld [vmem:[%s5 + $0x9e0] sm:$0xff]
    %v8137 = vld [vmem:[%s5 + $0x9e8] sm:$0xff]
    %v8138 = vld [vmem:[%s5 + $0x9f0] sm:$0xff]
    %v8139 = vld [vmem:[%s5 + $0x9f8] sm:$0xff]
    %v8140 = vld [vmem:[%s5 + $0xa00] sm:$0xff]
    %v8141 = vld [vmem:[%s5 + $0xa08] sm:$0xff]
    %v8142 = vld [vmem:[%s5 + $0xa10] sm:$0xff]
    %v8143 = vld [vmem:[%s5 + $0xa18] sm:$0xff]
    %v8144 = vld [vmem:[%s5 + $0xa20] sm:$0xff]
    %v8145 = vld [vmem:[%s5 + $0xa28] sm:$0xff]
    %v8146 = vld [vmem:[%s5 + $0xa30] sm:$0xff]
    %v8147 = vld [vmem:[%s5 + $0xa38] sm:$0xff]
    %v8148 = vld [vmem:[%s5 + $0xa40] sm:$0xff]
    %v8149 = vld [vmem:[%s5 + $0xa48] sm:$0xff]
    %v8150 = vld [vmem:[%s5 + $0xa50] sm:$0xff]
    %v8151 = vld [vmem:[%s5 + $0xa58] sm:$0xff]
    %v8152 = vld [vmem:[%s5 + $0xa60] sm:$0xff]
    %v8153 = vld [vmem:[%s5 + $0xa68] sm:$0xff]
    %v8154 = vld [vmem:[%s5 + $0xa70] sm:$0xff]
    %v8155 = vld [vmem:[%s5 + $0xa78] sm:$0xff]
    %v8156 = vld [vmem:[%s5 + $0xa80] sm:$0xff]
    %v8157 = vld [vmem:[%s5 + $0xa88] sm:$0xff]
    %v8158 = vld [vmem:[%s5 + $0xa90] sm:$0xff]
    %v8159 = vld [vmem:[%s5 + $0xa98] sm:$0xff]
    %v8160 = vld [vmem:[%s5 + $0xaa0] sm:$0xff]
    %v8161 = vld [vmem:[%s5 + $0xaa8] sm:$0xff]
    %v8162 = vld [vmem:[%s5 + $0xab0] sm:$0xff]
    %v8163 = vld [vmem:[%s5 + $0xab8] sm:$0xff]
    %v8164 = vld [vmem:[%s5 + $0xac0] sm:$0xff]
    %v8165 = vld [vmem:[%s5 + $0xac8] sm:$0xff]
    %v8166 = vld [vmem:[%s5 + $0xad0] sm:$0xff]
    %v8167 = vld [vmem:[%s5 + $0xad8] sm:$0xff]
    %v8168 = vld [vmem:[%s5 + $0xae0] sm:$0xff]
    %v8169 = vld [vmem:[%s5 + $0xae8] sm:$0xff]
    %v8170 = vld [vmem:[%s5 + $0xaf0] sm:$0xff]
    %v8171 = vld [vmem:[%s5 + $0xaf8] sm:$0xff]
    %v8172 = vld [vmem:[%s5 + $0xb00] sm:$0xff]
    %v8173 = vld [vmem:[%s5 + $0xb08] sm:$0xff]
    %v8174 = vld [vmem:[%s5 + $0xb10] sm:$0xff]
    %v8175 = vld [vmem:[%s5 + $0xb18] sm:$0xff]
    %v8176 = vld [vmem:[%s5 + $0xb20] sm:$0xff]
    %v8177 = vld [vmem:[%s5 + $0xb28] sm:$0xff]
    %v8178 = vld [vmem:[%s5 + $0xb30] sm:$0xff]
    %v8179 = vld [vmem:[%s5 + $0xb38] sm:$0xff]
    %v8180 = vld [vmem:[%s5 + $0xb40] sm:$0xff]
    %v8181 = vld [vmem:[%s5 + $0xb48] sm:$0xff]
    %v8182 = vld [vmem:[%s5 + $0xb50] sm:$0xff]
    %v8183 = vld [vmem:[%s5 + $0xb58] sm:$0xff]
    %v8184 = vld [vmem:[%s5 + $0xb60] sm:$0xff]
    %v8185 = vld [vmem:[%s5 + $0xb68] sm:$0xff]
    %v8186 = vld [vmem:[%s5 + $0xb70] sm:$0xff]
    %v8187 = vld [vmem:[%s5 + $0xb78] sm:$0xff]
    %v8188 = vld [vmem:[%s5 + $0xb80] sm:$0xff]
    %v8189 = vld [vmem:[%s5 + $0xb88] sm:$0xff]
    %v8190 = vld [vmem:[%s5 + $0xb90] sm:$0xff]
    %v8191 = vld [vmem:[%s5 + $0xb98] sm:$0xff]
    %v8192 = vld [vmem:[%s5 + $0xba0] sm:$0xff]
    %v8193 = vld [vmem:[%s5 + $0xba8] sm:$0xff]
    %v8194 = vld [vmem:[%s5 + $0xbb0] sm:$0xff]
    %v8195 = vld [vmem:[%s5 + $0xbb8] sm:$0xff]
    %v8196 = vld [vmem:[%s5 + $0xbc0] sm:$0xff]
    %v8197 = vld [vmem:[%s5 + $0xbc8] sm:$0xff]
    %v8198 = vld [vmem:[%s5 + $0xbd0] sm:$0xff]
    %v8199 = vld [vmem:[%s5 + $0xbd8] sm:$0xff]
    %v8200 = vld [vmem:[%s5 + $0xbe0] sm:$0xff]
    %v8201 = vld [vmem:[%s5 + $0xbe8] sm:$0xff]
    %v8202 = vld [vmem:[%s5 + $0xbf0] sm:$0xff]
    %v8203 = vld [vmem:[%s5 + $0xbf8] sm:$0xff]
    %v8204 = vld [vmem:[%s5 + $0xc00] sm:$0xff]
    %v8205 = vld [vmem:[%s5 + $0xc08] sm:$0xff]
    %v8206 = vld [vmem:[%s5 + $0xc10] sm:$0xff]
    %v8207 = vld [vmem:[%s5 + $0xc18] sm:$0xff]
    %v8208 = vld [vmem:[%s5 + $0xc20] sm:$0xff]
    %v8209 = vld [vmem:[%s5 + $0xc28] sm:$0xff]
    %v8210 = vld [vmem:[%s5 + $0xc30] sm:$0xff]
    %v8211 = vld [vmem:[%s5 + $0xc38] sm:$0xff]
    %v8212 = vld [vmem:[%s5 + $0xc40] sm:$0xff]
    %v8213 = vld [vmem:[%s5 + $0xc48] sm:$0xff]
    %v8214 = vld [vmem:[%s5 + $0xc50] sm:$0xff]
    %v8215 = vld [vmem:[%s5 + $0xc58] sm:$0xff]
    %v8216 = vld [vmem:[%s5 + $0xc60] sm:$0xff]
    %v8217 = vld [vmem:[%s5 + $0xc68] sm:$0xff]
    %v8218 = vld [vmem:[%s5 + $0xc70] sm:$0xff]
    %v8219 = vld [vmem:[%s5 + $0xc78] sm:$0xff]
    %v8220 = vld [vmem:[%s6] sm:$0xf]
    %v8222 = vlaneseq
    %v8223 = vshrl.u32 %v8222, 7
    %v8224 = vsub.s32 0, %v8223
    %v8225 = vrot.slane %v8220, %v8224
    %v8226 = vlaneseq
    %v8227 = vshrl.u32 %v8226, 7
    %v8228 = vsub.s32 1, %v8227
    %v8229 = vrot.slane %v8220, %v8228
    %v8230 = vlaneseq
    %v8231 = vshrl.u32 %v8230, 7
    %v8232 = vsub.s32 2, %v8231
    %v8233 = vrot.slane %v8220, %v8232
    %v8234 = vlaneseq
    %v8235 = vshrl.u32 %v8234, 7
    %v8236 = vsub.s32 3, %v8235
    %v8237 = vrot.slane %v8220, %v8236
    %v8642 = vunpack.c.l.b16 %v7820
    %v8643 = vunpack.c.h.b16 %v7820
    %v8644 = vunpack.c.l.b16 %v7821
    %v8645 = vunpack.c.h.b16 %v7821
    %v8646 = vunpack.c.l.b16 %v7822
    %v8647 = vunpack.c.h.b16 %v7822
    %v8648 = vunpack.c.l.b16 %v7823
    %v8649 = vunpack.c.h.b16 %v7823
    %v8650 = vunpack.c.l.b16 %v7824
    %v8651 = vunpack.c.h.b16 %v7824
    %v8652 = vunpack.c.l.b16 %v7825
    %v8653 = vunpack.c.h.b16 %v7825
    %v8654 = vunpack.c.l.b16 %v7826
    %v8655 = vunpack.c.h.b16 %v7826
    %v8656 = vunpack.c.l.b16 %v7827
    %v8657 = vunpack.c.h.b16 %v7827
    %v8658 = vunpack.c.l.b16 %v7828
    %v8659 = vunpack.c.h.b16 %v7828
    %v8660 = vunpack.c.l.b16 %v7829
    %v8661 = vunpack.c.h.b16 %v7829
    %v8662 = vunpack.c.l.b16 %v7830
    %v8663 = vunpack.c.h.b16 %v7830
    %v8664 = vunpack.c.l.b16 %v7831
    %v8665 = vunpack.c.h.b16 %v7831
    %v8666 = vunpack.c.l.b16 %v7832
    %v8667 = vunpack.c.h.b16 %v7832
    %v8668 = vunpack.c.l.b16 %v7833
    %v8669 = vunpack.c.h.b16 %v7833
    %v8670 = vunpack.c.l.b16 %v7834
    %v8671 = vunpack.c.h.b16 %v7834
    %v8672 = vunpack.c.l.b16 %v7835
    %v8673 = vunpack.c.h.b16 %v7835
    %v8674 = vunpack.c.l.b16 %v7836
    %v8675 = vunpack.c.h.b16 %v7836
    %v8676 = vunpack.c.l.b16 %v7837
    %v8677 = vunpack.c.h.b16 %v7837
    %v8678 = vunpack.c.l.b16 %v7838
    %v8679 = vunpack.c.h.b16 %v7838
    %v8680 = vunpack.c.l.b16 %v7839
    %v8681 = vunpack.c.h.b16 %v7839
    %v8682 = vunpack.c.l.b16 %v7840
    %v8683 = vunpack.c.h.b16 %v7840
    %v8684 = vunpack.c.l.b16 %v7841
    %v8685 = vunpack.c.h.b16 %v7841
    %v8686 = vunpack.c.l.b16 %v7842
    %v8687 = vunpack.c.h.b16 %v7842
    %v8688 = vunpack.c.l.b16 %v7843
    %v8689 = vunpack.c.h.b16 %v7843
    %v8690 = vunpack.c.l.b16 %v7844
    %v8691 = vunpack.c.h.b16 %v7844
    %v8692 = vunpack.c.l.b16 %v7845
    %v8693 = vunpack.c.h.b16 %v7845
    %v8694 = vunpack.c.l.b16 %v7846
    %v8695 = vunpack.c.h.b16 %v7846
    %v8696 = vunpack.c.l.b16 %v7847
    %v8697 = vunpack.c.h.b16 %v7847
    %v8698 = vunpack.c.l.b16 %v7848
    %v8699 = vunpack.c.h.b16 %v7848
    %v8700 = vunpack.c.l.b16 %v7849
    %v8701 = vunpack.c.h.b16 %v7849
    %v8702 = vunpack.c.l.b16 %v7850
    %v8703 = vunpack.c.h.b16 %v7850
    %v8704 = vunpack.c.l.b16 %v7851
    %v8705 = vunpack.c.h.b16 %v7851
    %v8706 = vunpack.c.l.b16 %v7852
    %v8707 = vunpack.c.h.b16 %v7852
    %v8708 = vunpack.c.l.b16 %v7853
    %v8709 = vunpack.c.h.b16 %v7853
    %v8710 = vunpack.c.l.b16 %v7854
    %v8711 = vunpack.c.h.b16 %v7854
    %v8712 = vunpack.c.l.b16 %v7855
    %v8713 = vunpack.c.h.b16 %v7855
    %v8714 = vunpack.c.l.b16 %v7856
    %v8715 = vunpack.c.h.b16 %v7856
    %v8716 = vunpack.c.l.b16 %v7857
    %v8717 = vunpack.c.h.b16 %v7857
    %v8718 = vunpack.c.l.b16 %v7858
    %v8719 = vunpack.c.h.b16 %v7858
    %v8720 = vunpack.c.l.b16 %v7859
    %v8721 = vunpack.c.h.b16 %v7859
    %v8722 = vunpack.c.l.b16 %v7860
    %v8723 = vunpack.c.h.b16 %v7860
    %v8724 = vunpack.c.l.b16 %v7861
    %v8725 = vunpack.c.h.b16 %v7861
    %v8726 = vunpack.c.l.b16 %v7862
    %v8727 = vunpack.c.h.b16 %v7862
    %v8728 = vunpack.c.l.b16 %v7863
    %v8729 = vunpack.c.h.b16 %v7863
    %v8730 = vunpack.c.l.b16 %v7864
    %v8731 = vunpack.c.h.b16 %v7864
    %v8732 = vunpack.c.l.b16 %v7865
    %v8733 = vunpack.c.h.b16 %v7865
    %v8734 = vunpack.c.l.b16 %v7866
    %v8735 = vunpack.c.h.b16 %v7866
    %v8736 = vunpack.c.l.b16 %v7867
    %v8737 = vunpack.c.h.b16 %v7867
    %v8738 = vunpack.c.l.b16 %v7868
    %v8739 = vunpack.c.h.b16 %v7868
    %v8740 = vunpack.c.l.b16 %v7869
    %v8741 = vunpack.c.h.b16 %v7869
    %v8742 = vunpack.c.l.b16 %v7870
    %v8743 = vunpack.c.h.b16 %v7870
    %v8744 = vunpack.c.l.b16 %v7871
    %v8745 = vunpack.c.h.b16 %v7871
    %v8746 = vunpack.c.l.b16 %v7872
    %v8747 = vunpack.c.h.b16 %v7872
    %v8748 = vunpack.c.l.b16 %v7873
    %v8749 = vunpack.c.h.b16 %v7873
    %v8750 = vunpack.c.l.b16 %v7874
    %v8751 = vunpack.c.h.b16 %v7874
    %v8752 = vunpack.c.l.b16 %v7875
    %v8753 = vunpack.c.h.b16 %v7875
    %v8754 = vunpack.c.l.b16 %v7876
    %v8755 = vunpack.c.h.b16 %v7876
    %v8756 = vunpack.c.l.b16 %v7877
    %v8757 = vunpack.c.h.b16 %v7877
    %v8758 = vunpack.c.l.b16 %v7878
    %v8759 = vunpack.c.h.b16 %v7878
    %v8760 = vunpack.c.l.b16 %v7879
    %v8761 = vunpack.c.h.b16 %v7879
    %v8762 = vunpack.c.l.b16 %v7880
    %v8763 = vunpack.c.h.b16 %v7880
    %v8764 = vunpack.c.l.b16 %v7881
    %v8765 = vunpack.c.h.b16 %v7881
    %v8766 = vunpack.c.l.b16 %v7882
    %v8767 = vunpack.c.h.b16 %v7882
    %v8768 = vunpack.c.l.b16 %v7883
    %v8769 = vunpack.c.h.b16 %v7883
    %v8770 = vunpack.c.l.b16 %v7884
    %v8771 = vunpack.c.h.b16 %v7884
    %v8772 = vunpack.c.l.b16 %v7885
    %v8773 = vunpack.c.h.b16 %v7885
    %v8774 = vunpack.c.l.b16 %v7886
    %v8775 = vunpack.c.h.b16 %v7886
    %v8776 = vunpack.c.l.b16 %v7887
    %v8777 = vunpack.c.h.b16 %v7887
    %v8778 = vunpack.c.l.b16 %v7888
    %v8779 = vunpack.c.h.b16 %v7888
    %v8780 = vunpack.c.l.b16 %v7889
    %v8781 = vunpack.c.h.b16 %v7889
    %v8782 = vunpack.c.l.b16 %v7890
    %v8783 = vunpack.c.h.b16 %v7890
    %v8784 = vunpack.c.l.b16 %v7891
    %v8785 = vunpack.c.h.b16 %v7891
    %v8786 = vunpack.c.l.b16 %v7892
    %v8787 = vunpack.c.h.b16 %v7892
    %v8788 = vunpack.c.l.b16 %v7893
    %v8789 = vunpack.c.h.b16 %v7893
    %v8790 = vunpack.c.l.b16 %v7894
    %v8791 = vunpack.c.h.b16 %v7894
    %v8792 = vunpack.c.l.b16 %v7895
    %v8793 = vunpack.c.h.b16 %v7895
    %v8794 = vunpack.c.l.b16 %v7896
    %v8795 = vunpack.c.h.b16 %v7896
    %v8796 = vunpack.c.l.b16 %v7897
    %v8797 = vunpack.c.h.b16 %v7897
    %v8798 = vunpack.c.l.b16 %v7898
    %v8799 = vunpack.c.h.b16 %v7898
    %v8800 = vunpack.c.l.b16 %v7899
    %v8801 = vunpack.c.h.b16 %v7899
    %v8802 = vunpack.c.l.b16 %v7900
    %v8803 = vunpack.c.h.b16 %v7900
    %v8804 = vunpack.c.l.b16 %v7901
    %v8805 = vunpack.c.h.b16 %v7901
    %v8806 = vunpack.c.l.b16 %v7902
    %v8807 = vunpack.c.h.b16 %v7902
    %v8808 = vunpack.c.l.b16 %v7903
    %v8809 = vunpack.c.h.b16 %v7903
    %v8810 = vunpack.c.l.b16 %v7904
    %v8811 = vunpack.c.h.b16 %v7904
    %v8812 = vunpack.c.l.b16 %v7905
    %v8813 = vunpack.c.h.b16 %v7905
    %v8814 = vunpack.c.l.b16 %v7906
    %v8815 = vunpack.c.h.b16 %v7906
    %v8816 = vunpack.c.l.b16 %v7907
    %v8817 = vunpack.c.h.b16 %v7907
    %v8818 = vunpack.c.l.b16 %v7908
    %v8819 = vunpack.c.h.b16 %v7908
    %v8820 = vunpack.c.l.b16 %v7909
    %v8821 = vunpack.c.h.b16 %v7909
    %v8822 = vunpack.c.l.b16 %v7910
    %v8823 = vunpack.c.h.b16 %v7910
    %v8824 = vunpack.c.l.b16 %v7911
    %v8825 = vunpack.c.h.b16 %v7911
    %v8826 = vunpack.c.l.b16 %v7912
    %v8827 = vunpack.c.h.b16 %v7912
    %v8828 = vunpack.c.l.b16 %v7913
    %v8829 = vunpack.c.h.b16 %v7913
    %v8830 = vunpack.c.l.b16 %v7914
    %v8831 = vunpack.c.h.b16 %v7914
    %v8832 = vunpack.c.l.b16 %v7915
    %v8833 = vunpack.c.h.b16 %v7915
    %v8834 = vunpack.c.l.b16 %v7916
    %v8835 = vunpack.c.h.b16 %v7916
    %v8836 = vunpack.c.l.b16 %v7917
    %v8837 = vunpack.c.h.b16 %v7917
    %v8838 = vunpack.c.l.b16 %v7918
    %v8839 = vunpack.c.h.b16 %v7918
    %v8840 = vunpack.c.l.b16 %v7919
    %v8841 = vunpack.c.h.b16 %v7919
    %v8842 = vunpack.c.l.b16 %v7920
    %v8843 = vunpack.c.h.b16 %v7920
    %v8844 = vunpack.c.l.b16 %v7921
    %v8845 = vunpack.c.h.b16 %v7921
    %v8846 = vunpack.c.l.b16 %v7922
    %v8847 = vunpack.c.h.b16 %v7922
    %v8848 = vunpack.c.l.b16 %v7923
    %v8849 = vunpack.c.h.b16 %v7923
    %v8850 = vunpack.c.l.b16 %v7924
    %v8851 = vunpack.c.h.b16 %v7924
    %v8852 = vunpack.c.l.b16 %v7925
    %v8853 = vunpack.c.h.b16 %v7925
    %v8854 = vunpack.c.l.b16 %v7926
    %v8855 = vunpack.c.h.b16 %v7926
    %v8856 = vunpack.c.l.b16 %v7927
    %v8857 = vunpack.c.h.b16 %v7927
    %v8858 = vunpack.c.l.b16 %v7928
    %v8859 = vunpack.c.h.b16 %v7928
    %v8860 = vunpack.c.l.b16 %v7929
    %v8861 = vunpack.c.h.b16 %v7929
    %v8862 = vunpack.c.l.b16 %v7930
    %v8863 = vunpack.c.h.b16 %v7930
    %v8864 = vunpack.c.l.b16 %v7931
    %v8865 = vunpack.c.h.b16 %v7931
    %v8866 = vunpack.c.l.b16 %v7932
    %v8867 = vunpack.c.h.b16 %v7932
    %v8868 = vunpack.c.l.b16 %v7933
    %v8869 = vunpack.c.h.b16 %v7933
    %v8870 = vunpack.c.l.b16 %v7934
    %v8871 = vunpack.c.h.b16 %v7934
    %v8872 = vunpack.c.l.b16 %v7935
    %v8873 = vunpack.c.h.b16 %v7935
    %v8874 = vunpack.c.l.b16 %v7936
    %v8875 = vunpack.c.h.b16 %v7936
    %v8876 = vunpack.c.l.b16 %v7937
    %v8877 = vunpack.c.h.b16 %v7937
    %v8878 = vunpack.c.l.b16 %v7938
    %v8879 = vunpack.c.h.b16 %v7938
    %v8880 = vunpack.c.l.b16 %v7939
    %v8881 = vunpack.c.h.b16 %v7939
    %v8882 = vunpack.c.l.b16 %v7940
    %v8883 = vunpack.c.h.b16 %v7940
    %v8884 = vunpack.c.l.b16 %v7941
    %v8885 = vunpack.c.h.b16 %v7941
    %v8886 = vunpack.c.l.b16 %v7942
    %v8887 = vunpack.c.h.b16 %v7942
    %v8888 = vunpack.c.l.b16 %v7943
    %v8889 = vunpack.c.h.b16 %v7943
    %v8890 = vunpack.c.l.b16 %v7944
    %v8891 = vunpack.c.h.b16 %v7944
    %v8892 = vunpack.c.l.b16 %v7945
    %v8893 = vunpack.c.h.b16 %v7945
    %v8894 = vunpack.c.l.b16 %v7946
    %v8895 = vunpack.c.h.b16 %v7946
    %v8896 = vunpack.c.l.b16 %v7947
    %v8897 = vunpack.c.h.b16 %v7947
    %v8898 = vunpack.c.l.b16 %v7948
    %v8899 = vunpack.c.h.b16 %v7948
    %v8900 = vunpack.c.l.b16 %v7949
    %v8901 = vunpack.c.h.b16 %v7949
    %v8902 = vunpack.c.l.b16 %v7950
    %v8903 = vunpack.c.h.b16 %v7950
    %v8904 = vunpack.c.l.b16 %v7951
    %v8905 = vunpack.c.h.b16 %v7951
    %v8906 = vunpack.c.l.b16 %v7952
    %v8907 = vunpack.c.h.b16 %v7952
    %v8908 = vunpack.c.l.b16 %v7953
    %v8909 = vunpack.c.h.b16 %v7953
    %v8910 = vunpack.c.l.b16 %v7954
    %v8911 = vunpack.c.h.b16 %v7954
    %v8912 = vunpack.c.l.b16 %v7955
    %v8913 = vunpack.c.h.b16 %v7955
    %v8914 = vunpack.c.l.b16 %v7956
    %v8915 = vunpack.c.h.b16 %v7956
    %v8916 = vunpack.c.l.b16 %v7957
    %v8917 = vunpack.c.h.b16 %v7957
    %v8918 = vunpack.c.l.b16 %v7958
    %v8919 = vunpack.c.h.b16 %v7958
    %v8920 = vunpack.c.l.b16 %v7959
    %v8921 = vunpack.c.h.b16 %v7959
    %v8922 = vunpack.c.l.b16 %v7960
    %v8923 = vunpack.c.h.b16 %v7960
    %v8924 = vunpack.c.l.b16 %v7961
    %v8925 = vunpack.c.h.b16 %v7961
    %v8926 = vunpack.c.l.b16 %v7962
    %v8927 = vunpack.c.h.b16 %v7962
    %v8928 = vunpack.c.l.b16 %v7963
    %v8929 = vunpack.c.h.b16 %v7963
    %v8930 = vunpack.c.l.b16 %v7964
    %v8931 = vunpack.c.h.b16 %v7964
    %v8932 = vunpack.c.l.b16 %v7965
    %v8933 = vunpack.c.h.b16 %v7965
    %v8934 = vunpack.c.l.b16 %v7966
    %v8935 = vunpack.c.h.b16 %v7966
    %v8936 = vunpack.c.l.b16 %v7967
    %v8937 = vunpack.c.h.b16 %v7967
    %v8938 = vunpack.c.l.b16 %v7968
    %v8939 = vunpack.c.h.b16 %v7968
    %v8940 = vunpack.c.l.b16 %v7969
    %v8941 = vunpack.c.h.b16 %v7969
    %v8942 = vunpack.c.l.b16 %v7970
    %v8943 = vunpack.c.h.b16 %v7970
    %v8944 = vunpack.c.l.b16 %v7971
    %v8945 = vunpack.c.h.b16 %v7971
    %v8946 = vunpack.c.l.b16 %v7972
    %v8947 = vunpack.c.h.b16 %v7972
    %v8948 = vunpack.c.l.b16 %v7973
    %v8949 = vunpack.c.h.b16 %v7973
    %v8950 = vunpack.c.l.b16 %v7974
    %v8951 = vunpack.c.h.b16 %v7974
    %v8952 = vunpack.c.l.b16 %v7975
    %v8953 = vunpack.c.h.b16 %v7975
    %v8954 = vunpack.c.l.b16 %v7976
    %v8955 = vunpack.c.h.b16 %v7976
    %v8956 = vunpack.c.l.b16 %v7977
    %v8957 = vunpack.c.h.b16 %v7977
    %v8958 = vunpack.c.l.b16 %v7978
    %v8959 = vunpack.c.h.b16 %v7978
    %v8960 = vunpack.c.l.b16 %v7979
    %v8961 = vunpack.c.h.b16 %v7979
    %v8962 = vunpack.c.l.b16 %v7980
    %v8963 = vunpack.c.h.b16 %v7980
    %v8964 = vunpack.c.l.b16 %v7981
    %v8965 = vunpack.c.h.b16 %v7981
    %v8966 = vunpack.c.l.b16 %v7982
    %v8967 = vunpack.c.h.b16 %v7982
    %v8968 = vunpack.c.l.b16 %v7983
    %v8969 = vunpack.c.h.b16 %v7983
    %v8970 = vunpack.c.l.b16 %v7984
    %v8971 = vunpack.c.h.b16 %v7984
    %v8972 = vunpack.c.l.b16 %v7985
    %v8973 = vunpack.c.h.b16 %v7985
    %v8974 = vunpack.c.l.b16 %v7986
    %v8975 = vunpack.c.h.b16 %v7986
    %v8976 = vunpack.c.l.b16 %v7987
    %v8977 = vunpack.c.h.b16 %v7987
    %v8978 = vunpack.c.l.b16 %v7988
    %v8979 = vunpack.c.h.b16 %v7988
    %v8980 = vunpack.c.l.b16 %v7989
    %v8981 = vunpack.c.h.b16 %v7989
    %v8982 = vunpack.c.l.b16 %v7990
    %v8983 = vunpack.c.h.b16 %v7990
    %v8984 = vunpack.c.l.b16 %v7991
    %v8985 = vunpack.c.h.b16 %v7991
    %v8986 = vunpack.c.l.b16 %v7992
    %v8987 = vunpack.c.h.b16 %v7992
    %v8988 = vunpack.c.l.b16 %v7993
    %v8989 = vunpack.c.h.b16 %v7993
    %v8990 = vunpack.c.l.b16 %v7994
    %v8991 = vunpack.c.h.b16 %v7994
    %v8992 = vunpack.c.l.b16 %v7995
    %v8993 = vunpack.c.h.b16 %v7995
    %v8994 = vunpack.c.l.b16 %v7996
    %v8995 = vunpack.c.h.b16 %v7996
    %v8996 = vunpack.c.l.b16 %v7997
    %v8997 = vunpack.c.h.b16 %v7997
    %v8998 = vunpack.c.l.b16 %v7998
    %v8999 = vunpack.c.h.b16 %v7998
    %v9000 = vunpack.c.l.b16 %v7999
    %v9001 = vunpack.c.h.b16 %v7999
    %v9002 = vunpack.c.l.b16 %v8000
    %v9003 = vunpack.c.h.b16 %v8000
    %v9004 = vunpack.c.l.b16 %v8001
    %v9005 = vunpack.c.h.b16 %v8001
    %v9006 = vunpack.c.l.b16 %v8002
    %v9007 = vunpack.c.h.b16 %v8002
    %v9008 = vunpack.c.l.b16 %v8003
    %v9009 = vunpack.c.h.b16 %v8003
    %v9010 = vunpack.c.l.b16 %v8004
    %v9011 = vunpack.c.h.b16 %v8004
    %v9012 = vunpack.c.l.b16 %v8005
    %v9013 = vunpack.c.h.b16 %v8005
    %v9014 = vunpack.c.l.b16 %v8006
    %v9015 = vunpack.c.h.b16 %v8006
    %v9016 = vunpack.c.l.b16 %v8007
    %v9017 = vunpack.c.h.b16 %v8007
    %v9018 = vunpack.c.l.b16 %v8008
    %v9019 = vunpack.c.h.b16 %v8008
    %v9020 = vunpack.c.l.b16 %v8009
    %v9021 = vunpack.c.h.b16 %v8009
    %v9022 = vunpack.c.l.b16 %v8010
    %v9023 = vunpack.c.h.b16 %v8010
    %v9024 = vunpack.c.l.b16 %v8011
    %v9025 = vunpack.c.h.b16 %v8011
    %v9026 = vunpack.c.l.b16 %v8012
    %v9027 = vunpack.c.h.b16 %v8012
    %v9028 = vunpack.c.l.b16 %v8013
    %v9029 = vunpack.c.h.b16 %v8013
    %v9030 = vunpack.c.l.b16 %v8014
    %v9031 = vunpack.c.h.b16 %v8014
    %v9032 = vunpack.c.l.b16 %v8015
    %v9033 = vunpack.c.h.b16 %v8015
    %v9034 = vunpack.c.l.b16 %v8016
    %v9035 = vunpack.c.h.b16 %v8016
    %v9036 = vunpack.c.l.b16 %v8017
    %v9037 = vunpack.c.h.b16 %v8017
    %v9038 = vunpack.c.l.b16 %v8018
    %v9039 = vunpack.c.h.b16 %v8018
    %v9040 = vunpack.c.l.b16 %v8019
    %v9041 = vunpack.c.h.b16 %v8019
    %v9042 = vunpack.c.l.b16 %v8020
    %v9043 = vunpack.c.h.b16 %v8020
    %v9044 = vunpack.c.l.b16 %v8021
    %v9045 = vunpack.c.h.b16 %v8021
    %v9046 = vunpack.c.l.b16 %v8022
    %v9047 = vunpack.c.h.b16 %v8022
    %v9048 = vunpack.c.l.b16 %v8023
    %v9049 = vunpack.c.h.b16 %v8023
    %v9050 = vunpack.c.l.b16 %v8024
    %v9051 = vunpack.c.h.b16 %v8024
    %v9052 = vunpack.c.l.b16 %v8025
    %v9053 = vunpack.c.h.b16 %v8025
    %v9054 = vunpack.c.l.b16 %v8026
    %v9055 = vunpack.c.h.b16 %v8026
    %v9056 = vunpack.c.l.b16 %v8027
    %v9057 = vunpack.c.h.b16 %v8027
    %v9058 = vunpack.c.l.b16 %v8028
    %v9059 = vunpack.c.h.b16 %v8028
    %v9060 = vunpack.c.l.b16 %v8029
    %v9061 = vunpack.c.h.b16 %v8029
    %v9062 = vunpack.c.l.b16 %v8030
    %v9063 = vunpack.c.h.b16 %v8030
    %v9064 = vunpack.c.l.b16 %v8031
    %v9065 = vunpack.c.h.b16 %v8031
    %v9066 = vunpack.c.l.b16 %v8032
    %v9067 = vunpack.c.h.b16 %v8032
    %v9068 = vunpack.c.l.b16 %v8033
    %v9069 = vunpack.c.h.b16 %v8033
    %v9070 = vunpack.c.l.b16 %v8034
    %v9071 = vunpack.c.h.b16 %v8034
    %v9072 = vunpack.c.l.b16 %v8035
    %v9073 = vunpack.c.h.b16 %v8035
    %v9074 = vunpack.c.l.b16 %v8036
    %v9075 = vunpack.c.h.b16 %v8036
    %v9076 = vunpack.c.l.b16 %v8037
    %v9077 = vunpack.c.h.b16 %v8037
    %v9078 = vunpack.c.l.b16 %v8038
    %v9079 = vunpack.c.h.b16 %v8038
    %v9080 = vunpack.c.l.b16 %v8039
    %v9081 = vunpack.c.h.b16 %v8039
    %v9082 = vunpack.c.l.b16 %v8040
    %v9083 = vunpack.c.h.b16 %v8040
    %v9084 = vunpack.c.l.b16 %v8041
    %v9085 = vunpack.c.h.b16 %v8041
    %v9086 = vunpack.c.l.b16 %v8042
    %v9087 = vunpack.c.h.b16 %v8042
    %v9088 = vunpack.c.l.b16 %v8043
    %v9089 = vunpack.c.h.b16 %v8043
    %v9090 = vunpack.c.l.b16 %v8044
    %v9091 = vunpack.c.h.b16 %v8044
    %v9092 = vunpack.c.l.b16 %v8045
    %v9093 = vunpack.c.h.b16 %v8045
    %v9094 = vunpack.c.l.b16 %v8046
    %v9095 = vunpack.c.h.b16 %v8046
    %v9096 = vunpack.c.l.b16 %v8047
    %v9097 = vunpack.c.h.b16 %v8047
    %v9098 = vunpack.c.l.b16 %v8048
    %v9099 = vunpack.c.h.b16 %v8048
    %v9100 = vunpack.c.l.b16 %v8049
    %v9101 = vunpack.c.h.b16 %v8049
    %v9102 = vunpack.c.l.b16 %v8050
    %v9103 = vunpack.c.h.b16 %v8050
    %v9104 = vunpack.c.l.b16 %v8051
    %v9105 = vunpack.c.h.b16 %v8051
    %v9106 = vunpack.c.l.b16 %v8052
    %v9107 = vunpack.c.h.b16 %v8052
    %v9108 = vunpack.c.l.b16 %v8053
    %v9109 = vunpack.c.h.b16 %v8053
    %v9110 = vunpack.c.l.b16 %v8054
    %v9111 = vunpack.c.h.b16 %v8054
    %v9112 = vunpack.c.l.b16 %v8055
    %v9113 = vunpack.c.h.b16 %v8055
    %v9114 = vunpack.c.l.b16 %v8056
    %v9115 = vunpack.c.h.b16 %v8056
    %v9116 = vunpack.c.l.b16 %v8057
    %v9117 = vunpack.c.h.b16 %v8057
    %v9118 = vunpack.c.l.b16 %v8058
    %v9119 = vunpack.c.h.b16 %v8058
    %v9120 = vunpack.c.l.b16 %v8059
    %v9121 = vunpack.c.h.b16 %v8059
    %v9122 = vunpack.c.l.b16 %v8060
    %v9123 = vunpack.c.h.b16 %v8060
    %v9124 = vunpack.c.l.b16 %v8061
    %v9125 = vunpack.c.h.b16 %v8061
    %v9126 = vunpack.c.l.b16 %v8062
    %v9127 = vunpack.c.h.b16 %v8062
    %v9128 = vunpack.c.l.b16 %v8063
    %v9129 = vunpack.c.h.b16 %v8063
    %v9130 = vunpack.c.l.b16 %v8064
    %v9131 = vunpack.c.h.b16 %v8064
    %v9132 = vunpack.c.l.b16 %v8065
    %v9133 = vunpack.c.h.b16 %v8065
    %v9134 = vunpack.c.l.b16 %v8066
    %v9135 = vunpack.c.h.b16 %v8066
    %v9136 = vunpack.c.l.b16 %v8067
    %v9137 = vunpack.c.h.b16 %v8067
    %v9138 = vunpack.c.l.b16 %v8068
    %v9139 = vunpack.c.h.b16 %v8068
    %v9140 = vunpack.c.l.b16 %v8069
    %v9141 = vunpack.c.h.b16 %v8069
    %v9142 = vunpack.c.l.b16 %v8070
    %v9143 = vunpack.c.h.b16 %v8070
    %v9144 = vunpack.c.l.b16 %v8071
    %v9145 = vunpack.c.h.b16 %v8071
    %v9146 = vunpack.c.l.b16 %v8072
    %v9147 = vunpack.c.h.b16 %v8072
    %v9148 = vunpack.c.l.b16 %v8073
    %v9149 = vunpack.c.h.b16 %v8073
    %v9150 = vunpack.c.l.b16 %v8074
    %v9151 = vunpack.c.h.b16 %v8074
    %v9152 = vunpack.c.l.b16 %v8075
    %v9153 = vunpack.c.h.b16 %v8075
    %v9154 = vunpack.c.l.b16 %v8076
    %v9155 = vunpack.c.h.b16 %v8076
    %v9156 = vunpack.c.l.b16 %v8077
    %v9157 = vunpack.c.h.b16 %v8077
    %v9158 = vunpack.c.l.b16 %v8078
    %v9159 = vunpack.c.h.b16 %v8078
    %v9160 = vunpack.c.l.b16 %v8079
    %v9161 = vunpack.c.h.b16 %v8079
    %v9162 = vunpack.c.l.b16 %v8080
    %v9163 = vunpack.c.h.b16 %v8080
    %v9164 = vunpack.c.l.b16 %v8081
    %v9165 = vunpack.c.h.b16 %v8081
    %v9166 = vunpack.c.l.b16 %v8082
    %v9167 = vunpack.c.h.b16 %v8082
    %v9168 = vunpack.c.l.b16 %v8083
    %v9169 = vunpack.c.h.b16 %v8083
    %v9170 = vunpack.c.l.b16 %v8084
    %v9171 = vunpack.c.h.b16 %v8084
    %v9172 = vunpack.c.l.b16 %v8085
    %v9173 = vunpack.c.h.b16 %v8085
    %v9174 = vunpack.c.l.b16 %v8086
    %v9175 = vunpack.c.h.b16 %v8086
    %v9176 = vunpack.c.l.b16 %v8087
    %v9177 = vunpack.c.h.b16 %v8087
    %v9178 = vunpack.c.l.b16 %v8088
    %v9179 = vunpack.c.h.b16 %v8088
    %v9180 = vunpack.c.l.b16 %v8089
    %v9181 = vunpack.c.h.b16 %v8089
    %v9182 = vunpack.c.l.b16 %v8090
    %v9183 = vunpack.c.h.b16 %v8090
    %v9184 = vunpack.c.l.b16 %v8091
    %v9185 = vunpack.c.h.b16 %v8091
    %v9186 = vunpack.c.l.b16 %v8092
    %v9187 = vunpack.c.h.b16 %v8092
    %v9188 = vunpack.c.l.b16 %v8093
    %v9189 = vunpack.c.h.b16 %v8093
    %v9190 = vunpack.c.l.b16 %v8094
    %v9191 = vunpack.c.h.b16 %v8094
    %v9192 = vunpack.c.l.b16 %v8095
    %v9193 = vunpack.c.h.b16 %v8095
    %v9194 = vunpack.c.l.b16 %v8096
    %v9195 = vunpack.c.h.b16 %v8096
    %v9196 = vunpack.c.l.b16 %v8097
    %v9197 = vunpack.c.h.b16 %v8097
    %v9198 = vunpack.c.l.b16 %v8098
    %v9199 = vunpack.c.h.b16 %v8098
    %v9200 = vunpack.c.l.b16 %v8099
    %v9201 = vunpack.c.h.b16 %v8099
    %v9202 = vunpack.c.l.b16 %v8100
    %v9203 = vunpack.c.h.b16 %v8100
    %v9204 = vunpack.c.l.b16 %v8101
    %v9205 = vunpack.c.h.b16 %v8101
    %v9206 = vunpack.c.l.b16 %v8102
    %v9207 = vunpack.c.h.b16 %v8102
    %v9208 = vunpack.c.l.b16 %v8103
    %v9209 = vunpack.c.h.b16 %v8103
    %v9210 = vunpack.c.l.b16 %v8104
    %v9211 = vunpack.c.h.b16 %v8104
    %v9212 = vunpack.c.l.b16 %v8105
    %v9213 = vunpack.c.h.b16 %v8105
    %v9214 = vunpack.c.l.b16 %v8106
    %v9215 = vunpack.c.h.b16 %v8106
    %v9216 = vunpack.c.l.b16 %v8107
    %v9217 = vunpack.c.h.b16 %v8107
    %v9218 = vunpack.c.l.b16 %v8108
    %v9219 = vunpack.c.h.b16 %v8108
    %v9220 = vunpack.c.l.b16 %v8109
    %v9221 = vunpack.c.h.b16 %v8109
    %v9222 = vunpack.c.l.b16 %v8110
    %v9223 = vunpack.c.h.b16 %v8110
    %v9224 = vunpack.c.l.b16 %v8111
    %v9225 = vunpack.c.h.b16 %v8111
    %v9226 = vunpack.c.l.b16 %v8112
    %v9227 = vunpack.c.h.b16 %v8112
    %v9228 = vunpack.c.l.b16 %v8113
    %v9229 = vunpack.c.h.b16 %v8113
    %v9230 = vunpack.c.l.b16 %v8114
    %v9231 = vunpack.c.h.b16 %v8114
    %v9232 = vunpack.c.l.b16 %v8115
    %v9233 = vunpack.c.h.b16 %v8115
    %v9234 = vunpack.c.l.b16 %v8116
    %v9235 = vunpack.c.h.b16 %v8116
    %v9236 = vunpack.c.l.b16 %v8117
    %v9237 = vunpack.c.h.b16 %v8117
    %v9238 = vunpack.c.l.b16 %v8118
    %v9239 = vunpack.c.h.b16 %v8118
    %v9240 = vunpack.c.l.b16 %v8119
    %v9241 = vunpack.c.h.b16 %v8119
    %v9242 = vunpack.c.l.b16 %v8120
    %v9243 = vunpack.c.h.b16 %v8120
    %v9244 = vunpack.c.l.b16 %v8121
    %v9245 = vunpack.c.h.b16 %v8121
    %v9246 = vunpack.c.l.b16 %v8122
    %v9247 = vunpack.c.h.b16 %v8122
    %v9248 = vunpack.c.l.b16 %v8123
    %v9249 = vunpack.c.h.b16 %v8123
    %v9250 = vunpack.c.l.b16 %v8124
    %v9251 = vunpack.c.h.b16 %v8124
    %v9252 = vunpack.c.l.b16 %v8125
    %v9253 = vunpack.c.h.b16 %v8125
    %v9254 = vunpack.c.l.b16 %v8126
    %v9255 = vunpack.c.h.b16 %v8126
    %v9256 = vunpack.c.l.b16 %v8127
    %v9257 = vunpack.c.h.b16 %v8127
    %v9258 = vunpack.c.l.b16 %v8128
    %v9259 = vunpack.c.h.b16 %v8128
    %v9260 = vunpack.c.l.b16 %v8129
    %v9261 = vunpack.c.h.b16 %v8129
    %v9262 = vunpack.c.l.b16 %v8130
    %v9263 = vunpack.c.h.b16 %v8130
    %v9264 = vunpack.c.l.b16 %v8131
    %v9265 = vunpack.c.h.b16 %v8131
    %v9266 = vunpack.c.l.b16 %v8132
    %v9267 = vunpack.c.h.b16 %v8132
    %v9268 = vunpack.c.l.b16 %v8133
    %v9269 = vunpack.c.h.b16 %v8133
    %v9270 = vunpack.c.l.b16 %v8134
    %v9271 = vunpack.c.h.b16 %v8134
    %v9272 = vunpack.c.l.b16 %v8135
    %v9273 = vunpack.c.h.b16 %v8135
    %v9274 = vunpack.c.l.b16 %v8136
    %v9275 = vunpack.c.h.b16 %v8136
    %v9276 = vunpack.c.l.b16 %v8137
    %v9277 = vunpack.c.h.b16 %v8137
    %v9278 = vunpack.c.l.b16 %v8138
    %v9279 = vunpack.c.h.b16 %v8138
    %v9280 = vunpack.c.l.b16 %v8139
    %v9281 = vunpack.c.h.b16 %v8139
    %v9282 = vunpack.c.l.b16 %v8140
    %v9283 = vunpack.c.h.b16 %v8140
    %v9284 = vunpack.c.l.b16 %v8141
    %v9285 = vunpack.c.h.b16 %v8141
    %v9286 = vunpack.c.l.b16 %v8142
    %v9287 = vunpack.c.h.b16 %v8142
    %v9288 = vunpack.c.l.b16 %v8143
    %v9289 = vunpack.c.h.b16 %v8143
    %v9290 = vunpack.c.l.b16 %v8144
    %v9291 = vunpack.c.h.b16 %v8144
    %v9292 = vunpack.c.l.b16 %v8145
    %v9293 = vunpack.c.h.b16 %v8145
    %v9294 = vunpack.c.l.b16 %v8146
    %v9295 = vunpack.c.h.b16 %v8146
    %v9296 = vunpack.c.l.b16 %v8147
    %v9297 = vunpack.c.h.b16 %v8147
    %v9298 = vunpack.c.l.b16 %v8148
    %v9299 = vunpack.c.h.b16 %v8148
    %v9300 = vunpack.c.l.b16 %v8149
    %v9301 = vunpack.c.h.b16 %v8149
    %v9302 = vunpack.c.l.b16 %v8150
    %v9303 = vunpack.c.h.b16 %v8150
    %v9304 = vunpack.c.l.b16 %v8151
    %v9305 = vunpack.c.h.b16 %v8151
    %v9306 = vunpack.c.l.b16 %v8152
    %v9307 = vunpack.c.h.b16 %v8152
    %v9308 = vunpack.c.l.b16 %v8153
    %v9309 = vunpack.c.h.b16 %v8153
    %v9310 = vunpack.c.l.b16 %v8154
    %v9311 = vunpack.c.h.b16 %v8154
    %v9312 = vunpack.c.l.b16 %v8155
    %v9313 = vunpack.c.h.b16 %v8155
    %v9314 = vunpack.c.l.b16 %v8156
    %v9315 = vunpack.c.h.b16 %v8156
    %v9316 = vunpack.c.l.b16 %v8157
    %v9317 = vunpack.c.h.b16 %v8157
    %v9318 = vunpack.c.l.b16 %v8158
    %v9319 = vunpack.c.h.b16 %v8158
    %v9320 = vunpack.c.l.b16 %v8159
    %v9321 = vunpack.c.h.b16 %v8159
    %v9322 = vunpack.c.l.b16 %v8160
    %v9323 = vunpack.c.h.b16 %v8160
    %v9324 = vunpack.c.l.b16 %v8161
    %v9325 = vunpack.c.h.b16 %v8161
    %v9326 = vunpack.c.l.b16 %v8162
    %v9327 = vunpack.c.h.b16 %v8162
    %v9328 = vunpack.c.l.b16 %v8163
    %v9329 = vunpack.c.h.b16 %v8163
    %v9330 = vunpack.c.l.b16 %v8164
    %v9331 = vunpack.c.h.b16 %v8164
    %v9332 = vunpack.c.l.b16 %v8165
    %v9333 = vunpack.c.h.b16 %v8165
    %v9334 = vunpack.c.l.b16 %v8166
    %v9335 = vunpack.c.h.b16 %v8166
    %v9336 = vunpack.c.l.b16 %v8167
    %v9337 = vunpack.c.h.b16 %v8167
    %v9338 = vunpack.c.l.b16 %v8168
    %v9339 = vunpack.c.h.b16 %v8168
    %v9340 = vunpack.c.l.b16 %v8169
    %v9341 = vunpack.c.h.b16 %v8169
    %v9342 = vunpack.c.l.b16 %v8170
    %v9343 = vunpack.c.h.b16 %v8170
    %v9344 = vunpack.c.l.b16 %v8171
    %v9345 = vunpack.c.h.b16 %v8171
    %v9346 = vunpack.c.l.b16 %v8172
    %v9347 = vunpack.c.h.b16 %v8172
    %v9348 = vunpack.c.l.b16 %v8173
    %v9349 = vunpack.c.h.b16 %v8173
    %v9350 = vunpack.c.l.b16 %v8174
    %v9351 = vunpack.c.h.b16 %v8174
    %v9352 = vunpack.c.l.b16 %v8175
    %v9353 = vunpack.c.h.b16 %v8175
    %v9354 = vunpack.c.l.b16 %v8176
    %v9355 = vunpack.c.h.b16 %v8176
    %v9356 = vunpack.c.l.b16 %v8177
    %v9357 = vunpack.c.h.b16 %v8177
    %v9358 = vunpack.c.l.b16 %v8178
    %v9359 = vunpack.c.h.b16 %v8178
    %v9360 = vunpack.c.l.b16 %v8179
    %v9361 = vunpack.c.h.b16 %v8179
    %v9362 = vunpack.c.l.b16 %v8180
    %v9363 = vunpack.c.h.b16 %v8180
    %v9364 = vunpack.c.l.b16 %v8181
    %v9365 = vunpack.c.h.b16 %v8181
    %v9366 = vunpack.c.l.b16 %v8182
    %v9367 = vunpack.c.h.b16 %v8182
    %v9368 = vunpack.c.l.b16 %v8183
    %v9369 = vunpack.c.h.b16 %v8183
    %v9370 = vunpack.c.l.b16 %v8184
    %v9371 = vunpack.c.h.b16 %v8184
    %v9372 = vunpack.c.l.b16 %v8185
    %v9373 = vunpack.c.h.b16 %v8185
    %v9374 = vunpack.c.l.b16 %v8186
    %v9375 = vunpack.c.h.b16 %v8186
    %v9376 = vunpack.c.l.b16 %v8187
    %v9377 = vunpack.c.h.b16 %v8187
    %v9378 = vunpack.c.l.b16 %v8188
    %v9379 = vunpack.c.h.b16 %v8188
    %v9380 = vunpack.c.l.b16 %v8189
    %v9381 = vunpack.c.h.b16 %v8189
    %v9382 = vunpack.c.l.b16 %v8190
    %v9383 = vunpack.c.h.b16 %v8190
    %v9384 = vunpack.c.l.b16 %v8191
    %v9385 = vunpack.c.h.b16 %v8191
    %v9386 = vunpack.c.l.b16 %v8192
    %v9387 = vunpack.c.h.b16 %v8192
    %v9388 = vunpack.c.l.b16 %v8193
    %v9389 = vunpack.c.h.b16 %v8193
    %v9390 = vunpack.c.l.b16 %v8194
    %v9391 = vunpack.c.h.b16 %v8194
    %v9392 = vunpack.c.l.b16 %v8195
    %v9393 = vunpack.c.h.b16 %v8195
    %v9394 = vunpack.c.l.b16 %v8196
    %v9395 = vunpack.c.h.b16 %v8196
    %v9396 = vunpack.c.l.b16 %v8197
    %v9397 = vunpack.c.h.b16 %v8197
    %v9398 = vunpack.c.l.b16 %v8198
    %v9399 = vunpack.c.h.b16 %v8198
    %v9400 = vunpack.c.l.b16 %v8199
    %v9401 = vunpack.c.h.b16 %v8199
    %v9402 = vunpack.c.l.b16 %v8200
    %v9403 = vunpack.c.h.b16 %v8200
    %v9404 = vunpack.c.l.b16 %v8201
    %v9405 = vunpack.c.h.b16 %v8201
    %v9406 = vunpack.c.l.b16 %v8202
    %v9407 = vunpack.c.h.b16 %v8202
    %v9408 = vunpack.c.l.b16 %v8203
    %v9409 = vunpack.c.h.b16 %v8203
    %v9410 = vunpack.c.l.b16 %v8204
    %v9411 = vunpack.c.h.b16 %v8204
    %v9412 = vunpack.c.l.b16 %v8205
    %v9413 = vunpack.c.h.b16 %v8205
    %v9414 = vunpack.c.l.b16 %v8206
    %v9415 = vunpack.c.h.b16 %v8206
    %v9416 = vunpack.c.l.b16 %v8207
    %v9417 = vunpack.c.h.b16 %v8207
    %v9418 = vunpack.c.l.b16 %v8208
    %v9419 = vunpack.c.h.b16 %v8208
    %v9420 = vunpack.c.l.b16 %v8209
    %v9421 = vunpack.c.h.b16 %v8209
    %v9422 = vunpack.c.l.b16 %v8210
    %v9423 = vunpack.c.h.b16 %v8210
    %v9424 = vunpack.c.l.b16 %v8211
    %v9425 = vunpack.c.h.b16 %v8211
    %v9426 = vunpack.c.l.b16 %v8212
    %v9427 = vunpack.c.h.b16 %v8212
    %v9428 = vunpack.c.l.b16 %v8213
    %v9429 = vunpack.c.h.b16 %v8213
    %v9430 = vunpack.c.l.b16 %v8214
    %v9431 = vunpack.c.h.b16 %v8214
    %v9432 = vunpack.c.l.b16 %v8215
    %v9433 = vunpack.c.h.b16 %v8215
    %v9434 = vunpack.c.l.b16 %v8216
    %v9435 = vunpack.c.h.b16 %v8216
    %v9436 = vunpack.c.l.b16 %v8217
    %v9437 = vunpack.c.h.b16 %v8217
    %v9438 = vunpack.c.l.b16 %v8218
    %v9439 = vunpack.c.h.b16 %v8218
    %v9440 = vunpack.c.l.b16 %v8219
    %v9441 = vunpack.c.h.b16 %v8219
    %v9442 = vpack.c.b16 %v8646, %v8642
    %v9443 = vpack.c.b16 %v8647, %v8643
    %v9444 = vpack.c.b16 %v8648, %v8644
    %v9445 = vpack.c.b16 %v8649, %v8645
    %v9446 = vpack.c.b16 %v8654, %v8650
    %v9447 = vpack.c.b16 %v8655, %v8651
    %v9448 = vpack.c.b16 %v8656, %v8652
    %v9449 = vpack.c.b16 %v8657, %v8653
    %v9450 = vpack.c.b16 %v8662, %v8658
    %v9451 = vpack.c.b16 %v8663, %v8659
    %v9452 = vpack.c.b16 %v8664, %v8660
    %v9453 = vpack.c.b16 %v8665, %v8661
    %v9454 = vpack.c.b16 %v8670, %v8666
    %v9455 = vpack.c.b16 %v8671, %v8667
    %v9456 = vpack.c.b16 %v8672, %v8668
    %v9457 = vpack.c.b16 %v8673, %v8669
    %v9458 = vpack.c.b16 %v8678, %v8674
    %v9459 = vpack.c.b16 %v8679, %v8675
    %v9460 = vpack.c.b16 %v8680, %v8676
    %v9461 = vpack.c.b16 %v8681, %v8677
    %v9462 = vpack.c.b16 %v8686, %v8682
    %v9463 = vpack.c.b16 %v8687, %v8683
    %v9464 = vpack.c.b16 %v8688, %v8684
    %v9465 = vpack.c.b16 %v8689, %v8685
    %v9466 = vpack.c.b16 %v8694, %v8690
    %v9467 = vpack.c.b16 %v8695, %v8691
    %v9468 = vpack.c.b16 %v8696, %v8692
    %v9469 = vpack.c.b16 %v8697, %v8693
    %v9470 = vpack.c.b16 %v8702, %v8698
    %v9471 = vpack.c.b16 %v8703, %v8699
    %v9472 = vpack.c.b16 %v8704, %v8700
    %v9473 = vpack.c.b16 %v8705, %v8701
    %v9474 = vpack.c.b16 %v8710, %v8706
    %v9475 = vpack.c.b16 %v8711, %v8707
    %v9476 = vpack.c.b16 %v8712, %v8708
    %v9477 = vpack.c.b16 %v8713, %v8709
    %v9478 = vpack.c.b16 %v8718, %v8714
    %v9479 = vpack.c.b16 %v8719, %v8715
    %v9480 = vpack.c.b16 %v8720, %v8716
    %v9481 = vpack.c.b16 %v8721, %v8717
    %v9482 = vpack.c.b16 %v8726, %v8722
    %v9483 = vpack.c.b16 %v8727, %v8723
    %v9484 = vpack.c.b16 %v8728, %v8724
    %v9485 = vpack.c.b16 %v8729, %v8725
    %v9486 = vpack.c.b16 %v8734, %v8730
    %v9487 = vpack.c.b16 %v8735, %v8731
    %v9488 = vpack.c.b16 %v8736, %v8732
    %v9489 = vpack.c.b16 %v8737, %v8733
    %v9490 = vpack.c.b16 %v8742, %v8738
    %v9491 = vpack.c.b16 %v8743, %v8739
    %v9492 = vpack.c.b16 %v8744, %v8740
    %v9493 = vpack.c.b16 %v8745, %v8741
    %v9494 = vpack.c.b16 %v8750, %v8746
    %v9495 = vpack.c.b16 %v8751, %v8747
    %v9496 = vpack.c.b16 %v8752, %v8748
    %v9497 = vpack.c.b16 %v8753, %v8749
    %v9498 = vpack.c.b16 %v8758, %v8754
    %v9499 = vpack.c.b16 %v8759, %v8755
    %v9500 = vpack.c.b16 %v8760, %v8756
    %v9501 = vpack.c.b16 %v8761, %v8757
    %v9502 = vpack.c.b16 %v8766, %v8762
    %v9503 = vpack.c.b16 %v8767, %v8763
    %v9504 = vpack.c.b16 %v8768, %v8764
    %v9505 = vpack.c.b16 %v8769, %v8765
    %v9506 = vpack.c.b16 %v8774, %v8770
    %v9507 = vpack.c.b16 %v8775, %v8771
    %v9508 = vpack.c.b16 %v8776, %v8772
    %v9509 = vpack.c.b16 %v8777, %v8773
    %v9510 = vpack.c.b16 %v8782, %v8778
    %v9511 = vpack.c.b16 %v8783, %v8779
    %v9512 = vpack.c.b16 %v8784, %v8780
    %v9513 = vpack.c.b16 %v8785, %v8781
    %v9514 = vpack.c.b16 %v8790, %v8786
    %v9515 = vpack.c.b16 %v8791, %v8787
    %v9516 = vpack.c.b16 %v8792, %v8788
    %v9517 = vpack.c.b16 %v8793, %v8789
    %v9518 = vpack.c.b16 %v8798, %v8794
    %v9519 = vpack.c.b16 %v8799, %v8795
    %v9520 = vpack.c.b16 %v8800, %v8796
    %v9521 = vpack.c.b16 %v8801, %v8797
    %v9522 = vpack.c.b16 %v8806, %v8802
    %v9523 = vpack.c.b16 %v8807, %v8803
    %v9524 = vpack.c.b16 %v8808, %v8804
    %v9525 = vpack.c.b16 %v8809, %v8805
    %v9526 = vpack.c.b16 %v8814, %v8810
    %v9527 = vpack.c.b16 %v8815, %v8811
    %v9528 = vpack.c.b16 %v8816, %v8812
    %v9529 = vpack.c.b16 %v8817, %v8813
    %v9530 = vpack.c.b16 %v8822, %v8818
    %v9531 = vpack.c.b16 %v8823, %v8819
    %v9532 = vpack.c.b16 %v8824, %v8820
    %v9533 = vpack.c.b16 %v8825, %v8821
    %v9534 = vpack.c.b16 %v8830, %v8826
    %v9535 = vpack.c.b16 %v8831, %v8827
    %v9536 = vpack.c.b16 %v8832, %v8828
    %v9537 = vpack.c.b16 %v8833, %v8829
    %v9538 = vpack.c.b16 %v8838, %v8834
    %v9539 = vpack.c.b16 %v8839, %v8835
    %v9540 = vpack.c.b16 %v8840, %v8836
    %v9541 = vpack.c.b16 %v8841, %v8837
    %v9542 = vpack.c.b16 %v8846, %v8842
    %v9543 = vpack.c.b16 %v8847, %v8843
    %v9544 = vpack.c.b16 %v8848, %v8844
    %v9545 = vpack.c.b16 %v8849, %v8845
    %v9546 = vpack.c.b16 %v8854, %v8850
    %v9547 = vpack.c.b16 %v8855, %v8851
    %v9548 = vpack.c.b16 %v8856, %v8852
    %v9549 = vpack.c.b16 %v8857, %v8853
    %v9550 = vpack.c.b16 %v8862, %v8858
    %v9551 = vpack.c.b16 %v8863, %v8859
    %v9552 = vpack.c.b16 %v8864, %v8860
    %v9553 = vpack.c.b16 %v8865, %v8861
    %v9554 = vpack.c.b16 %v8870, %v8866
    %v9555 = vpack.c.b16 %v8871, %v8867
    %v9556 = vpack.c.b16 %v8872, %v8868
    %v9557 = vpack.c.b16 %v8873, %v8869
    %v9558 = vpack.c.b16 %v8878, %v8874
    %v9559 = vpack.c.b16 %v8879, %v8875
    %v9560 = vpack.c.b16 %v8880, %v8876
    %v9561 = vpack.c.b16 %v8881, %v8877
    %v9562 = vpack.c.b16 %v8886, %v8882
    %v9563 = vpack.c.b16 %v8887, %v8883
    %v9564 = vpack.c.b16 %v8888, %v8884
    %v9565 = vpack.c.b16 %v8889, %v8885
    %v9566 = vpack.c.b16 %v8894, %v8890
    %v9567 = vpack.c.b16 %v8895, %v8891
    %v9568 = vpack.c.b16 %v8896, %v8892
    %v9569 = vpack.c.b16 %v8897, %v8893
    %v9570 = vpack.c.b16 %v8902, %v8898
    %v9571 = vpack.c.b16 %v8903, %v8899
    %v9572 = vpack.c.b16 %v8904, %v8900
    %v9573 = vpack.c.b16 %v8905, %v8901
    %v9574 = vpack.c.b16 %v8910, %v8906
    %v9575 = vpack.c.b16 %v8911, %v8907
    %v9576 = vpack.c.b16 %v8912, %v8908
    %v9577 = vpack.c.b16 %v8913, %v8909
    %v9578 = vpack.c.b16 %v8918, %v8914
    %v9579 = vpack.c.b16 %v8919, %v8915
    %v9580 = vpack.c.b16 %v8920, %v8916
    %v9581 = vpack.c.b16 %v8921, %v8917
    %v9582 = vpack.c.b16 %v8926, %v8922
    %v9583 = vpack.c.b16 %v8927, %v8923
    %v9584 = vpack.c.b16 %v8928, %v8924
    %v9585 = vpack.c.b16 %v8929, %v8925
    %v9586 = vpack.c.b16 %v8934, %v8930
    %v9587 = vpack.c.b16 %v8935, %v8931
    %v9588 = vpack.c.b16 %v8936, %v8932
    %v9589 = vpack.c.b16 %v8937, %v8933
    %v9590 = vpack.c.b16 %v8942, %v8938
    %v9591 = vpack.c.b16 %v8943, %v8939
    %v9592 = vpack.c.b16 %v8944, %v8940
    %v9593 = vpack.c.b16 %v8945, %v8941
    %v9594 = vpack.c.b16 %v8950, %v8946
    %v9595 = vpack.c.b16 %v8951, %v8947
    %v9596 = vpack.c.b16 %v8952, %v8948
    %v9597 = vpack.c.b16 %v8953, %v8949
    %v9598 = vpack.c.b16 %v8958, %v8954
    %v9599 = vpack.c.b16 %v8959, %v8955
    %v9600 = vpack.c.b16 %v8960, %v8956
    %v9601 = vpack.c.b16 %v8961, %v8957
    %v9602 = vpack.c.b16 %v8966, %v8962
    %v9603 = vpack.c.b16 %v8967, %v8963
    %v9604 = vpack.c.b16 %v8968, %v8964
    %v9605 = vpack.c.b16 %v8969, %v8965
    %v9606 = vpack.c.b16 %v8974, %v8970
    %v9607 = vpack.c.b16 %v8975, %v8971
    %v9608 = vpack.c.b16 %v8976, %v8972
    %v9609 = vpack.c.b16 %v8977, %v8973
    %v9610 = vpack.c.b16 %v8982, %v8978
    %v9611 = vpack.c.b16 %v8983, %v8979
    %v9612 = vpack.c.b16 %v8984, %v8980
    %v9613 = vpack.c.b16 %v8985, %v8981
    %v9614 = vpack.c.b16 %v8990, %v8986
    %v9615 = vpack.c.b16 %v8991, %v8987
    %v9616 = vpack.c.b16 %v8992, %v8988
    %v9617 = vpack.c.b16 %v8993, %v8989
    %v9618 = vpack.c.b16 %v8998, %v8994
    %v9619 = vpack.c.b16 %v8999, %v8995
    %v9620 = vpack.c.b16 %v9000, %v8996
    %v9621 = vpack.c.b16 %v9001, %v8997
    %v9622 = vpack.c.b16 %v9006, %v9002
    %v9623 = vpack.c.b16 %v9007, %v9003
    %v9624 = vpack.c.b16 %v9008, %v9004
    %v9625 = vpack.c.b16 %v9009, %v9005
    %v9626 = vpack.c.b16 %v9014, %v9010
    %v9627 = vpack.c.b16 %v9015, %v9011
    %v9628 = vpack.c.b16 %v9016, %v9012
    %v9629 = vpack.c.b16 %v9017, %v9013
    %v9630 = vpack.c.b16 %v9022, %v9018
    %v9631 = vpack.c.b16 %v9023, %v9019
    %v9632 = vpack.c.b16 %v9024, %v9020
    %v9633 = vpack.c.b16 %v9025, %v9021
    %v9634 = vpack.c.b16 %v9030, %v9026
    %v9635 = vpack.c.b16 %v9031, %v9027
    %v9636 = vpack.c.b16 %v9032, %v9028
    %v9637 = vpack.c.b16 %v9033, %v9029
    %v9638 = vpack.c.b16 %v9038, %v9034
    %v9639 = vpack.c.b16 %v9039, %v9035
    %v9640 = vpack.c.b16 %v9040, %v9036
    %v9641 = vpack.c.b16 %v9041, %v9037
    %v9642 = vpack.c.b16 %v9046, %v9042
    %v9643 = vpack.c.b16 %v9047, %v9043
    %v9644 = vpack.c.b16 %v9048, %v9044
    %v9645 = vpack.c.b16 %v9049, %v9045
    %v9646 = vpack.c.b16 %v9054, %v9050
    %v9647 = vpack.c.b16 %v9055, %v9051
    %v9648 = vpack.c.b16 %v9056, %v9052
    %v9649 = vpack.c.b16 %v9057, %v9053
    %v9650 = vpack.c.b16 %v9062, %v9058
    %v9651 = vpack.c.b16 %v9063, %v9059
    %v9652 = vpack.c.b16 %v9064, %v9060
    %v9653 = vpack.c.b16 %v9065, %v9061
    %v9654 = vpack.c.b16 %v9070, %v9066
    %v9655 = vpack.c.b16 %v9071, %v9067
    %v9656 = vpack.c.b16 %v9072, %v9068
    %v9657 = vpack.c.b16 %v9073, %v9069
    %v9658 = vpack.c.b16 %v9078, %v9074
    %v9659 = vpack.c.b16 %v9079, %v9075
    %v9660 = vpack.c.b16 %v9080, %v9076
    %v9661 = vpack.c.b16 %v9081, %v9077
    %v9662 = vpack.c.b16 %v9086, %v9082
    %v9663 = vpack.c.b16 %v9087, %v9083
    %v9664 = vpack.c.b16 %v9088, %v9084
    %v9665 = vpack.c.b16 %v9089, %v9085
    %v9666 = vpack.c.b16 %v9094, %v9090
    %v9667 = vpack.c.b16 %v9095, %v9091
    %v9668 = vpack.c.b16 %v9096, %v9092
    %v9669 = vpack.c.b16 %v9097, %v9093
    %v9670 = vpack.c.b16 %v9102, %v9098
    %v9671 = vpack.c.b16 %v9103, %v9099
    %v9672 = vpack.c.b16 %v9104, %v9100
    %v9673 = vpack.c.b16 %v9105, %v9101
    %v9674 = vpack.c.b16 %v9110, %v9106
    %v9675 = vpack.c.b16 %v9111, %v9107
    %v9676 = vpack.c.b16 %v9112, %v9108
    %v9677 = vpack.c.b16 %v9113, %v9109
    %v9678 = vpack.c.b16 %v9118, %v9114
    %v9679 = vpack.c.b16 %v9119, %v9115
    %v9680 = vpack.c.b16 %v9120, %v9116
    %v9681 = vpack.c.b16 %v9121, %v9117
    %v9682 = vpack.c.b16 %v9126, %v9122
    %v9683 = vpack.c.b16 %v9127, %v9123
    %v9684 = vpack.c.b16 %v9128, %v9124
    %v9685 = vpack.c.b16 %v9129, %v9125
    %v9686 = vpack.c.b16 %v9134, %v9130
    %v9687 = vpack.c.b16 %v9135, %v9131
    %v9688 = vpack.c.b16 %v9136, %v9132
    %v9689 = vpack.c.b16 %v9137, %v9133
    %v9690 = vpack.c.b16 %v9142, %v9138
    %v9691 = vpack.c.b16 %v9143, %v9139
    %v9692 = vpack.c.b16 %v9144, %v9140
    %v9693 = vpack.c.b16 %v9145, %v9141
    %v9694 = vpack.c.b16 %v9150, %v9146
    %v9695 = vpack.c.b16 %v9151, %v9147
    %v9696 = vpack.c.b16 %v9152, %v9148
    %v9697 = vpack.c.b16 %v9153, %v9149
    %v9698 = vpack.c.b16 %v9158, %v9154
    %v9699 = vpack.c.b16 %v9159, %v9155
    %v9700 = vpack.c.b16 %v9160, %v9156
    %v9701 = vpack.c.b16 %v9161, %v9157
    %v9702 = vpack.c.b16 %v9166, %v9162
    %v9703 = vpack.c.b16 %v9167, %v9163
    %v9704 = vpack.c.b16 %v9168, %v9164
    %v9705 = vpack.c.b16 %v9169, %v9165
    %v9706 = vpack.c.b16 %v9174, %v9170
    %v9707 = vpack.c.b16 %v9175, %v9171
    %v9708 = vpack.c.b16 %v9176, %v9172
    %v9709 = vpack.c.b16 %v9177, %v9173
    %v9710 = vpack.c.b16 %v9182, %v9178
    %v9711 = vpack.c.b16 %v9183, %v9179
    %v9712 = vpack.c.b16 %v9184, %v9180
    %v9713 = vpack.c.b16 %v9185, %v9181
    %v9714 = vpack.c.b16 %v9190, %v9186
    %v9715 = vpack.c.b16 %v9191, %v9187
    %v9716 = vpack.c.b16 %v9192, %v9188
    %v9717 = vpack.c.b16 %v9193, %v9189
    %v9718 = vpack.c.b16 %v9198, %v9194
    %v9719 = vpack.c.b16 %v9199, %v9195
    %v9720 = vpack.c.b16 %v9200, %v9196
    %v9721 = vpack.c.b16 %v9201, %v9197
    %v9722 = vpack.c.b16 %v9206, %v9202
    %v9723 = vpack.c.b16 %v9207, %v9203
    %v9724 = vpack.c.b16 %v9208, %v9204
    %v9725 = vpack.c.b16 %v9209, %v9205
    %v9726 = vpack.c.b16 %v9214, %v9210
    %v9727 = vpack.c.b16 %v9215, %v9211
    %v9728 = vpack.c.b16 %v9216, %v9212
    %v9729 = vpack.c.b16 %v9217, %v9213
    %v9730 = vpack.c.b16 %v9222, %v9218
    %v9731 = vpack.c.b16 %v9223, %v9219
    %v9732 = vpack.c.b16 %v9224, %v9220
    %v9733 = vpack.c.b16 %v9225, %v9221
    %v9734 = vpack.c.b16 %v9230, %v9226
    %v9735 = vpack.c.b16 %v9231, %v9227
    %v9736 = vpack.c.b16 %v9232, %v9228
    %v9737 = vpack.c.b16 %v9233, %v9229
    %v9738 = vpack.c.b16 %v9238, %v9234
    %v9739 = vpack.c.b16 %v9239, %v9235
    %v9740 = vpack.c.b16 %v9240, %v9236
    %v9741 = vpack.c.b16 %v9241, %v9237
    %v9742 = vpack.c.b16 %v9246, %v9242
    %v9743 = vpack.c.b16 %v9247, %v9243
    %v9744 = vpack.c.b16 %v9248, %v9244
    %v9745 = vpack.c.b16 %v9249, %v9245
    %v9746 = vpack.c.b16 %v9254, %v9250
    %v9747 = vpack.c.b16 %v9255, %v9251
    %v9748 = vpack.c.b16 %v9256, %v9252
    %v9749 = vpack.c.b16 %v9257, %v9253
    %v9750 = vpack.c.b16 %v9262, %v9258
    %v9751 = vpack.c.b16 %v9263, %v9259
    %v9752 = vpack.c.b16 %v9264, %v9260
    %v9753 = vpack.c.b16 %v9265, %v9261
    %v9754 = vpack.c.b16 %v9270, %v9266
    %v9755 = vpack.c.b16 %v9271, %v9267
    %v9756 = vpack.c.b16 %v9272, %v9268
    %v9757 = vpack.c.b16 %v9273, %v9269
    %v9758 = vpack.c.b16 %v9278, %v9274
    %v9759 = vpack.c.b16 %v9279, %v9275
    %v9760 = vpack.c.b16 %v9280, %v9276
    %v9761 = vpack.c.b16 %v9281, %v9277
    %v9762 = vpack.c.b16 %v9286, %v9282
    %v9763 = vpack.c.b16 %v9287, %v9283
    %v9764 = vpack.c.b16 %v9288, %v9284
    %v9765 = vpack.c.b16 %v9289, %v9285
    %v9766 = vpack.c.b16 %v9294, %v9290
    %v9767 = vpack.c.b16 %v9295, %v9291
    %v9768 = vpack.c.b16 %v9296, %v9292
    %v9769 = vpack.c.b16 %v9297, %v9293
    %v9770 = vpack.c.b16 %v9302, %v9298
    %v9771 = vpack.c.b16 %v9303, %v9299
    %v9772 = vpack.c.b16 %v9304, %v9300
    %v9773 = vpack.c.b16 %v9305, %v9301
    %v9774 = vpack.c.b16 %v9310, %v9306
    %v9775 = vpack.c.b16 %v9311, %v9307
    %v9776 = vpack.c.b16 %v9312, %v9308
    %v9777 = vpack.c.b16 %v9313, %v9309
    %v9778 = vpack.c.b16 %v9318, %v9314
    %v9779 = vpack.c.b16 %v9319, %v9315
    %v9780 = vpack.c.b16 %v9320, %v9316
    %v9781 = vpack.c.b16 %v9321, %v9317
    %v9782 = vpack.c.b16 %v9326, %v9322
    %v9783 = vpack.c.b16 %v9327, %v9323
    %v9784 = vpack.c.b16 %v9328, %v9324
    %v9785 = vpack.c.b16 %v9329, %v9325
    %v9786 = vpack.c.b16 %v9334, %v9330
    %v9787 = vpack.c.b16 %v9335, %v9331
    %v9788 = vpack.c.b16 %v9336, %v9332
    %v9789 = vpack.c.b16 %v9337, %v9333
    %v9790 = vpack.c.b16 %v9342, %v9338
    %v9791 = vpack.c.b16 %v9343, %v9339
    %v9792 = vpack.c.b16 %v9344, %v9340
    %v9793 = vpack.c.b16 %v9345, %v9341
    %v9794 = vpack.c.b16 %v9350, %v9346
    %v9795 = vpack.c.b16 %v9351, %v9347
    %v9796 = vpack.c.b16 %v9352, %v9348
    %v9797 = vpack.c.b16 %v9353, %v9349
    %v9798 = vpack.c.b16 %v9358, %v9354
    %v9799 = vpack.c.b16 %v9359, %v9355
    %v9800 = vpack.c.b16 %v9360, %v9356
    %v9801 = vpack.c.b16 %v9361, %v9357
    %v9802 = vpack.c.b16 %v9366, %v9362
    %v9803 = vpack.c.b16 %v9367, %v9363
    %v9804 = vpack.c.b16 %v9368, %v9364
    %v9805 = vpack.c.b16 %v9369, %v9365
    %v9806 = vpack.c.b16 %v9374, %v9370
    %v9807 = vpack.c.b16 %v9375, %v9371
    %v9808 = vpack.c.b16 %v9376, %v9372
    %v9809 = vpack.c.b16 %v9377, %v9373
    %v9810 = vpack.c.b16 %v9382, %v9378
    %v9811 = vpack.c.b16 %v9383, %v9379
    %v9812 = vpack.c.b16 %v9384, %v9380
    %v9813 = vpack.c.b16 %v9385, %v9381
    %v9814 = vpack.c.b16 %v9390, %v9386
    %v9815 = vpack.c.b16 %v9391, %v9387
    %v9816 = vpack.c.b16 %v9392, %v9388
    %v9817 = vpack.c.b16 %v9393, %v9389
    %v9818 = vpack.c.b16 %v9398, %v9394
    %v9819 = vpack.c.b16 %v9399, %v9395
    %v9820 = vpack.c.b16 %v9400, %v9396
    %v9821 = vpack.c.b16 %v9401, %v9397
    %v9822 = vpack.c.b16 %v9406, %v9402
    %v9823 = vpack.c.b16 %v9407, %v9403
    %v9824 = vpack.c.b16 %v9408, %v9404
    %v9825 = vpack.c.b16 %v9409, %v9405
    %v9826 = vpack.c.b16 %v9414, %v9410
    %v9827 = vpack.c.b16 %v9415, %v9411
    %v9828 = vpack.c.b16 %v9416, %v9412
    %v9829 = vpack.c.b16 %v9417, %v9413
    %v9830 = vpack.c.b16 %v9422, %v9418
    %v9831 = vpack.c.b16 %v9423, %v9419
    %v9832 = vpack.c.b16 %v9424, %v9420
    %v9833 = vpack.c.b16 %v9425, %v9421
    %v9834 = vpack.c.b16 %v9430, %v9426
    %v9835 = vpack.c.b16 %v9431, %v9427
    %v9836 = vpack.c.b16 %v9432, %v9428
    %v9837 = vpack.c.b16 %v9433, %v9429
    %v9838 = vpack.c.b16 %v9438, %v9434
    %v9839 = vpack.c.b16 %v9439, %v9435
    %v9840 = vpack.c.b16 %v9440, %v9436
    %v9841 = vpack.c.b16 %v9441, %v9437
    %v10243 = vsel %vm309, %v7819, 0
    %10245 = vmatprep.subr.bf16.mxu0 %v9471
    %10246 = vmatpush1.bf16.msra.mxu0 %v9470
    %10247 = vmatprep.subr.bf16.mxu0 %v9467
    %10248 = vmatpush1.bf16.msra.mxu0 %v9466
    %10249 = vmatprep.subr.bf16.mxu0 %v9463
    %10250 = vmatpush1.bf16.msra.mxu0 %v9462
    %10251 = vmatprep.subr.bf16.mxu0 %v9459
    %10252 = vmatpush1.bf16.msra.mxu0 %v9458
    %10253 = vmatprep.subr.bf16.mxu0 %v9455
    %10254 = vmatpush1.bf16.msra.mxu0 %v9454
    %10255 = vmatprep.subr.bf16.mxu0 %v9451
    %10256 = vmatpush1.bf16.msra.mxu0 %v9450
    %10257 = vmatprep.subr.bf16.mxu0 %v9447
    %10258 = vmatpush1.bf16.msra.mxu0 %v9446
    %10259 = vmatprep.subr.bf16.mxu0 %v9443
    %10260 = vmatpush1.bf16.msra.mxu0 %v9442
    %10261 = vmatprep.subr.bf16.mxu0 %v9503
    %10262 = vmatpush2.bf16.msra.mxu0 %v9502
    %10263 = vmatprep.subr.bf16.mxu0 %v9499
    %10264 = vmatpush2.bf16.msra.mxu0 %v9498
    %10265 = vmatprep.subr.bf16.mxu0 %v9495
    %10266 = vmatpush2.bf16.msra.mxu0 %v9494
    %10267 = vmatprep.subr.bf16.mxu0 %v9491
    %10268 = vmatpush2.bf16.msra.mxu0 %v9490
    %10269 = vmatprep.subr.bf16.mxu0 %v9487
    %10270 = vmatpush2.bf16.msra.mxu0 %v9486
    %10271 = vmatprep.subr.bf16.mxu0 %v9483
    %10272 = vmatpush2.bf16.msra.mxu0 %v9482
    %10273 = vmatprep.subr.bf16.mxu0 %v9479
    %10274 = vmatpush2.bf16.msra.mxu0 %v9478
    %10275 = vmatprep.subr.bf16.mxu0 %v9475
    %10276 = vmatpush2.bf16.msra.mxu0 %v9474
    %10277 = vmatprep.mubr.bf16.mxu0 %v7808
    %10278 = vmatmul.mubr.bf16.gmra.mxu0 %v7807
    %v10279 = vpop.f32.mrf.mxu0
    %v10280 = vadd.f32 %v8225, %v10279
    %v10281 = vpop.f32.mrf.mxu0
    %v10282 = vadd.f32 %v8229, %v10281
    %v10283 = vpop.f32.mrf.mxu0
    %v10284 = vpop.f32.mrf.mxu0
    %10285 = vdwg.mxu0
    %10286 = vmatprep.subr.bf16.mxu0 %v9535
    %10287 = vmatpush1.bf16.msra.mxu0 %v9534
    %10288 = vmatprep.subr.bf16.mxu0 %v9531
    %10289 = vmatpush1.bf16.msra.mxu0 %v9530
    %10290 = vmatprep.subr.bf16.mxu0 %v9527
    %10291 = vmatpush1.bf16.msra.mxu0 %v9526
    %10292 = vmatprep.subr.bf16.mxu0 %v9523
    %10293 = vmatpush1.bf16.msra.mxu0 %v9522
    %10294 = vmatprep.subr.bf16.mxu0 %v9519
    %10295 = vmatpush1.bf16.msra.mxu0 %v9518
    %10296 = vmatprep.subr.bf16.mxu0 %v9515
    %10297 = vmatpush1.bf16.msra.mxu0 %v9514
    %10298 = vmatprep.subr.bf16.mxu0 %v9511
    %10299 = vmatpush1.bf16.msra.mxu0 %v9510
    %10300 = vmatprep.subr.bf16.mxu0 %v9507
    %10301 = vmatpush1.bf16.msra.mxu0 %v9506
    %10302 = vmatprep.subr.bf16.mxu0 %v9567
    %10303 = vmatpush2.bf16.msra.mxu0 %v9566
    %10304 = vmatprep.subr.bf16.mxu0 %v9563
    %10305 = vmatpush2.bf16.msra.mxu0 %v9562
    %10306 = vmatprep.subr.bf16.mxu0 %v9559
    %10307 = vmatpush2.bf16.msra.mxu0 %v9558
    %10308 = vmatprep.subr.bf16.mxu0 %v9555
    %10309 = vmatpush2.bf16.msra.mxu0 %v9554
    %10310 = vmatprep.subr.bf16.mxu0 %v9551
    %10311 = vmatpush2.bf16.msra.mxu0 %v9550
    %10312 = vmatprep.subr.bf16.mxu0 %v9547
    %10313 = vmatpush2.bf16.msra.mxu0 %v9546
    %10314 = vmatprep.subr.bf16.mxu0 %v9543
    %10315 = vmatpush2.bf16.msra.mxu0 %v9542
    %10316 = vmatprep.subr.bf16.mxu0 %v9539
    %10317 = vmatpush2.bf16.msra.mxu0 %v9538
    %10318 = vmatprep.mubr.bf16.mxu0 %v7810
    %10319 = vmatmul.mubr.bf16.gmra.mxu0 %v7809
    %v10320 = vpop.f32.mrf.mxu0
    %v10321 = vadd.f32 %v10280, %v10320
    %v10322 = vpop.f32.mrf.mxu0
    %v10323 = vadd.f32 %v10282, %v10322
    %v10324 = vpop.f32.mrf.mxu0
    %v10325 = vpop.f32.mrf.mxu0
    %10326 = vdwg.mxu0
    %10327 = vmatprep.subr.bf16.mxu0 %v9599
    %10328 = vmatpush1.bf16.msra.mxu0 %v9598
    %10329 = vmatprep.subr.bf16.mxu0 %v9595
    %10330 = vmatpush1.bf16.msra.mxu0 %v9594
    %10331 = vmatprep.subr.bf16.mxu0 %v9591
    %10332 = vmatpush1.bf16.msra.mxu0 %v9590
    %10333 = vmatprep.subr.bf16.mxu0 %v9587
    %10334 = vmatpush1.bf16.msra.mxu0 %v9586
    %10335 = vmatprep.subr.bf16.mxu0 %v9583
    %10336 = vmatpush1.bf16.msra.mxu0 %v9582
    %10337 = vmatprep.subr.bf16.mxu0 %v9579
    %10338 = vmatpush1.bf16.msra.mxu0 %v9578
    %10339 = vmatprep.subr.bf16.mxu0 %v9575
    %10340 = vmatpush1.bf16.msra.mxu0 %v9574
    %10341 = vmatprep.subr.bf16.mxu0 %v9571
    %10342 = vmatpush1.bf16.msra.mxu0 %v9570
    %10343 = vmatprep.subr.bf16.mxu0 %v9631
    %10344 = vmatpush2.bf16.msra.mxu0 %v9630
    %10345 = vmatprep.subr.bf16.mxu0 %v9627
    %10346 = vmatpush2.bf16.msra.mxu0 %v9626
    %10347 = vmatprep.subr.bf16.mxu0 %v9623
    %10348 = vmatpush2.bf16.msra.mxu0 %v9622
    %10349 = vmatprep.subr.bf16.mxu0 %v9619
    %10350 = vmatpush2.bf16.msra.mxu0 %v9618
    %10351 = vmatprep.subr.bf16.mxu0 %v9615
    %10352 = vmatpush2.bf16.msra.mxu0 %v9614
    %10353 = vmatprep.subr.bf16.mxu0 %v9611
    %10354 = vmatpush2.bf16.msra.mxu0 %v9610
    %10355 = vmatprep.subr.bf16.mxu0 %v9607
    %10356 = vmatpush2.bf16.msra.mxu0 %v9606
    %10357 = vmatprep.subr.bf16.mxu0 %v9603
    %10358 = vmatpush2.bf16.msra.mxu0 %v9602
    %10359 = vmatprep.mubr.bf16.mxu0 %v7812
    %10360 = vmatmul.mubr.bf16.gmra.mxu0 %v7811
    %v10361 = vpop.f32.mrf.mxu0
    %v10362 = vadd.f32 %v10321, %v10361
    %v10363 = vpop.f32.mrf.mxu0
    %v10364 = vadd.f32 %v10323, %v10363
    %v10365 = vpop.f32.mrf.mxu0
    %v10366 = vpop.f32.mrf.mxu0
    %10367 = vdwg.mxu0
    %10368 = vmatprep.subr.bf16.mxu0 %v9663
    %10369 = vmatpush1.bf16.msra.mxu0 %v9662
    %10370 = vmatprep.subr.bf16.mxu0 %v9659
    %10371 = vmatpush1.bf16.msra.mxu0 %v9658
    %10372 = vmatprep.subr.bf16.mxu0 %v9655
    %10373 = vmatpush1.bf16.msra.mxu0 %v9654
    %10374 = vmatprep.subr.bf16.mxu0 %v9651
    %10375 = vmatpush1.bf16.msra.mxu0 %v9650
    %10376 = vmatprep.subr.bf16.mxu0 %v9647
    %10377 = vmatpush1.bf16.msra.mxu0 %v9646
    %10378 = vmatprep.subr.bf16.mxu0 %v9643
    %10379 = vmatpush1.bf16.msra.mxu0 %v9642
    %10380 = vmatprep.subr.bf16.mxu0 %v9639
    %10381 = vmatpush1.bf16.msra.mxu0 %v9638
    %10382 = vmatprep.subr.bf16.mxu0 %v9635
    %10383 = vmatpush1.bf16.msra.mxu0 %v9634
    %10384 = vmatprep.subr.bf16.mxu0 %v9695
    %10385 = vmatpush2.bf16.msra.mxu0 %v9694
    %10386 = vmatprep.subr.bf16.mxu0 %v9691
    %10387 = vmatpush2.bf16.msra.mxu0 %v9690
    %10388 = vmatprep.subr.bf16.mxu0 %v9687
    %10389 = vmatpush2.bf16.msra.mxu0 %v9686
    %10390 = vmatprep.subr.bf16.mxu0 %v9683
    %10391 = vmatpush2.bf16.msra.mxu0 %v9682
    %10392 = vmatprep.subr.bf16.mxu0 %v9679
    %10393 = vmatpush2.bf16.msra.mxu0 %v9678
    %10394 = vmatprep.subr.bf16.mxu0 %v9675
    %10395 = vmatpush2.bf16.msra.mxu0 %v9674
    %10396 = vmatprep.subr.bf16.mxu0 %v9671
    %10397 = vmatpush2.bf16.msra.mxu0 %v9670
    %10398 = vmatprep.subr.bf16.mxu0 %v9667
    %10399 = vmatpush2.bf16.msra.mxu0 %v9666
    %10400 = vmatprep.mubr.bf16.mxu0 %v7814
    %10401 = vmatmul.mubr.bf16.gmra.mxu0 %v7813
    %v10402 = vpop.f32.mrf.mxu0
    %v10403 = vadd.f32 %v10362, %v10402
    %v10404 = vpop.f32.mrf.mxu0
    %v10405 = vadd.f32 %v10364, %v10404
    %v10406 = vpop.f32.mrf.mxu0
    %v10407 = vpop.f32.mrf.mxu0
    %10408 = vdwg.mxu0
    %10409 = vmatprep.subr.bf16.mxu0 %v9727
    %10410 = vmatpush1.bf16.msra.mxu0 %v9726
    %10411 = vmatprep.subr.bf16.mxu0 %v9723
    %10412 = vmatpush1.bf16.msra.mxu0 %v9722
    %10413 = vmatprep.subr.bf16.mxu0 %v9719
    %10414 = vmatpush1.bf16.msra.mxu0 %v9718
    %10415 = vmatprep.subr.bf16.mxu0 %v9715
    %10416 = vmatpush1.bf16.msra.mxu0 %v9714
    %10417 = vmatprep.subr.bf16.mxu0 %v9711
    %10418 = vmatpush1.bf16.msra.mxu0 %v9710
    %10419 = vmatprep.subr.bf16.mxu0 %v9707
    %10420 = vmatpush1.bf16.msra.mxu0 %v9706
    %10421 = vmatprep.subr.bf16.mxu0 %v9703
    %10422 = vmatpush1.bf16.msra.mxu0 %v9702
    %10423 = vmatprep.subr.bf16.mxu0 %v9699
    %10424 = vmatpush1.bf16.msra.mxu0 %v9698
    %10425 = vmatprep.subr.bf16.mxu0 %v9759
    %10426 = vmatpush2.bf16.msra.mxu0 %v9758
    %10427 = vmatprep.subr.bf16.mxu0 %v9755
    %10428 = vmatpush2.bf16.msra.mxu0 %v9754
    %10429 = vmatprep.subr.bf16.mxu0 %v9751
    %10430 = vmatpush2.bf16.msra.mxu0 %v9750
    %10431 = vmatprep.subr.bf16.mxu0 %v9747
    %10432 = vmatpush2.bf16.msra.mxu0 %v9746
    %10433 = vmatprep.subr.bf16.mxu0 %v9743
    %10434 = vmatpush2.bf16.msra.mxu0 %v9742
    %10435 = vmatprep.subr.bf16.mxu0 %v9739
    %10436 = vmatpush2.bf16.msra.mxu0 %v9738
    %10437 = vmatprep.subr.bf16.mxu0 %v9735
    %10438 = vmatpush2.bf16.msra.mxu0 %v9734
    %10439 = vmatprep.subr.bf16.mxu0 %v9731
    %10440 = vmatpush2.bf16.msra.mxu0 %v9730
    %10441 = vmatprep.mubr.bf16.mxu0 %v7816
    %10442 = vmatmul.mubr.bf16.gmra.mxu0 %v7815
    %v10443 = vpop.f32.mrf.mxu0
    %v10444 = vadd.f32 %v10403, %v10443
    %v10445 = vpop.f32.mrf.mxu0
    %v10446 = vadd.f32 %v10405, %v10445
    %v10447 = vpop.f32.mrf.mxu0
    %v10448 = vpop.f32.mrf.mxu0
    %10449 = vdwg.mxu0
    %10450 = vmatprep.subr.bf16.mxu0 %v9791
    %10451 = vmatpush1.bf16.msra.mxu0 %v9790
    %10452 = vmatprep.subr.bf16.mxu0 %v9787
    %10453 = vmatpush1.bf16.msra.mxu0 %v9786
    %10454 = vmatprep.subr.bf16.mxu0 %v9783
    %10455 = vmatpush1.bf16.msra.mxu0 %v9782
    %10456 = vmatprep.subr.bf16.mxu0 %v9779
    %10457 = vmatpush1.bf16.msra.mxu0 %v9778
    %10458 = vmatprep.subr.bf16.mxu0 %v9775
    %10459 = vmatpush1.bf16.msra.mxu0 %v9774
    %10460 = vmatprep.subr.bf16.mxu0 %v9771
    %10461 = vmatpush1.bf16.msra.mxu0 %v9770
    %10462 = vmatprep.subr.bf16.mxu0 %v9767
    %10463 = vmatpush1.bf16.msra.mxu0 %v9766
    %10464 = vmatprep.subr.bf16.mxu0 %v9763
    %10465 = vmatpush1.bf16.msra.mxu0 %v9762
    %10466 = vmatprep.subr.bf16.mxu0 %v9823
    %10467 = vmatpush2.bf16.msra.mxu0 %v9822
    %10468 = vmatprep.subr.bf16.mxu0 %v9819
    %10469 = vmatpush2.bf16.msra.mxu0 %v9818
    %10470 = vmatprep.subr.bf16.mxu0 %v9815
    %10471 = vmatpush2.bf16.msra.mxu0 %v9814
    %10472 = vmatprep.subr.bf16.mxu0 %v9811
    %10473 = vmatpush2.bf16.msra.mxu0 %v9810
    %10474 = vmatprep.subr.bf16.mxu0 %v9807
    %10475 = vmatpush2.bf16.msra.mxu0 %v9806
    %10476 = vmatprep.subr.bf16.mxu0 %v9803
    %10477 = vmatpush2.bf16.msra.mxu0 %v9802
    %10478 = vmatprep.subr.bf16.mxu0 %v9799
    %10479 = vmatpush2.bf16.msra.mxu0 %v9798
    %10480 = vmatprep.subr.bf16.mxu0 %v9795
    %10481 = vmatpush2.bf16.msra.mxu0 %v9794
    %10482 = vmatprep.mubr.bf16.mxu0 %v7818
    %10483 = vmatmul.mubr.bf16.gmra.mxu0 %v7817
    %v10484 = vpop.f32.mrf.mxu0
    %v10485 = vadd.f32 %v10444, %v10484
    %v10486 = vpop.f32.mrf.mxu0
    %v10487 = vadd.f32 %v10446, %v10486
    %v10488 = vpop.f32.mrf.mxu0
    %v10489 = vpop.f32.mrf.mxu0
    %10490 = vdwg.mxu0
    %10491 = vmatprep.subr.bf16.mxu0 0
    %10492 = vmatpush1.bf16.msra.mxu0 0
    %10493 = vmatprep.subr.bf16.mxu0 0
    %10494 = vmatpush1.bf16.msra.mxu0 0
    %10495 = vmatprep.subr.bf16.mxu0 0
    %10496 = vmatpush1.bf16.msra.mxu0 0
    %10497 = vmatprep.subr.bf16.mxu0 0
    %10498 = vmatpush1.bf16.msra.mxu0 0
    %10499 = vmatprep.subr.bf16.mxu0 %v9839
    %10500 = vmatpush1.bf16.msra.mxu0 %v9838
    %10501 = vmatprep.subr.bf16.mxu0 %v9835
    %10502 = vmatpush1.bf16.msra.mxu0 %v9834
    %10503 = vmatprep.subr.bf16.mxu0 %v9831
    %10504 = vmatpush1.bf16.msra.mxu0 %v9830
    %10505 = vmatprep.subr.bf16.mxu0 %v9827
    %10506 = vmatpush1.bf16.msra.mxu0 %v9826
    %10507 = vmatprep.subr.bf16.mxu0 0
    %10508 = vmatpush2.bf16.msra.mxu0 0
    %10509 = vmatprep.subr.bf16.mxu0 0
    %10510 = vmatpush2.bf16.msra.mxu0 0
    %10511 = vmatprep.subr.bf16.mxu0 0
    %10512 = vmatpush2.bf16.msra.mxu0 0
    %10513 = vmatprep.subr.bf16.mxu0 0
    %10514 = vmatpush2.bf16.msra.mxu0 0
    %10515 = vmatprep.subr.bf16.mxu0 0
    %10516 = vmatpush2.bf16.msra.mxu0 0
    %10517 = vmatprep.subr.bf16.mxu0 0
    %10518 = vmatpush2.bf16.msra.mxu0 0
    %10519 = vmatprep.subr.bf16.mxu0 0
    %10520 = vmatpush2.bf16.msra.mxu0 0
    %10521 = vmatprep.subr.bf16.mxu0 0
    %10522 = vmatpush2.bf16.msra.mxu0 0
    %10523 = vmatprep.mubr.bf16.mxu0 0
    %10524 = vmatmul.mubr.bf16.gmra.mxu0 %v10243
    %v10525 = vpop.f32.mrf.mxu0
    %v10526 = vadd.f32 %v10485, %v10525
    %v10527 = vpop.f32.mrf.mxu0
    %v10528 = vadd.f32 %v10487, %v10527
    %v10529 = vpop.f32.mrf.mxu0
    %v10530 = vpop.f32.mrf.mxu0
    %10531 = vdwg.mxu0
    %10532 = vmatprep.subr.bf16.mxu0 %v9473
    %10533 = vmatpush1.bf16.msra.mxu0 %v9472
    %10534 = vmatprep.subr.bf16.mxu0 %v9469
    %10535 = vmatpush1.bf16.msra.mxu0 %v9468
    %10536 = vmatprep.subr.bf16.mxu0 %v9465
    %10537 = vmatpush1.bf16.msra.mxu0 %v9464
    %10538 = vmatprep.subr.bf16.mxu0 %v9461
    %10539 = vmatpush1.bf16.msra.mxu0 %v9460
    %10540 = vmatprep.subr.bf16.mxu0 %v9457
    %10541 = vmatpush1.bf16.msra.mxu0 %v9456
    %10542 = vmatprep.subr.bf16.mxu0 %v9453
    %10543 = vmatpush1.bf16.msra.mxu0 %v9452
    %10544 = vmatprep.subr.bf16.mxu0 %v9449
    %10545 = vmatpush1.bf16.msra.mxu0 %v9448
    %10546 = vmatprep.subr.bf16.mxu0 %v9445
    %10547 = vmatpush1.bf16.msra.mxu0 %v9444
    %10548 = vmatprep.subr.bf16.mxu0 %v9505
    %10549 = vmatpush2.bf16.msra.mxu0 %v9504
    %10550 = vmatprep.subr.bf16.mxu0 %v9501
    %10551 = vmatpush2.bf16.msra.mxu0 %v9500
    %10552 = vmatprep.subr.bf16.mxu0 %v9497
    %10553 = vmatpush2.bf16.msra.mxu0 %v9496
    %10554 = vmatprep.subr.bf16.mxu0 %v9493
    %10555 = vmatpush2.bf16.msra.mxu0 %v9492
    %10556 = vmatprep.subr.bf16.mxu0 %v9489
    %10557 = vmatpush2.bf16.msra.mxu0 %v9488
    %10558 = vmatprep.subr.bf16.mxu0 %v9485
    %10559 = vmatpush2.bf16.msra.mxu0 %v9484
    %10560 = vmatprep.subr.bf16.mxu0 %v9481
    %10561 = vmatpush2.bf16.msra.mxu0 %v9480
    %10562 = vmatprep.subr.bf16.mxu0 %v9477
    %10563 = vmatpush2.bf16.msra.mxu0 %v9476
    %10564 = vmatprep.mubr.bf16.mxu0 %v7808
    %10565 = vmatmul.mubr.bf16.gmra.mxu0 %v7807
    %v10566 = vpop.f32.mrf.mxu0
    %v10567 = vadd.f32 %v8233, %v10566
    %v10568 = vpop.f32.mrf.mxu0
    %v10569 = vadd.f32 %v8237, %v10568
    %v10570 = vpop.f32.mrf.mxu0
    %v10571 = vpop.f32.mrf.mxu0
    %10572 = vdwg.mxu0
    %10573 = vmatprep.subr.bf16.mxu0 %v9537
    %10574 = vmatpush1.bf16.msra.mxu0 %v9536
    %10575 = vmatprep.subr.bf16.mxu0 %v9533
    %10576 = vmatpush1.bf16.msra.mxu0 %v9532
    %10577 = vmatprep.subr.bf16.mxu0 %v9529
    %10578 = vmatpush1.bf16.msra.mxu0 %v9528
    %10579 = vmatprep.subr.bf16.mxu0 %v9525
    %10580 = vmatpush1.bf16.msra.mxu0 %v9524
    %10581 = vmatprep.subr.bf16.mxu0 %v9521
    %10582 = vmatpush1.bf16.msra.mxu0 %v9520
    %10583 = vmatprep.subr.bf16.mxu0 %v9517
    %10584 = vmatpush1.bf16.msra.mxu0 %v9516
    %10585 = vmatprep.subr.bf16.mxu0 %v9513
    %10586 = vmatpush1.bf16.msra.mxu0 %v9512
    %10587 = vmatprep.subr.bf16.mxu0 %v9509
    %10588 = vmatpush1.bf16.msra.mxu0 %v9508
    %10589 = vmatprep.subr.bf16.mxu0 %v9569
    %10590 = vmatpush2.bf16.msra.mxu0 %v9568
    %10591 = vmatprep.subr.bf16.mxu0 %v9565
    %10592 = vmatpush2.bf16.msra.mxu0 %v9564
    %10593 = vmatprep.subr.bf16.mxu0 %v9561
    %10594 = vmatpush2.bf16.msra.mxu0 %v9560
    %10595 = vmatprep.subr.bf16.mxu0 %v9557
    %10596 = vmatpush2.bf16.msra.mxu0 %v9556
    %10597 = vmatprep.subr.bf16.mxu0 %v9553
    %10598 = vmatpush2.bf16.msra.mxu0 %v9552
    %10599 = vmatprep.subr.bf16.mxu0 %v9549
    %10600 = vmatpush2.bf16.msra.mxu0 %v9548
    %10601 = vmatprep.subr.bf16.mxu0 %v9545
    %10602 = vmatpush2.bf16.msra.mxu0 %v9544
    %10603 = vmatprep.subr.bf16.mxu0 %v9541
    %10604 = vmatpush2.bf16.msra.mxu0 %v9540
    %10605 = vmatprep.mubr.bf16.mxu0 %v7810
    %10606 = vmatmul.mubr.bf16.gmra.mxu0 %v7809
    %v10607 = vpop.f32.mrf.mxu0
    %v10608 = vadd.f32 %v10567, %v10607
    %v10609 = vpop.f32.mrf.mxu0
    %v10610 = vadd.f32 %v10569, %v10609
    %v10611 = vpop.f32.mrf.mxu0
    %v10612 = vpop.f32.mrf.mxu0
    %10613 = vdwg.mxu0
    %10614 = vmatprep.subr.bf16.mxu0 %v9601
    %10615 = vmatpush1.bf16.msra.mxu0 %v9600
    %10616 = vmatprep.subr.bf16.mxu0 %v9597
    %10617 = vmatpush1.bf16.msra.mxu0 %v9596
    %10618 = vmatprep.subr.bf16.mxu0 %v9593
    %10619 = vmatpush1.bf16.msra.mxu0 %v9592
    %10620 = vmatprep.subr.bf16.mxu0 %v9589
    %10621 = vmatpush1.bf16.msra.mxu0 %v9588
    %10622 = vmatprep.subr.bf16.mxu0 %v9585
    %10623 = vmatpush1.bf16.msra.mxu0 %v9584
    %10624 = vmatprep.subr.bf16.mxu0 %v9581
    %10625 = vmatpush1.bf16.msra.mxu0 %v9580
    %10626 = vmatprep.subr.bf16.mxu0 %v9577
    %10627 = vmatpush1.bf16.msra.mxu0 %v9576
    %10628 = vmatprep.subr.bf16.mxu0 %v9573
    %10629 = vmatpush1.bf16.msra.mxu0 %v9572
    %10630 = vmatprep.subr.bf16.mxu0 %v9633
    %10631 = vmatpush2.bf16.msra.mxu0 %v9632
    %10632 = vmatprep.subr.bf16.mxu0 %v9629
    %10633 = vmatpush2.bf16.msra.mxu0 %v9628
    %10634 = vmatprep.subr.bf16.mxu0 %v9625
    %10635 = vmatpush2.bf16.msra.mxu0 %v9624
    %10636 = vmatprep.subr.bf16.mxu0 %v9621
    %10637 = vmatpush2.bf16.msra.mxu0 %v9620
    %10638 = vmatprep.subr.bf16.mxu0 %v9617
    %10639 = vmatpush2.bf16.msra.mxu0 %v9616
    %10640 = vmatprep.subr.bf16.mxu0 %v9613
    %10641 = vmatpush2.bf16.msra.mxu0 %v9612
    %10642 = vmatprep.subr.bf16.mxu0 %v9609
    %10643 = vmatpush2.bf16.msra.mxu0 %v9608
    %10644 = vmatprep.subr.bf16.mxu0 %v9605
    %10645 = vmatpush2.bf16.msra.mxu0 %v9604
    %10646 = vmatprep.mubr.bf16.mxu0 %v7812
    %10647 = vmatmul.mubr.bf16.gmra.mxu0 %v7811
    %v10648 = vpop.f32.mrf.mxu0
    %v10649 = vadd.f32 %v10608, %v10648
    %v10650 = vpop.f32.mrf.mxu0
    %v10651 = vadd.f32 %v10610, %v10650
    %v10652 = vpop.f32.mrf.mxu0
    %v10653 = vpop.f32.mrf.mxu0
    %10654 = vdwg.mxu0
    %10655 = vmatprep.subr.bf16.mxu0 %v9665
    %10656 = vmatpush1.bf16.msra.mxu0 %v9664
    %10657 = vmatprep.subr.bf16.mxu0 %v9661
    %10658 = vmatpush1.bf16.msra.mxu0 %v9660
    %10659 = vmatprep.subr.bf16.mxu0 %v9657
    %10660 = vmatpush1.bf16.msra.mxu0 %v9656
    %10661 = vmatprep.subr.bf16.mxu0 %v9653
    %10662 = vmatpush1.bf16.msra.mxu0 %v9652
    %10663 = vmatprep.subr.bf16.mxu0 %v9649
    %10664 = vmatpush1.bf16.msra.mxu0 %v9648
    %10665 = vmatprep.subr.bf16.mxu0 %v9645
    %10666 = vmatpush1.bf16.msra.mxu0 %v9644
    %10667 = vmatprep.subr.bf16.mxu0 %v9641
    %10668 = vmatpush1.bf16.msra.mxu0 %v9640
    %10669 = vmatprep.subr.bf16.mxu0 %v9637
    %10670 = vmatpush1.bf16.msra.mxu0 %v9636
    %10671 = vmatprep.subr.bf16.mxu0 %v9697
    %10672 = vmatpush2.bf16.msra.mxu0 %v9696
    %10673 = vmatprep.subr.bf16.mxu0 %v9693
    %10674 = vmatpush2.bf16.msra.mxu0 %v9692
    %10675 = vmatprep.subr.bf16.mxu0 %v9689
    %10676 = vmatpush2.bf16.msra.mxu0 %v9688
    %10677 = vmatprep.subr.bf16.mxu0 %v9685
    %10678 = vmatpush2.bf16.msra.mxu0 %v9684
    %10679 = vmatprep.subr.bf16.mxu0 %v9681
    %10680 = vmatpush2.bf16.msra.mxu0 %v9680
    %10681 = vmatprep.subr.bf16.mxu0 %v9677
    %10682 = vmatpush2.bf16.msra.mxu0 %v9676
    %10683 = vmatprep.subr.bf16.mxu0 %v9673
    %10684 = vmatpush2.bf16.msra.mxu0 %v9672
    %10685 = vmatprep.subr.bf16.mxu0 %v9669
    %10686 = vmatpush2.bf16.msra.mxu0 %v9668
    %10687 = vmatprep.mubr.bf16.mxu0 %v7814
    %10688 = vmatmul.mubr.bf16.gmra.mxu0 %v7813
    %v10689 = vpop.f32.mrf.mxu0
    %v10690 = vadd.f32 %v10649, %v10689
    %v10691 = vpop.f32.mrf.mxu0
    %v10692 = vadd.f32 %v10651, %v10691
    %v10693 = vpop.f32.mrf.mxu0
    %v10694 = vpop.f32.mrf.mxu0
    %10695 = vdwg.mxu0
    %10696 = vmatprep.subr.bf16.mxu0 %v9729
    %10697 = vmatpush1.bf16.msra.mxu0 %v9728
    %10698 = vmatprep.subr.bf16.mxu0 %v9725
    %10699 = vmatpush1.bf16.msra.mxu0 %v9724
    %10700 = vmatprep.subr.bf16.mxu0 %v9721
    %10701 = vmatpush1.bf16.msra.mxu0 %v9720
    %10702 = vmatprep.subr.bf16.mxu0 %v9717
    %10703 = vmatpush1.bf16.msra.mxu0 %v9716
    %10704 = vmatprep.subr.bf16.mxu0 %v9713
    %10705 = vmatpush1.bf16.msra.mxu0 %v9712
    %10706 = vmatprep.subr.bf16.mxu0 %v9709
    %10707 = vmatpush1.bf16.msra.mxu0 %v9708
    %10708 = vmatprep.subr.bf16.mxu0 %v9705
    %10709 = vmatpush1.bf16.msra.mxu0 %v9704
    %10710 = vmatprep.subr.bf16.mxu0 %v9701
    %10711 = vmatpush1.bf16.msra.mxu0 %v9700
    %10712 = vmatprep.subr.bf16.mxu0 %v9761
    %10713 = vmatpush2.bf16.msra.mxu0 %v9760
    %10714 = vmatprep.subr.bf16.mxu0 %v9757
    %10715 = vmatpush2.bf16.msra.mxu0 %v9756
    %10716 = vmatprep.subr.bf16.mxu0 %v9753
    %10717 = vmatpush2.bf16.msra.mxu0 %v9752
    %10718 = vmatprep.subr.bf16.mxu0 %v9749
    %10719 = vmatpush2.bf16.msra.mxu0 %v9748
    %10720 = vmatprep.subr.bf16.mxu0 %v9745
    %10721 = vmatpush2.bf16.msra.mxu0 %v9744
    %10722 = vmatprep.subr.bf16.mxu0 %v9741
    %10723 = vmatpush2.bf16.msra.mxu0 %v9740
    %10724 = vmatprep.subr.bf16.mxu0 %v9737
    %10725 = vmatpush2.bf16.msra.mxu0 %v9736
    %10726 = vmatprep.subr.bf16.mxu0 %v9733
    %10727 = vmatpush2.bf16.msra.mxu0 %v9732
    %10728 = vmatprep.mubr.bf16.mxu0 %v7816
    %10729 = vmatmul.mubr.bf16.gmra.mxu0 %v7815
    %v10730 = vpop.f32.mrf.mxu0
    %v10731 = vadd.f32 %v10690, %v10730
    %v10732 = vpop.f32.mrf.mxu0
    %v10733 = vadd.f32 %v10692, %v10732
    %v10734 = vpop.f32.mrf.mxu0
    %v10735 = vpop.f32.mrf.mxu0
    %10736 = vdwg.mxu0
    %10737 = vmatprep.subr.bf16.mxu0 %v9793
    %10738 = vmatpush1.bf16.msra.mxu0 %v9792
    %10739 = vmatprep.subr.bf16.mxu0 %v9789
    %10740 = vmatpush1.bf16.msra.mxu0 %v9788
    %10741 = vmatprep.subr.bf16.mxu0 %v9785
    %10742 = vmatpush1.bf16.msra.mxu0 %v9784
    %10743 = vmatprep.subr.bf16.mxu0 %v9781
    %10744 = vmatpush1.bf16.msra.mxu0 %v9780
    %10745 = vmatprep.subr.bf16.mxu0 %v9777
    %10746 = vmatpush1.bf16.msra.mxu0 %v9776
    %10747 = vmatprep.subr.bf16.mxu0 %v9773
    %10748 = vmatpush1.bf16.msra.mxu0 %v9772
    %10749 = vmatprep.subr.bf16.mxu0 %v9769
    %10750 = vmatpush1.bf16.msra.mxu0 %v9768
    %10751 = vmatprep.subr.bf16.mxu0 %v9765
    %10752 = vmatpush1.bf16.msra.mxu0 %v9764
    %10753 = vmatprep.subr.bf16.mxu0 %v9825
    %10754 = vmatpush2.bf16.msra.mxu0 %v9824
    %10755 = vmatprep.subr.bf16.mxu0 %v9821
    %10756 = vmatpush2.bf16.msra.mxu0 %v9820
    %10757 = vmatprep.subr.bf16.mxu0 %v9817
    %10758 = vmatpush2.bf16.msra.mxu0 %v9816
    %10759 = vmatprep.subr.bf16.mxu0 %v9813
    %10760 = vmatpush2.bf16.msra.mxu0 %v9812
    %10761 = vmatprep.subr.bf16.mxu0 %v9809
    %10762 = vmatpush2.bf16.msra.mxu0 %v9808
    %10763 = vmatprep.subr.bf16.mxu0 %v9805
    %10764 = vmatpush2.bf16.msra.mxu0 %v9804
    %10765 = vmatprep.subr.bf16.mxu0 %v9801
    %10766 = vmatpush2.bf16.msra.mxu0 %v9800
    %10767 = vmatprep.subr.bf16.mxu0 %v9797
    %10768 = vmatpush2.bf16.msra.mxu0 %v9796
    %10769 = vmatprep.mubr.bf16.mxu0 %v7818
    %10770 = vmatmul.mubr.bf16.gmra.mxu0 %v7817
    %v10771 = vpop.f32.mrf.mxu0
    %v10772 = vadd.f32 %v10731, %v10771
    %v10773 = vpop.f32.mrf.mxu0
    %v10774 = vadd.f32 %v10733, %v10773
    %v10775 = vpop.f32.mrf.mxu0
    %v10776 = vpop.f32.mrf.mxu0
    %10777 = vdwg.mxu0
    %10778 = vmatprep.subr.bf16.mxu0 0
    %10779 = vmatpush1.bf16.msra.mxu0 0
    %10780 = vmatprep.subr.bf16.mxu0 0
    %10781 = vmatpush1.bf16.msra.mxu0 0
    %10782 = vmatprep.subr.bf16.mxu0 0
    %10783 = vmatpush1.bf16.msra.mxu0 0
    %10784 = vmatprep.subr.bf16.mxu0 0
    %10785 = vmatpush1.bf16.msra.mxu0 0
    %10786 = vmatprep.subr.bf16.mxu0 %v9841
    %10787 = vmatpush1.bf16.msra.mxu0 %v9840
    %10788 = vmatprep.subr.bf16.mxu0 %v9837
    %10789 = vmatpush1.bf16.msra.mxu0 %v9836
    %10790 = vmatprep.subr.bf16.mxu0 %v9833
    %10791 = vmatpush1.bf16.msra.mxu0 %v9832
    %10792 = vmatprep.subr.bf16.mxu0 %v9829
    %10793 = vmatpush1.bf16.msra.mxu0 %v9828
    %10794 = vmatprep.subr.bf16.mxu0 0
    %10795 = vmatpush2.bf16.msra.mxu0 0
    %10796 = vmatprep.subr.bf16.mxu0 0
    %10797 = vmatpush2.bf16.msra.mxu0 0
    %10798 = vmatprep.subr.bf16.mxu0 0
    %10799 = vmatpush2.bf16.msra.mxu0 0
    %10800 = vmatprep.subr.bf16.mxu0 0
    %10801 = vmatpush2.bf16.msra.mxu0 0
    %10802 = vmatprep.subr.bf16.mxu0 0
    %10803 = vmatpush2.bf16.msra.mxu0 0
    %10804 = vmatprep.subr.bf16.mxu0 0
    %10805 = vmatpush2.bf16.msra.mxu0 0
    %10806 = vmatprep.subr.bf16.mxu0 0
    %10807 = vmatpush2.bf16.msra.mxu0 0
    %10808 = vmatprep.subr.bf16.mxu0 0
    %10809 = vmatpush2.bf16.msra.mxu0 0
    %10810 = vmatprep.mubr.bf16.mxu0 0
    %10811 = vmatmul.mubr.bf16.gmra.mxu0 %v10243
    %v10812 = vpop.f32.mrf.mxu0
    %v10813 = vadd.f32 %v10772, %v10812
    %v10814 = vpop.f32.mrf.mxu0
    %v10815 = vadd.f32 %v10774, %v10814
    %v10816 = vpop.f32.mrf.mxu0
    %v10817 = vpop.f32.mrf.mxu0
    %10818 = vdwg.mxu0
    %v10819 = vmax.f32 %v10526, 0.0
    %v10820 = vmax.f32 %v10528, 0.0
    %v10821 = vmax.f32 %v10813, 0.0
    %v10822 = vmax.f32 %v10815, 0.0
    %v10823 = vpack.c.bf16 %v10819, %v10819
    %v10824 = vpack.c.bf16 %v10820, %v10820
    %v10825 = vpack.c.bf16 %v10821, %v10821
    %v10826 = vpack.c.bf16 %v10822, %v10822
    %v10827 = vld [vmem:[%s7] sm:$0xf]
    %v10828 = vld [vmem:[%s7 + $0x4] sm:$0xf]
    %v10829 = vld [vmem:[%s7 + $0x8] sm:$0xf]
    %v10830 = vld [vmem:[%s7 + $0xc] sm:$0xf]
    %v10831 = vld [vmem:[%s7 + $0x10] sm:$0xf]
    %v10832 = vld [vmem:[%s7 + $0x14] sm:$0xf]
    %v10833 = vld [vmem:[%s7 + $0x18] sm:$0xf]
    %v10834 = vld [vmem:[%s7 + $0x1c] sm:$0xf]
    %v10835 = vld [vmem:[%s7 + $0x20] sm:$0xf]
    %v10836 = vld [vmem:[%s7 + $0x24] sm:$0xf]
    %v10837 = vld [vmem:[%s7 + $0x28] sm:$0xf]
    %v10838 = vld [vmem:[%s7 + $0x2c] sm:$0xf]
    %v10839 = vld [vmem:[%s7 + $0x30] sm:$0xf]
    %v10840 = vld [vmem:[%s7 + $0x34] sm:$0xf]
    %v10841 = vld [vmem:[%s7 + $0x38] sm:$0xf]
    %v10842 = vld [vmem:[%s7 + $0x3c] sm:$0xf]
    %v10843 = vld [vmem:[%s7 + $0x40] sm:$0xf]
    %v10844 = vld [vmem:[%s7 + $0x44] sm:$0xf]
    %v10845 = vld [vmem:[%s7 + $0x48] sm:$0xf]
    %v10846 = vld [vmem:[%s7 + $0x4c] sm:$0xf]
    %v10847 = vld [vmem:[%s7 + $0x50] sm:$0xf]
    %v10848 = vld [vmem:[%s7 + $0x54] sm:$0xf]
    %v10849 = vld [vmem:[%s7 + $0x58] sm:$0xf]
    %v10850 = vld [vmem:[%s7 + $0x5c] sm:$0xf]
    %v10851 = vld [vmem:[%s7 + $0x60] sm:$0xf]
    %v10852 = vld [vmem:[%s7 + $0x64] sm:$0xf]
    %v10853 = vld [vmem:[%s7 + $0x68] sm:$0xf]
    %v10854 = vld [vmem:[%s7 + $0x6c] sm:$0xf]
    %v10855 = vld [vmem:[%s7 + $0x70] sm:$0xf]
    %v10856 = vld [vmem:[%s7 + $0x74] sm:$0xf]
    %v10857 = vld [vmem:[%s7 + $0x78] sm:$0xf]
    %v10858 = vld [vmem:[%s7 + $0x7c] sm:$0xf]
    %v10859 = vld [vmem:[%s7 + $0x80] sm:$0xf]
    %v10860 = vld [vmem:[%s7 + $0x84] sm:$0xf]
    %v10861 = vld [vmem:[%s7 + $0x88] sm:$0xf]
    %v10862 = vld [vmem:[%s7 + $0x8c] sm:$0xf]
    %v10863 = vld [vmem:[%s7 + $0x90] sm:$0xf]
    %v10864 = vld [vmem:[%s7 + $0x94] sm:$0xf]
    %v10865 = vld [vmem:[%s7 + $0x98] sm:$0xf]
    %v10866 = vld [vmem:[%s7 + $0x9c] sm:$0xf]
    %v10867 = vld [vmem:[%s7 + $0xa0] sm:$0xf]
    %v10868 = vld [vmem:[%s7 + $0xa4] sm:$0xf]
    %v10869 = vld [vmem:[%s7 + $0xa8] sm:$0xf]
    %v10870 = vld [vmem:[%s7 + $0xac] sm:$0xf]
    %v10871 = vld [vmem:[%s7 + $0xb0] sm:$0xf]
    %v10872 = vld [vmem:[%s7 + $0xb4] sm:$0xf]
    %v10873 = vld [vmem:[%s7 + $0xb8] sm:$0xf]
    %v10874 = vld [vmem:[%s7 + $0xbc] sm:$0xf]
    %v10875 = vld [vmem:[%s7 + $0xc0] sm:$0xf]
    %v10876 = vld [vmem:[%s7 + $0xc4] sm:$0xf]
    %v10877 = vld [vmem:[%s7 + $0xc8] sm:$0xf]
    %v10878 = vld [vmem:[%s7 + $0xcc] sm:$0xf]
    %v10879 = vld [vmem:[%s7 + $0xd0] sm:$0xf]
    %v10880 = vld [vmem:[%s7 + $0xd4] sm:$0xf]
    %v10881 = vld [vmem:[%s7 + $0xd8] sm:$0xf]
    %v10882 = vld [vmem:[%s7 + $0xdc] sm:$0xf]
    %v10883 = vld [vmem:[%s7 + $0xe0] sm:$0xf]
    %v10884 = vld [vmem:[%s7 + $0xe4] sm:$0xf]
    %v10885 = vld [vmem:[%s7 + $0xe8] sm:$0xf]
    %v10886 = vld [vmem:[%s7 + $0xec] sm:$0xf]
    %v10887 = vld [vmem:[%s7 + $0xf0] sm:$0xf]
    %v10888 = vld [vmem:[%s7 + $0xf4] sm:$0xf]
    %v10889 = vld [vmem:[%s7 + $0xf8] sm:$0xf]
    %v10890 = vld [vmem:[%s7 + $0xfc] sm:$0xf]
    %v10891 = vld [vmem:[%s8] sm:$0x1]
    %v10893 = vlaneseq
    %v10894 = vshrl.u32 %v10893, 7
    %v10895 = vsub.s32 0, %v10894
    %v10896 = vrot.slane %v10891, %v10895
    %v10962 = vunpack.c.l.b16 %v10827
    %v10963 = vunpack.c.l.b16 %v10828
    %v10964 = vunpack.c.l.b16 %v10829
    %v10965 = vunpack.c.l.b16 %v10830
    %v10966 = vunpack.c.l.b16 %v10831
    %v10967 = vunpack.c.l.b16 %v10832
    %v10968 = vunpack.c.l.b16 %v10833
    %v10969 = vunpack.c.l.b16 %v10834
    %v10970 = vunpack.c.l.b16 %v10835
    %v10971 = vunpack.c.l.b16 %v10836
    %v10972 = vunpack.c.l.b16 %v10837
    %v10973 = vunpack.c.l.b16 %v10838
    %v10974 = vunpack.c.l.b16 %v10839
    %v10975 = vunpack.c.l.b16 %v10840
    %v10976 = vunpack.c.l.b16 %v10841
    %v10977 = vunpack.c.l.b16 %v10842
    %v10978 = vunpack.c.l.b16 %v10843
    %v10979 = vunpack.c.l.b16 %v10844
    %v10980 = vunpack.c.l.b16 %v10845
    %v10981 = vunpack.c.l.b16 %v10846
    %v10982 = vunpack.c.l.b16 %v10847
    %v10983 = vunpack.c.l.b16 %v10848
    %v10984 = vunpack.c.l.b16 %v10849
    %v10985 = vunpack.c.l.b16 %v10850
    %v10986 = vunpack.c.l.b16 %v10851
    %v10987 = vunpack.c.l.b16 %v10852
    %v10988 = vunpack.c.l.b16 %v10853
    %v10989 = vunpack.c.l.b16 %v10854
    %v10990 = vunpack.c.l.b16 %v10855
    %v10991 = vunpack.c.l.b16 %v10856
    %v10992 = vunpack.c.l.b16 %v10857
    %v10993 = vunpack.c.l.b16 %v10858
    %v10994 = vunpack.c.l.b16 %v10859
    %v10995 = vunpack.c.l.b16 %v10860
    %v10996 = vunpack.c.l.b16 %v10861
    %v10997 = vunpack.c.l.b16 %v10862
    %v10998 = vunpack.c.l.b16 %v10863
    %v10999 = vunpack.c.l.b16 %v10864
    %v11000 = vunpack.c.l.b16 %v10865
    %v11001 = vunpack.c.l.b16 %v10866
    %v11002 = vunpack.c.l.b16 %v10867
    %v11003 = vunpack.c.l.b16 %v10868
    %v11004 = vunpack.c.l.b16 %v10869
    %v11005 = vunpack.c.l.b16 %v10870
    %v11006 = vunpack.c.l.b16 %v10871
    %v11007 = vunpack.c.l.b16 %v10872
    %v11008 = vunpack.c.l.b16 %v10873
    %v11009 = vunpack.c.l.b16 %v10874
    %v11010 = vunpack.c.l.b16 %v10875
    %v11011 = vunpack.c.l.b16 %v10876
    %v11012 = vunpack.c.l.b16 %v10877
    %v11013 = vunpack.c.l.b16 %v10878
    %v11014 = vunpack.c.l.b16 %v10879
    %v11015 = vunpack.c.l.b16 %v10880
    %v11016 = vunpack.c.l.b16 %v10881
    %v11017 = vunpack.c.l.b16 %v10882
    %v11018 = vunpack.c.l.b16 %v10883
    %v11019 = vunpack.c.l.b16 %v10884
    %v11020 = vunpack.c.l.b16 %v10885
    %v11021 = vunpack.c.l.b16 %v10886
    %v11022 = vunpack.c.l.b16 %v10887
    %v11023 = vunpack.c.l.b16 %v10888
    %v11024 = vunpack.c.l.b16 %v10889
    %v11025 = vunpack.c.l.b16 %v10890
    %v11026 = vpack.c.b16 %v10963, %v10962
    %v11027 = vpack.c.b16 %v10965, %v10964
    %v11028 = vpack.c.b16 %v10967, %v10966
    %v11029 = vpack.c.b16 %v10969, %v10968
    %v11030 = vpack.c.b16 %v10971, %v10970
    %v11031 = vpack.c.b16 %v10973, %v10972
    %v11032 = vpack.c.b16 %v10975, %v10974
    %v11033 = vpack.c.b16 %v10977, %v10976
    %v11034 = vpack.c.b16 %v10979, %v10978
    %v11035 = vpack.c.b16 %v10981, %v10980
    %v11036 = vpack.c.b16 %v10983, %v10982
    %v11037 = vpack.c.b16 %v10985, %v10984
    %v11038 = vpack.c.b16 %v10987, %v10986
    %v11039 = vpack.c.b16 %v10989, %v10988
    %v11040 = vpack.c.b16 %v10991, %v10990
    %v11041 = vpack.c.b16 %v10993, %v10992
    %v11042 = vpack.c.b16 %v10995, %v10994
    %v11043 = vpack.c.b16 %v10997, %v10996
    %v11044 = vpack.c.b16 %v10999, %v10998
    %v11045 = vpack.c.b16 %v11001, %v11000
    %v11046 = vpack.c.b16 %v11003, %v11002
    %v11047 = vpack.c.b16 %v11005, %v11004
    %v11048 = vpack.c.b16 %v11007, %v11006
    %v11049 = vpack.c.b16 %v11009, %v11008
    %v11050 = vpack.c.b16 %v11011, %v11010
    %v11051 = vpack.c.b16 %v11013, %v11012
    %v11052 = vpack.c.b16 %v11015, %v11014
    %v11053 = vpack.c.b16 %v11017, %v11016
    %v11054 = vpack.c.b16 %v11019, %v11018
    %v11055 = vpack.c.b16 %v11021, %v11020
    %v11056 = vpack.c.b16 %v11023, %v11022
    %v11057 = vpack.c.b16 %v11025, %v11024
    %11090 = vmatprep.subr.bf16.mxu0 0
    %11091 = vmatpush1.bf16.msra.mxu0 %v11033
    %11092 = vmatprep.subr.bf16.mxu0 0
    %11093 = vmatpush1.bf16.msra.mxu0 %v11032
    %11094 = vmatprep.subr.bf16.mxu0 0
    %11095 = vmatpush1.bf16.msra.mxu0 %v11031
    %11096 = vmatprep.subr.bf16.mxu0 0
    %11097 = vmatpush1.bf16.msra.mxu0 %v11030
    %11098 = vmatprep.subr.bf16.mxu0 0
    %11099 = vmatpush1.bf16.msra.mxu0 %v11029
    %11100 = vmatprep.subr.bf16.mxu0 0
    %11101 = vmatpush1.bf16.msra.mxu0 %v11028
    %11102 = vmatprep.subr.bf16.mxu0 0
    %11103 = vmatpush1.bf16.msra.mxu0 %v11027
    %11104 = vmatprep.subr.bf16.mxu0 0
    %11105 = vmatpush1.bf16.msra.mxu0 %v11026
    %11106 = vmatprep.subr.bf16.mxu0 0
    %11107 = vmatpush2.bf16.msra.mxu0 %v11041
    %11108 = vmatprep.subr.bf16.mxu0 0
    %11109 = vmatpush2.bf16.msra.mxu0 %v11040
    %11110 = vmatprep.subr.bf16.mxu0 0
    %11111 = vmatpush2.bf16.msra.mxu0 %v11039
    %11112 = vmatprep.subr.bf16.mxu0 0
    %11113 = vmatpush2.bf16.msra.mxu0 %v11038
    %11114 = vmatprep.subr.bf16.mxu0 0
    %11115 = vmatpush2.bf16.msra.mxu0 %v11037
    %11116 = vmatprep.subr.bf16.mxu0 0
    %11117 = vmatpush2.bf16.msra.mxu0 %v11036
    %11118 = vmatprep.subr.bf16.mxu0 0
    %11119 = vmatpush2.bf16.msra.mxu0 %v11035
    %11120 = vmatprep.subr.bf16.mxu0 0
    %11121 = vmatpush2.bf16.msra.mxu0 %v11034
    %11122 = vmatprep.mubr.bf16.mxu0 %v10824
    %11123 = vmatmul.mubr.bf16.gmra.mxu0 %v10823
    %v11124 = vpop.f32.mrf.mxu0
    %v11125 = vadd.f32 %v10896, %v11124
    %v11126 = vpop.f32.mrf.mxu0
    %v11127 = vpop.f32.mrf.mxu0
    %v11128 = vpop.f32.mrf.mxu0
    %11129 = vdwg.mxu0
    %11130 = vmatprep.subr.bf16.mxu0 0
    %11131 = vmatpush1.bf16.msra.mxu0 %v11049
    %11132 = vmatprep.subr.bf16.mxu0 0
    %11133 = vmatpush1.bf16.msra.mxu0 %v11048
    %11134 = vmatprep.subr.bf16.mxu0 0
    %11135 = vmatpush1.bf16.msra.mxu0 %v11047
    %11136 = vmatprep.subr.bf16.mxu0 0
    %11137 = vmatpush1.bf16.msra.mxu0 %v11046
    %11138 = vmatprep.subr.bf16.mxu0 0
    %11139 = vmatpush1.bf16.msra.mxu0 %v11045
    %11140 = vmatprep.subr.bf16.mxu0 0
    %11141 = vmatpush1.bf16.msra.mxu0 %v11044
    %11142 = vmatprep.subr.bf16.mxu0 0
    %11143 = vmatpush1.bf16.msra.mxu0 %v11043
    %11144 = vmatprep.subr.bf16.mxu0 0
    %11145 = vmatpush1.bf16.msra.mxu0 %v11042
    %11146 = vmatprep.subr.bf16.mxu0 0
    %11147 = vmatpush2.bf16.msra.mxu0 %v11057
    %11148 = vmatprep.subr.bf16.mxu0 0
    %11149 = vmatpush2.bf16.msra.mxu0 %v11056
    %11150 = vmatprep.subr.bf16.mxu0 0
    %11151 = vmatpush2.bf16.msra.mxu0 %v11055
    %11152 = vmatprep.subr.bf16.mxu0 0
    %11153 = vmatpush2.bf16.msra.mxu0 %v11054
    %11154 = vmatprep.subr.bf16.mxu0 0
    %11155 = vmatpush2.bf16.msra.mxu0 %v11053
    %11156 = vmatprep.subr.bf16.mxu0 0
    %11157 = vmatpush2.bf16.msra.mxu0 %v11052
    %11158 = vmatprep.subr.bf16.mxu0 0
    %11159 = vmatpush2.bf16.msra.mxu0 %v11051
    %11160 = vmatprep.subr.bf16.mxu0 0
    %11161 = vmatpush2.bf16.msra.mxu0 %v11050
    %11162 = vmatprep.mubr.bf16.mxu0 %v10826
    %11163 = vmatmul.mubr.bf16.gmra.mxu0 %v10825
    %v11164 = vpop.f32.mrf.mxu0
    %v11165 = vadd.f32 %v11125, %v11164
    %v11166 = vpop.f32.mrf.mxu0
    %v11167 = vpop.f32.mrf.mxu0
    %v11168 = vpop.f32.mrf.mxu0
    %11169 = vdwg.mxu0
    %11170 = vst [vmem:[#allocation2] sm:$0x3] %v11165
    // Predicated region
    $region38: #{tpu_custom_call.1} parent=1 // pred_check
      _
    $region39: #{tpu_custom_call.1} parent=1 // pred_check_branch
      %11172 = sbr.rel (0) target = $region41
    $region40: #{tpu_custom_call.1} parent=1 // pred_region
      %s11174 = ssub.s32 32, 32
      %11175 = vsyncadd [#allocation3], %s11174
      %s11177 = sshll.u32 [#allocation2], 4
      %s11178 = int_to_ptr.vmem [resolvable:$true] %s11177
      %11180 = dma.vmem_to_hbm [thread:$0]  %s11178, 32, %s9, [#allocation3]
    $region41: #{tpu_custom_call.1} parent=1 // pred_fallthru
      _
    // Predicated region
    $region42: #{tpu_custom_call.1} parent=1 // pred_check
      _
    $region43: #{tpu_custom_call.1} parent=1 // pred_check_branch
      %11182 = sbr.rel (0) target = $region45
    $region44: #{tpu_custom_call.1} parent=1 // pred_region
      %11183 = dma.done [#allocation3], 32
    $region45: #{tpu_custom_call.1} parent=1 // pred_fallthru
      _
    %11184 = vsyncpa [#allocation3], 1

</llo_original>
